<compile_context>
chip_gen: v6e
topology: v6e:2x2x1
jax: 0.10.0
libtpu: 0.0.40
codegen_flags: <defaults>
</compile_context>

<pallas_src>
import jax
import jax.numpy as jnp
from jax import lax
from jax.experimental import pallas as pl
from jax.experimental.pallas import tpu as pltpu

# ----------------------------- configuration --------------------------------
B = 2                 # batch
HORIZON = 8           # prediction horizon T
HIST_LEN = 8          # history length
HIST_HIDDEN = 32      # algo_config.hist_encoder_hidden
MAP_FEAT = 32         # algo_config.map_feature_dim
COND_FEAT = 32        # algo_config.cond_feat_dim
VAE_HIDDEN = 32       # vae_config.hidden_size
LATENT = 8            # vae_config.latent_size
OBS_DIM = 4
ACT_DIM = 2
IMG_C, IMG_H, IMG_W = 3, 16, 16
DT = 0.1
ACCE_BOUND = 6.0
YAWVEL_BOUND = 4.0

_VMEM = pl.BlockSpec(memory_space=pltpu.MemorySpace.VMEM)
_SMEM = pl.BlockSpec(memory_space=pltpu.MemorySpace.SMEM)


# --------------------------- in-kernel helpers --------------------------------
def _lstm_last(gx, whh, T, Bb, H):
    """Run an LSTM over T steps given the pre-projected input gates gx
    ((T*Bb, 4H), time-major) and return only the final hidden state (Bb, H).
    Fully unrolled Python loop (T is small and static)."""
    h = jnp.zeros((Bb, H), jnp.float32)
    c = jnp.zeros((Bb, H), jnp.float32)
    for t in range(T):
        gates = gx[t * Bb:(t + 1) * Bb, :] + jnp.dot(
            h, whh, preferred_element_type=jnp.float32)
        i = jax.nn.sigmoid(gates[:, 0:H])
        f = jax.nn.sigmoid(gates[:, H:2 * H])
        g = jnp.tanh(gates[:, 2 * H:3 * H])
        o = jax.nn.sigmoid(gates[:, 3 * H:4 * H])
        c = f * c + i * g
        h = o * jnp.tanh(c)
    return h


# ------------------------------ mega-kernel -----------------------------------
def _forward_kernel(
        # data
        hist_ref, traj_ref, curr_ref, patches_ref, pool_ref, eps_ref,
        add_ref, div_ref, invdiv_ref,
        # history LSTM
        hist_wih_ref, hist_whh_ref, hist_b_ref,
        # map encoder
        conv_w_ref, conv_b_ref, mapfc_w_ref, mapfc_b_ref,
        # conditioning MLP
        mlp_w0_ref, mlp_b0_ref, mlp_w1_ref, mlp_b1_ref, mlp_w2_ref, mlp_b2_ref,
        mlp_w3_ref, mlp_b3_ref, mlp_w4_ref, mlp_b4_ref,
        # VAE encoder LSTM + fused mu/logvar head
        enc_wih_ref, enc_whh_ref, enc_b_ref, mulv_w_ref, mulv_b_ref,
        # VAE decoder LSTM + output head
        dec_wih_ref, dec_whh_ref, dec_b_ref, out_w_ref, out_b_ref,
        # scalar
        beta_ref,
        # outputs
        states_ref, losses_ref):
    f32 = jnp.float32
    add6 = add_ref[...]          # (1, 6)
    div6 = div_ref[...]          # (1, 6)
    inv6 = invdiv_ref[...]       # (1, 6) = 1/div

    # ---------------- history encoder LSTM (final hidden only) ----------------
    hist_scaled = (hist_ref[...] + add6[:, 0:4]) * inv6[:, 0:4]        # (Th*B, 4)
    gx_h = jnp.dot(hist_scaled, hist_wih_ref[...],
                   preferred_element_type=f32) + hist_b_ref[...]       # (Th*B, 4H)
    hist_feat = _lstm_last(gx_h, hist_whh_ref[...], HIST_LEN, B, HIST_HIDDEN)

    # ---------------- map encoder: conv-matmul + ReLU + GAP + fc --------------
    conv = jnp.dot(patches_ref[...], conv_w_ref[...],
                   preferred_element_type=f32) + conv_b_ref[...]       # (B*H*W, 8)
    conv = jnp.maximum(conv, 0.0)
    pooled = jnp.dot(pool_ref[...], conv, preferred_element_type=f32)  # (B, 8) = GAP
    map_feat = jnp.dot(pooled, mapfc_w_ref[...],
                       preferred_element_type=f32) + mapfc_b_ref[...]  # (B, 32)

    # ---------------- conditioning MLP (4x LN+ReLU, 1x linear) ----------------
    # TODO(synk): base_models.MLP uses BatchNorm1d; LayerNorm stand-in.
    h = jnp.concatenate([hist_feat, map_feat], axis=-1)                # (B, 64)
    for w_ref, b_ref in ((mlp_w0_ref, mlp_b0_ref), (mlp_w1_ref, mlp_b1_ref),
                         (mlp_w2_ref, mlp_b2_ref), (mlp_w3_ref, mlp_b3_ref)):
        y = jnp.dot(h, w_ref[...], preferred_element_type=f32) + b_ref[...]
        mean = jnp.mean(y, axis=-1, keepdims=True)
        var = jnp.mean((y - mean) ** 2, axis=-1, keepdims=True)
        y = (y - mean) * lax.rsqrt(var + 1e-5)
        h = jnp.maximum(y, 0.0)
    context = jnp.dot(h, mlp_w4_ref[...],
                      preferred_element_type=f32) + mlp_b4_ref[...]    # (B, 32)

    # ---------------- scaled input (encoder sequence + VAE target) ------------
    scaled_in = (traj_ref[...] + add6) * inv6                          # (T*B, 6)

    # ---------------- VAE encoder LSTM + fused mu/logvar head -----------------
    gx_e = jnp.dot(scaled_in, enc_wih_ref[...],
                   preferred_element_type=f32) + enc_b_ref[...]        # (T*B, 4H)
    enc_h = _lstm_last(gx_e, enc_whh_ref[...], HORIZON, B, VAE_HIDDEN)
    mulv = jnp.dot(enc_h, mulv_w_ref[...],
                   preferred_element_type=f32) + mulv_b_ref[...]       # (B, 2L)
    mu = mulv[:, 0:LATENT]
    logvar = mulv[:, LATENT:2 * LATENT]
    z = mu + jnp.exp(0.5 * logvar) * eps_ref[...]                      # (B, L)

    # ---- fused decoder LSTM + out head + descale + rollout + recon loss ------
    dec_in = jnp.concatenate([z, context], axis=-1)                    # (B, L+C)
    gx_d = jnp.dot(dec_in, dec_wih_ref[...],
                   preferred_element_type=f32) + dec_b_ref[...]        # (B, 4H), const over t
    dec_whh = dec_whh_ref[...]
    out_w = out_w_ref[...]
    out_b = out_b_ref[...]

    add_st, inv_st = add6[:, 0:4], inv6[:, 0:4]
    add_act, div_act = add6[:, 4:6], div6[:, 4:6]

    H = VAE_HIDDEN
    h_d = jnp.zeros((B, H), f32)
    c_d = jnp.zeros((B, H), f32)
    state = curr_ref[...]                                              # (B, 4) [x,y,v,yaw]
    lane = lax.broadcasted_iota(jnp.int32, (B, 4), 1)
    sq_err = jnp.zeros((1, 1), f32)

    for t in range(HORIZON):
        # decoder LSTM step (time-constant input projection reused)
        gates = gx_d + jnp.dot(h_d, dec_whh, preferred_element_type=f32)
        i = jax.nn.sigmoid(gates[:, 0:H])
        f = jax.nn.sigmoid(gates[:, H:2 * H])
        g = jnp.tanh(gates[:, 2 * H:3 * H])
        o = jax.nn.sigmoid(gates[:, 3 * H:4 * H])
        c_d = f * c_d + i * g
        h_d = o * jnp.tanh(c_d)

        # output head + action descale (indices [4, 5])
        scaled_a = jnp.dot(h_d, out_w, preferred_element_type=f32) + out_b  # (B, 2)
        a = scaled_a * div_act - add_act

        # unicycle dynamics step
        v = state[:, 2:3]
        yaw = state[:, 3:4]
        acc = jnp.clip(a[:, 0:1], -ACCE_BOUND, ACCE_BOUND)
        yawvel = jnp.clip(a[:, 1:2], -YAWVEL_BOUND, YAWVEL_BOUND)
        deriv = jnp.where(
            lane == 0, v * jnp.cos(yaw),
            jnp.where(lane == 1, v * jnp.sin(yaw),
                      jnp.where(lane == 2, acc, yawvel)))
        state = state + DT * deriv
        states_ref[t] = state

        # recon loss on scaled state+action; scale(descale(scaled_a)) == scaled_a
        scaled_state = (state + add_st) * inv_st                       # (B, 4)
        tgt = scaled_in[t * B:(t + 1) * B, :]                          # (B, 6)
        d_st = scaled_state - tgt[:, 0:4]
        d_ac = scaled_a - tgt[:, 4:6]
        sq_err = sq_err + jnp.sum(d_st * d_st, keepdims=True) \
                        + jnp.sum(d_ac * d_ac, keepdims=True)

    # ---------------- VAE loss -------------------------------------------------
    recon = sq_err / float(HORIZON * B * 6)
    kl_terms = 1.0 + logvar - mu * mu - jnp.exp(logvar)
    kl = -0.5 * jnp.sum(kl_terms, keepdims=True) / float(B * LATENT)
    beta = beta_ref[0]
    loss = recon + beta * kl
    losses_ref[...] = jnp.concatenate([loss, recon, kl], axis=-1)      # (1, 3)


# ------------------------------ JAX glue --------------------------------------
def convert_state_to_state_and_action(traj_state, curr_speed, dt):
    """(B,T,3) [x,y,yaw] + curr_speed -> (B,T,6) [x,y,vel,yaw,acc,yawvel]."""
    # TODO(synk): finite-difference approximation of tbsim's helper.
    pos = traj_state[..., :2]
    yaw = traj_state[..., 2:3]
    Bb, T, _ = pos.shape
    prev_pos = jnp.concatenate([jnp.zeros((Bb, 1, 2), pos.dtype), pos[:, :-1]], axis=1)
    vel = jnp.linalg.norm(pos - prev_pos, axis=-1, keepdims=True) / dt
    vel = vel.at[:, 0, 0].set(curr_speed)
    acc = (jnp.concatenate([vel[:, 1:], vel[:, -1:]], axis=1) - vel) / dt
    prev_yaw = jnp.concatenate([jnp.zeros((Bb, 1, 1), yaw.dtype), yaw[:, :-1]], axis=1)
    yawvel = (yaw - prev_yaw) / dt
    return jnp.concatenate([pos, vel, yaw, acc, yawvel], axis=-1)


def vae_model_forward(params, batch, beta_arr, eps):
    add6 = params["add_coeffs"].reshape(1, 6)
    div6 = params["div_coeffs"].reshape(1, 6)
    inv6 = 1.0 / div6

    # ------------------ layout-only preprocessing (plain XLA) ------------------
    avail = batch["history_availabilities"]
    hist_pos = jnp.where(avail[..., None], batch["history_positions"], 0.0)
    hist_speed = jnp.where(avail, batch["history_speeds"], 0.0)
    hist_yaw = jnp.where(avail[..., None], batch["history_yaws"], 0.0)
    hist_state = jnp.concatenate(
        [hist_pos, hist_speed[..., None], hist_yaw], axis=-1)          # (B, Th, 4)
    hist_flat = jnp.transpose(hist_state, (1, 0, 2)).reshape(HIST_LEN * B, OBS_DIM)

    curr_states = jnp.concatenate(
        [batch["history_positions"][:, -1, :],
         batch["curr_speed"][:, None],
         batch["history_yaws"][:, -1, :]], axis=-1)                    # (B, 4)

    # im2col patches for the 3x3 conv (map encoder stand-in)
    img = jnp.transpose(batch["image"], (0, 2, 3, 1))                  # NCHW -> NHWC
    Bb, Hh, Ww, Cc = img.shape
    pad = jnp.pad(img, ((0, 0), (1, 1), (1, 1), (0, 0)))
    patches = jnp.concatenate(
        [pad[:, i:i + Hh, j:j + Ww, :] for i in range(3) for j in range(3)], axis=-1)
    patches2d = patches.reshape(Bb * Hh * Ww, 9 * Cc)
    # global-average-pool expressed as a matmul so the conv stays in vregs
    hw = Hh * Ww
    rows = jnp.arange(Bb)[:, None]
    cols = jnp.arange(Bb * hw)[None, :]
    pool_mat = jnp.where((cols // hw) == rows, 1.0 / hw, 0.0).astype(jnp.float32)

    traj_state = jnp.concatenate(
        [batch["target_positions"][:, :HORIZON, :],
         batch["target_yaws"][:, :HORIZON, :]], axis=-1)
    unscaled_input = convert_state_to_state_and_action(traj_state, batch["curr_speed"], DT)
    traj_flat = jnp.transpose(unscaled_input, (1, 0, 2)).reshape(HORIZON * B, 6)

    inputs = [
        hist_flat, traj_flat, curr_states, patches2d, pool_mat, eps,
        add6, div6, inv6,
        params["hist_wih"], params["hist_whh"], params["hist_b"],
        params["conv_w"], params["conv_b"], params["map_fc_w"], params["map_fc_b"],
        params["mlp_w0"], params["mlp_b0"], params["mlp_w1"], params["mlp_b1"],
        params["mlp_w2"], params["mlp_b2"], params["mlp_w3"], params["mlp_b3"],
        params["mlp_w4"], params["mlp_b4"],
        params["enc_wih"], params["enc_whh"], params["enc_b"],
        params["mulv_w"], params["mulv_b"],
        params["dec_wih"], params["dec_whh"], params["dec_b"],
        params["out_w"], params["out_b"],
        beta_arr,
    ]

    states_tm, losses_vec = pl.pallas_call(
        _forward_kernel,
        out_shape=(
            jax.ShapeDtypeStruct((HORIZON, B, 4), jnp.float32),
            jax.ShapeDtypeStruct((1, 3), jnp.float32),
        ),
        in_specs=[_VMEM] * (len(inputs) - 1) + [_SMEM],
        out_specs=(_VMEM, _VMEM),
    )(*inputs)

    states = jnp.transpose(states_tm, (1, 0, 2))                       # (B, T, 4)
    loss = losses_vec[0, 0]
    recon = losses_vec[0, 1]
    kl = losses_vec[0, 2]
    losses = {"loss": loss, "recon_loss": recon, "kl_loss": kl}
    out = {
        "loss": loss,
        "input": batch["target_positions"],
        # descale(scale(x_out_all))[..., :2] is mathematically the rollout positions.
        "output": states[..., :2],
        "raster_from_agent": batch["raster_from_agent"],
        "image": batch["image"],
    }
    return out, losses


# ------------------------------ parameters ------------------------------------
def init_params(key):
    keys = iter(jax.random.split(key, 64))

    def w(shape):
        fan_in = shape[0]
        return jax.random.normal(next(keys), shape, jnp.float32) / jnp.sqrt(float(fan_in))

    def b(n):
        return jnp.zeros((1, n), jnp.float32)

    cond_in = HIST_HIDDEN + MAP_FEAT                                   # 64
    params = {
        # trajectory normalization coeffs (nusc_norm_info stand-in)
        "add_coeffs": jnp.array([0.1, 0.2, 0.0, 0.0, 0.05, 0.0], jnp.float32),
        "div_coeffs": jnp.array([5.0, 2.0, 4.0, 1.0, 2.0, 0.5], jnp.float32),
        # history LSTM
        "hist_wih": w((OBS_DIM, 4 * HIST_HIDDEN)),
        "hist_whh": w((HIST_HIDDEN, 4 * HIST_HIDDEN)),
        "hist_b": b(4 * HIST_HIDDEN),
        # map encoder (stand-in CNN)
        "conv_w": w((9 * IMG_C, 8)),
        "conv_b": b(8),
        "map_fc_w": w((8, MAP_FEAT)),
        "map_fc_b": b(MAP_FEAT),
        # VAE encoder LSTM + fused mu/logvar head
        "enc_wih": w((OBS_DIM + ACT_DIM, 4 * VAE_HIDDEN)),
        "enc_whh": w((VAE_HIDDEN, 4 * VAE_HIDDEN)),
        "enc_b": b(4 * VAE_HIDDEN),
        "mulv_w": w((VAE_HIDDEN, 2 * LATENT)),
        "mulv_b": b(2 * LATENT),
        # VAE decoder LSTM + output head
        "dec_wih": w((LATENT + COND_FEAT, 4 * VAE_HIDDEN)),
        "dec_whh": w((VAE_HIDDEN, 4 * VAE_HIDDEN)),
        "dec_b": b(4 * VAE_HIDDEN),
        "out_w": w((VAE_HIDDEN, ACT_DIM)),
        "out_b": b(ACT_DIM),
    }
    # process_cond_mlp: 64 -> 64 -> 64 -> 32 -> 32 -> 32 (last layer linear)
    dims = [cond_in, cond_in, cond_in, COND_FEAT, COND_FEAT, COND_FEAT]
    for i in range(5):
        params[f"mlp_w{i}"] = w((dims[i], dims[i + 1]))
        params[f"mlp_b{i}"] = b(dims[i + 1])
    return params


# --------------------------------- main ---------------------------------------
if __name__ == "__main__":
    key = jax.random.PRNGKey(0)
    k = iter(jax.random.split(key, 16))

    batch = {
        "target_positions": jax.random.normal(next(k), (B, HORIZON, 2), jnp.float32),
        "target_yaws": 0.1 * jax.random.normal(next(k), (B, HORIZON, 1), jnp.float32),
        "curr_speed": jnp.abs(jax.random.normal(next(k), (B,), jnp.float32)) + 1.0,
        "history_positions": jax.random.normal(next(k), (B, HIST_LEN, 2), jnp.float32),
        "history_speeds": jnp.abs(jax.random.normal(next(k), (B, HIST_LEN), jnp.float32)),
        "history_yaws": 0.1 * jax.random.normal(next(k), (B, HIST_LEN, 1), jnp.float32),
        "history_availabilities": jnp.ones((B, HIST_LEN), bool).at[0, 0].set(False),
        "image": jax.random.normal(next(k), (B, IMG_C, IMG_H, IMG_W), jnp.float32),
        "raster_from_agent": jnp.broadcast_to(jnp.eye(3, dtype=jnp.float32), (B, 3, 3)),
    }
    eps = jax.random.normal(next(k), (B, LATENT), jnp.float32)
    beta_arr = jnp.asarray([0.5], jnp.float32)

    params = init_params(jax.random.PRNGKey(42))

    fwd = jax.jit(vae_model_forward)
    out, losses = fwd(params, batch, beta_arr, eps)
    jax.block_until_ready(losses["loss"])
    jax.block_until_ready(out["output"])
    assert out["output"].shape == (B, HORIZON, 2)
    assert jnp.isfinite(losses["loss"])
    assert jnp.isfinite(losses["recon_loss"])
    assert jnp.isfinite(losses["kl_loss"])
    print("KERNEL_OK")
</pallas_src>

<mosaic_0001>
module attributes {stable_mosaic.version = 11 : i64} {
  func.func @_forward_kernel(%arg0: memref<16x4xf32, #tpu.memory_space<vmem>>, %arg1: memref<16x6xf32, #tpu.memory_space<vmem>>, %arg2: memref<2x4xf32, #tpu.memory_space<vmem>>, %arg3: memref<512x27xf32, #tpu.memory_space<vmem>>, %arg4: memref<2x512xf32, #tpu.memory_space<vmem>>, %arg5: memref<2x8xf32, #tpu.memory_space<vmem>>, %arg6: memref<1x6xf32, #tpu.memory_space<vmem>>, %arg7: memref<1x6xf32, #tpu.memory_space<vmem>>, %arg8: memref<1x6xf32, #tpu.memory_space<vmem>>, %arg9: memref<4x128xf32, #tpu.memory_space<vmem>>, %arg10: memref<32x128xf32, #tpu.memory_space<vmem>>, %arg11: memref<1x128xf32, #tpu.memory_space<vmem>>, %arg12: memref<27x8xf32, #tpu.memory_space<vmem>>, %arg13: memref<1x8xf32, #tpu.memory_space<vmem>>, %arg14: memref<8x32xf32, #tpu.memory_space<vmem>>, %arg15: memref<1x32xf32, #tpu.memory_space<vmem>>, %arg16: memref<64x64xf32, #tpu.memory_space<vmem>>, %arg17: memref<1x64xf32, #tpu.memory_space<vmem>>, %arg18: memref<64x64xf32, #tpu.memory_space<vmem>>, %arg19: memref<1x64xf32, #tpu.memory_space<vmem>>, %arg20: memref<64x32xf32, #tpu.memory_space<vmem>>, %arg21: memref<1x32xf32, #tpu.memory_space<vmem>>, %arg22: memref<32x32xf32, #tpu.memory_space<vmem>>, %arg23: memref<1x32xf32, #tpu.memory_space<vmem>>, %arg24: memref<32x32xf32, #tpu.memory_space<vmem>>, %arg25: memref<1x32xf32, #tpu.memory_space<vmem>>, %arg26: memref<6x128xf32, #tpu.memory_space<vmem>>, %arg27: memref<32x128xf32, #tpu.memory_space<vmem>>, %arg28: memref<1x128xf32, #tpu.memory_space<vmem>>, %arg29: memref<32x16xf32, #tpu.memory_space<vmem>>, %arg30: memref<1x16xf32, #tpu.memory_space<vmem>>, %arg31: memref<40x128xf32, #tpu.memory_space<vmem>>, %arg32: memref<32x128xf32, #tpu.memory_space<vmem>>, %arg33: memref<1x128xf32, #tpu.memory_space<vmem>>, %arg34: memref<32x2xf32, #tpu.memory_space<vmem>>, %arg35: memref<1x2xf32, #tpu.memory_space<vmem>>, %arg36: memref<1xf32, #tpu.memory_space<smem>>, %arg37: memref<8x2x4xf32, #tpu.memory_space<vmem>>, %arg38: memref<1x3xf32, #tpu.memory_space<vmem>>) attributes {dimension_semantics = [], scalar_prefetch = 0 : i64, scratch_operands = 0 : i64, tpu.core_type = #tpu.core_type<tc>} {
    %c0 = arith.constant 0 : index
    %c0_0 = arith.constant 0 : index
    %0 = vector.load %arg6[%c0, %c0_0] : memref<1x6xf32, #tpu.memory_space<vmem>>, vector<1x6xf32>
    %c0_1 = arith.constant 0 : index
    %c0_2 = arith.constant 0 : index
    %1 = vector.load %arg7[%c0_1, %c0_2] : memref<1x6xf32, #tpu.memory_space<vmem>>, vector<1x6xf32>
    %c0_3 = arith.constant 0 : index
    %c0_4 = arith.constant 0 : index
    %2 = vector.load %arg8[%c0_3, %c0_4] : memref<1x6xf32, #tpu.memory_space<vmem>>, vector<1x6xf32>
    %c0_5 = arith.constant 0 : index
    %c0_6 = arith.constant 0 : index
    %3 = vector.load %arg0[%c0_5, %c0_6] : memref<16x4xf32, #tpu.memory_space<vmem>>, vector<16x4xf32>
    %4 = vector.extract_strided_slice %0 {offsets = [0, 0], sizes = [1, 4], strides = [1, 1]} : vector<1x6xf32> to vector<1x4xf32>
    %5 = vector.broadcast %4 : vector<1x4xf32> to vector<16x4xf32>
    %6 = arith.addf %3, %5 : vector<16x4xf32>
    %7 = vector.extract_strided_slice %2 {offsets = [0, 0], sizes = [1, 4], strides = [1, 1]} : vector<1x6xf32> to vector<1x4xf32>
    %8 = vector.broadcast %7 : vector<1x4xf32> to vector<16x4xf32>
    %9 = arith.mulf %6, %8 : vector<16x4xf32>
    %c0_7 = arith.constant 0 : index
    %c0_8 = arith.constant 0 : index
    %10 = vector.load %arg9[%c0_7, %c0_8] : memref<4x128xf32, #tpu.memory_space<vmem>>, vector<4x128xf32>
    %cst = arith.constant dense<0.000000e+00> : vector<16x128xf32>
    %11 = tpu.matmul %9, %10, %cst {dimension_numbers = #tpu.dot_dimension_numbers<[1], [0], [0], [1], [0, 0, 1, 1], [], []>} : vector<16x4xf32>, vector<4x128xf32>, vector<16x128xf32> -> vector<16x128xf32>
    %c0_9 = arith.constant 0 : index
    %c0_10 = arith.constant 0 : index
    %12 = vector.load %arg11[%c0_9, %c0_10] : memref<1x128xf32, #tpu.memory_space<vmem>>, vector<1x128xf32>
    %13 = vector.broadcast %12 : vector<1x128xf32> to vector<16x128xf32>
    %14 = arith.addf %11, %13 : vector<16x128xf32>
    %c0_11 = arith.constant 0 : index
    %c0_12 = arith.constant 0 : index
    %15 = vector.load %arg10[%c0_11, %c0_12] : memref<32x128xf32, #tpu.memory_space<vmem>>, vector<32x128xf32>
    %cst_13 = arith.constant 0.000000e+00 : f32
    %16 = vector.broadcast %cst_13 : f32 to vector<2x32xf32>
    %cst_14 = arith.constant 0.000000e+00 : f32
    %17 = vector.broadcast %cst_14 : f32 to vector<2x32xf32>
    %18 = vector.extract_strided_slice %14 {offsets = [0, 0], sizes = [2, 128], strides = [1, 1]} : vector<16x128xf32> to vector<2x128xf32>
    %cst_15 = arith.constant dense<0.000000e+00> : vector<2x128xf32>
    %19 = tpu.matmul %16, %15, %cst_15 {dimension_numbers = #tpu.dot_dimension_numbers<[1], [0], [0], [1], [0, 0, 1, 1], [], []>} : vector<2x32xf32>, vector<32x128xf32>, vector<2x128xf32> -> vector<2x128xf32>
    %20 = arith.addf %18, %19 : vector<2x128xf32>
    %21 = vector.extract_strided_slice %20 {offsets = [0, 0], sizes = [2, 32], strides = [1, 1]} : vector<2x128xf32> to vector<2x32xf32>
    %22 = arith.negf %21 : vector<2x32xf32>
    %23 = math.exp %22 : vector<2x32xf32>
    %cst_16 = arith.constant 1.000000e+00 : f32
    %24 = vector.broadcast %cst_16 : f32 to vector<2x32xf32>
    %25 = arith.addf %24, %23 : vector<2x32xf32>
    %26 = arith.divf %24, %25 : vector<2x32xf32>
    %27 = vector.extract_strided_slice %20 {offsets = [0, 32], sizes = [2, 32], strides = [1, 1]} : vector<2x128xf32> to vector<2x32xf32>
    %28 = arith.negf %27 : vector<2x32xf32>
    %29 = math.exp %28 : vector<2x32xf32>
    %cst_17 = arith.constant 1.000000e+00 : f32
    %30 = vector.broadcast %cst_17 : f32 to vector<2x32xf32>
    %31 = arith.addf %30, %29 : vector<2x32xf32>
    %32 = arith.divf %30, %31 : vector<2x32xf32>
    %33 = vector.extract_strided_slice %20 {offsets = [0, 64], sizes = [2, 32], strides = [1, 1]} : vector<2x128xf32> to vector<2x32xf32>
    %34 = math.tanh %33 : vector<2x32xf32>
    %35 = vector.extract_strided_slice %20 {offsets = [0, 96], sizes = [2, 32], strides = [1, 1]} : vector<2x128xf32> to vector<2x32xf32>
    %36 = arith.negf %35 : vector<2x32xf32>
    %37 = math.exp %36 : vector<2x32xf32>
    %cst_18 = arith.constant 1.000000e+00 : f32
    %38 = vector.broadcast %cst_18 : f32 to vector<2x32xf32>
    %39 = arith.addf %38, %37 : vector<2x32xf32>
    %40 = arith.divf %38, %39 : vector<2x32xf32>
    %41 = arith.mulf %32, %17 : vector<2x32xf32>
    %42 = arith.mulf %26, %34 : vector<2x32xf32>
    %43 = arith.addf %41, %42 : vector<2x32xf32>
    %44 = math.tanh %43 : vector<2x32xf32>
    %45 = arith.mulf %40, %44 : vector<2x32xf32>
    %46 = vector.extract_strided_slice %14 {offsets = [2, 0], sizes = [2, 128], strides = [1, 1]} : vector<16x128xf32> to vector<2x128xf32>
    %cst_19 = arith.constant dense<0.000000e+00> : vector<2x128xf32>
    %47 = tpu.matmul %45, %15, %cst_19 {dimension_numbers = #tpu.dot_dimension_numbers<[1], [0], [0], [1], [0, 0, 1, 1], [], []>} : vector<2x32xf32>, vector<32x128xf32>, vector<2x128xf32> -> vector<2x128xf32>
    %48 = arith.addf %46, %47 : vector<2x128xf32>
    %49 = vector.extract_strided_slice %48 {offsets = [0, 0], sizes = [2, 32], strides = [1, 1]} : vector<2x128xf32> to vector<2x32xf32>
    %50 = arith.negf %49 : vector<2x32xf32>
    %51 = math.exp %50 : vector<2x32xf32>
    %cst_20 = arith.constant 1.000000e+00 : f32
    %52 = vector.broadcast %cst_20 : f32 to vector<2x32xf32>
    %53 = arith.addf %52, %51 : vector<2x32xf32>
    %54 = arith.divf %52, %53 : vector<2x32xf32>
    %55 = vector.extract_strided_slice %48 {offsets = [0, 32], sizes = [2, 32], strides = [1, 1]} : vector<2x128xf32> to vector<2x32xf32>
    %56 = arith.negf %55 : vector<2x32xf32>
    %57 = math.exp %56 : vector<2x32xf32>
    %cst_21 = arith.constant 1.000000e+00 : f32
    %58 = vector.broadcast %cst_21 : f32 to vector<2x32xf32>
    %59 = arith.addf %58, %57 : vector<2x32xf32>
    %60 = arith.divf %58, %59 : vector<2x32xf32>
    %61 = vector.extract_strided_slice %48 {offsets = [0, 64], sizes = [2, 32], strides = [1, 1]} : vector<2x128xf32> to vector<2x32xf32>
    %62 = math.tanh %61 : vector<2x32xf32>
    %63 = vector.extract_strided_slice %48 {offsets = [0, 96], sizes = [2, 32], strides = [1, 1]} : vector<2x128xf32> to vector<2x32xf32>
    %64 = arith.negf %63 : vector<2x32xf32>
    %65 = math.exp %64 : vector<2x32xf32>
    %cst_22 = arith.constant 1.000000e+00 : f32
    %66 = vector.broadcast %cst_22 : f32 to vector<2x32xf32>
    %67 = arith.addf %66, %65 : vector<2x32xf32>
    %68 = arith.divf %66, %67 : vector<2x32xf32>
    %69 = arith.mulf %60, %43 : vector<2x32xf32>
    %70 = arith.mulf %54, %62 : vector<2x32xf32>
    %71 = arith.addf %69, %70 : vector<2x32xf32>
    %72 = math.tanh %71 : vector<2x32xf32>
    %73 = arith.mulf %68, %72 : vector<2x32xf32>
    %74 = vector.extract_strided_slice %14 {offsets = [4, 0], sizes = [2, 128], strides = [1, 1]} : vector<16x128xf32> to vector<2x128xf32>
    %cst_23 = arith.constant dense<0.000000e+00> : vector<2x128xf32>
    %75 = tpu.matmul %73, %15, %cst_23 {dimension_numbers = #tpu.dot_dimension_numbers<[1], [0], [0], [1], [0, 0, 1, 1], [], []>} : vector<2x32xf32>, vector<32x128xf32>, vector<2x128xf32> -> vector<2x128xf32>
    %76 = arith.addf %74, %75 : vector<2x128xf32>
    %77 = vector.extract_strided_slice %76 {offsets = [0, 0], sizes = [2, 32], strides = [1, 1]} : vector<2x128xf32> to vector<2x32xf32>
    %78 = arith.negf %77 : vector<2x32xf32>
    %79 = math.exp %78 : vector<2x32xf32>
    %cst_24 = arith.constant 1.000000e+00 : f32
    %80 = vector.broadcast %cst_24 : f32 to vector<2x32xf32>
    %81 = arith.addf %80, %79 : vector<2x32xf32>
    %82 = arith.divf %80, %81 : vector<2x32xf32>
    %83 = vector.extract_strided_slice %76 {offsets = [0, 32], sizes = [2, 32], strides = [1, 1]} : vector<2x128xf32> to vector<2x32xf32>
    %84 = arith.negf %83 : vector<2x32xf32>
    %85 = math.exp %84 : vector<2x32xf32>
    %cst_25 = arith.constant 1.000000e+00 : f32
    %86 = vector.broadcast %cst_25 : f32 to vector<2x32xf32>
    %87 = arith.addf %86, %85 : vector<2x32xf32>
    %88 = arith.divf %86, %87 : vector<2x32xf32>
    %89 = vector.extract_strided_slice %76 {offsets = [0, 64], sizes = [2, 32], strides = [1, 1]} : vector<2x128xf32> to vector<2x32xf32>
    %90 = math.tanh %89 : vector<2x32xf32>
    %91 = vector.extract_strided_slice %76 {offsets = [0, 96], sizes = [2, 32], strides = [1, 1]} : vector<2x128xf32> to vector<2x32xf32>
    %92 = arith.negf %91 : vector<2x32xf32>
    %93 = math.exp %92 : vector<2x32xf32>
    %cst_26 = arith.constant 1.000000e+00 : f32
    %94 = vector.broadcast %cst_26 : f32 to vector<2x32xf32>
    %95 = arith.addf %94, %93 : vector<2x32xf32>
    %96 = arith.divf %94, %95 : vector<2x32xf32>
    %97 = arith.mulf %88, %71 : vector<2x32xf32>
    %98 = arith.mulf %82, %90 : vector<2x32xf32>
    %99 = arith.addf %97, %98 : vector<2x32xf32>
    %100 = math.tanh %99 : vector<2x32xf32>
    %101 = arith.mulf %96, %100 : vector<2x32xf32>
    %102 = vector.extract_strided_slice %14 {offsets = [6, 0], sizes = [2, 128], strides = [1, 1]} : vector<16x128xf32> to vector<2x128xf32>
    %cst_27 = arith.constant dense<0.000000e+00> : vector<2x128xf32>
    %103 = tpu.matmul %101, %15, %cst_27 {dimension_numbers = #tpu.dot_dimension_numbers<[1], [0], [0], [1], [0, 0, 1, 1], [], []>} : vector<2x32xf32>, vector<32x128xf32>, vector<2x128xf32> -> vector<2x128xf32>
    %104 = arith.addf %102, %103 : vector<2x128xf32>
    %105 = vector.extract_strided_slice %104 {offsets = [0, 0], sizes = [2, 32], strides = [1, 1]} : vector<2x128xf32> to vector<2x32xf32>
    %106 = arith.negf %105 : vector<2x32xf32>
    %107 = math.exp %106 : vector<2x32xf32>
    %cst_28 = arith.constant 1.000000e+00 : f32
    %108 = vector.broadcast %cst_28 : f32 to vector<2x32xf32>
    %109 = arith.addf %108, %107 : vector<2x32xf32>
    %110 = arith.divf %108, %109 : vector<2x32xf32>
    %111 = vector.extract_strided_slice %104 {offsets = [0, 32], sizes = [2, 32], strides = [1, 1]} : vector<2x128xf32> to vector<2x32xf32>
    %112 = arith.negf %111 : vector<2x32xf32>
    %113 = math.exp %112 : vector<2x32xf32>
    %cst_29 = arith.constant 1.000000e+00 : f32
    %114 = vector.broadcast %cst_29 : f32 to vector<2x32xf32>
    %115 = arith.addf %114, %113 : vector<2x32xf32>
    %116 = arith.divf %114, %115 : vector<2x32xf32>
    %117 = vector.extract_strided_slice %104 {offsets = [0, 64], sizes = [2, 32], strides = [1, 1]} : vector<2x128xf32> to vector<2x32xf32>
    %118 = math.tanh %117 : vector<2x32xf32>
    %119 = vector.extract_strided_slice %104 {offsets = [0, 96], sizes = [2, 32], strides = [1, 1]} : vector<2x128xf32> to vector<2x32xf32>
    %120 = arith.negf %119 : vector<2x32xf32>
    %121 = math.exp %120 : vector<2x32xf32>
    %cst_30 = arith.constant 1.000000e+00 : f32
    %122 = vector.broadcast %cst_30 : f32 to vector<2x32xf32>
    %123 = arith.addf %122, %121 : vector<2x32xf32>
    %124 = arith.divf %122, %123 : vector<2x32xf32>
    %125 = arith.mulf %116, %99 : vector<2x32xf32>
    %126 = arith.mulf %110, %118 : vector<2x32xf32>
    %127 = arith.addf %125, %126 : vector<2x32xf32>
    %128 = math.tanh %127 : vector<2x32xf32>
    %129 = arith.mulf %124, %128 : vector<2x32xf32>
    %130 = vector.extract_strided_slice %14 {offsets = [8, 0], sizes = [2, 128], strides = [1, 1]} : vector<16x128xf32> to vector<2x128xf32>
    %cst_31 = arith.constant dense<0.000000e+00> : vector<2x128xf32>
    %131 = tpu.matmul %129, %15, %cst_31 {dimension_numbers = #tpu.dot_dimension_numbers<[1], [0], [0], [1], [0, 0, 1, 1], [], []>} : vector<2x32xf32>, vector<32x128xf32>, vector<2x128xf32> -> vector<2x128xf32>
    %132 = arith.addf %130, %131 : vector<2x128xf32>
    %133 = vector.extract_strided_slice %132 {offsets = [0, 0], sizes = [2, 32], strides = [1, 1]} : vector<2x128xf32> to vector<2x32xf32>
    %134 = arith.negf %133 : vector<2x32xf32>
    %135 = math.exp %134 : vector<2x32xf32>
    %cst_32 = arith.constant 1.000000e+00 : f32
    %136 = vector.broadcast %cst_32 : f32 to vector<2x32xf32>
    %137 = arith.addf %136, %135 : vector<2x32xf32>
    %138 = arith.divf %136, %137 : vector<2x32xf32>
    %139 = vector.extract_strided_slice %132 {offsets = [0, 32], sizes = [2, 32], strides = [1, 1]} : vector<2x128xf32> to vector<2x32xf32>
    %140 = arith.negf %139 : vector<2x32xf32>
    %141 = math.exp %140 : vector<2x32xf32>
    %cst_33 = arith.constant 1.000000e+00 : f32
    %142 = vector.broadcast %cst_33 : f32 to vector<2x32xf32>
    %143 = arith.addf %142, %141 : vector<2x32xf32>
    %144 = arith.divf %142, %143 : vector<2x32xf32>
    %145 = vector.extract_strided_slice %132 {offsets = [0, 64], sizes = [2, 32], strides = [1, 1]} : vector<2x128xf32> to vector<2x32xf32>
    %146 = math.tanh %145 : vector<2x32xf32>
    %147 = vector.extract_strided_slice %132 {offsets = [0, 96], sizes = [2, 32], strides = [1, 1]} : vector<2x128xf32> to vector<2x32xf32>
    %148 = arith.negf %147 : vector<2x32xf32>
    %149 = math.exp %148 : vector<2x32xf32>
    %cst_34 = arith.constant 1.000000e+00 : f32
    %150 = vector.broadcast %cst_34 : f32 to vector<2x32xf32>
    %151 = arith.addf %150, %149 : vector<2x32xf32>
    %152 = arith.divf %150, %151 : vector<2x32xf32>
    %153 = arith.mulf %144, %127 : vector<2x32xf32>
    %154 = arith.mulf %138, %146 : vector<2x32xf32>
    %155 = arith.addf %153, %154 : vector<2x32xf32>
    %156 = math.tanh %155 : vector<2x32xf32>
    %157 = arith.mulf %152, %156 : vector<2x32xf32>
    %158 = vector.extract_strided_slice %14 {offsets = [10, 0], sizes = [2, 128], strides = [1, 1]} : vector<16x128xf32> to vector<2x128xf32>
    %cst_35 = arith.constant dense<0.000000e+00> : vector<2x128xf32>
    %159 = tpu.matmul %157, %15, %cst_35 {dimension_numbers = #tpu.dot_dimension_numbers<[1], [0], [0], [1], [0, 0, 1, 1], [], []>} : vector<2x32xf32>, vector<32x128xf32>, vector<2x128xf32> -> vector<2x128xf32>
    %160 = arith.addf %158, %159 : vector<2x128xf32>
    %161 = vector.extract_strided_slice %160 {offsets = [0, 0], sizes = [2, 32], strides = [1, 1]} : vector<2x128xf32> to vector<2x32xf32>
    %162 = arith.negf %161 : vector<2x32xf32>
    %163 = math.exp %162 : vector<2x32xf32>
    %cst_36 = arith.constant 1.000000e+00 : f32
    %164 = vector.broadcast %cst_36 : f32 to vector<2x32xf32>
    %165 = arith.addf %164, %163 : vector<2x32xf32>
    %166 = arith.divf %164, %165 : vector<2x32xf32>
    %167 = vector.extract_strided_slice %160 {offsets = [0, 32], sizes = [2, 32], strides = [1, 1]} : vector<2x128xf32> to vector<2x32xf32>
    %168 = arith.negf %167 : vector<2x32xf32>
    %169 = math.exp %168 : vector<2x32xf32>
    %cst_37 = arith.constant 1.000000e+00 : f32
    %170 = vector.broadcast %cst_37 : f32 to vector<2x32xf32>
    %171 = arith.addf %170, %169 : vector<2x32xf32>
    %172 = arith.divf %170, %171 : vector<2x32xf32>
    %173 = vector.extract_strided_slice %160 {offsets = [0, 64], sizes = [2, 32], strides = [1, 1]} : vector<2x128xf32> to vector<2x32xf32>
    %174 = math.tanh %173 : vector<2x32xf32>
    %175 = vector.extract_strided_slice %160 {offsets = [0, 96], sizes = [2, 32], strides = [1, 1]} : vector<2x128xf32> to vector<2x32xf32>
    %176 = arith.negf %175 : vector<2x32xf32>
    %177 = math.exp %176 : vector<2x32xf32>
    %cst_38 = arith.constant 1.000000e+00 : f32
    %178 = vector.broadcast %cst_38 : f32 to vector<2x32xf32>
    %179 = arith.addf %178, %177 : vector<2x32xf32>
    %180 = arith.divf %178, %179 : vector<2x32xf32>
    %181 = arith.mulf %172, %155 : vector<2x32xf32>
    %182 = arith.mulf %166, %174 : vector<2x32xf32>
    %183 = arith.addf %181, %182 : vector<2x32xf32>
    %184 = math.tanh %183 : vector<2x32xf32>
    %185 = arith.mulf %180, %184 : vector<2x32xf32>
    %186 = vector.extract_strided_slice %14 {offsets = [12, 0], sizes = [2, 128], strides = [1, 1]} : vector<16x128xf32> to vector<2x128xf32>
    %cst_39 = arith.constant dense<0.000000e+00> : vector<2x128xf32>
    %187 = tpu.matmul %185, %15, %cst_39 {dimension_numbers = #tpu.dot_dimension_numbers<[1], [0], [0], [1], [0, 0, 1, 1], [], []>} : vector<2x32xf32>, vector<32x128xf32>, vector<2x128xf32> -> vector<2x128xf32>
    %188 = arith.addf %186, %187 : vector<2x128xf32>
    %189 = vector.extract_strided_slice %188 {offsets = [0, 0], sizes = [2, 32], strides = [1, 1]} : vector<2x128xf32> to vector<2x32xf32>
    %190 = arith.negf %189 : vector<2x32xf32>
    %191 = math.exp %190 : vector<2x32xf32>
    %cst_40 = arith.constant 1.000000e+00 : f32
    %192 = vector.broadcast %cst_40 : f32 to vector<2x32xf32>
    %193 = arith.addf %192, %191 : vector<2x32xf32>
    %194 = arith.divf %192, %193 : vector<2x32xf32>
    %195 = vector.extract_strided_slice %188 {offsets = [0, 32], sizes = [2, 32], strides = [1, 1]} : vector<2x128xf32> to vector<2x32xf32>
    %196 = arith.negf %195 : vector<2x32xf32>
    %197 = math.exp %196 : vector<2x32xf32>
    %cst_41 = arith.constant 1.000000e+00 : f32
    %198 = vector.broadcast %cst_41 : f32 to vector<2x32xf32>
    %199 = arith.addf %198, %197 : vector<2x32xf32>
    %200 = arith.divf %198, %199 : vector<2x32xf32>
    %201 = vector.extract_strided_slice %188 {offsets = [0, 64], sizes = [2, 32], strides = [1, 1]} : vector<2x128xf32> to vector<2x32xf32>
    %202 = math.tanh %201 : vector<2x32xf32>
    %203 = vector.extract_strided_slice %188 {offsets = [0, 96], sizes = [2, 32], strides = [1, 1]} : vector<2x128xf32> to vector<2x32xf32>
    %204 = arith.negf %203 : vector<2x32xf32>
    %205 = math.exp %204 : vector<2x32xf32>
    %cst_42 = arith.constant 1.000000e+00 : f32
    %206 = vector.broadcast %cst_42 : f32 to vector<2x32xf32>
    %207 = arith.addf %206, %205 : vector<2x32xf32>
    %208 = arith.divf %206, %207 : vector<2x32xf32>
    %209 = arith.mulf %200, %183 : vector<2x32xf32>
    %210 = arith.mulf %194, %202 : vector<2x32xf32>
    %211 = arith.addf %209, %210 : vector<2x32xf32>
    %212 = math.tanh %211 : vector<2x32xf32>
    %213 = arith.mulf %208, %212 : vector<2x32xf32>
    %214 = vector.extract_strided_slice %14 {offsets = [14, 0], sizes = [2, 128], strides = [1, 1]} : vector<16x128xf32> to vector<2x128xf32>
    %cst_43 = arith.constant dense<0.000000e+00> : vector<2x128xf32>
    %215 = tpu.matmul %213, %15, %cst_43 {dimension_numbers = #tpu.dot_dimension_numbers<[1], [0], [0], [1], [0, 0, 1, 1], [], []>} : vector<2x32xf32>, vector<32x128xf32>, vector<2x128xf32> -> vector<2x128xf32>
    %216 = arith.addf %214, %215 : vector<2x128xf32>
    %217 = vector.extract_strided_slice %216 {offsets = [0, 0], sizes = [2, 32], strides = [1, 1]} : vector<2x128xf32> to vector<2x32xf32>
    %218 = arith.negf %217 : vector<2x32xf32>
    %219 = math.exp %218 : vector<2x32xf32>
    %cst_44 = arith.constant 1.000000e+00 : f32
    %220 = vector.broadcast %cst_44 : f32 to vector<2x32xf32>
    %221 = arith.addf %220, %219 : vector<2x32xf32>
    %222 = arith.divf %220, %221 : vector<2x32xf32>
    %223 = vector.extract_strided_slice %216 {offsets = [0, 32], sizes = [2, 32], strides = [1, 1]} : vector<2x128xf32> to vector<2x32xf32>
    %224 = arith.negf %223 : vector<2x32xf32>
    %225 = math.exp %224 : vector<2x32xf32>
    %cst_45 = arith.constant 1.000000e+00 : f32
    %226 = vector.broadcast %cst_45 : f32 to vector<2x32xf32>
    %227 = arith.addf %226, %225 : vector<2x32xf32>
    %228 = arith.divf %226, %227 : vector<2x32xf32>
    %229 = vector.extract_strided_slice %216 {offsets = [0, 64], sizes = [2, 32], strides = [1, 1]} : vector<2x128xf32> to vector<2x32xf32>
    %230 = math.tanh %229 : vector<2x32xf32>
    %231 = vector.extract_strided_slice %216 {offsets = [0, 96], sizes = [2, 32], strides = [1, 1]} : vector<2x128xf32> to vector<2x32xf32>
    %232 = arith.negf %231 : vector<2x32xf32>
    %233 = math.exp %232 : vector<2x32xf32>
    %cst_46 = arith.constant 1.000000e+00 : f32
    %234 = vector.broadcast %cst_46 : f32 to vector<2x32xf32>
    %235 = arith.addf %234, %233 : vector<2x32xf32>
    %236 = arith.divf %234, %235 : vector<2x32xf32>
    %237 = arith.mulf %228, %211 : vector<2x32xf32>
    %238 = arith.mulf %222, %230 : vector<2x32xf32>
    %239 = arith.addf %237, %238 : vector<2x32xf32>
    %240 = math.tanh %239 : vector<2x32xf32>
    %241 = arith.mulf %236, %240 : vector<2x32xf32>
    %c0_47 = arith.constant 0 : index
    %c0_48 = arith.constant 0 : index
    %242 = vector.load %arg3[%c0_47, %c0_48] : memref<512x27xf32, #tpu.memory_space<vmem>>, vector<512x27xf32>
    %c0_49 = arith.constant 0 : index
    %c0_50 = arith.constant 0 : index
    %243 = vector.load %arg12[%c0_49, %c0_50] : memref<27x8xf32, #tpu.memory_space<vmem>>, vector<27x8xf32>
    %cst_51 = arith.constant dense<0.000000e+00> : vector<512x8xf32>
    %244 = tpu.matmul %242, %243, %cst_51 {dimension_numbers = #tpu.dot_dimension_numbers<[1], [0], [0], [1], [0, 0, 1, 1], [], []>} : vector<512x27xf32>, vector<27x8xf32>, vector<512x8xf32> -> vector<512x8xf32>
    %c0_52 = arith.constant 0 : index
    %c0_53 = arith.constant 0 : index
    %245 = vector.load %arg13[%c0_52, %c0_53] : memref<1x8xf32, #tpu.memory_space<vmem>>, vector<1x8xf32>
    %246 = vector.broadcast %245 : vector<1x8xf32> to vector<512x8xf32>
    %247 = arith.addf %244, %246 : vector<512x8xf32>
    %cst_54 = arith.constant 0.000000e+00 : f32
    %248 = vector.broadcast %cst_54 : f32 to vector<512x8xf32>
    %249 = arith.maximumf %247, %248 : vector<512x8xf32>
    %c0_55 = arith.constant 0 : index
    %c0_56 = arith.constant 0 : index
    %250 = vector.load %arg4[%c0_55, %c0_56] : memref<2x512xf32, #tpu.memory_space<vmem>>, vector<2x512xf32>
    %cst_57 = arith.constant dense<0.000000e+00> : vector<2x8xf32>
    %251 = tpu.matmul %250, %249, %cst_57 {dimension_numbers = #tpu.dot_dimension_numbers<[1], [0], [0], [1], [0, 0, 1, 1], [], []>} : vector<2x512xf32>, vector<512x8xf32>, vector<2x8xf32> -> vector<2x8xf32>
    %c0_58 = arith.constant 0 : index
    %c0_59 = arith.constant 0 : index
    %252 = vector.load %arg14[%c0_58, %c0_59] : memref<8x32xf32, #tpu.memory_space<vmem>>, vector<8x32xf32>
    %cst_60 = arith.constant dense<0.000000e+00> : vector<2x32xf32>
    %253 = tpu.matmul %251, %252, %cst_60 {dimension_numbers = #tpu.dot_dimension_numbers<[1], [0], [0], [1], [0, 0, 1, 1], [], []>} : vector<2x8xf32>, vector<8x32xf32>, vector<2x32xf32> -> vector<2x32xf32>
    %c0_61 = arith.constant 0 : index
    %c0_62 = arith.constant 0 : index
    %254 = vector.load %arg15[%c0_61, %c0_62] : memref<1x32xf32, #tpu.memory_space<vmem>>, vector<1x32xf32>
    %255 = vector.broadcast %254 : vector<1x32xf32> to vector<2x32xf32>
    %256 = arith.addf %253, %255 : vector<2x32xf32>
    %257 = tpu.concatenate %241, %256 in 1 : vector<2x32xf32>, vector<2x32xf32> -> vector<2x64xf32>
    %c0_63 = arith.constant 0 : index
    %c0_64 = arith.constant 0 : index
    %258 = vector.load %arg16[%c0_63, %c0_64] : memref<64x64xf32, #tpu.memory_space<vmem>>, vector<64x64xf32>
    %cst_65 = arith.constant dense<0.000000e+00> : vector<2x64xf32>
    %259 = tpu.matmul %257, %258, %cst_65 {dimension_numbers = #tpu.dot_dimension_numbers<[1], [0], [0], [1], [0, 0, 1, 1], [], []>} : vector<2x64xf32>, vector<64x64xf32>, vector<2x64xf32> -> vector<2x64xf32>
    %c0_66 = arith.constant 0 : index
    %c0_67 = arith.constant 0 : index
    %260 = vector.load %arg17[%c0_66, %c0_67] : memref<1x64xf32, #tpu.memory_space<vmem>>, vector<1x64xf32>
    %261 = vector.broadcast %260 : vector<1x64xf32> to vector<2x64xf32>
    %262 = arith.addf %259, %261 : vector<2x64xf32>
    %cst_68 = arith.constant dense<0.000000e+00> : vector<2xf32>
    %263 = vector.multi_reduction <add>, %262, %cst_68 [1] : vector<2x64xf32> to vector<2xf32>
    %264 = vector.shape_cast %263 : vector<2xf32> to vector<2x1xf32>
    %cst_69 = arith.constant 6.400000e+01 : f32
    %265 = vector.broadcast %cst_69 : f32 to vector<2x1xf32>
    %266 = arith.divf %264, %265 : vector<2x1xf32>
    %267 = vector.broadcast %266 : vector<2x1xf32> to vector<2x64xf32>
    %268 = arith.subf %262, %267 : vector<2x64xf32>
    %269 = arith.mulf %268, %268 : vector<2x64xf32>
    %cst_70 = arith.constant dense<0.000000e+00> : vector<2xf32>
    %270 = vector.multi_reduction <add>, %269, %cst_70 [1] : vector<2x64xf32> to vector<2xf32>
    %271 = vector.shape_cast %270 : vector<2xf32> to vector<2x1xf32>
    %cst_71 = arith.constant 6.400000e+01 : f32
    %272 = vector.broadcast %cst_71 : f32 to vector<2x1xf32>
    %273 = arith.divf %271, %272 : vector<2x1xf32>
    %274 = vector.broadcast %266 : vector<2x1xf32> to vector<2x64xf32>
    %275 = arith.subf %262, %274 : vector<2x64xf32>
    %cst_72 = arith.constant 9.99999974E-6 : f32
    %276 = vector.broadcast %cst_72 : f32 to vector<2x1xf32>
    %277 = arith.addf %273, %276 : vector<2x1xf32>
    %278 = math.rsqrt %277 : vector<2x1xf32>
    %279 = vector.broadcast %278 : vector<2x1xf32> to vector<2x64xf32>
    %280 = arith.mulf %275, %279 : vector<2x64xf32>
    %cst_73 = arith.constant 0.000000e+00 : f32
    %281 = vector.broadcast %cst_73 : f32 to vector<2x64xf32>
    %282 = arith.maximumf %280, %281 : vector<2x64xf32>
    %c0_74 = arith.constant 0 : index
    %c0_75 = arith.constant 0 : index
    %283 = vector.load %arg18[%c0_74, %c0_75] : memref<64x64xf32, #tpu.memory_space<vmem>>, vector<64x64xf32>
    %cst_76 = arith.constant dense<0.000000e+00> : vector<2x64xf32>
    %284 = tpu.matmul %282, %283, %cst_76 {dimension_numbers = #tpu.dot_dimension_numbers<[1], [0], [0], [1], [0, 0, 1, 1], [], []>} : vector<2x64xf32>, vector<64x64xf32>, vector<2x64xf32> -> vector<2x64xf32>
    %c0_77 = arith.constant 0 : index
    %c0_78 = arith.constant 0 : index
    %285 = vector.load %arg19[%c0_77, %c0_78] : memref<1x64xf32, #tpu.memory_space<vmem>>, vector<1x64xf32>
    %286 = vector.broadcast %285 : vector<1x64xf32> to vector<2x64xf32>
    %287 = arith.addf %284, %286 : vector<2x64xf32>
    %cst_79 = arith.constant dense<0.000000e+00> : vector<2xf32>
    %288 = vector.multi_reduction <add>, %287, %cst_79 [1] : vector<2x64xf32> to vector<2xf32>
    %289 = vector.shape_cast %288 : vector<2xf32> to vector<2x1xf32>
    %cst_80 = arith.constant 6.400000e+01 : f32
    %290 = vector.broadcast %cst_80 : f32 to vector<2x1xf32>
    %291 = arith.divf %289, %290 : vector<2x1xf32>
    %292 = vector.broadcast %291 : vector<2x1xf32> to vector<2x64xf32>
    %293 = arith.subf %287, %292 : vector<2x64xf32>
    %294 = arith.mulf %293, %293 : vector<2x64xf32>
    %cst_81 = arith.constant dense<0.000000e+00> : vector<2xf32>
    %295 = vector.multi_reduction <add>, %294, %cst_81 [1] : vector<2x64xf32> to vector<2xf32>
    %296 = vector.shape_cast %295 : vector<2xf32> to vector<2x1xf32>
    %cst_82 = arith.constant 6.400000e+01 : f32
    %297 = vector.broadcast %cst_82 : f32 to vector<2x1xf32>
    %298 = arith.divf %296, %297 : vector<2x1xf32>
    %299 = vector.broadcast %291 : vector<2x1xf32> to vector<2x64xf32>
    %300 = arith.subf %287, %299 : vector<2x64xf32>
    %cst_83 = arith.constant 9.99999974E-6 : f32
    %301 = vector.broadcast %cst_83 : f32 to vector<2x1xf32>
    %302 = arith.addf %298, %301 : vector<2x1xf32>
    %303 = math.rsqrt %302 : vector<2x1xf32>
    %304 = vector.broadcast %303 : vector<2x1xf32> to vector<2x64xf32>
    %305 = arith.mulf %300, %304 : vector<2x64xf32>
    %cst_84 = arith.constant 0.000000e+00 : f32
    %306 = vector.broadcast %cst_84 : f32 to vector<2x64xf32>
    %307 = arith.maximumf %305, %306 : vector<2x64xf32>
    %c0_85 = arith.constant 0 : index
    %c0_86 = arith.constant 0 : index
    %308 = vector.load %arg20[%c0_85, %c0_86] : memref<64x32xf32, #tpu.memory_space<vmem>>, vector<64x32xf32>
    %cst_87 = arith.constant dense<0.000000e+00> : vector<2x32xf32>
    %309 = tpu.matmul %307, %308, %cst_87 {dimension_numbers = #tpu.dot_dimension_numbers<[1], [0], [0], [1], [0, 0, 1, 1], [], []>} : vector<2x64xf32>, vector<64x32xf32>, vector<2x32xf32> -> vector<2x32xf32>
    %c0_88 = arith.constant 0 : index
    %c0_89 = arith.constant 0 : index
    %310 = vector.load %arg21[%c0_88, %c0_89] : memref<1x32xf32, #tpu.memory_space<vmem>>, vector<1x32xf32>
    %311 = vector.broadcast %310 : vector<1x32xf32> to vector<2x32xf32>
    %312 = arith.addf %309, %311 : vector<2x32xf32>
    %cst_90 = arith.constant dense<0.000000e+00> : vector<2xf32>
    %313 = vector.multi_reduction <add>, %312, %cst_90 [1] : vector<2x32xf32> to vector<2xf32>
    %314 = vector.shape_cast %313 : vector<2xf32> to vector<2x1xf32>
    %cst_91 = arith.constant 3.200000e+01 : f32
    %315 = vector.broadcast %cst_91 : f32 to vector<2x1xf32>
    %316 = arith.divf %314, %315 : vector<2x1xf32>
    %317 = vector.broadcast %316 : vector<2x1xf32> to vector<2x32xf32>
    %318 = arith.subf %312, %317 : vector<2x32xf32>
    %319 = arith.mulf %318, %318 : vector<2x32xf32>
    %cst_92 = arith.constant dense<0.000000e+00> : vector<2xf32>
    %320 = vector.multi_reduction <add>, %319, %cst_92 [1] : vector<2x32xf32> to vector<2xf32>
    %321 = vector.shape_cast %320 : vector<2xf32> to vector<2x1xf32>
    %cst_93 = arith.constant 3.200000e+01 : f32
    %322 = vector.broadcast %cst_93 : f32 to vector<2x1xf32>
    %323 = arith.divf %321, %322 : vector<2x1xf32>
    %324 = vector.broadcast %316 : vector<2x1xf32> to vector<2x32xf32>
    %325 = arith.subf %312, %324 : vector<2x32xf32>
    %cst_94 = arith.constant 9.99999974E-6 : f32
    %326 = vector.broadcast %cst_94 : f32 to vector<2x1xf32>
    %327 = arith.addf %323, %326 : vector<2x1xf32>
    %328 = math.rsqrt %327 : vector<2x1xf32>
    %329 = vector.broadcast %328 : vector<2x1xf32> to vector<2x32xf32>
    %330 = arith.mulf %325, %329 : vector<2x32xf32>
    %cst_95 = arith.constant 0.000000e+00 : f32
    %331 = vector.broadcast %cst_95 : f32 to vector<2x32xf32>
    %332 = arith.maximumf %330, %331 : vector<2x32xf32>
    %c0_96 = arith.constant 0 : index
    %c0_97 = arith.constant 0 : index
    %333 = vector.load %arg22[%c0_96, %c0_97] : memref<32x32xf32, #tpu.memory_space<vmem>>, vector<32x32xf32>
    %cst_98 = arith.constant dense<0.000000e+00> : vector<2x32xf32>
    %334 = tpu.matmul %332, %333, %cst_98 {dimension_numbers = #tpu.dot_dimension_numbers<[1], [0], [0], [1], [0, 0, 1, 1], [], []>} : vector<2x32xf32>, vector<32x32xf32>, vector<2x32xf32> -> vector<2x32xf32>
    %c0_99 = arith.constant 0 : index
    %c0_100 = arith.constant 0 : index
    %335 = vector.load %arg23[%c0_99, %c0_100] : memref<1x32xf32, #tpu.memory_space<vmem>>, vector<1x32xf32>
    %336 = vector.broadcast %335 : vector<1x32xf32> to vector<2x32xf32>
    %337 = arith.addf %334, %336 : vector<2x32xf32>
    %cst_101 = arith.constant dense<0.000000e+00> : vector<2xf32>
    %338 = vector.multi_reduction <add>, %337, %cst_101 [1] : vector<2x32xf32> to vector<2xf32>
    %339 = vector.shape_cast %338 : vector<2xf32> to vector<2x1xf32>
    %cst_102 = arith.constant 3.200000e+01 : f32
    %340 = vector.broadcast %cst_102 : f32 to vector<2x1xf32>
    %341 = arith.divf %339, %340 : vector<2x1xf32>
    %342 = vector.broadcast %341 : vector<2x1xf32> to vector<2x32xf32>
    %343 = arith.subf %337, %342 : vector<2x32xf32>
    %344 = arith.mulf %343, %343 : vector<2x32xf32>
    %cst_103 = arith.constant dense<0.000000e+00> : vector<2xf32>
    %345 = vector.multi_reduction <add>, %344, %cst_103 [1] : vector<2x32xf32> to vector<2xf32>
    %346 = vector.shape_cast %345 : vector<2xf32> to vector<2x1xf32>
    %cst_104 = arith.constant 3.200000e+01 : f32
    %347 = vector.broadcast %cst_104 : f32 to vector<2x1xf32>
    %348 = arith.divf %346, %347 : vector<2x1xf32>
    %349 = vector.broadcast %341 : vector<2x1xf32> to vector<2x32xf32>
    %350 = arith.subf %337, %349 : vector<2x32xf32>
    %cst_105 = arith.constant 9.99999974E-6 : f32
    %351 = vector.broadcast %cst_105 : f32 to vector<2x1xf32>
    %352 = arith.addf %348, %351 : vector<2x1xf32>
    %353 = math.rsqrt %352 : vector<2x1xf32>
    %354 = vector.broadcast %353 : vector<2x1xf32> to vector<2x32xf32>
    %355 = arith.mulf %350, %354 : vector<2x32xf32>
    %cst_106 = arith.constant 0.000000e+00 : f32
    %356 = vector.broadcast %cst_106 : f32 to vector<2x32xf32>
    %357 = arith.maximumf %355, %356 : vector<2x32xf32>
    %c0_107 = arith.constant 0 : index
    %c0_108 = arith.constant 0 : index
    %358 = vector.load %arg24[%c0_107, %c0_108] : memref<32x32xf32, #tpu.memory_space<vmem>>, vector<32x32xf32>
    %cst_109 = arith.constant dense<0.000000e+00> : vector<2x32xf32>
    %359 = tpu.matmul %357, %358, %cst_109 {dimension_numbers = #tpu.dot_dimension_numbers<[1], [0], [0], [1], [0, 0, 1, 1], [], []>} : vector<2x32xf32>, vector<32x32xf32>, vector<2x32xf32> -> vector<2x32xf32>
    %c0_110 = arith.constant 0 : index
    %c0_111 = arith.constant 0 : index
    %360 = vector.load %arg25[%c0_110, %c0_111] : memref<1x32xf32, #tpu.memory_space<vmem>>, vector<1x32xf32>
    %361 = vector.broadcast %360 : vector<1x32xf32> to vector<2x32xf32>
    %362 = arith.addf %359, %361 : vector<2x32xf32>
    %c0_112 = arith.constant 0 : index
    %c0_113 = arith.constant 0 : index
    %363 = vector.load %arg1[%c0_112, %c0_113] : memref<16x6xf32, #tpu.memory_space<vmem>>, vector<16x6xf32>
    %364 = vector.broadcast %0 : vector<1x6xf32> to vector<16x6xf32>
    %365 = arith.addf %363, %364 : vector<16x6xf32>
    %366 = vector.broadcast %2 : vector<1x6xf32> to vector<16x6xf32>
    %367 = arith.mulf %365, %366 : vector<16x6xf32>
    %c0_114 = arith.constant 0 : index
    %c0_115 = arith.constant 0 : index
    %368 = vector.load %arg26[%c0_114, %c0_115] : memref<6x128xf32, #tpu.memory_space<vmem>>, vector<6x128xf32>
    %cst_116 = arith.constant dense<0.000000e+00> : vector<16x128xf32>
    %369 = tpu.matmul %367, %368, %cst_116 {dimension_numbers = #tpu.dot_dimension_numbers<[1], [0], [0], [1], [0, 0, 1, 1], [], []>} : vector<16x6xf32>, vector<6x128xf32>, vector<16x128xf32> -> vector<16x128xf32>
    %c0_117 = arith.constant 0 : index
    %c0_118 = arith.constant 0 : index
    %370 = vector.load %arg28[%c0_117, %c0_118] : memref<1x128xf32, #tpu.memory_space<vmem>>, vector<1x128xf32>
    %371 = vector.broadcast %370 : vector<1x128xf32> to vector<16x128xf32>
    %372 = arith.addf %369, %371 : vector<16x128xf32>
    %c0_119 = arith.constant 0 : index
    %c0_120 = arith.constant 0 : index
    %373 = vector.load %arg27[%c0_119, %c0_120] : memref<32x128xf32, #tpu.memory_space<vmem>>, vector<32x128xf32>
    %cst_121 = arith.constant 0.000000e+00 : f32
    %374 = vector.broadcast %cst_121 : f32 to vector<2x32xf32>
    %cst_122 = arith.constant 0.000000e+00 : f32
    %375 = vector.broadcast %cst_122 : f32 to vector<2x32xf32>
    %376 = vector.extract_strided_slice %372 {offsets = [0, 0], sizes = [2, 128], strides = [1, 1]} : vector<16x128xf32> to vector<2x128xf32>
    %cst_123 = arith.constant dense<0.000000e+00> : vector<2x128xf32>
    %377 = tpu.matmul %374, %373, %cst_123 {dimension_numbers = #tpu.dot_dimension_numbers<[1], [0], [0], [1], [0, 0, 1, 1], [], []>} : vector<2x32xf32>, vector<32x128xf32>, vector<2x128xf32> -> vector<2x128xf32>
    %378 = arith.addf %376, %377 : vector<2x128xf32>
    %379 = vector.extract_strided_slice %378 {offsets = [0, 0], sizes = [2, 32], strides = [1, 1]} : vector<2x128xf32> to vector<2x32xf32>
    %380 = arith.negf %379 : vector<2x32xf32>
    %381 = math.exp %380 : vector<2x32xf32>
    %cst_124 = arith.constant 1.000000e+00 : f32
    %382 = vector.broadcast %cst_124 : f32 to vector<2x32xf32>
    %383 = arith.addf %382, %381 : vector<2x32xf32>
    %384 = arith.divf %382, %383 : vector<2x32xf32>
    %385 = vector.extract_strided_slice %378 {offsets = [0, 32], sizes = [2, 32], strides = [1, 1]} : vector<2x128xf32> to vector<2x32xf32>
    %386 = arith.negf %385 : vector<2x32xf32>
    %387 = math.exp %386 : vector<2x32xf32>
    %cst_125 = arith.constant 1.000000e+00 : f32
    %388 = vector.broadcast %cst_125 : f32 to vector<2x32xf32>
    %389 = arith.addf %388, %387 : vector<2x32xf32>
    %390 = arith.divf %388, %389 : vector<2x32xf32>
    %391 = vector.extract_strided_slice %378 {offsets = [0, 64], sizes = [2, 32], strides = [1, 1]} : vector<2x128xf32> to vector<2x32xf32>
    %392 = math.tanh %391 : vector<2x32xf32>
    %393 = vector.extract_strided_slice %378 {offsets = [0, 96], sizes = [2, 32], strides = [1, 1]} : vector<2x128xf32> to vector<2x32xf32>
    %394 = arith.negf %393 : vector<2x32xf32>
    %395 = math.exp %394 : vector<2x32xf32>
    %cst_126 = arith.constant 1.000000e+00 : f32
    %396 = vector.broadcast %cst_126 : f32 to vector<2x32xf32>
    %397 = arith.addf %396, %395 : vector<2x32xf32>
    %398 = arith.divf %396, %397 : vector<2x32xf32>
    %399 = arith.mulf %390, %375 : vector<2x32xf32>
    %400 = arith.mulf %384, %392 : vector<2x32xf32>
    %401 = arith.addf %399, %400 : vector<2x32xf32>
    %402 = math.tanh %401 : vector<2x32xf32>
    %403 = arith.mulf %398, %402 : vector<2x32xf32>
    %404 = vector.extract_strided_slice %372 {offsets = [2, 0], sizes = [2, 128], strides = [1, 1]} : vector<16x128xf32> to vector<2x128xf32>
    %cst_127 = arith.constant dense<0.000000e+00> : vector<2x128xf32>
    %405 = tpu.matmul %403, %373, %cst_127 {dimension_numbers = #tpu.dot_dimension_numbers<[1], [0], [0], [1], [0, 0, 1, 1], [], []>} : vector<2x32xf32>, vector<32x128xf32>, vector<2x128xf32> -> vector<2x128xf32>
    %406 = arith.addf %404, %405 : vector<2x128xf32>
    %407 = vector.extract_strided_slice %406 {offsets = [0, 0], sizes = [2, 32], strides = [1, 1]} : vector<2x128xf32> to vector<2x32xf32>
    %408 = arith.negf %407 : vector<2x32xf32>
    %409 = math.exp %408 : vector<2x32xf32>
    %cst_128 = arith.constant 1.000000e+00 : f32
    %410 = vector.broadcast %cst_128 : f32 to vector<2x32xf32>
    %411 = arith.addf %410, %409 : vector<2x32xf32>
    %412 = arith.divf %410, %411 : vector<2x32xf32>
    %413 = vector.extract_strided_slice %406 {offsets = [0, 32], sizes = [2, 32], strides = [1, 1]} : vector<2x128xf32> to vector<2x32xf32>
    %414 = arith.negf %413 : vector<2x32xf32>
    %415 = math.exp %414 : vector<2x32xf32>
    %cst_129 = arith.constant 1.000000e+00 : f32
    %416 = vector.broadcast %cst_129 : f32 to vector<2x32xf32>
    %417 = arith.addf %416, %415 : vector<2x32xf32>
    %418 = arith.divf %416, %417 : vector<2x32xf32>
    %419 = vector.extract_strided_slice %406 {offsets = [0, 64], sizes = [2, 32], strides = [1, 1]} : vector<2x128xf32> to vector<2x32xf32>
    %420 = math.tanh %419 : vector<2x32xf32>
    %421 = vector.extract_strided_slice %406 {offsets = [0, 96], sizes = [2, 32], strides = [1, 1]} : vector<2x128xf32> to vector<2x32xf32>
    %422 = arith.negf %421 : vector<2x32xf32>
    %423 = math.exp %422 : vector<2x32xf32>
    %cst_130 = arith.constant 1.000000e+00 : f32
    %424 = vector.broadcast %cst_130 : f32 to vector<2x32xf32>
    %425 = arith.addf %424, %423 : vector<2x32xf32>
    %426 = arith.divf %424, %425 : vector<2x32xf32>
    %427 = arith.mulf %418, %401 : vector<2x32xf32>
    %428 = arith.mulf %412, %420 : vector<2x32xf32>
    %429 = arith.addf %427, %428 : vector<2x32xf32>
    %430 = math.tanh %429 : vector<2x32xf32>
    %431 = arith.mulf %426, %430 : vector<2x32xf32>
    %432 = vector.extract_strided_slice %372 {offsets = [4, 0], sizes = [2, 128], strides = [1, 1]} : vector<16x128xf32> to vector<2x128xf32>
    %cst_131 = arith.constant dense<0.000000e+00> : vector<2x128xf32>
    %433 = tpu.matmul %431, %373, %cst_131 {dimension_numbers = #tpu.dot_dimension_numbers<[1], [0], [0], [1], [0, 0, 1, 1], [], []>} : vector<2x32xf32>, vector<32x128xf32>, vector<2x128xf32> -> vector<2x128xf32>
    %434 = arith.addf %432, %433 : vector<2x128xf32>
    %435 = vector.extract_strided_slice %434 {offsets = [0, 0], sizes = [2, 32], strides = [1, 1]} : vector<2x128xf32> to vector<2x32xf32>
    %436 = arith.negf %435 : vector<2x32xf32>
    %437 = math.exp %436 : vector<2x32xf32>
    %cst_132 = arith.constant 1.000000e+00 : f32
    %438 = vector.broadcast %cst_132 : f32 to vector<2x32xf32>
    %439 = arith.addf %438, %437 : vector<2x32xf32>
    %440 = arith.divf %438, %439 : vector<2x32xf32>
    %441 = vector.extract_strided_slice %434 {offsets = [0, 32], sizes = [2, 32], strides = [1, 1]} : vector<2x128xf32> to vector<2x32xf32>
    %442 = arith.negf %441 : vector<2x32xf32>
    %443 = math.exp %442 : vector<2x32xf32>
    %cst_133 = arith.constant 1.000000e+00 : f32
    %444 = vector.broadcast %cst_133 : f32 to vector<2x32xf32>
    %445 = arith.addf %444, %443 : vector<2x32xf32>
    %446 = arith.divf %444, %445 : vector<2x32xf32>
    %447 = vector.extract_strided_slice %434 {offsets = [0, 64], sizes = [2, 32], strides = [1, 1]} : vector<2x128xf32> to vector<2x32xf32>
    %448 = math.tanh %447 : vector<2x32xf32>
    %449 = vector.extract_strided_slice %434 {offsets = [0, 96], sizes = [2, 32], strides = [1, 1]} : vector<2x128xf32> to vector<2x32xf32>
    %450 = arith.negf %449 : vector<2x32xf32>
    %451 = math.exp %450 : vector<2x32xf32>
    %cst_134 = arith.constant 1.000000e+00 : f32
    %452 = vector.broadcast %cst_134 : f32 to vector<2x32xf32>
    %453 = arith.addf %452, %451 : vector<2x32xf32>
    %454 = arith.divf %452, %453 : vector<2x32xf32>
    %455 = arith.mulf %446, %429 : vector<2x32xf32>
    %456 = arith.mulf %440, %448 : vector<2x32xf32>
    %457 = arith.addf %455, %456 : vector<2x32xf32>
    %458 = math.tanh %457 : vector<2x32xf32>
    %459 = arith.mulf %454, %458 : vector<2x32xf32>
    %460 = vector.extract_strided_slice %372 {offsets = [6, 0], sizes = [2, 128], strides = [1, 1]} : vector<16x128xf32> to vector<2x128xf32>
    %cst_135 = arith.constant dense<0.000000e+00> : vector<2x128xf32>
    %461 = tpu.matmul %459, %373, %cst_135 {dimension_numbers = #tpu.dot_dimension_numbers<[1], [0], [0], [1], [0, 0, 1, 1], [], []>} : vector<2x32xf32>, vector<32x128xf32>, vector<2x128xf32> -> vector<2x128xf32>
    %462 = arith.addf %460, %461 : vector<2x128xf32>
    %463 = vector.extract_strided_slice %462 {offsets = [0, 0], sizes = [2, 32], strides = [1, 1]} : vector<2x128xf32> to vector<2x32xf32>
    %464 = arith.negf %463 : vector<2x32xf32>
    %465 = math.exp %464 : vector<2x32xf32>
    %cst_136 = arith.constant 1.000000e+00 : f32
    %466 = vector.broadcast %cst_136 : f32 to vector<2x32xf32>
    %467 = arith.addf %466, %465 : vector<2x32xf32>
    %468 = arith.divf %466, %467 : vector<2x32xf32>
    %469 = vector.extract_strided_slice %462 {offsets = [0, 32], sizes = [2, 32], strides = [1, 1]} : vector<2x128xf32> to vector<2x32xf32>
    %470 = arith.negf %469 : vector<2x32xf32>
    %471 = math.exp %470 : vector<2x32xf32>
    %cst_137 = arith.constant 1.000000e+00 : f32
    %472 = vector.broadcast %cst_137 : f32 to vector<2x32xf32>
    %473 = arith.addf %472, %471 : vector<2x32xf32>
    %474 = arith.divf %472, %473 : vector<2x32xf32>
    %475 = vector.extract_strided_slice %462 {offsets = [0, 64], sizes = [2, 32], strides = [1, 1]} : vector<2x128xf32> to vector<2x32xf32>
    %476 = math.tanh %475 : vector<2x32xf32>
    %477 = vector.extract_strided_slice %462 {offsets = [0, 96], sizes = [2, 32], strides = [1, 1]} : vector<2x128xf32> to vector<2x32xf32>
    %478 = arith.negf %477 : vector<2x32xf32>
    %479 = math.exp %478 : vector<2x32xf32>
    %cst_138 = arith.constant 1.000000e+00 : f32
    %480 = vector.broadcast %cst_138 : f32 to vector<2x32xf32>
    %481 = arith.addf %480, %479 : vector<2x32xf32>
    %482 = arith.divf %480, %481 : vector<2x32xf32>
    %483 = arith.mulf %474, %457 : vector<2x32xf32>
    %484 = arith.mulf %468, %476 : vector<2x32xf32>
    %485 = arith.addf %483, %484 : vector<2x32xf32>
    %486 = math.tanh %485 : vector<2x32xf32>
    %487 = arith.mulf %482, %486 : vector<2x32xf32>
    %488 = vector.extract_strided_slice %372 {offsets = [8, 0], sizes = [2, 128], strides = [1, 1]} : vector<16x128xf32> to vector<2x128xf32>
    %cst_139 = arith.constant dense<0.000000e+00> : vector<2x128xf32>
    %489 = tpu.matmul %487, %373, %cst_139 {dimension_numbers = #tpu.dot_dimension_numbers<[1], [0], [0], [1], [0, 0, 1, 1], [], []>} : vector<2x32xf32>, vector<32x128xf32>, vector<2x128xf32> -> vector<2x128xf32>
    %490 = arith.addf %488, %489 : vector<2x128xf32>
    %491 = vector.extract_strided_slice %490 {offsets = [0, 0], sizes = [2, 32], strides = [1, 1]} : vector<2x128xf32> to vector<2x32xf32>
    %492 = arith.negf %491 : vector<2x32xf32>
    %493 = math.exp %492 : vector<2x32xf32>
    %cst_140 = arith.constant 1.000000e+00 : f32
    %494 = vector.broadcast %cst_140 : f32 to vector<2x32xf32>
    %495 = arith.addf %494, %493 : vector<2x32xf32>
    %496 = arith.divf %494, %495 : vector<2x32xf32>
    %497 = vector.extract_strided_slice %490 {offsets = [0, 32], sizes = [2, 32], strides = [1, 1]} : vector<2x128xf32> to vector<2x32xf32>
    %498 = arith.negf %497 : vector<2x32xf32>
    %499 = math.exp %498 : vector<2x32xf32>
    %cst_141 = arith.constant 1.000000e+00 : f32
    %500 = vector.broadcast %cst_141 : f32 to vector<2x32xf32>
    %501 = arith.addf %500, %499 : vector<2x32xf32>
    %502 = arith.divf %500, %501 : vector<2x32xf32>
    %503 = vector.extract_strided_slice %490 {offsets = [0, 64], sizes = [2, 32], strides = [1, 1]} : vector<2x128xf32> to vector<2x32xf32>
    %504 = math.tanh %503 : vector<2x32xf32>
    %505 = vector.extract_strided_slice %490 {offsets = [0, 96], sizes = [2, 32], strides = [1, 1]} : vector<2x128xf32> to vector<2x32xf32>
    %506 = arith.negf %505 : vector<2x32xf32>
    %507 = math.exp %506 : vector<2x32xf32>
    %cst_142 = arith.constant 1.000000e+00 : f32
    %508 = vector.broadcast %cst_142 : f32 to vector<2x32xf32>
    %509 = arith.addf %508, %507 : vector<2x32xf32>
    %510 = arith.divf %508, %509 : vector<2x32xf32>
    %511 = arith.mulf %502, %485 : vector<2x32xf32>
    %512 = arith.mulf %496, %504 : vector<2x32xf32>
    %513 = arith.addf %511, %512 : vector<2x32xf32>
    %514 = math.tanh %513 : vector<2x32xf32>
    %515 = arith.mulf %510, %514 : vector<2x32xf32>
    %516 = vector.extract_strided_slice %372 {offsets = [10, 0], sizes = [2, 128], strides = [1, 1]} : vector<16x128xf32> to vector<2x128xf32>
    %cst_143 = arith.constant dense<0.000000e+00> : vector<2x128xf32>
    %517 = tpu.matmul %515, %373, %cst_143 {dimension_numbers = #tpu.dot_dimension_numbers<[1], [0], [0], [1], [0, 0, 1, 1], [], []>} : vector<2x32xf32>, vector<32x128xf32>, vector<2x128xf32> -> vector<2x128xf32>
    %518 = arith.addf %516, %517 : vector<2x128xf32>
    %519 = vector.extract_strided_slice %518 {offsets = [0, 0], sizes = [2, 32], strides = [1, 1]} : vector<2x128xf32> to vector<2x32xf32>
    %520 = arith.negf %519 : vector<2x32xf32>
    %521 = math.exp %520 : vector<2x32xf32>
    %cst_144 = arith.constant 1.000000e+00 : f32
    %522 = vector.broadcast %cst_144 : f32 to vector<2x32xf32>
    %523 = arith.addf %522, %521 : vector<2x32xf32>
    %524 = arith.divf %522, %523 : vector<2x32xf32>
    %525 = vector.extract_strided_slice %518 {offsets = [0, 32], sizes = [2, 32], strides = [1, 1]} : vector<2x128xf32> to vector<2x32xf32>
    %526 = arith.negf %525 : vector<2x32xf32>
    %527 = math.exp %526 : vector<2x32xf32>
    %cst_145 = arith.constant 1.000000e+00 : f32
    %528 = vector.broadcast %cst_145 : f32 to vector<2x32xf32>
    %529 = arith.addf %528, %527 : vector<2x32xf32>
    %530 = arith.divf %528, %529 : vector<2x32xf32>
    %531 = vector.extract_strided_slice %518 {offsets = [0, 64], sizes = [2, 32], strides = [1, 1]} : vector<2x128xf32> to vector<2x32xf32>
    %532 = math.tanh %531 : vector<2x32xf32>
    %533 = vector.extract_strided_slice %518 {offsets = [0, 96], sizes = [2, 32], strides = [1, 1]} : vector<2x128xf32> to vector<2x32xf32>
    %534 = arith.negf %533 : vector<2x32xf32>
    %535 = math.exp %534 : vector<2x32xf32>
    %cst_146 = arith.constant 1.000000e+00 : f32
    %536 = vector.broadcast %cst_146 : f32 to vector<2x32xf32>
    %537 = arith.addf %536, %535 : vector<2x32xf32>
    %538 = arith.divf %536, %537 : vector<2x32xf32>
    %539 = arith.mulf %530, %513 : vector<2x32xf32>
    %540 = arith.mulf %524, %532 : vector<2x32xf32>
    %541 = arith.addf %539, %540 : vector<2x32xf32>
    %542 = math.tanh %541 : vector<2x32xf32>
    %543 = arith.mulf %538, %542 : vector<2x32xf32>
    %544 = vector.extract_strided_slice %372 {offsets = [12, 0], sizes = [2, 128], strides = [1, 1]} : vector<16x128xf32> to vector<2x128xf32>
    %cst_147 = arith.constant dense<0.000000e+00> : vector<2x128xf32>
    %545 = tpu.matmul %543, %373, %cst_147 {dimension_numbers = #tpu.dot_dimension_numbers<[1], [0], [0], [1], [0, 0, 1, 1], [], []>} : vector<2x32xf32>, vector<32x128xf32>, vector<2x128xf32> -> vector<2x128xf32>
    %546 = arith.addf %544, %545 : vector<2x128xf32>
    %547 = vector.extract_strided_slice %546 {offsets = [0, 0], sizes = [2, 32], strides = [1, 1]} : vector<2x128xf32> to vector<2x32xf32>
    %548 = arith.negf %547 : vector<2x32xf32>
    %549 = math.exp %548 : vector<2x32xf32>
    %cst_148 = arith.constant 1.000000e+00 : f32
    %550 = vector.broadcast %cst_148 : f32 to vector<2x32xf32>
    %551 = arith.addf %550, %549 : vector<2x32xf32>
    %552 = arith.divf %550, %551 : vector<2x32xf32>
    %553 = vector.extract_strided_slice %546 {offsets = [0, 32], sizes = [2, 32], strides = [1, 1]} : vector<2x128xf32> to vector<2x32xf32>
    %554 = arith.negf %553 : vector<2x32xf32>
    %555 = math.exp %554 : vector<2x32xf32>
    %cst_149 = arith.constant 1.000000e+00 : f32
    %556 = vector.broadcast %cst_149 : f32 to vector<2x32xf32>
    %557 = arith.addf %556, %555 : vector<2x32xf32>
    %558 = arith.divf %556, %557 : vector<2x32xf32>
    %559 = vector.extract_strided_slice %546 {offsets = [0, 64], sizes = [2, 32], strides = [1, 1]} : vector<2x128xf32> to vector<2x32xf32>
    %560 = math.tanh %559 : vector<2x32xf32>
    %561 = vector.extract_strided_slice %546 {offsets = [0, 96], sizes = [2, 32], strides = [1, 1]} : vector<2x128xf32> to vector<2x32xf32>
    %562 = arith.negf %561 : vector<2x32xf32>
    %563 = math.exp %562 : vector<2x32xf32>
    %cst_150 = arith.constant 1.000000e+00 : f32
    %564 = vector.broadcast %cst_150 : f32 to vector<2x32xf32>
    %565 = arith.addf %564, %563 : vector<2x32xf32>
    %566 = arith.divf %564, %565 : vector<2x32xf32>
    %567 = arith.mulf %558, %541 : vector<2x32xf32>
    %568 = arith.mulf %552, %560 : vector<2x32xf32>
    %569 = arith.addf %567, %568 : vector<2x32xf32>
    %570 = math.tanh %569 : vector<2x32xf32>
    %571 = arith.mulf %566, %570 : vector<2x32xf32>
    %572 = vector.extract_strided_slice %372 {offsets = [14, 0], sizes = [2, 128], strides = [1, 1]} : vector<16x128xf32> to vector<2x128xf32>
    %cst_151 = arith.constant dense<0.000000e+00> : vector<2x128xf32>
    %573 = tpu.matmul %571, %373, %cst_151 {dimension_numbers = #tpu.dot_dimension_numbers<[1], [0], [0], [1], [0, 0, 1, 1], [], []>} : vector<2x32xf32>, vector<32x128xf32>, vector<2x128xf32> -> vector<2x128xf32>
    %574 = arith.addf %572, %573 : vector<2x128xf32>
    %575 = vector.extract_strided_slice %574 {offsets = [0, 0], sizes = [2, 32], strides = [1, 1]} : vector<2x128xf32> to vector<2x32xf32>
    %576 = arith.negf %575 : vector<2x32xf32>
    %577 = math.exp %576 : vector<2x32xf32>
    %cst_152 = arith.constant 1.000000e+00 : f32
    %578 = vector.broadcast %cst_152 : f32 to vector<2x32xf32>
    %579 = arith.addf %578, %577 : vector<2x32xf32>
    %580 = arith.divf %578, %579 : vector<2x32xf32>
    %581 = vector.extract_strided_slice %574 {offsets = [0, 32], sizes = [2, 32], strides = [1, 1]} : vector<2x128xf32> to vector<2x32xf32>
    %582 = arith.negf %581 : vector<2x32xf32>
    %583 = math.exp %582 : vector<2x32xf32>
    %cst_153 = arith.constant 1.000000e+00 : f32
    %584 = vector.broadcast %cst_153 : f32 to vector<2x32xf32>
    %585 = arith.addf %584, %583 : vector<2x32xf32>
    %586 = arith.divf %584, %585 : vector<2x32xf32>
    %587 = vector.extract_strided_slice %574 {offsets = [0, 64], sizes = [2, 32], strides = [1, 1]} : vector<2x128xf32> to vector<2x32xf32>
    %588 = math.tanh %587 : vector<2x32xf32>
    %589 = vector.extract_strided_slice %574 {offsets = [0, 96], sizes = [2, 32], strides = [1, 1]} : vector<2x128xf32> to vector<2x32xf32>
    %590 = arith.negf %589 : vector<2x32xf32>
    %591 = math.exp %590 : vector<2x32xf32>
    %cst_154 = arith.constant 1.000000e+00 : f32
    %592 = vector.broadcast %cst_154 : f32 to vector<2x32xf32>
    %593 = arith.addf %592, %591 : vector<2x32xf32>
    %594 = arith.divf %592, %593 : vector<2x32xf32>
    %595 = arith.mulf %586, %569 : vector<2x32xf32>
    %596 = arith.mulf %580, %588 : vector<2x32xf32>
    %597 = arith.addf %595, %596 : vector<2x32xf32>
    %598 = math.tanh %597 : vector<2x32xf32>
    %599 = arith.mulf %594, %598 : vector<2x32xf32>
    %c0_155 = arith.constant 0 : index
    %c0_156 = arith.constant 0 : index
    %600 = vector.load %arg29[%c0_155, %c0_156] : memref<32x16xf32, #tpu.memory_space<vmem>>, vector<32x16xf32>
    %cst_157 = arith.constant dense<0.000000e+00> : vector<2x16xf32>
    %601 = tpu.matmul %599, %600, %cst_157 {dimension_numbers = #tpu.dot_dimension_numbers<[1], [0], [0], [1], [0, 0, 1, 1], [], []>} : vector<2x32xf32>, vector<32x16xf32>, vector<2x16xf32> -> vector<2x16xf32>
    %c0_158 = arith.constant 0 : index
    %c0_159 = arith.constant 0 : index
    %602 = vector.load %arg30[%c0_158, %c0_159] : memref<1x16xf32, #tpu.memory_space<vmem>>, vector<1x16xf32>
    %603 = vector.broadcast %602 : vector<1x16xf32> to vector<2x16xf32>
    %604 = arith.addf %601, %603 : vector<2x16xf32>
    %605 = vector.extract_strided_slice %604 {offsets = [0, 0], sizes = [2, 8], strides = [1, 1]} : vector<2x16xf32> to vector<2x8xf32>
    %606 = vector.extract_strided_slice %604 {offsets = [0, 8], sizes = [2, 8], strides = [1, 1]} : vector<2x16xf32> to vector<2x8xf32>
    %cst_160 = arith.constant 5.000000e-01 : f32
    %607 = vector.broadcast %cst_160 : f32 to vector<2x8xf32>
    %608 = arith.mulf %607, %606 : vector<2x8xf32>
    %609 = math.exp %608 : vector<2x8xf32>
    %c0_161 = arith.constant 0 : index
    %c0_162 = arith.constant 0 : index
    %610 = vector.load %arg5[%c0_161, %c0_162] : memref<2x8xf32, #tpu.memory_space<vmem>>, vector<2x8xf32>
    %611 = arith.mulf %609, %610 : vector<2x8xf32>
    %612 = arith.addf %605, %611 : vector<2x8xf32>
    %613 = tpu.concatenate %612, %362 in 1 : vector<2x8xf32>, vector<2x32xf32> -> vector<2x40xf32>
    %c0_163 = arith.constant 0 : index
    %c0_164 = arith.constant 0 : index
    %614 = vector.load %arg31[%c0_163, %c0_164] : memref<40x128xf32, #tpu.memory_space<vmem>>, vector<40x128xf32>
    %cst_165 = arith.constant dense<0.000000e+00> : vector<2x128xf32>
    %615 = tpu.matmul %613, %614, %cst_165 {dimension_numbers = #tpu.dot_dimension_numbers<[1], [0], [0], [1], [0, 0, 1, 1], [], []>} : vector<2x40xf32>, vector<40x128xf32>, vector<2x128xf32> -> vector<2x128xf32>
    %c0_166 = arith.constant 0 : index
    %c0_167 = arith.constant 0 : index
    %616 = vector.load %arg33[%c0_166, %c0_167] : memref<1x128xf32, #tpu.memory_space<vmem>>, vector<1x128xf32>
    %617 = vector.broadcast %616 : vector<1x128xf32> to vector<2x128xf32>
    %618 = arith.addf %615, %617 : vector<2x128xf32>
    %c0_168 = arith.constant 0 : index
    %c0_169 = arith.constant 0 : index
    %619 = vector.load %arg32[%c0_168, %c0_169] : memref<32x128xf32, #tpu.memory_space<vmem>>, vector<32x128xf32>
    %c0_170 = arith.constant 0 : index
    %c0_171 = arith.constant 0 : index
    %620 = vector.load %arg34[%c0_170, %c0_171] : memref<32x2xf32, #tpu.memory_space<vmem>>, vector<32x2xf32>
    %c0_172 = arith.constant 0 : index
    %c0_173 = arith.constant 0 : index
    %621 = vector.load %arg35[%c0_172, %c0_173] : memref<1x2xf32, #tpu.memory_space<vmem>>, vector<1x2xf32>
    %622 = vector.extract_strided_slice %0 {offsets = [0, 0], sizes = [1, 4], strides = [1, 1]} : vector<1x6xf32> to vector<1x4xf32>
    %623 = vector.extract_strided_slice %2 {offsets = [0, 0], sizes = [1, 4], strides = [1, 1]} : vector<1x6xf32> to vector<1x4xf32>
    %624 = vector.extract_strided_slice %0 {offsets = [0, 4], sizes = [1, 2], strides = [1, 1]} : vector<1x6xf32> to vector<1x2xf32>
    %625 = vector.extract_strided_slice %1 {offsets = [0, 4], sizes = [1, 2], strides = [1, 1]} : vector<1x6xf32> to vector<1x2xf32>
    %cst_174 = arith.constant 0.000000e+00 : f32
    %626 = vector.broadcast %cst_174 : f32 to vector<2x32xf32>
    %cst_175 = arith.constant 0.000000e+00 : f32
    %627 = vector.broadcast %cst_175 : f32 to vector<2x32xf32>
    %c0_176 = arith.constant 0 : index
    %c0_177 = arith.constant 0 : index
    %628 = vector.load %arg2[%c0_176, %c0_177] : memref<2x4xf32, #tpu.memory_space<vmem>>, vector<2x4xf32>
    %629 = tpu.iota {dimensions = array<i32: 1>} : vector<2x4xi32>
    %cst_178 = arith.constant 0.000000e+00 : f32
    %630 = vector.broadcast %cst_178 : f32 to vector<1x1xf32>
    %cst_179 = arith.constant dense<0.000000e+00> : vector<2x128xf32>
    %631 = tpu.matmul %626, %619, %cst_179 {dimension_numbers = #tpu.dot_dimension_numbers<[1], [0], [0], [1], [0, 0, 1, 1], [], []>} : vector<2x32xf32>, vector<32x128xf32>, vector<2x128xf32> -> vector<2x128xf32>
    %632 = arith.addf %618, %631 : vector<2x128xf32>
    %633 = vector.extract_strided_slice %632 {offsets = [0, 0], sizes = [2, 32], strides = [1, 1]} : vector<2x128xf32> to vector<2x32xf32>
    %634 = arith.negf %633 : vector<2x32xf32>
    %635 = math.exp %634 : vector<2x32xf32>
    %cst_180 = arith.constant 1.000000e+00 : f32
    %636 = vector.broadcast %cst_180 : f32 to vector<2x32xf32>
    %637 = arith.addf %636, %635 : vector<2x32xf32>
    %638 = arith.divf %636, %637 : vector<2x32xf32>
    %639 = vector.extract_strided_slice %632 {offsets = [0, 32], sizes = [2, 32], strides = [1, 1]} : vector<2x128xf32> to vector<2x32xf32>
    %640 = arith.negf %639 : vector<2x32xf32>
    %641 = math.exp %640 : vector<2x32xf32>
    %cst_181 = arith.constant 1.000000e+00 : f32
    %642 = vector.broadcast %cst_181 : f32 to vector<2x32xf32>
    %643 = arith.addf %642, %641 : vector<2x32xf32>
    %644 = arith.divf %642, %643 : vector<2x32xf32>
    %645 = vector.extract_strided_slice %632 {offsets = [0, 64], sizes = [2, 32], strides = [1, 1]} : vector<2x128xf32> to vector<2x32xf32>
    %646 = math.tanh %645 : vector<2x32xf32>
    %647 = vector.extract_strided_slice %632 {offsets = [0, 96], sizes = [2, 32], strides = [1, 1]} : vector<2x128xf32> to vector<2x32xf32>
    %648 = arith.negf %647 : vector<2x32xf32>
    %649 = math.exp %648 : vector<2x32xf32>
    %cst_182 = arith.constant 1.000000e+00 : f32
    %650 = vector.broadcast %cst_182 : f32 to vector<2x32xf32>
    %651 = arith.addf %650, %649 : vector<2x32xf32>
    %652 = arith.divf %650, %651 : vector<2x32xf32>
    %653 = arith.mulf %644, %627 : vector<2x32xf32>
    %654 = arith.mulf %638, %646 : vector<2x32xf32>
    %655 = arith.addf %653, %654 : vector<2x32xf32>
    %656 = math.tanh %655 : vector<2x32xf32>
    %657 = arith.mulf %652, %656 : vector<2x32xf32>
    %cst_183 = arith.constant dense<0.000000e+00> : vector<2x2xf32>
    %658 = tpu.matmul %657, %620, %cst_183 {dimension_numbers = #tpu.dot_dimension_numbers<[1], [0], [0], [1], [0, 0, 1, 1], [], []>} : vector<2x32xf32>, vector<32x2xf32>, vector<2x2xf32> -> vector<2x2xf32>
    %659 = vector.broadcast %621 : vector<1x2xf32> to vector<2x2xf32>
    %660 = arith.addf %658, %659 : vector<2x2xf32>
    %661 = vector.broadcast %625 : vector<1x2xf32> to vector<2x2xf32>
    %662 = arith.mulf %660, %661 : vector<2x2xf32>
    %663 = vector.broadcast %624 : vector<1x2xf32> to vector<2x2xf32>
    %664 = arith.subf %662, %663 : vector<2x2xf32>
    %665 = vector.extract_strided_slice %628 {offsets = [0, 2], sizes = [2, 1], strides = [1, 1]} : vector<2x4xf32> to vector<2x1xf32>
    %666 = vector.extract_strided_slice %628 {offsets = [0, 3], sizes = [2, 1], strides = [1, 1]} : vector<2x4xf32> to vector<2x1xf32>
    %667 = vector.extract_strided_slice %664 {offsets = [0, 0], sizes = [2, 1], strides = [1, 1]} : vector<2x2xf32> to vector<2x1xf32>
    %cst_184 = arith.constant -6.000000e+00 : f32
    %cst_185 = arith.constant 6.000000e+00 : f32
    %668 = vector.broadcast %cst_184 : f32 to vector<2x1xf32>
    %669 = arith.maximumf %668, %667 : vector<2x1xf32>
    %670 = vector.broadcast %cst_185 : f32 to vector<2x1xf32>
    %671 = arith.minimumf %670, %669 : vector<2x1xf32>
    %672 = vector.extract_strided_slice %664 {offsets = [0, 1], sizes = [2, 1], strides = [1, 1]} : vector<2x2xf32> to vector<2x1xf32>
    %cst_186 = arith.constant -4.000000e+00 : f32
    %cst_187 = arith.constant 4.000000e+00 : f32
    %673 = vector.broadcast %cst_186 : f32 to vector<2x1xf32>
    %674 = arith.maximumf %673, %672 : vector<2x1xf32>
    %675 = vector.broadcast %cst_187 : f32 to vector<2x1xf32>
    %676 = arith.minimumf %675, %674 : vector<2x1xf32>
    %c0_i32 = arith.constant 0 : i32
    %677 = vector.broadcast %c0_i32 : i32 to vector<2x4xi32>
    %678 = arith.cmpi eq, %629, %677 : vector<2x4xi32>
    %679 = math.cos %666 : vector<2x1xf32>
    %680 = arith.mulf %665, %679 : vector<2x1xf32>
    %c1_i32 = arith.constant 1 : i32
    %681 = vector.broadcast %c1_i32 : i32 to vector<2x4xi32>
    %682 = arith.cmpi eq, %629, %681 : vector<2x4xi32>
    %683 = math.sin %666 : vector<2x1xf32>
    %684 = arith.mulf %665, %683 : vector<2x1xf32>
    %c2_i32 = arith.constant 2 : i32
    %685 = vector.broadcast %c2_i32 : i32 to vector<2x4xi32>
    %686 = arith.cmpi eq, %629, %685 : vector<2x4xi32>
    %687 = vector.shape_cast %671 : vector<2x1xf32> to vector<2x1xf32>
    %688 = vector.broadcast %687 : vector<2x1xf32> to vector<2x4xf32>
    %689 = vector.shape_cast %676 : vector<2x1xf32> to vector<2x1xf32>
    %690 = vector.broadcast %689 : vector<2x1xf32> to vector<2x4xf32>
    %691 = arith.select %686, %688, %690 : vector<2x4xi1>, vector<2x4xf32>
    %692 = vector.shape_cast %684 : vector<2x1xf32> to vector<2x1xf32>
    %693 = vector.broadcast %692 : vector<2x1xf32> to vector<2x4xf32>
    %694 = arith.select %682, %693, %691 : vector<2x4xi1>, vector<2x4xf32>
    %695 = vector.shape_cast %680 : vector<2x1xf32> to vector<2x1xf32>
    %696 = vector.broadcast %695 : vector<2x1xf32> to vector<2x4xf32>
    %697 = arith.select %678, %696, %694 : vector<2x4xi1>, vector<2x4xf32>
    %cst_188 = arith.constant 1.000000e-01 : f32
    %698 = vector.broadcast %cst_188 : f32 to vector<2x4xf32>
    %699 = arith.mulf %698, %697 : vector<2x4xf32>
    %700 = arith.addf %628, %699 : vector<2x4xf32>
    %c0_189 = arith.constant 0 : index
    %c0_190 = arith.constant 0 : index
    %c0_191 = arith.constant 0 : index
    %701 = vector.load %arg37[%c0_189, %c0_190, %c0_191] : memref<8x2x4xf32, #tpu.memory_space<vmem>>, vector<1x2x4xf32>
    %702 = vector.shape_cast %701 : vector<1x2x4xf32> to vector<2x4xf32>
    %703 = vector.shape_cast %700 : vector<2x4xf32> to vector<1x2x4xf32>
    tpu.vector_store %arg37[%c0_189, %c0_190, %c0_191], %703 {strides = array<i32>} : memref<8x2x4xf32, #tpu.memory_space<vmem>>, vector<1x2x4xf32>,
    %704 = vector.broadcast %622 : vector<1x4xf32> to vector<2x4xf32>
    %705 = arith.addf %700, %704 : vector<2x4xf32>
    %706 = vector.broadcast %623 : vector<1x4xf32> to vector<2x4xf32>
    %707 = arith.mulf %705, %706 : vector<2x4xf32>
    %708 = vector.extract_strided_slice %367 {offsets = [0, 0], sizes = [2, 6], strides = [1, 1]} : vector<16x6xf32> to vector<2x6xf32>
    %709 = vector.extract_strided_slice %708 {offsets = [0, 0], sizes = [2, 4], strides = [1, 1]} : vector<2x6xf32> to vector<2x4xf32>
    %710 = arith.subf %707, %709 : vector<2x4xf32>
    %711 = vector.extract_strided_slice %708 {offsets = [0, 4], sizes = [2, 2], strides = [1, 1]} : vector<2x6xf32> to vector<2x2xf32>
    %712 = arith.subf %660, %711 : vector<2x2xf32>
    %713 = arith.mulf %710, %710 : vector<2x4xf32>
    %714 = vector.shape_cast %713 : vector<2x4xf32> to vector<1x2x4xf32>
    %cst_192 = arith.constant dense<0.000000e+00> : vector<1xf32>
    %715 = vector.multi_reduction <add>, %714, %cst_192 [1, 2] : vector<1x2x4xf32> to vector<1xf32>
    %716 = vector.shape_cast %715 : vector<1xf32> to vector<1x1x1xf32>
    %717 = vector.extract %716[0, 0, 0] : f32 from vector<1x1x1xf32>
    %718 = vector.broadcast %717 : f32 to vector<1x1xf32>
    %719 = arith.addf %630, %718 : vector<1x1xf32>
    %720 = arith.mulf %712, %712 : vector<2x2xf32>
    %721 = vector.shape_cast %720 : vector<2x2xf32> to vector<1x2x2xf32>
    %cst_193 = arith.constant dense<0.000000e+00> : vector<1xf32>
    %722 = vector.multi_reduction <add>, %721, %cst_193 [1, 2] : vector<1x2x2xf32> to vector<1xf32>
    %723 = vector.shape_cast %722 : vector<1xf32> to vector<1x1x1xf32>
    %724 = vector.extract %723[0, 0, 0] : f32 from vector<1x1x1xf32>
    %725 = vector.broadcast %724 : f32 to vector<1x1xf32>
    %726 = arith.addf %719, %725 : vector<1x1xf32>
    %cst_194 = arith.constant dense<0.000000e+00> : vector<2x128xf32>
    %727 = tpu.matmul %657, %619, %cst_194 {dimension_numbers = #tpu.dot_dimension_numbers<[1], [0], [0], [1], [0, 0, 1, 1], [], []>} : vector<2x32xf32>, vector<32x128xf32>, vector<2x128xf32> -> vector<2x128xf32>
    %728 = arith.addf %618, %727 : vector<2x128xf32>
    %729 = vector.extract_strided_slice %728 {offsets = [0, 0], sizes = [2, 32], strides = [1, 1]} : vector<2x128xf32> to vector<2x32xf32>
    %730 = arith.negf %729 : vector<2x32xf32>
    %731 = math.exp %730 : vector<2x32xf32>
    %cst_195 = arith.constant 1.000000e+00 : f32
    %732 = vector.broadcast %cst_195 : f32 to vector<2x32xf32>
    %733 = arith.addf %732, %731 : vector<2x32xf32>
    %734 = arith.divf %732, %733 : vector<2x32xf32>
    %735 = vector.extract_strided_slice %728 {offsets = [0, 32], sizes = [2, 32], strides = [1, 1]} : vector<2x128xf32> to vector<2x32xf32>
    %736 = arith.negf %735 : vector<2x32xf32>
    %737 = math.exp %736 : vector<2x32xf32>
    %cst_196 = arith.constant 1.000000e+00 : f32
    %738 = vector.broadcast %cst_196 : f32 to vector<2x32xf32>
    %739 = arith.addf %738, %737 : vector<2x32xf32>
    %740 = arith.divf %738, %739 : vector<2x32xf32>
    %741 = vector.extract_strided_slice %728 {offsets = [0, 64], sizes = [2, 32], strides = [1, 1]} : vector<2x128xf32> to vector<2x32xf32>
    %742 = math.tanh %741 : vector<2x32xf32>
    %743 = vector.extract_strided_slice %728 {offsets = [0, 96], sizes = [2, 32], strides = [1, 1]} : vector<2x128xf32> to vector<2x32xf32>
    %744 = arith.negf %743 : vector<2x32xf32>
    %745 = math.exp %744 : vector<2x32xf32>
    %cst_197 = arith.constant 1.000000e+00 : f32
    %746 = vector.broadcast %cst_197 : f32 to vector<2x32xf32>
    %747 = arith.addf %746, %745 : vector<2x32xf32>
    %748 = arith.divf %746, %747 : vector<2x32xf32>
    %749 = arith.mulf %740, %655 : vector<2x32xf32>
    %750 = arith.mulf %734, %742 : vector<2x32xf32>
    %751 = arith.addf %749, %750 : vector<2x32xf32>
    %752 = math.tanh %751 : vector<2x32xf32>
    %753 = arith.mulf %748, %752 : vector<2x32xf32>
    %cst_198 = arith.constant dense<0.000000e+00> : vector<2x2xf32>
    %754 = tpu.matmul %753, %620, %cst_198 {dimension_numbers = #tpu.dot_dimension_numbers<[1], [0], [0], [1], [0, 0, 1, 1], [], []>} : vector<2x32xf32>, vector<32x2xf32>, vector<2x2xf32> -> vector<2x2xf32>
    %755 = vector.broadcast %621 : vector<1x2xf32> to vector<2x2xf32>
    %756 = arith.addf %754, %755 : vector<2x2xf32>
    %757 = vector.broadcast %625 : vector<1x2xf32> to vector<2x2xf32>
    %758 = arith.mulf %756, %757 : vector<2x2xf32>
    %759 = vector.broadcast %624 : vector<1x2xf32> to vector<2x2xf32>
    %760 = arith.subf %758, %759 : vector<2x2xf32>
    %761 = vector.extract_strided_slice %700 {offsets = [0, 2], sizes = [2, 1], strides = [1, 1]} : vector<2x4xf32> to vector<2x1xf32>
    %762 = vector.extract_strided_slice %700 {offsets = [0, 3], sizes = [2, 1], strides = [1, 1]} : vector<2x4xf32> to vector<2x1xf32>
    %763 = vector.extract_strided_slice %760 {offsets = [0, 0], sizes = [2, 1], strides = [1, 1]} : vector<2x2xf32> to vector<2x1xf32>
    %cst_199 = arith.constant -6.000000e+00 : f32
    %cst_200 = arith.constant 6.000000e+00 : f32
    %764 = vector.broadcast %cst_199 : f32 to vector<2x1xf32>
    %765 = arith.maximumf %764, %763 : vector<2x1xf32>
    %766 = vector.broadcast %cst_200 : f32 to vector<2x1xf32>
    %767 = arith.minimumf %766, %765 : vector<2x1xf32>
    %768 = vector.extract_strided_slice %760 {offsets = [0, 1], sizes = [2, 1], strides = [1, 1]} : vector<2x2xf32> to vector<2x1xf32>
    %cst_201 = arith.constant -4.000000e+00 : f32
    %cst_202 = arith.constant 4.000000e+00 : f32
    %769 = vector.broadcast %cst_201 : f32 to vector<2x1xf32>
    %770 = arith.maximumf %769, %768 : vector<2x1xf32>
    %771 = vector.broadcast %cst_202 : f32 to vector<2x1xf32>
    %772 = arith.minimumf %771, %770 : vector<2x1xf32>
    %c0_i32_203 = arith.constant 0 : i32
    %773 = vector.broadcast %c0_i32_203 : i32 to vector<2x4xi32>
    %774 = arith.cmpi eq, %629, %773 : vector<2x4xi32>
    %775 = math.cos %762 : vector<2x1xf32>
    %776 = arith.mulf %761, %775 : vector<2x1xf32>
    %c1_i32_204 = arith.constant 1 : i32
    %777 = vector.broadcast %c1_i32_204 : i32 to vector<2x4xi32>
    %778 = arith.cmpi eq, %629, %777 : vector<2x4xi32>
    %779 = math.sin %762 : vector<2x1xf32>
    %780 = arith.mulf %761, %779 : vector<2x1xf32>
    %c2_i32_205 = arith.constant 2 : i32
    %781 = vector.broadcast %c2_i32_205 : i32 to vector<2x4xi32>
    %782 = arith.cmpi eq, %629, %781 : vector<2x4xi32>
    %783 = vector.shape_cast %767 : vector<2x1xf32> to vector<2x1xf32>
    %784 = vector.broadcast %783 : vector<2x1xf32> to vector<2x4xf32>
    %785 = vector.shape_cast %772 : vector<2x1xf32> to vector<2x1xf32>
    %786 = vector.broadcast %785 : vector<2x1xf32> to vector<2x4xf32>
    %787 = arith.select %782, %784, %786 : vector<2x4xi1>, vector<2x4xf32>
    %788 = vector.shape_cast %780 : vector<2x1xf32> to vector<2x1xf32>
    %789 = vector.broadcast %788 : vector<2x1xf32> to vector<2x4xf32>
    %790 = arith.select %778, %789, %787 : vector<2x4xi1>, vector<2x4xf32>
    %791 = vector.shape_cast %776 : vector<2x1xf32> to vector<2x1xf32>
    %792 = vector.broadcast %791 : vector<2x1xf32> to vector<2x4xf32>
    %793 = arith.select %774, %792, %790 : vector<2x4xi1>, vector<2x4xf32>
    %cst_206 = arith.constant 1.000000e-01 : f32
    %794 = vector.broadcast %cst_206 : f32 to vector<2x4xf32>
    %795 = arith.mulf %794, %793 : vector<2x4xf32>
    %796 = arith.addf %700, %795 : vector<2x4xf32>
    %c1 = arith.constant 1 : index
    %c0_207 = arith.constant 0 : index
    %c0_208 = arith.constant 0 : index
    %797 = vector.load %arg37[%c1, %c0_207, %c0_208] : memref<8x2x4xf32, #tpu.memory_space<vmem>>, vector<1x2x4xf32>
    %798 = vector.shape_cast %797 : vector<1x2x4xf32> to vector<2x4xf32>
    %799 = vector.shape_cast %796 : vector<2x4xf32> to vector<1x2x4xf32>
    tpu.vector_store %arg37[%c1, %c0_207, %c0_208], %799 {strides = array<i32>} : memref<8x2x4xf32, #tpu.memory_space<vmem>>, vector<1x2x4xf32>,
    %800 = vector.broadcast %622 : vector<1x4xf32> to vector<2x4xf32>
    %801 = arith.addf %796, %800 : vector<2x4xf32>
    %802 = vector.broadcast %623 : vector<1x4xf32> to vector<2x4xf32>
    %803 = arith.mulf %801, %802 : vector<2x4xf32>
    %804 = vector.extract_strided_slice %367 {offsets = [2, 0], sizes = [2, 6], strides = [1, 1]} : vector<16x6xf32> to vector<2x6xf32>
    %805 = vector.extract_strided_slice %804 {offsets = [0, 0], sizes = [2, 4], strides = [1, 1]} : vector<2x6xf32> to vector<2x4xf32>
    %806 = arith.subf %803, %805 : vector<2x4xf32>
    %807 = vector.extract_strided_slice %804 {offsets = [0, 4], sizes = [2, 2], strides = [1, 1]} : vector<2x6xf32> to vector<2x2xf32>
    %808 = arith.subf %756, %807 : vector<2x2xf32>
    %809 = arith.mulf %806, %806 : vector<2x4xf32>
    %810 = vector.shape_cast %809 : vector<2x4xf32> to vector<1x2x4xf32>
    %cst_209 = arith.constant dense<0.000000e+00> : vector<1xf32>
    %811 = vector.multi_reduction <add>, %810, %cst_209 [1, 2] : vector<1x2x4xf32> to vector<1xf32>
    %812 = vector.shape_cast %811 : vector<1xf32> to vector<1x1x1xf32>
    %813 = vector.extract %812[0, 0, 0] : f32 from vector<1x1x1xf32>
    %814 = vector.broadcast %813 : f32 to vector<1x1xf32>
    %815 = arith.addf %726, %814 : vector<1x1xf32>
    %816 = arith.mulf %808, %808 : vector<2x2xf32>
    %817 = vector.shape_cast %816 : vector<2x2xf32> to vector<1x2x2xf32>
    %cst_210 = arith.constant dense<0.000000e+00> : vector<1xf32>
    %818 = vector.multi_reduction <add>, %817, %cst_210 [1, 2] : vector<1x2x2xf32> to vector<1xf32>
    %819 = vector.shape_cast %818 : vector<1xf32> to vector<1x1x1xf32>
    %820 = vector.extract %819[0, 0, 0] : f32 from vector<1x1x1xf32>
    %821 = vector.broadcast %820 : f32 to vector<1x1xf32>
    %822 = arith.addf %815, %821 : vector<1x1xf32>
    %cst_211 = arith.constant dense<0.000000e+00> : vector<2x128xf32>
    %823 = tpu.matmul %753, %619, %cst_211 {dimension_numbers = #tpu.dot_dimension_numbers<[1], [0], [0], [1], [0, 0, 1, 1], [], []>} : vector<2x32xf32>, vector<32x128xf32>, vector<2x128xf32> -> vector<2x128xf32>
    %824 = arith.addf %618, %823 : vector<2x128xf32>
    %825 = vector.extract_strided_slice %824 {offsets = [0, 0], sizes = [2, 32], strides = [1, 1]} : vector<2x128xf32> to vector<2x32xf32>
    %826 = arith.negf %825 : vector<2x32xf32>
    %827 = math.exp %826 : vector<2x32xf32>
    %cst_212 = arith.constant 1.000000e+00 : f32
    %828 = vector.broadcast %cst_212 : f32 to vector<2x32xf32>
    %829 = arith.addf %828, %827 : vector<2x32xf32>
    %830 = arith.divf %828, %829 : vector<2x32xf32>
    %831 = vector.extract_strided_slice %824 {offsets = [0, 32], sizes = [2, 32], strides = [1, 1]} : vector<2x128xf32> to vector<2x32xf32>
    %832 = arith.negf %831 : vector<2x32xf32>
    %833 = math.exp %832 : vector<2x32xf32>
    %cst_213 = arith.constant 1.000000e+00 : f32
    %834 = vector.broadcast %cst_213 : f32 to vector<2x32xf32>
    %835 = arith.addf %834, %833 : vector<2x32xf32>
    %836 = arith.divf %834, %835 : vector<2x32xf32>
    %837 = vector.extract_strided_slice %824 {offsets = [0, 64], sizes = [2, 32], strides = [1, 1]} : vector<2x128xf32> to vector<2x32xf32>
    %838 = math.tanh %837 : vector<2x32xf32>
    %839 = vector.extract_strided_slice %824 {offsets = [0, 96], sizes = [2, 32], strides = [1, 1]} : vector<2x128xf32> to vector<2x32xf32>
    %840 = arith.negf %839 : vector<2x32xf32>
    %841 = math.exp %840 : vector<2x32xf32>
    %cst_214 = arith.constant 1.000000e+00 : f32
    %842 = vector.broadcast %cst_214 : f32 to vector<2x32xf32>
    %843 = arith.addf %842, %841 : vector<2x32xf32>
    %844 = arith.divf %842, %843 : vector<2x32xf32>
    %845 = arith.mulf %836, %751 : vector<2x32xf32>
    %846 = arith.mulf %830, %838 : vector<2x32xf32>
    %847 = arith.addf %845, %846 : vector<2x32xf32>
    %848 = math.tanh %847 : vector<2x32xf32>
    %849 = arith.mulf %844, %848 : vector<2x32xf32>
    %cst_215 = arith.constant dense<0.000000e+00> : vector<2x2xf32>
    %850 = tpu.matmul %849, %620, %cst_215 {dimension_numbers = #tpu.dot_dimension_numbers<[1], [0], [0], [1], [0, 0, 1, 1], [], []>} : vector<2x32xf32>, vector<32x2xf32>, vector<2x2xf32> -> vector<2x2xf32>
    %851 = vector.broadcast %621 : vector<1x2xf32> to vector<2x2xf32>
    %852 = arith.addf %850, %851 : vector<2x2xf32>
    %853 = vector.broadcast %625 : vector<1x2xf32> to vector<2x2xf32>
    %854 = arith.mulf %852, %853 : vector<2x2xf32>
    %855 = vector.broadcast %624 : vector<1x2xf32> to vector<2x2xf32>
    %856 = arith.subf %854, %855 : vector<2x2xf32>
    %857 = vector.extract_strided_slice %796 {offsets = [0, 2], sizes = [2, 1], strides = [1, 1]} : vector<2x4xf32> to vector<2x1xf32>
    %858 = vector.extract_strided_slice %796 {offsets = [0, 3], sizes = [2, 1], strides = [1, 1]} : vector<2x4xf32> to vector<2x1xf32>
    %859 = vector.extract_strided_slice %856 {offsets = [0, 0], sizes = [2, 1], strides = [1, 1]} : vector<2x2xf32> to vector<2x1xf32>
    %cst_216 = arith.constant -6.000000e+00 : f32
    %cst_217 = arith.constant 6.000000e+00 : f32
    %860 = vector.broadcast %cst_216 : f32 to vector<2x1xf32>
    %861 = arith.maximumf %860, %859 : vector<2x1xf32>
    %862 = vector.broadcast %cst_217 : f32 to vector<2x1xf32>
    %863 = arith.minimumf %862, %861 : vector<2x1xf32>
    %864 = vector.extract_strided_slice %856 {offsets = [0, 1], sizes = [2, 1], strides = [1, 1]} : vector<2x2xf32> to vector<2x1xf32>
    %cst_218 = arith.constant -4.000000e+00 : f32
    %cst_219 = arith.constant 4.000000e+00 : f32
    %865 = vector.broadcast %cst_218 : f32 to vector<2x1xf32>
    %866 = arith.maximumf %865, %864 : vector<2x1xf32>
    %867 = vector.broadcast %cst_219 : f32 to vector<2x1xf32>
    %868 = arith.minimumf %867, %866 : vector<2x1xf32>
    %c0_i32_220 = arith.constant 0 : i32
    %869 = vector.broadcast %c0_i32_220 : i32 to vector<2x4xi32>
    %870 = arith.cmpi eq, %629, %869 : vector<2x4xi32>
    %871 = math.cos %858 : vector<2x1xf32>
    %872 = arith.mulf %857, %871 : vector<2x1xf32>
    %c1_i32_221 = arith.constant 1 : i32
    %873 = vector.broadcast %c1_i32_221 : i32 to vector<2x4xi32>
    %874 = arith.cmpi eq, %629, %873 : vector<2x4xi32>
    %875 = math.sin %858 : vector<2x1xf32>
    %876 = arith.mulf %857, %875 : vector<2x1xf32>
    %c2_i32_222 = arith.constant 2 : i32
    %877 = vector.broadcast %c2_i32_222 : i32 to vector<2x4xi32>
    %878 = arith.cmpi eq, %629, %877 : vector<2x4xi32>
    %879 = vector.shape_cast %863 : vector<2x1xf32> to vector<2x1xf32>
    %880 = vector.broadcast %879 : vector<2x1xf32> to vector<2x4xf32>
    %881 = vector.shape_cast %868 : vector<2x1xf32> to vector<2x1xf32>
    %882 = vector.broadcast %881 : vector<2x1xf32> to vector<2x4xf32>
    %883 = arith.select %878, %880, %882 : vector<2x4xi1>, vector<2x4xf32>
    %884 = vector.shape_cast %876 : vector<2x1xf32> to vector<2x1xf32>
    %885 = vector.broadcast %884 : vector<2x1xf32> to vector<2x4xf32>
    %886 = arith.select %874, %885, %883 : vector<2x4xi1>, vector<2x4xf32>
    %887 = vector.shape_cast %872 : vector<2x1xf32> to vector<2x1xf32>
    %888 = vector.broadcast %887 : vector<2x1xf32> to vector<2x4xf32>
    %889 = arith.select %870, %888, %886 : vector<2x4xi1>, vector<2x4xf32>
    %cst_223 = arith.constant 1.000000e-01 : f32
    %890 = vector.broadcast %cst_223 : f32 to vector<2x4xf32>
    %891 = arith.mulf %890, %889 : vector<2x4xf32>
    %892 = arith.addf %796, %891 : vector<2x4xf32>
    %c2 = arith.constant 2 : index
    %c0_224 = arith.constant 0 : index
    %c0_225 = arith.constant 0 : index
    %893 = vector.load %arg37[%c2, %c0_224, %c0_225] : memref<8x2x4xf32, #tpu.memory_space<vmem>>, vector<1x2x4xf32>
    %894 = vector.shape_cast %893 : vector<1x2x4xf32> to vector<2x4xf32>
    %895 = vector.shape_cast %892 : vector<2x4xf32> to vector<1x2x4xf32>
    tpu.vector_store %arg37[%c2, %c0_224, %c0_225], %895 {strides = array<i32>} : memref<8x2x4xf32, #tpu.memory_space<vmem>>, vector<1x2x4xf32>,
    %896 = vector.broadcast %622 : vector<1x4xf32> to vector<2x4xf32>
    %897 = arith.addf %892, %896 : vector<2x4xf32>
    %898 = vector.broadcast %623 : vector<1x4xf32> to vector<2x4xf32>
    %899 = arith.mulf %897, %898 : vector<2x4xf32>
    %900 = vector.extract_strided_slice %367 {offsets = [4, 0], sizes = [2, 6], strides = [1, 1]} : vector<16x6xf32> to vector<2x6xf32>
    %901 = vector.extract_strided_slice %900 {offsets = [0, 0], sizes = [2, 4], strides = [1, 1]} : vector<2x6xf32> to vector<2x4xf32>
    %902 = arith.subf %899, %901 : vector<2x4xf32>
    %903 = vector.extract_strided_slice %900 {offsets = [0, 4], sizes = [2, 2], strides = [1, 1]} : vector<2x6xf32> to vector<2x2xf32>
    %904 = arith.subf %852, %903 : vector<2x2xf32>
    %905 = arith.mulf %902, %902 : vector<2x4xf32>
    %906 = vector.shape_cast %905 : vector<2x4xf32> to vector<1x2x4xf32>
    %cst_226 = arith.constant dense<0.000000e+00> : vector<1xf32>
    %907 = vector.multi_reduction <add>, %906, %cst_226 [1, 2] : vector<1x2x4xf32> to vector<1xf32>
    %908 = vector.shape_cast %907 : vector<1xf32> to vector<1x1x1xf32>
    %909 = vector.extract %908[0, 0, 0] : f32 from vector<1x1x1xf32>
    %910 = vector.broadcast %909 : f32 to vector<1x1xf32>
    %911 = arith.addf %822, %910 : vector<1x1xf32>
    %912 = arith.mulf %904, %904 : vector<2x2xf32>
    %913 = vector.shape_cast %912 : vector<2x2xf32> to vector<1x2x2xf32>
    %cst_227 = arith.constant dense<0.000000e+00> : vector<1xf32>
    %914 = vector.multi_reduction <add>, %913, %cst_227 [1, 2] : vector<1x2x2xf32> to vector<1xf32>
    %915 = vector.shape_cast %914 : vector<1xf32> to vector<1x1x1xf32>
    %916 = vector.extract %915[0, 0, 0] : f32 from vector<1x1x1xf32>
    %917 = vector.broadcast %916 : f32 to vector<1x1xf32>
    %918 = arith.addf %911, %917 : vector<1x1xf32>
    %cst_228 = arith.constant dense<0.000000e+00> : vector<2x128xf32>
    %919 = tpu.matmul %849, %619, %cst_228 {dimension_numbers = #tpu.dot_dimension_numbers<[1], [0], [0], [1], [0, 0, 1, 1], [], []>} : vector<2x32xf32>, vector<32x128xf32>, vector<2x128xf32> -> vector<2x128xf32>
    %920 = arith.addf %618, %919 : vector<2x128xf32>
    %921 = vector.extract_strided_slice %920 {offsets = [0, 0], sizes = [2, 32], strides = [1, 1]} : vector<2x128xf32> to vector<2x32xf32>
    %922 = arith.negf %921 : vector<2x32xf32>
    %923 = math.exp %922 : vector<2x32xf32>
    %cst_229 = arith.constant 1.000000e+00 : f32
    %924 = vector.broadcast %cst_229 : f32 to vector<2x32xf32>
    %925 = arith.addf %924, %923 : vector<2x32xf32>
    %926 = arith.divf %924, %925 : vector<2x32xf32>
    %927 = vector.extract_strided_slice %920 {offsets = [0, 32], sizes = [2, 32], strides = [1, 1]} : vector<2x128xf32> to vector<2x32xf32>
    %928 = arith.negf %927 : vector<2x32xf32>
    %929 = math.exp %928 : vector<2x32xf32>
    %cst_230 = arith.constant 1.000000e+00 : f32
    %930 = vector.broadcast %cst_230 : f32 to vector<2x32xf32>
    %931 = arith.addf %930, %929 : vector<2x32xf32>
    %932 = arith.divf %930, %931 : vector<2x32xf32>
    %933 = vector.extract_strided_slice %920 {offsets = [0, 64], sizes = [2, 32], strides = [1, 1]} : vector<2x128xf32> to vector<2x32xf32>
    %934 = math.tanh %933 : vector<2x32xf32>
    %935 = vector.extract_strided_slice %920 {offsets = [0, 96], sizes = [2, 32], strides = [1, 1]} : vector<2x128xf32> to vector<2x32xf32>
    %936 = arith.negf %935 : vector<2x32xf32>
    %937 = math.exp %936 : vector<2x32xf32>
    %cst_231 = arith.constant 1.000000e+00 : f32
    %938 = vector.broadcast %cst_231 : f32 to vector<2x32xf32>
    %939 = arith.addf %938, %937 : vector<2x32xf32>
    %940 = arith.divf %938, %939 : vector<2x32xf32>
    %941 = arith.mulf %932, %847 : vector<2x32xf32>
    %942 = arith.mulf %926, %934 : vector<2x32xf32>
    %943 = arith.addf %941, %942 : vector<2x32xf32>
    %944 = math.tanh %943 : vector<2x32xf32>
    %945 = arith.mulf %940, %944 : vector<2x32xf32>
    %cst_232 = arith.constant dense<0.000000e+00> : vector<2x2xf32>
    %946 = tpu.matmul %945, %620, %cst_232 {dimension_numbers = #tpu.dot_dimension_numbers<[1], [0], [0], [1], [0, 0, 1, 1], [], []>} : vector<2x32xf32>, vector<32x2xf32>, vector<2x2xf32> -> vector<2x2xf32>
    %947 = vector.broadcast %621 : vector<1x2xf32> to vector<2x2xf32>
    %948 = arith.addf %946, %947 : vector<2x2xf32>
    %949 = vector.broadcast %625 : vector<1x2xf32> to vector<2x2xf32>
    %950 = arith.mulf %948, %949 : vector<2x2xf32>
    %951 = vector.broadcast %624 : vector<1x2xf32> to vector<2x2xf32>
    %952 = arith.subf %950, %951 : vector<2x2xf32>
    %953 = vector.extract_strided_slice %892 {offsets = [0, 2], sizes = [2, 1], strides = [1, 1]} : vector<2x4xf32> to vector<2x1xf32>
    %954 = vector.extract_strided_slice %892 {offsets = [0, 3], sizes = [2, 1], strides = [1, 1]} : vector<2x4xf32> to vector<2x1xf32>
    %955 = vector.extract_strided_slice %952 {offsets = [0, 0], sizes = [2, 1], strides = [1, 1]} : vector<2x2xf32> to vector<2x1xf32>
    %cst_233 = arith.constant -6.000000e+00 : f32
    %cst_234 = arith.constant 6.000000e+00 : f32
    %956 = vector.broadcast %cst_233 : f32 to vector<2x1xf32>
    %957 = arith.maximumf %956, %955 : vector<2x1xf32>
    %958 = vector.broadcast %cst_234 : f32 to vector<2x1xf32>
    %959 = arith.minimumf %958, %957 : vector<2x1xf32>
    %960 = vector.extract_strided_slice %952 {offsets = [0, 1], sizes = [2, 1], strides = [1, 1]} : vector<2x2xf32> to vector<2x1xf32>
    %cst_235 = arith.constant -4.000000e+00 : f32
    %cst_236 = arith.constant 4.000000e+00 : f32
    %961 = vector.broadcast %cst_235 : f32 to vector<2x1xf32>
    %962 = arith.maximumf %961, %960 : vector<2x1xf32>
    %963 = vector.broadcast %cst_236 : f32 to vector<2x1xf32>
    %964 = arith.minimumf %963, %962 : vector<2x1xf32>
    %c0_i32_237 = arith.constant 0 : i32
    %965 = vector.broadcast %c0_i32_237 : i32 to vector<2x4xi32>
    %966 = arith.cmpi eq, %629, %965 : vector<2x4xi32>
    %967 = math.cos %954 : vector<2x1xf32>
    %968 = arith.mulf %953, %967 : vector<2x1xf32>
    %c1_i32_238 = arith.constant 1 : i32
    %969 = vector.broadcast %c1_i32_238 : i32 to vector<2x4xi32>
    %970 = arith.cmpi eq, %629, %969 : vector<2x4xi32>
    %971 = math.sin %954 : vector<2x1xf32>
    %972 = arith.mulf %953, %971 : vector<2x1xf32>
    %c2_i32_239 = arith.constant 2 : i32
    %973 = vector.broadcast %c2_i32_239 : i32 to vector<2x4xi32>
    %974 = arith.cmpi eq, %629, %973 : vector<2x4xi32>
    %975 = vector.shape_cast %959 : vector<2x1xf32> to vector<2x1xf32>
    %976 = vector.broadcast %975 : vector<2x1xf32> to vector<2x4xf32>
    %977 = vector.shape_cast %964 : vector<2x1xf32> to vector<2x1xf32>
    %978 = vector.broadcast %977 : vector<2x1xf32> to vector<2x4xf32>
    %979 = arith.select %974, %976, %978 : vector<2x4xi1>, vector<2x4xf32>
    %980 = vector.shape_cast %972 : vector<2x1xf32> to vector<2x1xf32>
    %981 = vector.broadcast %980 : vector<2x1xf32> to vector<2x4xf32>
    %982 = arith.select %970, %981, %979 : vector<2x4xi1>, vector<2x4xf32>
    %983 = vector.shape_cast %968 : vector<2x1xf32> to vector<2x1xf32>
    %984 = vector.broadcast %983 : vector<2x1xf32> to vector<2x4xf32>
    %985 = arith.select %966, %984, %982 : vector<2x4xi1>, vector<2x4xf32>
    %cst_240 = arith.constant 1.000000e-01 : f32
    %986 = vector.broadcast %cst_240 : f32 to vector<2x4xf32>
    %987 = arith.mulf %986, %985 : vector<2x4xf32>
    %988 = arith.addf %892, %987 : vector<2x4xf32>
    %c3 = arith.constant 3 : index
    %c0_241 = arith.constant 0 : index
    %c0_242 = arith.constant 0 : index
    %989 = vector.load %arg37[%c3, %c0_241, %c0_242] : memref<8x2x4xf32, #tpu.memory_space<vmem>>, vector<1x2x4xf32>
    %990 = vector.shape_cast %989 : vector<1x2x4xf32> to vector<2x4xf32>
    %991 = vector.shape_cast %988 : vector<2x4xf32> to vector<1x2x4xf32>
    tpu.vector_store %arg37[%c3, %c0_241, %c0_242], %991 {strides = array<i32>} : memref<8x2x4xf32, #tpu.memory_space<vmem>>, vector<1x2x4xf32>,
    %992 = vector.broadcast %622 : vector<1x4xf32> to vector<2x4xf32>
    %993 = arith.addf %988, %992 : vector<2x4xf32>
    %994 = vector.broadcast %623 : vector<1x4xf32> to vector<2x4xf32>
    %995 = arith.mulf %993, %994 : vector<2x4xf32>
    %996 = vector.extract_strided_slice %367 {offsets = [6, 0], sizes = [2, 6], strides = [1, 1]} : vector<16x6xf32> to vector<2x6xf32>
    %997 = vector.extract_strided_slice %996 {offsets = [0, 0], sizes = [2, 4], strides = [1, 1]} : vector<2x6xf32> to vector<2x4xf32>
    %998 = arith.subf %995, %997 : vector<2x4xf32>
    %999 = vector.extract_strided_slice %996 {offsets = [0, 4], sizes = [2, 2], strides = [1, 1]} : vector<2x6xf32> to vector<2x2xf32>
    %1000 = arith.subf %948, %999 : vector<2x2xf32>
    %1001 = arith.mulf %998, %998 : vector<2x4xf32>
    %1002 = vector.shape_cast %1001 : vector<2x4xf32> to vector<1x2x4xf32>
    %cst_243 = arith.constant dense<0.000000e+00> : vector<1xf32>
    %1003 = vector.multi_reduction <add>, %1002, %cst_243 [1, 2] : vector<1x2x4xf32> to vector<1xf32>
    %1004 = vector.shape_cast %1003 : vector<1xf32> to vector<1x1x1xf32>
    %1005 = vector.extract %1004[0, 0, 0] : f32 from vector<1x1x1xf32>
    %1006 = vector.broadcast %1005 : f32 to vector<1x1xf32>
    %1007 = arith.addf %918, %1006 : vector<1x1xf32>
    %1008 = arith.mulf %1000, %1000 : vector<2x2xf32>
    %1009 = vector.shape_cast %1008 : vector<2x2xf32> to vector<1x2x2xf32>
    %cst_244 = arith.constant dense<0.000000e+00> : vector<1xf32>
    %1010 = vector.multi_reduction <add>, %1009, %cst_244 [1, 2] : vector<1x2x2xf32> to vector<1xf32>
    %1011 = vector.shape_cast %1010 : vector<1xf32> to vector<1x1x1xf32>
    %1012 = vector.extract %1011[0, 0, 0] : f32 from vector<1x1x1xf32>
    %1013 = vector.broadcast %1012 : f32 to vector<1x1xf32>
    %1014 = arith.addf %1007, %1013 : vector<1x1xf32>
    %cst_245 = arith.constant dense<0.000000e+00> : vector<2x128xf32>
    %1015 = tpu.matmul %945, %619, %cst_245 {dimension_numbers = #tpu.dot_dimension_numbers<[1], [0], [0], [1], [0, 0, 1, 1], [], []>} : vector<2x32xf32>, vector<32x128xf32>, vector<2x128xf32> -> vector<2x128xf32>
    %1016 = arith.addf %618, %1015 : vector<2x128xf32>
    %1017 = vector.extract_strided_slice %1016 {offsets = [0, 0], sizes = [2, 32], strides = [1, 1]} : vector<2x128xf32> to vector<2x32xf32>
    %1018 = arith.negf %1017 : vector<2x32xf32>
    %1019 = math.exp %1018 : vector<2x32xf32>
    %cst_246 = arith.constant 1.000000e+00 : f32
    %1020 = vector.broadcast %cst_246 : f32 to vector<2x32xf32>
    %1021 = arith.addf %1020, %1019 : vector<2x32xf32>
    %1022 = arith.divf %1020, %1021 : vector<2x32xf32>
    %1023 = vector.extract_strided_slice %1016 {offsets = [0, 32], sizes = [2, 32], strides = [1, 1]} : vector<2x128xf32> to vector<2x32xf32>
    %1024 = arith.negf %1023 : vector<2x32xf32>
    %1025 = math.exp %1024 : vector<2x32xf32>
    %cst_247 = arith.constant 1.000000e+00 : f32
    %1026 = vector.broadcast %cst_247 : f32 to vector<2x32xf32>
    %1027 = arith.addf %1026, %1025 : vector<2x32xf32>
    %1028 = arith.divf %1026, %1027 : vector<2x32xf32>
    %1029 = vector.extract_strided_slice %1016 {offsets = [0, 64], sizes = [2, 32], strides = [1, 1]} : vector<2x128xf32> to vector<2x32xf32>
    %1030 = math.tanh %1029 : vector<2x32xf32>
    %1031 = vector.extract_strided_slice %1016 {offsets = [0, 96], sizes = [2, 32], strides = [1, 1]} : vector<2x128xf32> to vector<2x32xf32>
    %1032 = arith.negf %1031 : vector<2x32xf32>
    %1033 = math.exp %1032 : vector<2x32xf32>
    %cst_248 = arith.constant 1.000000e+00 : f32
    %1034 = vector.broadcast %cst_248 : f32 to vector<2x32xf32>
    %1035 = arith.addf %1034, %1033 : vector<2x32xf32>
    %1036 = arith.divf %1034, %1035 : vector<2x32xf32>
    %1037 = arith.mulf %1028, %943 : vector<2x32xf32>
    %1038 = arith.mulf %1022, %1030 : vector<2x32xf32>
    %1039 = arith.addf %1037, %1038 : vector<2x32xf32>
    %1040 = math.tanh %1039 : vector<2x32xf32>
    %1041 = arith.mulf %1036, %1040 : vector<2x32xf32>
    %cst_249 = arith.constant dense<0.000000e+00> : vector<2x2xf32>
    %1042 = tpu.matmul %1041, %620, %cst_249 {dimension_numbers = #tpu.dot_dimension_numbers<[1], [0], [0], [1], [0, 0, 1, 1], [], []>} : vector<2x32xf32>, vector<32x2xf32>, vector<2x2xf32> -> vector<2x2xf32>
    %1043 = vector.broadcast %621 : vector<1x2xf32> to vector<2x2xf32>
    %1044 = arith.addf %1042, %1043 : vector<2x2xf32>
    %1045 = vector.broadcast %625 : vector<1x2xf32> to vector<2x2xf32>
    %1046 = arith.mulf %1044, %1045 : vector<2x2xf32>
    %1047 = vector.broadcast %624 : vector<1x2xf32> to vector<2x2xf32>
    %1048 = arith.subf %1046, %1047 : vector<2x2xf32>
    %1049 = vector.extract_strided_slice %988 {offsets = [0, 2], sizes = [2, 1], strides = [1, 1]} : vector<2x4xf32> to vector<2x1xf32>
    %1050 = vector.extract_strided_slice %988 {offsets = [0, 3], sizes = [2, 1], strides = [1, 1]} : vector<2x4xf32> to vector<2x1xf32>
    %1051 = vector.extract_strided_slice %1048 {offsets = [0, 0], sizes = [2, 1], strides = [1, 1]} : vector<2x2xf32> to vector<2x1xf32>
    %cst_250 = arith.constant -6.000000e+00 : f32
    %cst_251 = arith.constant 6.000000e+00 : f32
    %1052 = vector.broadcast %cst_250 : f32 to vector<2x1xf32>
    %1053 = arith.maximumf %1052, %1051 : vector<2x1xf32>
    %1054 = vector.broadcast %cst_251 : f32 to vector<2x1xf32>
    %1055 = arith.minimumf %1054, %1053 : vector<2x1xf32>
    %1056 = vector.extract_strided_slice %1048 {offsets = [0, 1], sizes = [2, 1], strides = [1, 1]} : vector<2x2xf32> to vector<2x1xf32>
    %cst_252 = arith.constant -4.000000e+00 : f32
    %cst_253 = arith.constant 4.000000e+00 : f32
    %1057 = vector.broadcast %cst_252 : f32 to vector<2x1xf32>
    %1058 = arith.maximumf %1057, %1056 : vector<2x1xf32>
    %1059 = vector.broadcast %cst_253 : f32 to vector<2x1xf32>
    %1060 = arith.minimumf %1059, %1058 : vector<2x1xf32>
    %c0_i32_254 = arith.constant 0 : i32
    %1061 = vector.broadcast %c0_i32_254 : i32 to vector<2x4xi32>
    %1062 = arith.cmpi eq, %629, %1061 : vector<2x4xi32>
    %1063 = math.cos %1050 : vector<2x1xf32>
    %1064 = arith.mulf %1049, %1063 : vector<2x1xf32>
    %c1_i32_255 = arith.constant 1 : i32
    %1065 = vector.broadcast %c1_i32_255 : i32 to vector<2x4xi32>
    %1066 = arith.cmpi eq, %629, %1065 : vector<2x4xi32>
    %1067 = math.sin %1050 : vector<2x1xf32>
    %1068 = arith.mulf %1049, %1067 : vector<2x1xf32>
    %c2_i32_256 = arith.constant 2 : i32
    %1069 = vector.broadcast %c2_i32_256 : i32 to vector<2x4xi32>
    %1070 = arith.cmpi eq, %629, %1069 : vector<2x4xi32>
    %1071 = vector.shape_cast %1055 : vector<2x1xf32> to vector<2x1xf32>
    %1072 = vector.broadcast %1071 : vector<2x1xf32> to vector<2x4xf32>
    %1073 = vector.shape_cast %1060 : vector<2x1xf32> to vector<2x1xf32>
    %1074 = vector.broadcast %1073 : vector<2x1xf32> to vector<2x4xf32>
    %1075 = arith.select %1070, %1072, %1074 : vector<2x4xi1>, vector<2x4xf32>
    %1076 = vector.shape_cast %1068 : vector<2x1xf32> to vector<2x1xf32>
    %1077 = vector.broadcast %1076 : vector<2x1xf32> to vector<2x4xf32>
    %1078 = arith.select %1066, %1077, %1075 : vector<2x4xi1>, vector<2x4xf32>
    %1079 = vector.shape_cast %1064 : vector<2x1xf32> to vector<2x1xf32>
    %1080 = vector.broadcast %1079 : vector<2x1xf32> to vector<2x4xf32>
    %1081 = arith.select %1062, %1080, %1078 : vector<2x4xi1>, vector<2x4xf32>
    %cst_257 = arith.constant 1.000000e-01 : f32
    %1082 = vector.broadcast %cst_257 : f32 to vector<2x4xf32>
    %1083 = arith.mulf %1082, %1081 : vector<2x4xf32>
    %1084 = arith.addf %988, %1083 : vector<2x4xf32>
    %c4 = arith.constant 4 : index
    %c0_258 = arith.constant 0 : index
    %c0_259 = arith.constant 0 : index
    %1085 = vector.load %arg37[%c4, %c0_258, %c0_259] : memref<8x2x4xf32, #tpu.memory_space<vmem>>, vector<1x2x4xf32>
    %1086 = vector.shape_cast %1085 : vector<1x2x4xf32> to vector<2x4xf32>
    %1087 = vector.shape_cast %1084 : vector<2x4xf32> to vector<1x2x4xf32>
    tpu.vector_store %arg37[%c4, %c0_258, %c0_259], %1087 {strides = array<i32>} : memref<8x2x4xf32, #tpu.memory_space<vmem>>, vector<1x2x4xf32>,
    %1088 = vector.broadcast %622 : vector<1x4xf32> to vector<2x4xf32>
    %1089 = arith.addf %1084, %1088 : vector<2x4xf32>
    %1090 = vector.broadcast %623 : vector<1x4xf32> to vector<2x4xf32>
    %1091 = arith.mulf %1089, %1090 : vector<2x4xf32>
    %1092 = vector.extract_strided_slice %367 {offsets = [8, 0], sizes = [2, 6], strides = [1, 1]} : vector<16x6xf32> to vector<2x6xf32>
    %1093 = vector.extract_strided_slice %1092 {offsets = [0, 0], sizes = [2, 4], strides = [1, 1]} : vector<2x6xf32> to vector<2x4xf32>
    %1094 = arith.subf %1091, %1093 : vector<2x4xf32>
    %1095 = vector.extract_strided_slice %1092 {offsets = [0, 4], sizes = [2, 2], strides = [1, 1]} : vector<2x6xf32> to vector<2x2xf32>
    %1096 = arith.subf %1044, %1095 : vector<2x2xf32>
    %1097 = arith.mulf %1094, %1094 : vector<2x4xf32>
    %1098 = vector.shape_cast %1097 : vector<2x4xf32> to vector<1x2x4xf32>
    %cst_260 = arith.constant dense<0.000000e+00> : vector<1xf32>
    %1099 = vector.multi_reduction <add>, %1098, %cst_260 [1, 2] : vector<1x2x4xf32> to vector<1xf32>
    %1100 = vector.shape_cast %1099 : vector<1xf32> to vector<1x1x1xf32>
    %1101 = vector.extract %1100[0, 0, 0] : f32 from vector<1x1x1xf32>
    %1102 = vector.broadcast %1101 : f32 to vector<1x1xf32>
    %1103 = arith.addf %1014, %1102 : vector<1x1xf32>
    %1104 = arith.mulf %1096, %1096 : vector<2x2xf32>
    %1105 = vector.shape_cast %1104 : vector<2x2xf32> to vector<1x2x2xf32>
    %cst_261 = arith.constant dense<0.000000e+00> : vector<1xf32>
    %1106 = vector.multi_reduction <add>, %1105, %cst_261 [1, 2] : vector<1x2x2xf32> to vector<1xf32>
    %1107 = vector.shape_cast %1106 : vector<1xf32> to vector<1x1x1xf32>
    %1108 = vector.extract %1107[0, 0, 0] : f32 from vector<1x1x1xf32>
    %1109 = vector.broadcast %1108 : f32 to vector<1x1xf32>
    %1110 = arith.addf %1103, %1109 : vector<1x1xf32>
    %cst_262 = arith.constant dense<0.000000e+00> : vector<2x128xf32>
    %1111 = tpu.matmul %1041, %619, %cst_262 {dimension_numbers = #tpu.dot_dimension_numbers<[1], [0], [0], [1], [0, 0, 1, 1], [], []>} : vector<2x32xf32>, vector<32x128xf32>, vector<2x128xf32> -> vector<2x128xf32>
    %1112 = arith.addf %618, %1111 : vector<2x128xf32>
    %1113 = vector.extract_strided_slice %1112 {offsets = [0, 0], sizes = [2, 32], strides = [1, 1]} : vector<2x128xf32> to vector<2x32xf32>
    %1114 = arith.negf %1113 : vector<2x32xf32>
    %1115 = math.exp %1114 : vector<2x32xf32>
    %cst_263 = arith.constant 1.000000e+00 : f32
    %1116 = vector.broadcast %cst_263 : f32 to vector<2x32xf32>
    %1117 = arith.addf %1116, %1115 : vector<2x32xf32>
    %1118 = arith.divf %1116, %1117 : vector<2x32xf32>
    %1119 = vector.extract_strided_slice %1112 {offsets = [0, 32], sizes = [2, 32], strides = [1, 1]} : vector<2x128xf32> to vector<2x32xf32>
    %1120 = arith.negf %1119 : vector<2x32xf32>
    %1121 = math.exp %1120 : vector<2x32xf32>
    %cst_264 = arith.constant 1.000000e+00 : f32
    %1122 = vector.broadcast %cst_264 : f32 to vector<2x32xf32>
    %1123 = arith.addf %1122, %1121 : vector<2x32xf32>
    %1124 = arith.divf %1122, %1123 : vector<2x32xf32>
    %1125 = vector.extract_strided_slice %1112 {offsets = [0, 64], sizes = [2, 32], strides = [1, 1]} : vector<2x128xf32> to vector<2x32xf32>
    %1126 = math.tanh %1125 : vector<2x32xf32>
    %1127 = vector.extract_strided_slice %1112 {offsets = [0, 96], sizes = [2, 32], strides = [1, 1]} : vector<2x128xf32> to vector<2x32xf32>
    %1128 = arith.negf %1127 : vector<2x32xf32>
    %1129 = math.exp %1128 : vector<2x32xf32>
    %cst_265 = arith.constant 1.000000e+00 : f32
    %1130 = vector.broadcast %cst_265 : f32 to vector<2x32xf32>
    %1131 = arith.addf %1130, %1129 : vector<2x32xf32>
    %1132 = arith.divf %1130, %1131 : vector<2x32xf32>
    %1133 = arith.mulf %1124, %1039 : vector<2x32xf32>
    %1134 = arith.mulf %1118, %1126 : vector<2x32xf32>
    %1135 = arith.addf %1133, %1134 : vector<2x32xf32>
    %1136 = math.tanh %1135 : vector<2x32xf32>
    %1137 = arith.mulf %1132, %1136 : vector<2x32xf32>
    %cst_266 = arith.constant dense<0.000000e+00> : vector<2x2xf32>
    %1138 = tpu.matmul %1137, %620, %cst_266 {dimension_numbers = #tpu.dot_dimension_numbers<[1], [0], [0], [1], [0, 0, 1, 1], [], []>} : vector<2x32xf32>, vector<32x2xf32>, vector<2x2xf32> -> vector<2x2xf32>
    %1139 = vector.broadcast %621 : vector<1x2xf32> to vector<2x2xf32>
    %1140 = arith.addf %1138, %1139 : vector<2x2xf32>
    %1141 = vector.broadcast %625 : vector<1x2xf32> to vector<2x2xf32>
    %1142 = arith.mulf %1140, %1141 : vector<2x2xf32>
    %1143 = vector.broadcast %624 : vector<1x2xf32> to vector<2x2xf32>
    %1144 = arith.subf %1142, %1143 : vector<2x2xf32>
    %1145 = vector.extract_strided_slice %1084 {offsets = [0, 2], sizes = [2, 1], strides = [1, 1]} : vector<2x4xf32> to vector<2x1xf32>
    %1146 = vector.extract_strided_slice %1084 {offsets = [0, 3], sizes = [2, 1], strides = [1, 1]} : vector<2x4xf32> to vector<2x1xf32>
    %1147 = vector.extract_strided_slice %1144 {offsets = [0, 0], sizes = [2, 1], strides = [1, 1]} : vector<2x2xf32> to vector<2x1xf32>
    %cst_267 = arith.constant -6.000000e+00 : f32
    %cst_268 = arith.constant 6.000000e+00 : f32
    %1148 = vector.broadcast %cst_267 : f32 to vector<2x1xf32>
    %1149 = arith.maximumf %1148, %1147 : vector<2x1xf32>
    %1150 = vector.broadcast %cst_268 : f32 to vector<2x1xf32>
    %1151 = arith.minimumf %1150, %1149 : vector<2x1xf32>
    %1152 = vector.extract_strided_slice %1144 {offsets = [0, 1], sizes = [2, 1], strides = [1, 1]} : vector<2x2xf32> to vector<2x1xf32>
    %cst_269 = arith.constant -4.000000e+00 : f32
    %cst_270 = arith.constant 4.000000e+00 : f32
    %1153 = vector.broadcast %cst_269 : f32 to vector<2x1xf32>
    %1154 = arith.maximumf %1153, %1152 : vector<2x1xf32>
    %1155 = vector.broadcast %cst_270 : f32 to vector<2x1xf32>
    %1156 = arith.minimumf %1155, %1154 : vector<2x1xf32>
    %c0_i32_271 = arith.constant 0 : i32
    %1157 = vector.broadcast %c0_i32_271 : i32 to vector<2x4xi32>
    %1158 = arith.cmpi eq, %629, %1157 : vector<2x4xi32>
    %1159 = math.cos %1146 : vector<2x1xf32>
    %1160 = arith.mulf %1145, %1159 : vector<2x1xf32>
    %c1_i32_272 = arith.constant 1 : i32
    %1161 = vector.broadcast %c1_i32_272 : i32 to vector<2x4xi32>
    %1162 = arith.cmpi eq, %629, %1161 : vector<2x4xi32>
    %1163 = math.sin %1146 : vector<2x1xf32>
    %1164 = arith.mulf %1145, %1163 : vector<2x1xf32>
    %c2_i32_273 = arith.constant 2 : i32
    %1165 = vector.broadcast %c2_i32_273 : i32 to vector<2x4xi32>
    %1166 = arith.cmpi eq, %629, %1165 : vector<2x4xi32>
    %1167 = vector.shape_cast %1151 : vector<2x1xf32> to vector<2x1xf32>
    %1168 = vector.broadcast %1167 : vector<2x1xf32> to vector<2x4xf32>
    %1169 = vector.shape_cast %1156 : vector<2x1xf32> to vector<2x1xf32>
    %1170 = vector.broadcast %1169 : vector<2x1xf32> to vector<2x4xf32>
    %1171 = arith.select %1166, %1168, %1170 : vector<2x4xi1>, vector<2x4xf32>
    %1172 = vector.shape_cast %1164 : vector<2x1xf32> to vector<2x1xf32>
    %1173 = vector.broadcast %1172 : vector<2x1xf32> to vector<2x4xf32>
    %1174 = arith.select %1162, %1173, %1171 : vector<2x4xi1>, vector<2x4xf32>
    %1175 = vector.shape_cast %1160 : vector<2x1xf32> to vector<2x1xf32>
    %1176 = vector.broadcast %1175 : vector<2x1xf32> to vector<2x4xf32>
    %1177 = arith.select %1158, %1176, %1174 : vector<2x4xi1>, vector<2x4xf32>
    %cst_274 = arith.constant 1.000000e-01 : f32
    %1178 = vector.broadcast %cst_274 : f32 to vector<2x4xf32>
    %1179 = arith.mulf %1178, %1177 : vector<2x4xf32>
    %1180 = arith.addf %1084, %1179 : vector<2x4xf32>
    %c5 = arith.constant 5 : index
    %c0_275 = arith.constant 0 : index
    %c0_276 = arith.constant 0 : index
    %1181 = vector.load %arg37[%c5, %c0_275, %c0_276] : memref<8x2x4xf32, #tpu.memory_space<vmem>>, vector<1x2x4xf32>
    %1182 = vector.shape_cast %1181 : vector<1x2x4xf32> to vector<2x4xf32>
    %1183 = vector.shape_cast %1180 : vector<2x4xf32> to vector<1x2x4xf32>
    tpu.vector_store %arg37[%c5, %c0_275, %c0_276], %1183 {strides = array<i32>} : memref<8x2x4xf32, #tpu.memory_space<vmem>>, vector<1x2x4xf32>,
    %1184 = vector.broadcast %622 : vector<1x4xf32> to vector<2x4xf32>
    %1185 = arith.addf %1180, %1184 : vector<2x4xf32>
    %1186 = vector.broadcast %623 : vector<1x4xf32> to vector<2x4xf32>
    %1187 = arith.mulf %1185, %1186 : vector<2x4xf32>
    %1188 = vector.extract_strided_slice %367 {offsets = [10, 0], sizes = [2, 6], strides = [1, 1]} : vector<16x6xf32> to vector<2x6xf32>
    %1189 = vector.extract_strided_slice %1188 {offsets = [0, 0], sizes = [2, 4], strides = [1, 1]} : vector<2x6xf32> to vector<2x4xf32>
    %1190 = arith.subf %1187, %1189 : vector<2x4xf32>
    %1191 = vector.extract_strided_slice %1188 {offsets = [0, 4], sizes = [2, 2], strides = [1, 1]} : vector<2x6xf32> to vector<2x2xf32>
    %1192 = arith.subf %1140, %1191 : vector<2x2xf32>
    %1193 = arith.mulf %1190, %1190 : vector<2x4xf32>
    %1194 = vector.shape_cast %1193 : vector<2x4xf32> to vector<1x2x4xf32>
    %cst_277 = arith.constant dense<0.000000e+00> : vector<1xf32>
    %1195 = vector.multi_reduction <add>, %1194, %cst_277 [1, 2] : vector<1x2x4xf32> to vector<1xf32>
    %1196 = vector.shape_cast %1195 : vector<1xf32> to vector<1x1x1xf32>
    %1197 = vector.extract %1196[0, 0, 0] : f32 from vector<1x1x1xf32>
    %1198 = vector.broadcast %1197 : f32 to vector<1x1xf32>
    %1199 = arith.addf %1110, %1198 : vector<1x1xf32>
    %1200 = arith.mulf %1192, %1192 : vector<2x2xf32>
    %1201 = vector.shape_cast %1200 : vector<2x2xf32> to vector<1x2x2xf32>
    %cst_278 = arith.constant dense<0.000000e+00> : vector<1xf32>
    %1202 = vector.multi_reduction <add>, %1201, %cst_278 [1, 2] : vector<1x2x2xf32> to vector<1xf32>
    %1203 = vector.shape_cast %1202 : vector<1xf32> to vector<1x1x1xf32>
    %1204 = vector.extract %1203[0, 0, 0] : f32 from vector<1x1x1xf32>
    %1205 = vector.broadcast %1204 : f32 to vector<1x1xf32>
    %1206 = arith.addf %1199, %1205 : vector<1x1xf32>
    %cst_279 = arith.constant dense<0.000000e+00> : vector<2x128xf32>
    %1207 = tpu.matmul %1137, %619, %cst_279 {dimension_numbers = #tpu.dot_dimension_numbers<[1], [0], [0], [1], [0, 0, 1, 1], [], []>} : vector<2x32xf32>, vector<32x128xf32>, vector<2x128xf32> -> vector<2x128xf32>
    %1208 = arith.addf %618, %1207 : vector<2x128xf32>
    %1209 = vector.extract_strided_slice %1208 {offsets = [0, 0], sizes = [2, 32], strides = [1, 1]} : vector<2x128xf32> to vector<2x32xf32>
    %1210 = arith.negf %1209 : vector<2x32xf32>
    %1211 = math.exp %1210 : vector<2x32xf32>
    %cst_280 = arith.constant 1.000000e+00 : f32
    %1212 = vector.broadcast %cst_280 : f32 to vector<2x32xf32>
    %1213 = arith.addf %1212, %1211 : vector<2x32xf32>
    %1214 = arith.divf %1212, %1213 : vector<2x32xf32>
    %1215 = vector.extract_strided_slice %1208 {offsets = [0, 32], sizes = [2, 32], strides = [1, 1]} : vector<2x128xf32> to vector<2x32xf32>
    %1216 = arith.negf %1215 : vector<2x32xf32>
    %1217 = math.exp %1216 : vector<2x32xf32>
    %cst_281 = arith.constant 1.000000e+00 : f32
    %1218 = vector.broadcast %cst_281 : f32 to vector<2x32xf32>
    %1219 = arith.addf %1218, %1217 : vector<2x32xf32>
    %1220 = arith.divf %1218, %1219 : vector<2x32xf32>
    %1221 = vector.extract_strided_slice %1208 {offsets = [0, 64], sizes = [2, 32], strides = [1, 1]} : vector<2x128xf32> to vector<2x32xf32>
    %1222 = math.tanh %1221 : vector<2x32xf32>
    %1223 = vector.extract_strided_slice %1208 {offsets = [0, 96], sizes = [2, 32], strides = [1, 1]} : vector<2x128xf32> to vector<2x32xf32>
    %1224 = arith.negf %1223 : vector<2x32xf32>
    %1225 = math.exp %1224 : vector<2x32xf32>
    %cst_282 = arith.constant 1.000000e+00 : f32
    %1226 = vector.broadcast %cst_282 : f32 to vector<2x32xf32>
    %1227 = arith.addf %1226, %1225 : vector<2x32xf32>
    %1228 = arith.divf %1226, %1227 : vector<2x32xf32>
    %1229 = arith.mulf %1220, %1135 : vector<2x32xf32>
    %1230 = arith.mulf %1214, %1222 : vector<2x32xf32>
    %1231 = arith.addf %1229, %1230 : vector<2x32xf32>
    %1232 = math.tanh %1231 : vector<2x32xf32>
    %1233 = arith.mulf %1228, %1232 : vector<2x32xf32>
    %cst_283 = arith.constant dense<0.000000e+00> : vector<2x2xf32>
    %1234 = tpu.matmul %1233, %620, %cst_283 {dimension_numbers = #tpu.dot_dimension_numbers<[1], [0], [0], [1], [0, 0, 1, 1], [], []>} : vector<2x32xf32>, vector<32x2xf32>, vector<2x2xf32> -> vector<2x2xf32>
    %1235 = vector.broadcast %621 : vector<1x2xf32> to vector<2x2xf32>
    %1236 = arith.addf %1234, %1235 : vector<2x2xf32>
    %1237 = vector.broadcast %625 : vector<1x2xf32> to vector<2x2xf32>
    %1238 = arith.mulf %1236, %1237 : vector<2x2xf32>
    %1239 = vector.broadcast %624 : vector<1x2xf32> to vector<2x2xf32>
    %1240 = arith.subf %1238, %1239 : vector<2x2xf32>
    %1241 = vector.extract_strided_slice %1180 {offsets = [0, 2], sizes = [2, 1], strides = [1, 1]} : vector<2x4xf32> to vector<2x1xf32>
    %1242 = vector.extract_strided_slice %1180 {offsets = [0, 3], sizes = [2, 1], strides = [1, 1]} : vector<2x4xf32> to vector<2x1xf32>
    %1243 = vector.extract_strided_slice %1240 {offsets = [0, 0], sizes = [2, 1], strides = [1, 1]} : vector<2x2xf32> to vector<2x1xf32>
    %cst_284 = arith.constant -6.000000e+00 : f32
    %cst_285 = arith.constant 6.000000e+00 : f32
    %1244 = vector.broadcast %cst_284 : f32 to vector<2x1xf32>
    %1245 = arith.maximumf %1244, %1243 : vector<2x1xf32>
    %1246 = vector.broadcast %cst_285 : f32 to vector<2x1xf32>
    %1247 = arith.minimumf %1246, %1245 : vector<2x1xf32>
    %1248 = vector.extract_strided_slice %1240 {offsets = [0, 1], sizes = [2, 1], strides = [1, 1]} : vector<2x2xf32> to vector<2x1xf32>
    %cst_286 = arith.constant -4.000000e+00 : f32
    %cst_287 = arith.constant 4.000000e+00 : f32
    %1249 = vector.broadcast %cst_286 : f32 to vector<2x1xf32>
    %1250 = arith.maximumf %1249, %1248 : vector<2x1xf32>
    %1251 = vector.broadcast %cst_287 : f32 to vector<2x1xf32>
    %1252 = arith.minimumf %1251, %1250 : vector<2x1xf32>
    %c0_i32_288 = arith.constant 0 : i32
    %1253 = vector.broadcast %c0_i32_288 : i32 to vector<2x4xi32>
    %1254 = arith.cmpi eq, %629, %1253 : vector<2x4xi32>
    %1255 = math.cos %1242 : vector<2x1xf32>
    %1256 = arith.mulf %1241, %1255 : vector<2x1xf32>
    %c1_i32_289 = arith.constant 1 : i32
    %1257 = vector.broadcast %c1_i32_289 : i32 to vector<2x4xi32>
    %1258 = arith.cmpi eq, %629, %1257 : vector<2x4xi32>
    %1259 = math.sin %1242 : vector<2x1xf32>
    %1260 = arith.mulf %1241, %1259 : vector<2x1xf32>
    %c2_i32_290 = arith.constant 2 : i32
    %1261 = vector.broadcast %c2_i32_290 : i32 to vector<2x4xi32>
    %1262 = arith.cmpi eq, %629, %1261 : vector<2x4xi32>
    %1263 = vector.shape_cast %1247 : vector<2x1xf32> to vector<2x1xf32>
    %1264 = vector.broadcast %1263 : vector<2x1xf32> to vector<2x4xf32>
    %1265 = vector.shape_cast %1252 : vector<2x1xf32> to vector<2x1xf32>
    %1266 = vector.broadcast %1265 : vector<2x1xf32> to vector<2x4xf32>
    %1267 = arith.select %1262, %1264, %1266 : vector<2x4xi1>, vector<2x4xf32>
    %1268 = vector.shape_cast %1260 : vector<2x1xf32> to vector<2x1xf32>
    %1269 = vector.broadcast %1268 : vector<2x1xf32> to vector<2x4xf32>
    %1270 = arith.select %1258, %1269, %1267 : vector<2x4xi1>, vector<2x4xf32>
    %1271 = vector.shape_cast %1256 : vector<2x1xf32> to vector<2x1xf32>
    %1272 = vector.broadcast %1271 : vector<2x1xf32> to vector<2x4xf32>
    %1273 = arith.select %1254, %1272, %1270 : vector<2x4xi1>, vector<2x4xf32>
    %cst_291 = arith.constant 1.000000e-01 : f32
    %1274 = vector.broadcast %cst_291 : f32 to vector<2x4xf32>
    %1275 = arith.mulf %1274, %1273 : vector<2x4xf32>
    %1276 = arith.addf %1180, %1275 : vector<2x4xf32>
    %c6 = arith.constant 6 : index
    %c0_292 = arith.constant 0 : index
    %c0_293 = arith.constant 0 : index
    %1277 = vector.load %arg37[%c6, %c0_292, %c0_293] : memref<8x2x4xf32, #tpu.memory_space<vmem>>, vector<1x2x4xf32>
    %1278 = vector.shape_cast %1277 : vector<1x2x4xf32> to vector<2x4xf32>
    %1279 = vector.shape_cast %1276 : vector<2x4xf32> to vector<1x2x4xf32>
    tpu.vector_store %arg37[%c6, %c0_292, %c0_293], %1279 {strides = array<i32>} : memref<8x2x4xf32, #tpu.memory_space<vmem>>, vector<1x2x4xf32>,
    %1280 = vector.broadcast %622 : vector<1x4xf32> to vector<2x4xf32>
    %1281 = arith.addf %1276, %1280 : vector<2x4xf32>
    %1282 = vector.broadcast %623 : vector<1x4xf32> to vector<2x4xf32>
    %1283 = arith.mulf %1281, %1282 : vector<2x4xf32>
    %1284 = vector.extract_strided_slice %367 {offsets = [12, 0], sizes = [2, 6], strides = [1, 1]} : vector<16x6xf32> to vector<2x6xf32>
    %1285 = vector.extract_strided_slice %1284 {offsets = [0, 0], sizes = [2, 4], strides = [1, 1]} : vector<2x6xf32> to vector<2x4xf32>
    %1286 = arith.subf %1283, %1285 : vector<2x4xf32>
    %1287 = vector.extract_strided_slice %1284 {offsets = [0, 4], sizes = [2, 2], strides = [1, 1]} : vector<2x6xf32> to vector<2x2xf32>
    %1288 = arith.subf %1236, %1287 : vector<2x2xf32>
    %1289 = arith.mulf %1286, %1286 : vector<2x4xf32>
    %1290 = vector.shape_cast %1289 : vector<2x4xf32> to vector<1x2x4xf32>
    %cst_294 = arith.constant dense<0.000000e+00> : vector<1xf32>
    %1291 = vector.multi_reduction <add>, %1290, %cst_294 [1, 2] : vector<1x2x4xf32> to vector<1xf32>
    %1292 = vector.shape_cast %1291 : vector<1xf32> to vector<1x1x1xf32>
    %1293 = vector.extract %1292[0, 0, 0] : f32 from vector<1x1x1xf32>
    %1294 = vector.broadcast %1293 : f32 to vector<1x1xf32>
    %1295 = arith.addf %1206, %1294 : vector<1x1xf32>
    %1296 = arith.mulf %1288, %1288 : vector<2x2xf32>
    %1297 = vector.shape_cast %1296 : vector<2x2xf32> to vector<1x2x2xf32>
    %cst_295 = arith.constant dense<0.000000e+00> : vector<1xf32>
    %1298 = vector.multi_reduction <add>, %1297, %cst_295 [1, 2] : vector<1x2x2xf32> to vector<1xf32>
    %1299 = vector.shape_cast %1298 : vector<1xf32> to vector<1x1x1xf32>
    %1300 = vector.extract %1299[0, 0, 0] : f32 from vector<1x1x1xf32>
    %1301 = vector.broadcast %1300 : f32 to vector<1x1xf32>
    %1302 = arith.addf %1295, %1301 : vector<1x1xf32>
    %cst_296 = arith.constant dense<0.000000e+00> : vector<2x128xf32>
    %1303 = tpu.matmul %1233, %619, %cst_296 {dimension_numbers = #tpu.dot_dimension_numbers<[1], [0], [0], [1], [0, 0, 1, 1], [], []>} : vector<2x32xf32>, vector<32x128xf32>, vector<2x128xf32> -> vector<2x128xf32>
    %1304 = arith.addf %618, %1303 : vector<2x128xf32>
    %1305 = vector.extract_strided_slice %1304 {offsets = [0, 0], sizes = [2, 32], strides = [1, 1]} : vector<2x128xf32> to vector<2x32xf32>
    %1306 = arith.negf %1305 : vector<2x32xf32>
    %1307 = math.exp %1306 : vector<2x32xf32>
    %cst_297 = arith.constant 1.000000e+00 : f32
    %1308 = vector.broadcast %cst_297 : f32 to vector<2x32xf32>
    %1309 = arith.addf %1308, %1307 : vector<2x32xf32>
    %1310 = arith.divf %1308, %1309 : vector<2x32xf32>
    %1311 = vector.extract_strided_slice %1304 {offsets = [0, 32], sizes = [2, 32], strides = [1, 1]} : vector<2x128xf32> to vector<2x32xf32>
    %1312 = arith.negf %1311 : vector<2x32xf32>
    %1313 = math.exp %1312 : vector<2x32xf32>
    %cst_298 = arith.constant 1.000000e+00 : f32
    %1314 = vector.broadcast %cst_298 : f32 to vector<2x32xf32>
    %1315 = arith.addf %1314, %1313 : vector<2x32xf32>
    %1316 = arith.divf %1314, %1315 : vector<2x32xf32>
    %1317 = vector.extract_strided_slice %1304 {offsets = [0, 64], sizes = [2, 32], strides = [1, 1]} : vector<2x128xf32> to vector<2x32xf32>
    %1318 = math.tanh %1317 : vector<2x32xf32>
    %1319 = vector.extract_strided_slice %1304 {offsets = [0, 96], sizes = [2, 32], strides = [1, 1]} : vector<2x128xf32> to vector<2x32xf32>
    %1320 = arith.negf %1319 : vector<2x32xf32>
    %1321 = math.exp %1320 : vector<2x32xf32>
    %cst_299 = arith.constant 1.000000e+00 : f32
    %1322 = vector.broadcast %cst_299 : f32 to vector<2x32xf32>
    %1323 = arith.addf %1322, %1321 : vector<2x32xf32>
    %1324 = arith.divf %1322, %1323 : vector<2x32xf32>
    %1325 = arith.mulf %1316, %1231 : vector<2x32xf32>
    %1326 = arith.mulf %1310, %1318 : vector<2x32xf32>
    %1327 = arith.addf %1325, %1326 : vector<2x32xf32>
    %1328 = math.tanh %1327 : vector<2x32xf32>
    %1329 = arith.mulf %1324, %1328 : vector<2x32xf32>
    %cst_300 = arith.constant dense<0.000000e+00> : vector<2x2xf32>
    %1330 = tpu.matmul %1329, %620, %cst_300 {dimension_numbers = #tpu.dot_dimension_numbers<[1], [0], [0], [1], [0, 0, 1, 1], [], []>} : vector<2x32xf32>, vector<32x2xf32>, vector<2x2xf32> -> vector<2x2xf32>
    %1331 = vector.broadcast %621 : vector<1x2xf32> to vector<2x2xf32>
    %1332 = arith.addf %1330, %1331 : vector<2x2xf32>
    %1333 = vector.broadcast %625 : vector<1x2xf32> to vector<2x2xf32>
    %1334 = arith.mulf %1332, %1333 : vector<2x2xf32>
    %1335 = vector.broadcast %624 : vector<1x2xf32> to vector<2x2xf32>
    %1336 = arith.subf %1334, %1335 : vector<2x2xf32>
    %1337 = vector.extract_strided_slice %1276 {offsets = [0, 2], sizes = [2, 1], strides = [1, 1]} : vector<2x4xf32> to vector<2x1xf32>
    %1338 = vector.extract_strided_slice %1276 {offsets = [0, 3], sizes = [2, 1], strides = [1, 1]} : vector<2x4xf32> to vector<2x1xf32>
    %1339 = vector.extract_strided_slice %1336 {offsets = [0, 0], sizes = [2, 1], strides = [1, 1]} : vector<2x2xf32> to vector<2x1xf32>
    %cst_301 = arith.constant -6.000000e+00 : f32
    %cst_302 = arith.constant 6.000000e+00 : f32
    %1340 = vector.broadcast %cst_301 : f32 to vector<2x1xf32>
    %1341 = arith.maximumf %1340, %1339 : vector<2x1xf32>
    %1342 = vector.broadcast %cst_302 : f32 to vector<2x1xf32>
    %1343 = arith.minimumf %1342, %1341 : vector<2x1xf32>
    %1344 = vector.extract_strided_slice %1336 {offsets = [0, 1], sizes = [2, 1], strides = [1, 1]} : vector<2x2xf32> to vector<2x1xf32>
    %cst_303 = arith.constant -4.000000e+00 : f32
    %cst_304 = arith.constant 4.000000e+00 : f32
    %1345 = vector.broadcast %cst_303 : f32 to vector<2x1xf32>
    %1346 = arith.maximumf %1345, %1344 : vector<2x1xf32>
    %1347 = vector.broadcast %cst_304 : f32 to vector<2x1xf32>
    %1348 = arith.minimumf %1347, %1346 : vector<2x1xf32>
    %c0_i32_305 = arith.constant 0 : i32
    %1349 = vector.broadcast %c0_i32_305 : i32 to vector<2x4xi32>
    %1350 = arith.cmpi eq, %629, %1349 : vector<2x4xi32>
    %1351 = math.cos %1338 : vector<2x1xf32>
    %1352 = arith.mulf %1337, %1351 : vector<2x1xf32>
    %c1_i32_306 = arith.constant 1 : i32
    %1353 = vector.broadcast %c1_i32_306 : i32 to vector<2x4xi32>
    %1354 = arith.cmpi eq, %629, %1353 : vector<2x4xi32>
    %1355 = math.sin %1338 : vector<2x1xf32>
    %1356 = arith.mulf %1337, %1355 : vector<2x1xf32>
    %c2_i32_307 = arith.constant 2 : i32
    %1357 = vector.broadcast %c2_i32_307 : i32 to vector<2x4xi32>
    %1358 = arith.cmpi eq, %629, %1357 : vector<2x4xi32>
    %1359 = vector.shape_cast %1343 : vector<2x1xf32> to vector<2x1xf32>
    %1360 = vector.broadcast %1359 : vector<2x1xf32> to vector<2x4xf32>
    %1361 = vector.shape_cast %1348 : vector<2x1xf32> to vector<2x1xf32>
    %1362 = vector.broadcast %1361 : vector<2x1xf32> to vector<2x4xf32>
    %1363 = arith.select %1358, %1360, %1362 : vector<2x4xi1>, vector<2x4xf32>
    %1364 = vector.shape_cast %1356 : vector<2x1xf32> to vector<2x1xf32>
    %1365 = vector.broadcast %1364 : vector<2x1xf32> to vector<2x4xf32>
    %1366 = arith.select %1354, %1365, %1363 : vector<2x4xi1>, vector<2x4xf32>
    %1367 = vector.shape_cast %1352 : vector<2x1xf32> to vector<2x1xf32>
    %1368 = vector.broadcast %1367 : vector<2x1xf32> to vector<2x4xf32>
    %1369 = arith.select %1350, %1368, %1366 : vector<2x4xi1>, vector<2x4xf32>
    %cst_308 = arith.constant 1.000000e-01 : f32
    %1370 = vector.broadcast %cst_308 : f32 to vector<2x4xf32>
    %1371 = arith.mulf %1370, %1369 : vector<2x4xf32>
    %1372 = arith.addf %1276, %1371 : vector<2x4xf32>
    %c7 = arith.constant 7 : index
    %c0_309 = arith.constant 0 : index
    %c0_310 = arith.constant 0 : index
    %1373 = vector.load %arg37[%c7, %c0_309, %c0_310] : memref<8x2x4xf32, #tpu.memory_space<vmem>>, vector<1x2x4xf32>
    %1374 = vector.shape_cast %1373 : vector<1x2x4xf32> to vector<2x4xf32>
    %1375 = vector.shape_cast %1372 : vector<2x4xf32> to vector<1x2x4xf32>
    tpu.vector_store %arg37[%c7, %c0_309, %c0_310], %1375 {strides = array<i32>} : memref<8x2x4xf32, #tpu.memory_space<vmem>>, vector<1x2x4xf32>,
    %1376 = vector.broadcast %622 : vector<1x4xf32> to vector<2x4xf32>
    %1377 = arith.addf %1372, %1376 : vector<2x4xf32>
    %1378 = vector.broadcast %623 : vector<1x4xf32> to vector<2x4xf32>
    %1379 = arith.mulf %1377, %1378 : vector<2x4xf32>
    %1380 = vector.extract_strided_slice %367 {offsets = [14, 0], sizes = [2, 6], strides = [1, 1]} : vector<16x6xf32> to vector<2x6xf32>
    %1381 = vector.extract_strided_slice %1380 {offsets = [0, 0], sizes = [2, 4], strides = [1, 1]} : vector<2x6xf32> to vector<2x4xf32>
    %1382 = arith.subf %1379, %1381 : vector<2x4xf32>
    %1383 = vector.extract_strided_slice %1380 {offsets = [0, 4], sizes = [2, 2], strides = [1, 1]} : vector<2x6xf32> to vector<2x2xf32>
    %1384 = arith.subf %1332, %1383 : vector<2x2xf32>
    %1385 = arith.mulf %1382, %1382 : vector<2x4xf32>
    %1386 = vector.shape_cast %1385 : vector<2x4xf32> to vector<1x2x4xf32>
    %cst_311 = arith.constant dense<0.000000e+00> : vector<1xf32>
    %1387 = vector.multi_reduction <add>, %1386, %cst_311 [1, 2] : vector<1x2x4xf32> to vector<1xf32>
    %1388 = vector.shape_cast %1387 : vector<1xf32> to vector<1x1x1xf32>
    %1389 = vector.extract %1388[0, 0, 0] : f32 from vector<1x1x1xf32>
    %1390 = vector.broadcast %1389 : f32 to vector<1x1xf32>
    %1391 = arith.addf %1302, %1390 : vector<1x1xf32>
    %1392 = arith.mulf %1384, %1384 : vector<2x2xf32>
    %1393 = vector.shape_cast %1392 : vector<2x2xf32> to vector<1x2x2xf32>
    %cst_312 = arith.constant dense<0.000000e+00> : vector<1xf32>
    %1394 = vector.multi_reduction <add>, %1393, %cst_312 [1, 2] : vector<1x2x2xf32> to vector<1xf32>
    %1395 = vector.shape_cast %1394 : vector<1xf32> to vector<1x1x1xf32>
    %1396 = vector.extract %1395[0, 0, 0] : f32 from vector<1x1x1xf32>
    %1397 = vector.broadcast %1396 : f32 to vector<1x1xf32>
    %1398 = arith.addf %1391, %1397 : vector<1x1xf32>
    %cst_313 = arith.constant 9.600000e+01 : f32
    %1399 = vector.broadcast %cst_313 : f32 to vector<1x1xf32>
    %1400 = arith.divf %1398, %1399 : vector<1x1xf32>
    %cst_314 = arith.constant 1.000000e+00 : f32
    %1401 = vector.broadcast %cst_314 : f32 to vector<2x8xf32>
    %1402 = arith.addf %1401, %606 : vector<2x8xf32>
    %1403 = arith.mulf %605, %605 : vector<2x8xf32>
    %1404 = arith.subf %1402, %1403 : vector<2x8xf32>
    %1405 = math.exp %606 : vector<2x8xf32>
    %1406 = arith.subf %1404, %1405 : vector<2x8xf32>
    %1407 = vector.shape_cast %1406 : vector<2x8xf32> to vector<1x2x8xf32>
    %cst_315 = arith.constant dense<0.000000e+00> : vector<1xf32>
    %1408 = vector.multi_reduction <add>, %1407, %cst_315 [1, 2] : vector<1x2x8xf32> to vector<1xf32>
    %1409 = vector.shape_cast %1408 : vector<1xf32> to vector<1x1x1xf32>
    %1410 = vector.extract %1409[0, 0, 0] : f32 from vector<1x1x1xf32>
    %1411 = vector.broadcast %1410 : f32 to vector<1x1xf32>
    %cst_316 = arith.constant -5.000000e-01 : f32
    %1412 = vector.broadcast %cst_316 : f32 to vector<1x1xf32>
    %1413 = arith.mulf %1412, %1411 : vector<1x1xf32>
    %cst_317 = arith.constant 1.600000e+01 : f32
    %1414 = vector.broadcast %cst_317 : f32 to vector<1x1xf32>
    %1415 = arith.divf %1413, %1414 : vector<1x1xf32>
    %c0_318 = arith.constant 0 : index
    %1416 = memref.load %arg36[%c0_318] : memref<1xf32, #tpu.memory_space<smem>>
    %1417 = vector.broadcast %1416 : f32 to vector<1x1xf32>
    %1418 = arith.mulf %1417, %1415 : vector<1x1xf32>
    %1419 = arith.addf %1400, %1418 : vector<1x1xf32>
    %1420 = tpu.concatenate %1419, %1400, %1415 in 1 : vector<1x1xf32>, vector<1x1xf32>, vector<1x1xf32> -> vector<1x3xf32>
    %c0_319 = arith.constant 0 : index
    %c0_320 = arith.constant 0 : index
    %1421 = vector.load %arg38[%c0_319, %c0_320] : memref<1x3xf32, #tpu.memory_space<vmem>>, vector<1x3xf32>
    tpu.vector_store %arg38[%c0_319, %c0_320], %1420 {strides = array<i32>} : memref<1x3xf32, #tpu.memory_space<vmem>>, vector<1x3xf32>,
    return
  }
}

</mosaic_0001>

<llo_original>
// kernel: vae_model_forward.1
$region0: #{vae_model_forward.1}
  #allocation0 [shape = 'u32[]', space=smem, size = 0x4, offset = 0x4, fixed_abs, tag = 'smem constant byte address 0x4 - core index']
  #allocation1 [shape = 'u32[144,128]{1,0:T(1,128)}', space=vmem, size = 0x12000, scoped, tag = 'internal scratch']
  #allocation2 [shape = 'f32[1]{0:T(128)S(6)}', space=smem, size = 0x200, scoped, tag = 'scoped memory for vae_model_forward.1']
  %s0 = inlined_call_operand.smem [shape: u32[39], index: -1, kind: input, shape index: {}]
  %s1 = sld [smem:[%s0]]
  %s2 = scalar_lea.smem %s0, 1
  %s3 = sld [smem:[%s2]]
  %s4 = scalar_lea.smem %s0, 2
  %s5 = sld [smem:[%s4]]
  %s6 = scalar_lea.smem %s0, 3
  %s7 = sld [smem:[%s6]]
  %s8 = scalar_lea.smem %s0, 4
  %s9 = sld [smem:[%s8]]
  %s10 = scalar_lea.smem %s0, 5
  %s11 = sld [smem:[%s10]]
  %s12 = scalar_lea.smem %s0, 6
  %s13 = sld [smem:[%s12]]
  %s14 = scalar_lea.smem %s0, 7
  %s15 = sld [smem:[%s14]]
  %s16 = scalar_lea.smem %s0, 8
  %s17 = sld [smem:[%s16]]
  %s18 = scalar_lea.smem %s0, 9
  %s19 = sld [smem:[%s18]]
  %s20 = scalar_lea.smem %s0, 10
  %s21 = sld [smem:[%s20]]
  %s22 = scalar_lea.smem %s0, 11
  %s23 = sld [smem:[%s22]]
  %s24 = scalar_lea.smem %s0, 12
  %s25 = sld [smem:[%s24]]
  %s26 = scalar_lea.smem %s0, 13
  %s27 = sld [smem:[%s26]]
  %s28 = scalar_lea.smem %s0, 14
  %s29 = sld [smem:[%s28]]
  %s30 = scalar_lea.smem %s0, 15
  %s31 = sld [smem:[%s30]]
  %s32 = scalar_lea.smem %s0, 16
  %s33 = sld [smem:[%s32]]
  %s34 = scalar_lea.smem %s0, 17
  %s35 = sld [smem:[%s34]]
  %s36 = scalar_lea.smem %s0, 18
  %s37 = sld [smem:[%s36]]
  %s38 = scalar_lea.smem %s0, 19
  %s39 = sld [smem:[%s38]]
  %s40 = scalar_lea.smem %s0, 20
  %s41 = sld [smem:[%s40]]
  %s42 = scalar_lea.smem %s0, 21
  %s43 = sld [smem:[%s42]]
  %s44 = scalar_lea.smem %s0, 22
  %s45 = sld [smem:[%s44]]
  %s46 = scalar_lea.smem %s0, 23
  %s47 = sld [smem:[%s46]]
  %s48 = scalar_lea.smem %s0, 24
  %s49 = sld [smem:[%s48]]
  %s50 = scalar_lea.smem %s0, 25
  %s51 = sld [smem:[%s50]]
  %s52 = scalar_lea.smem %s0, 26
  %s53 = sld [smem:[%s52]]
  %s54 = scalar_lea.smem %s0, 27
  %s55 = sld [smem:[%s54]]
  %s56 = scalar_lea.smem %s0, 28
  %s57 = sld [smem:[%s56]]
  %s58 = scalar_lea.smem %s0, 29
  %s59 = sld [smem:[%s58]]
  %s60 = scalar_lea.smem %s0, 30
  %s61 = sld [smem:[%s60]]
  %s62 = scalar_lea.smem %s0, 31
  %s63 = sld [smem:[%s62]]
  %s64 = scalar_lea.smem %s0, 32
  %s65 = sld [smem:[%s64]]
  %s66 = scalar_lea.smem %s0, 33
  %s67 = sld [smem:[%s66]]
  %s68 = scalar_lea.smem %s0, 34
  %s69 = sld [smem:[%s68]]
  %s70 = scalar_lea.smem %s0, 35
  %s71 = sld [smem:[%s70]]
  %s72 = scalar_lea.smem %s0, 36
  %s73 = sld [smem:[%s72]]
  %s74 = scalar_lea.smem %s0, 37
  %s75 = sld [smem:[%s74]]
  %s76 = scalar_lea.smem %s0, 38
  %s77 = sld [smem:[%s76]]
  %78 = xla_tuple %s75, %s77
  %s79 = sld [smem:[#allocation0]]
  $region166: #{vae_model_forward.1} parent=0
    _
  %s81 = ssub.s32 1, %s79
  %s82 = scalar_select 0, %s81, %s79
  %83 = sst [smem:[#allocation2]] %s73
  // Predicated region
  $region2: #{vae_model_forward.1} parent=0 // pred_check
    _
  $region3: #{vae_model_forward.1} parent=0 // pred_check_branch
    %85 = sbr.rel (0) target = $region5
  $region4: #{vae_model_forward.1} parent=0 // pred_region
    _
  $region5: #{vae_model_forward.1} parent=0 // pred_fallthru
    _
  // Predicated region
  $region6: #{vae_model_forward.1} parent=0 // pred_check
    _
  $region7: #{vae_model_forward.1} parent=0 // pred_check_branch
    %87 = sbr.rel (0) target = $region9
  $region8: #{vae_model_forward.1} parent=0 // pred_region
    _
  $region9: #{vae_model_forward.1} parent=0 // pred_fallthru
    _
  // Predicated region
  $region10: #{vae_model_forward.1} parent=0 // pred_check
    _
  $region11: #{vae_model_forward.1} parent=0 // pred_check_branch
    %89 = sbr.rel (0) target = $region13
  $region12: #{vae_model_forward.1} parent=0 // pred_region
    _
  $region13: #{vae_model_forward.1} parent=0 // pred_fallthru
    _
  // Predicated region
  $region14: #{vae_model_forward.1} parent=0 // pred_check
    _
  $region15: #{vae_model_forward.1} parent=0 // pred_check_branch
    %91 = sbr.rel (0) target = $region17
  $region16: #{vae_model_forward.1} parent=0 // pred_region
    _
  $region17: #{vae_model_forward.1} parent=0 // pred_fallthru
    _
  // Predicated region
  $region18: #{vae_model_forward.1} parent=0 // pred_check
    _
  $region19: #{vae_model_forward.1} parent=0 // pred_check_branch
    %93 = sbr.rel (0) target = $region21
  $region20: #{vae_model_forward.1} parent=0 // pred_region
    _
  $region21: #{vae_model_forward.1} parent=0 // pred_fallthru
    _
  // Predicated region
  $region22: #{vae_model_forward.1} parent=0 // pred_check
    _
  $region23: #{vae_model_forward.1} parent=0 // pred_check_branch
    %95 = sbr.rel (0) target = $region25
  $region24: #{vae_model_forward.1} parent=0 // pred_region
    _
  $region25: #{vae_model_forward.1} parent=0 // pred_fallthru
    _
  // Predicated region
  $region26: #{vae_model_forward.1} parent=0 // pred_check
    _
  $region27: #{vae_model_forward.1} parent=0 // pred_check_branch
    %97 = sbr.rel (0) target = $region29
  $region28: #{vae_model_forward.1} parent=0 // pred_region
    _
  $region29: #{vae_model_forward.1} parent=0 // pred_fallthru
    _
  // Predicated region
  $region30: #{vae_model_forward.1} parent=0 // pred_check
    _
  $region31: #{vae_model_forward.1} parent=0 // pred_check_branch
    %99 = sbr.rel (0) target = $region33
  $region32: #{vae_model_forward.1} parent=0 // pred_region
    _
  $region33: #{vae_model_forward.1} parent=0 // pred_fallthru
    _
  // Predicated region
  $region34: #{vae_model_forward.1} parent=0 // pred_check
    _
  $region35: #{vae_model_forward.1} parent=0 // pred_check_branch
    %101 = sbr.rel (0) target = $region37
  $region36: #{vae_model_forward.1} parent=0 // pred_region
    _
  $region37: #{vae_model_forward.1} parent=0 // pred_fallthru
    _
  // Predicated region
  $region38: #{vae_model_forward.1} parent=0 // pred_check
    _
  $region39: #{vae_model_forward.1} parent=0 // pred_check_branch
    %103 = sbr.rel (0) target = $region41
  $region40: #{vae_model_forward.1} parent=0 // pred_region
    _
  $region41: #{vae_model_forward.1} parent=0 // pred_fallthru
    _
  // Predicated region
  $region42: #{vae_model_forward.1} parent=0 // pred_check
    _
  $region43: #{vae_model_forward.1} parent=0 // pred_check_branch
    %105 = sbr.rel (0) target = $region45
  $region44: #{vae_model_forward.1} parent=0 // pred_region
    _
  $region45: #{vae_model_forward.1} parent=0 // pred_fallthru
    _
  // Predicated region
  $region46: #{vae_model_forward.1} parent=0 // pred_check
    _
  $region47: #{vae_model_forward.1} parent=0 // pred_check_branch
    %107 = sbr.rel (0) target = $region49
  $region48: #{vae_model_forward.1} parent=0 // pred_region
    _
  $region49: #{vae_model_forward.1} parent=0 // pred_fallthru
    _
  // Predicated region
  $region50: #{vae_model_forward.1} parent=0 // pred_check
    _
  $region51: #{vae_model_forward.1} parent=0 // pred_check_branch
    %109 = sbr.rel (0) target = $region53
  $region52: #{vae_model_forward.1} parent=0 // pred_region
    _
  $region53: #{vae_model_forward.1} parent=0 // pred_fallthru
    _
  // Predicated region
  $region54: #{vae_model_forward.1} parent=0 // pred_check
    _
  $region55: #{vae_model_forward.1} parent=0 // pred_check_branch
    %111 = sbr.rel (0) target = $region57
  $region56: #{vae_model_forward.1} parent=0 // pred_region
    _
  $region57: #{vae_model_forward.1} parent=0 // pred_fallthru
    _
  // Predicated region
  $region58: #{vae_model_forward.1} parent=0 // pred_check
    _
  $region59: #{vae_model_forward.1} parent=0 // pred_check_branch
    %113 = sbr.rel (0) target = $region61
  $region60: #{vae_model_forward.1} parent=0 // pred_region
    _
  $region61: #{vae_model_forward.1} parent=0 // pred_fallthru
    _
  // Predicated region
  $region62: #{vae_model_forward.1} parent=0 // pred_check
    _
  $region63: #{vae_model_forward.1} parent=0 // pred_check_branch
    %115 = sbr.rel (0) target = $region65
  $region64: #{vae_model_forward.1} parent=0 // pred_region
    _
  $region65: #{vae_model_forward.1} parent=0 // pred_fallthru
    _
  // Predicated region
  $region66: #{vae_model_forward.1} parent=0 // pred_check
    _
  $region67: #{vae_model_forward.1} parent=0 // pred_check_branch
    %117 = sbr.rel (0) target = $region69
  $region68: #{vae_model_forward.1} parent=0 // pred_region
    _
  $region69: #{vae_model_forward.1} parent=0 // pred_fallthru
    _
  // Predicated region
  $region70: #{vae_model_forward.1} parent=0 // pred_check
    _
  $region71: #{vae_model_forward.1} parent=0 // pred_check_branch
    %119 = sbr.rel (0) target = $region73
  $region72: #{vae_model_forward.1} parent=0 // pred_region
    _
  $region73: #{vae_model_forward.1} parent=0 // pred_fallthru
    _
  // Predicated region
  $region74: #{vae_model_forward.1} parent=0 // pred_check
    _
  $region75: #{vae_model_forward.1} parent=0 // pred_check_branch
    %121 = sbr.rel (0) target = $region77
  $region76: #{vae_model_forward.1} parent=0 // pred_region
    _
  $region77: #{vae_model_forward.1} parent=0 // pred_fallthru
    _
  // Predicated region
  $region78: #{vae_model_forward.1} parent=0 // pred_check
    _
  $region79: #{vae_model_forward.1} parent=0 // pred_check_branch
    %123 = sbr.rel (0) target = $region81
  $region80: #{vae_model_forward.1} parent=0 // pred_region
    _
  $region81: #{vae_model_forward.1} parent=0 // pred_fallthru
    _
  // Predicated region
  $region82: #{vae_model_forward.1} parent=0 // pred_check
    _
  $region83: #{vae_model_forward.1} parent=0 // pred_check_branch
    %125 = sbr.rel (0) target = $region85
  $region84: #{vae_model_forward.1} parent=0 // pred_region
    _
  $region85: #{vae_model_forward.1} parent=0 // pred_fallthru
    _
  // Predicated region
  $region86: #{vae_model_forward.1} parent=0 // pred_check
    _
  $region87: #{vae_model_forward.1} parent=0 // pred_check_branch
    %127 = sbr.rel (0) target = $region89
  $region88: #{vae_model_forward.1} parent=0 // pred_region
    _
  $region89: #{vae_model_forward.1} parent=0 // pred_fallthru
    _
  // Predicated region
  $region90: #{vae_model_forward.1} parent=0 // pred_check
    _
  $region91: #{vae_model_forward.1} parent=0 // pred_check_branch
    %129 = sbr.rel (0) target = $region93
  $region92: #{vae_model_forward.1} parent=0 // pred_region
    _
  $region93: #{vae_model_forward.1} parent=0 // pred_fallthru
    _
  // Predicated region
  $region94: #{vae_model_forward.1} parent=0 // pred_check
    _
  $region95: #{vae_model_forward.1} parent=0 // pred_check_branch
    %131 = sbr.rel (0) target = $region97
  $region96: #{vae_model_forward.1} parent=0 // pred_region
    _
  $region97: #{vae_model_forward.1} parent=0 // pred_fallthru
    _
  // Predicated region
  $region98: #{vae_model_forward.1} parent=0 // pred_check
    _
  $region99: #{vae_model_forward.1} parent=0 // pred_check_branch
    %133 = sbr.rel (0) target = $region101
  $region100: #{vae_model_forward.1} parent=0 // pred_region
    _
  $region101: #{vae_model_forward.1} parent=0 // pred_fallthru
    _
  // Predicated region
  $region102: #{vae_model_forward.1} parent=0 // pred_check
    _
  $region103: #{vae_model_forward.1} parent=0 // pred_check_branch
    %135 = sbr.rel (0) target = $region105
  $region104: #{vae_model_forward.1} parent=0 // pred_region
    _
  $region105: #{vae_model_forward.1} parent=0 // pred_fallthru
    _
  // Predicated region
  $region106: #{vae_model_forward.1} parent=0 // pred_check
    _
  $region107: #{vae_model_forward.1} parent=0 // pred_check_branch
    %137 = sbr.rel (0) target = $region109
  $region108: #{vae_model_forward.1} parent=0 // pred_region
    _
  $region109: #{vae_model_forward.1} parent=0 // pred_fallthru
    _
  // Predicated region
  $region110: #{vae_model_forward.1} parent=0 // pred_check
    _
  $region111: #{vae_model_forward.1} parent=0 // pred_check_branch
    %139 = sbr.rel (0) target = $region113
  $region112: #{vae_model_forward.1} parent=0 // pred_region
    _
  $region113: #{vae_model_forward.1} parent=0 // pred_fallthru
    _
  // Predicated region
  $region114: #{vae_model_forward.1} parent=0 // pred_check
    _
  $region115: #{vae_model_forward.1} parent=0 // pred_check_branch
    %141 = sbr.rel (0) target = $region117
  $region116: #{vae_model_forward.1} parent=0 // pred_region
    _
  $region117: #{vae_model_forward.1} parent=0 // pred_fallthru
    _
  // Predicated region
  $region118: #{vae_model_forward.1} parent=0 // pred_check
    _
  $region119: #{vae_model_forward.1} parent=0 // pred_check_branch
    %143 = sbr.rel (0) target = $region121
  $region120: #{vae_model_forward.1} parent=0 // pred_region
    _
  $region121: #{vae_model_forward.1} parent=0 // pred_fallthru
    _
  // Predicated region
  $region122: #{vae_model_forward.1} parent=0 // pred_check
    _
  $region123: #{vae_model_forward.1} parent=0 // pred_check_branch
    %145 = sbr.rel (0) target = $region125
  $region124: #{vae_model_forward.1} parent=0 // pred_region
    _
  $region125: #{vae_model_forward.1} parent=0 // pred_fallthru
    _
  // Predicated region
  $region126: #{vae_model_forward.1} parent=0 // pred_check
    _
  $region127: #{vae_model_forward.1} parent=0 // pred_check_branch
    %147 = sbr.rel (0) target = $region129
  $region128: #{vae_model_forward.1} parent=0 // pred_region
    _
  $region129: #{vae_model_forward.1} parent=0 // pred_fallthru
    _
  // Predicated region
  $region130: #{vae_model_forward.1} parent=0 // pred_check
    _
  $region131: #{vae_model_forward.1} parent=0 // pred_check_branch
    %149 = sbr.rel (0) target = $region133
  $region132: #{vae_model_forward.1} parent=0 // pred_region
    _
  $region133: #{vae_model_forward.1} parent=0 // pred_fallthru
    _
  // Predicated region
  $region134: #{vae_model_forward.1} parent=0 // pred_check
    _
  $region135: #{vae_model_forward.1} parent=0 // pred_check_branch
    %151 = sbr.rel (0) target = $region137
  $region136: #{vae_model_forward.1} parent=0 // pred_region
    _
  $region137: #{vae_model_forward.1} parent=0 // pred_fallthru
    _
  // Predicated region
  $region138: #{vae_model_forward.1} parent=0 // pred_check
    _
  $region139: #{vae_model_forward.1} parent=0 // pred_check_branch
    %153 = sbr.rel (0) target = $region141
  $region140: #{vae_model_forward.1} parent=0 // pred_region
    _
  $region141: #{vae_model_forward.1} parent=0 // pred_fallthru
    _
  // Predicated region
  $region142: #{vae_model_forward.1} parent=0 // pred_check
    _
  $region143: #{vae_model_forward.1} parent=0 // pred_check_branch
    %155 = sbr.rel (0) target = $region145
  $region144: #{vae_model_forward.1} parent=0 // pred_region
    _
  $region145: #{vae_model_forward.1} parent=0 // pred_fallthru
    _
  // Predicated region
  $region146: #{vae_model_forward.1} parent=0 // pred_check
    _
  $region147: #{vae_model_forward.1} parent=0 // pred_check_branch
    %157 = sbr.rel (0) target = $region149
  $region148: #{vae_model_forward.1} parent=0 // pred_region
    _
  $region149: #{vae_model_forward.1} parent=0 // pred_fallthru
    _
  %v158 = vld [vmem:[%s13] sm:$0x1]
  %v159 = vld [vmem:[%s15] sm:$0x1]
  %v160 = vld [vmem:[%s17] sm:$0x1]
  %v161 = vld [vmem:[%s1] sm:$0xff]
  %v162 = vld [vmem:[%s1 + $0x8] sm:$0xff]
  %v164 = vlaneseq
  %v165 = vshrl.u32 %v164, 7
  %v166 = vsub.s32 0, %v165
  %v167 = vrot.slane %v158, %v166
  %v169 = vadd.f32 %v161, %v167
  %v170 = vadd.f32 %v162, %v167
  %v172 = vlaneseq
  %v173 = vshrl.u32 %v172, 7
  %v174 = vsub.s32 0, %v173
  %v175 = vrot.slane %v160, %v174
  %v177 = vmul.f32 %v169, %v175
  %v178 = vmul.f32 %v170, %v175
  %v179 = vld [vmem:[%s19] sm:$0xf]
  %v180 = vld [vmem:[%s23] sm:$0x1]
  %v182 = vlaneseq
  %v183 = vshrl.u32 %v182, 7
  %v184 = vsub.s32 0, %v183
  %v185 = vrot.slane %v180, %v184
  %vm187 = vcmask 31744
  %v189 = vsel %vm187, %v177, 0
  %v192 = vsel %vm187, %v178, 0
  %vm194 = vcmask 1043456
  %v196 = vsel %vm194, %v179, 0
  %198 = vmatprep.subr.mxu0 0.0
  %199 = vmatpush1.msra.mxu0 0.0
  %200 = vmatprep.subr.mxu0 0.0
  %201 = vmatpush1.msra.mxu0 0.0
  %202 = vmatprep.subr.mxu0 0.0
  %203 = vmatpush1.msra.mxu0 0.0
  %204 = vmatprep.subr.mxu0 0.0
  %205 = vmatpush1.msra.mxu0 0.0
  %206 = vmatprep.subr.mxu0 0.0
  %207 = vmatpush1.msra.mxu0 0.0
  %208 = vmatprep.subr.mxu0 0.0
  %209 = vmatpush1.msra.mxu0 0.0
  %210 = vmatprep.subr.mxu0 0.0
  %211 = vmatpush1.msra.mxu0 0.0
  %212 = vmatprep.subr.mxu0 0.0
  %213 = vmatpush1.msra.mxu0 0.0
  %214 = vmatprep.subr.mxu0 0.0
  %215 = vmatpush1.msra.mxu0 0.0
  %216 = vmatprep.subr.mxu0 0.0
  %217 = vmatpush1.msra.mxu0 0.0
  %218 = vmatprep.subr.mxu0 0.0
  %219 = vmatpush1.msra.mxu0 0.0
  %220 = vmatprep.subr.mxu0 0.0
  %221 = vmatpush1.msra.mxu0 0.0
  %222 = vmatprep.subr.mxu0 0.0
  %223 = vmatpush1.msra.mxu0 0.0
  %224 = vmatprep.subr.mxu0 0.0
  %225 = vmatpush1.msra.mxu0 0.0
  %226 = vmatprep.subr.mxu0 0.0
  %227 = vmatpush1.msra.mxu0 0.0
  %228 = vmatprep.subr.mxu0 0.0
  %229 = vmatpush1.msra.mxu0 %v196
  %230 = vmatprep.subr.mxu0 0.0
  %231 = vmatpush2.msra.mxu0 0.0
  %232 = vmatprep.subr.mxu0 0.0
  %233 = vmatpush2.msra.mxu0 0.0
  %234 = vmatprep.subr.mxu0 0.0
  %235 = vmatpush2.msra.mxu0 0.0
  %236 = vmatprep.subr.mxu0 0.0
  %237 = vmatpush2.msra.mxu0 0.0
  %238 = vmatprep.subr.mxu0 0.0
  %239 = vmatpush2.msra.mxu0 0.0
  %240 = vmatprep.subr.mxu0 0.0
  %241 = vmatpush2.msra.mxu0 0.0
  %242 = vmatprep.subr.mxu0 0.0
  %243 = vmatpush2.msra.mxu0 0.0
  %244 = vmatprep.subr.mxu0 0.0
  %245 = vmatpush2.msra.mxu0 0.0
  %246 = vmatprep.subr.mxu0 0.0
  %247 = vmatpush2.msra.mxu0 0.0
  %248 = vmatprep.subr.mxu0 0.0
  %249 = vmatpush2.msra.mxu0 0.0
  %250 = vmatprep.subr.mxu0 0.0
  %251 = vmatpush2.msra.mxu0 0.0
  %252 = vmatprep.subr.mxu0 0.0
  %253 = vmatpush2.msra.mxu0 0.0
  %254 = vmatprep.subr.mxu0 0.0
  %255 = vmatpush2.msra.mxu0 0.0
  %256 = vmatprep.subr.mxu0 0.0
  %257 = vmatpush2.msra.mxu0 0.0
  %258 = vmatprep.subr.mxu0 0.0
  %259 = vmatpush2.msra.mxu0 0.0
  %260 = vmatprep.subr.mxu0 0.0
  %261 = vmatpush2.msra.mxu0 0.0
  %262 = vmatprep.mubr.f32.mxu0 0.0
  %263 = vmatmul.mubr.f32.gmra.mxu0 %v189
  %v264 = vpop.f32.mrf.mxu0
  %v265 = vadd.f32 %v185, %v264
  %v266 = vpop.f32.mrf.mxu0
  %267 = vmatprep.mubr.f32.mxu0 0.0
  %268 = vmatmul.mubr.f32.gmra.mxu0 %v192
  %v269 = vpop.f32.mrf.mxu0
  %v270 = vadd.f32 %v185, %v269
  %v271 = vpop.f32.mrf.mxu0
  %272 = vdwg.mxu0
  %v273 = vld [vmem:[%s21] sm:$0xff]
  %v274 = vld [vmem:[%s21 + $0x8] sm:$0xff]
  %v275 = vld [vmem:[%s21 + $0x10] sm:$0xff]
  %v276 = vld [vmem:[%s21 + $0x18] sm:$0xff]
  %vm277 = vcmask 261120
  %v279 = vsel %vm277, 0.0, 0
  %281 = vmatprep.subr.mxu0 0.0
  %282 = vmatpush1.msra.mxu0 0.0
  %283 = vmatprep.subr.mxu0 0.0
  %284 = vmatpush1.msra.mxu0 0.0
  %285 = vmatprep.subr.mxu0 0.0
  %286 = vmatpush1.msra.mxu0 0.0
  %287 = vmatprep.subr.mxu0 0.0
  %288 = vmatpush1.msra.mxu0 0.0
  %289 = vmatprep.subr.mxu0 0.0
  %290 = vmatpush1.msra.mxu0 0.0
  %291 = vmatprep.subr.mxu0 0.0
  %292 = vmatpush1.msra.mxu0 0.0
  %293 = vmatprep.subr.mxu0 0.0
  %294 = vmatpush1.msra.mxu0 0.0
  %295 = vmatprep.subr.mxu0 0.0
  %296 = vmatpush1.msra.mxu0 0.0
  %297 = vmatprep.subr.mxu0 0.0
  %298 = vmatpush1.msra.mxu0 0.0
  %299 = vmatprep.subr.mxu0 0.0
  %300 = vmatpush1.msra.mxu0 0.0
  %301 = vmatprep.subr.mxu0 0.0
  %302 = vmatpush1.msra.mxu0 0.0
  %303 = vmatprep.subr.mxu0 0.0
  %304 = vmatpush1.msra.mxu0 0.0
  %305 = vmatprep.subr.mxu0 0.0
  %306 = vmatpush1.msra.mxu0 %v276
  %307 = vmatprep.subr.mxu0 0.0
  %308 = vmatpush1.msra.mxu0 %v275
  %309 = vmatprep.subr.mxu0 0.0
  %310 = vmatpush1.msra.mxu0 %v274
  %311 = vmatprep.subr.mxu0 0.0
  %312 = vmatpush1.msra.mxu0 %v273
  %313 = vmatprep.subr.mxu0 0.0
  %314 = vmatpush2.msra.mxu0 0.0
  %315 = vmatprep.subr.mxu0 0.0
  %316 = vmatpush2.msra.mxu0 0.0
  %317 = vmatprep.subr.mxu0 0.0
  %318 = vmatpush2.msra.mxu0 0.0
  %319 = vmatprep.subr.mxu0 0.0
  %320 = vmatpush2.msra.mxu0 0.0
  %321 = vmatprep.subr.mxu0 0.0
  %322 = vmatpush2.msra.mxu0 0.0
  %323 = vmatprep.subr.mxu0 0.0
  %324 = vmatpush2.msra.mxu0 0.0
  %325 = vmatprep.subr.mxu0 0.0
  %326 = vmatpush2.msra.mxu0 0.0
  %327 = vmatprep.subr.mxu0 0.0
  %328 = vmatpush2.msra.mxu0 0.0
  %329 = vmatprep.subr.mxu0 0.0
  %330 = vmatpush2.msra.mxu0 0.0
  %331 = vmatprep.subr.mxu0 0.0
  %332 = vmatpush2.msra.mxu0 0.0
  %333 = vmatprep.subr.mxu0 0.0
  %334 = vmatpush2.msra.mxu0 0.0
  %335 = vmatprep.subr.mxu0 0.0
  %336 = vmatpush2.msra.mxu0 0.0
  %337 = vmatprep.subr.mxu0 0.0
  %338 = vmatpush2.msra.mxu0 0.0
  %339 = vmatprep.subr.mxu0 0.0
  %340 = vmatpush2.msra.mxu0 0.0
  %341 = vmatprep.subr.mxu0 0.0
  %342 = vmatpush2.msra.mxu0 0.0
  %343 = vmatprep.subr.mxu0 0.0
  %344 = vmatpush2.msra.mxu0 0.0
  %345 = vmatprep.mubr.f32.mxu0 0.0
  %346 = vmatmul.mubr.f32.gmra.mxu0 %v279
  %v347 = vpop.f32.mrf.mxu0
  %v348 = vadd.f32 0.0, %v347
  %v349 = vpop.f32.mrf.mxu0
  %350 = vdwg.mxu0
  %v351 = vadd.f32 %v265, %v348
  %v352 = vxor.u32 %v351, 2147483648
  %v353 = vmul.f32 %v352, 1.442695
  %v354 = vpow.pop %v353
  %v355 = vadd.f32 %v354, 1.0
  %v356 = vrcp.pop %v355
  %v357 = vmul.f32 1.0, %v356
  %v358 = vtanh.pop %v351
  %v359 = vmul.f32 %v357, 0.0
  %361 = vrot.lane.b32.xlu0 %v358, 64
  %v362 = vpop.permute.xlu0 %361
  %v364 = vmul.f32 %v357, %v362
  %366 = vrot.lane.b32.xlu0 %v364, 32
  %v367 = vpop.permute.xlu0 %366
  %v369 = vadd.f32 %v359, %v367
  %v370 = vtanh.pop %v369
  %372 = vrot.lane.b32.xlu0 %v370, 64
  %v373 = vpop.permute.xlu0 %372
  %v375 = vmul.f32 %v357, %v373
  %377 = vrot.lane.b32.xlu0 %v375, 32
  %v378 = vpop.permute.xlu0 %377
  %v379 = vsel %vm277, %v378, 0
  %381 = vmatprep.subr.mxu0 0.0
  %382 = vmatpush1.msra.mxu0 0.0
  %383 = vmatprep.subr.mxu0 0.0
  %384 = vmatpush1.msra.mxu0 0.0
  %385 = vmatprep.subr.mxu0 0.0
  %386 = vmatpush1.msra.mxu0 0.0
  %387 = vmatprep.subr.mxu0 0.0
  %388 = vmatpush1.msra.mxu0 0.0
  %389 = vmatprep.subr.mxu0 0.0
  %390 = vmatpush1.msra.mxu0 0.0
  %391 = vmatprep.subr.mxu0 0.0
  %392 = vmatpush1.msra.mxu0 0.0
  %393 = vmatprep.subr.mxu0 0.0
  %394 = vmatpush1.msra.mxu0 0.0
  %395 = vmatprep.subr.mxu0 0.0
  %396 = vmatpush1.msra.mxu0 0.0
  %397 = vmatprep.subr.mxu0 0.0
  %398 = vmatpush1.msra.mxu0 0.0
  %399 = vmatprep.subr.mxu0 0.0
  %400 = vmatpush1.msra.mxu0 0.0
  %401 = vmatprep.subr.mxu0 0.0
  %402 = vmatpush1.msra.mxu0 0.0
  %403 = vmatprep.subr.mxu0 0.0
  %404 = vmatpush1.msra.mxu0 0.0
  %405 = vmatprep.subr.mxu0 0.0
  %406 = vmatpush1.msra.mxu0 %v276
  %407 = vmatprep.subr.mxu0 0.0
  %408 = vmatpush1.msra.mxu0 %v275
  %409 = vmatprep.subr.mxu0 0.0
  %410 = vmatpush1.msra.mxu0 %v274
  %411 = vmatprep.subr.mxu0 0.0
  %412 = vmatpush1.msra.mxu0 %v273
  %413 = vmatprep.subr.mxu0 0.0
  %414 = vmatpush2.msra.mxu0 0.0
  %415 = vmatprep.subr.mxu0 0.0
  %416 = vmatpush2.msra.mxu0 0.0
  %417 = vmatprep.subr.mxu0 0.0
  %418 = vmatpush2.msra.mxu0 0.0
  %419 = vmatprep.subr.mxu0 0.0
  %420 = vmatpush2.msra.mxu0 0.0
  %421 = vmatprep.subr.mxu0 0.0
  %422 = vmatpush2.msra.mxu0 0.0
  %423 = vmatprep.subr.mxu0 0.0
  %424 = vmatpush2.msra.mxu0 0.0
  %425 = vmatprep.subr.mxu0 0.0
  %426 = vmatpush2.msra.mxu0 0.0
  %427 = vmatprep.subr.mxu0 0.0
  %428 = vmatpush2.msra.mxu0 0.0
  %429 = vmatprep.subr.mxu0 0.0
  %430 = vmatpush2.msra.mxu0 0.0
  %431 = vmatprep.subr.mxu0 0.0
  %432 = vmatpush2.msra.mxu0 0.0
  %433 = vmatprep.subr.mxu0 0.0
  %434 = vmatpush2.msra.mxu0 0.0
  %435 = vmatprep.subr.mxu0 0.0
  %436 = vmatpush2.msra.mxu0 0.0
  %437 = vmatprep.subr.mxu0 0.0
  %438 = vmatpush2.msra.mxu0 0.0
  %439 = vmatprep.subr.mxu0 0.0
  %440 = vmatpush2.msra.mxu0 0.0
  %441 = vmatprep.subr.mxu0 0.0
  %442 = vmatpush2.msra.mxu0 0.0
  %443 = vmatprep.subr.mxu0 0.0
  %444 = vmatpush2.msra.mxu0 0.0
  %445 = vmatprep.mubr.f32.mxu0 0.0
  %446 = vmatmul.mubr.f32.gmra.mxu0 %v379
  %v447 = vpop.f32.mrf.mxu0
  %v448 = vadd.f32 0.0, %v447
  %v449 = vpop.f32.mrf.mxu0
  %450 = vdwg.mxu0
  %v452 = vrot.slane %v448, 6
  %v454 = vadd.f32 %v265, %v452
  %v455 = vxor.u32 %v454, 2147483648
  %v456 = vmul.f32 %v455, 1.442695
  %v457 = vpow.pop %v456
  %v458 = vadd.f32 %v457, 1.0
  %v459 = vrcp.pop %v458
  %v460 = vmul.f32 1.0, %v459
  %v461 = vtanh.pop %v454
  %v463 = vrot.slane %v369, 6
  %v465 = vmul.f32 %v460, %v463
  %467 = vrot.lane.b32.xlu0 %v461, 64
  %v468 = vpop.permute.xlu0 %467
  %v470 = vmul.f32 %v460, %v468
  %472 = vrot.lane.b32.xlu0 %v470, 32
  %v473 = vpop.permute.xlu0 %472
  %v475 = vadd.f32 %v465, %v473
  %v476 = vtanh.pop %v475
  %478 = vrot.lane.b32.xlu0 %v476, 64
  %v479 = vpop.permute.xlu0 %478
  %v481 = vmul.f32 %v460, %v479
  %v483 = vrot.slane %v481, 2
  %484 = vrot.lane.b32.xlu0 %v483, 32
  %v485 = vpop.permute.xlu0 %484
  %v486 = vsel %vm277, %v485, 0
  %488 = vmatprep.subr.mxu0 0.0
  %489 = vmatpush1.msra.mxu0 0.0
  %490 = vmatprep.subr.mxu0 0.0
  %491 = vmatpush1.msra.mxu0 0.0
  %492 = vmatprep.subr.mxu0 0.0
  %493 = vmatpush1.msra.mxu0 0.0
  %494 = vmatprep.subr.mxu0 0.0
  %495 = vmatpush1.msra.mxu0 0.0
  %496 = vmatprep.subr.mxu0 0.0
  %497 = vmatpush1.msra.mxu0 0.0
  %498 = vmatprep.subr.mxu0 0.0
  %499 = vmatpush1.msra.mxu0 0.0
  %500 = vmatprep.subr.mxu0 0.0
  %501 = vmatpush1.msra.mxu0 0.0
  %502 = vmatprep.subr.mxu0 0.0
  %503 = vmatpush1.msra.mxu0 0.0
  %504 = vmatprep.subr.mxu0 0.0
  %505 = vmatpush1.msra.mxu0 0.0
  %506 = vmatprep.subr.mxu0 0.0
  %507 = vmatpush1.msra.mxu0 0.0
  %508 = vmatprep.subr.mxu0 0.0
  %509 = vmatpush1.msra.mxu0 0.0
  %510 = vmatprep.subr.mxu0 0.0
  %511 = vmatpush1.msra.mxu0 0.0
  %512 = vmatprep.subr.mxu0 0.0
  %513 = vmatpush1.msra.mxu0 %v276
  %514 = vmatprep.subr.mxu0 0.0
  %515 = vmatpush1.msra.mxu0 %v275
  %516 = vmatprep.subr.mxu0 0.0
  %517 = vmatpush1.msra.mxu0 %v274
  %518 = vmatprep.subr.mxu0 0.0
  %519 = vmatpush1.msra.mxu0 %v273
  %520 = vmatprep.subr.mxu0 0.0
  %521 = vmatpush2.msra.mxu0 0.0
  %522 = vmatprep.subr.mxu0 0.0
  %523 = vmatpush2.msra.mxu0 0.0
  %524 = vmatprep.subr.mxu0 0.0
  %525 = vmatpush2.msra.mxu0 0.0
  %526 = vmatprep.subr.mxu0 0.0
  %527 = vmatpush2.msra.mxu0 0.0
  %528 = vmatprep.subr.mxu0 0.0
  %529 = vmatpush2.msra.mxu0 0.0
  %530 = vmatprep.subr.mxu0 0.0
  %531 = vmatpush2.msra.mxu0 0.0
  %532 = vmatprep.subr.mxu0 0.0
  %533 = vmatpush2.msra.mxu0 0.0
  %534 = vmatprep.subr.mxu0 0.0
  %535 = vmatpush2.msra.mxu0 0.0
  %536 = vmatprep.subr.mxu0 0.0
  %537 = vmatpush2.msra.mxu0 0.0
  %538 = vmatprep.subr.mxu0 0.0
  %539 = vmatpush2.msra.mxu0 0.0
  %540 = vmatprep.subr.mxu0 0.0
  %541 = vmatpush2.msra.mxu0 0.0
  %542 = vmatprep.subr.mxu0 0.0
  %543 = vmatpush2.msra.mxu0 0.0
  %544 = vmatprep.subr.mxu0 0.0
  %545 = vmatpush2.msra.mxu0 0.0
  %546 = vmatprep.subr.mxu0 0.0
  %547 = vmatpush2.msra.mxu0 0.0
  %548 = vmatprep.subr.mxu0 0.0
  %549 = vmatpush2.msra.mxu0 0.0
  %550 = vmatprep.subr.mxu0 0.0
  %551 = vmatpush2.msra.mxu0 0.0
  %552 = vmatprep.mubr.f32.mxu0 0.0
  %553 = vmatmul.mubr.f32.gmra.mxu0 %v486
  %v554 = vpop.f32.mrf.mxu0
  %v555 = vadd.f32 0.0, %v554
  %v556 = vpop.f32.mrf.mxu0
  %557 = vdwg.mxu0
  %v559 = vrot.slane %v555, 4
  %v561 = vadd.f32 %v265, %v559
  %v562 = vxor.u32 %v561, 2147483648
  %v563 = vmul.f32 %v562, 1.442695
  %v564 = vpow.pop %v563
  %v565 = vadd.f32 %v564, 1.0
  %v566 = vrcp.pop %v565
  %v567 = vmul.f32 1.0, %v566
  %v568 = vtanh.pop %v561
  %v570 = vrot.slane %v475, 6
  %v572 = vmul.f32 %v567, %v570
  %574 = vrot.lane.b32.xlu0 %v568, 64
  %v575 = vpop.permute.xlu0 %574
  %v577 = vmul.f32 %v567, %v575
  %579 = vrot.lane.b32.xlu0 %v577, 32
  %v580 = vpop.permute.xlu0 %579
  %v582 = vadd.f32 %v572, %v580
  %v583 = vtanh.pop %v582
  %585 = vrot.lane.b32.xlu0 %v583, 64
  %v586 = vpop.permute.xlu0 %585
  %v588 = vmul.f32 %v567, %v586
  %v590 = vrot.slane %v588, 4
  %591 = vrot.lane.b32.xlu0 %v590, 32
  %v592 = vpop.permute.xlu0 %591
  %v593 = vsel %vm277, %v592, 0
  %595 = vmatprep.subr.mxu0 0.0
  %596 = vmatpush1.msra.mxu0 0.0
  %597 = vmatprep.subr.mxu0 0.0
  %598 = vmatpush1.msra.mxu0 0.0
  %599 = vmatprep.subr.mxu0 0.0
  %600 = vmatpush1.msra.mxu0 0.0
  %601 = vmatprep.subr.mxu0 0.0
  %602 = vmatpush1.msra.mxu0 0.0
  %603 = vmatprep.subr.mxu0 0.0
  %604 = vmatpush1.msra.mxu0 0.0
  %605 = vmatprep.subr.mxu0 0.0
  %606 = vmatpush1.msra.mxu0 0.0
  %607 = vmatprep.subr.mxu0 0.0
  %608 = vmatpush1.msra.mxu0 0.0
  %609 = vmatprep.subr.mxu0 0.0
  %610 = vmatpush1.msra.mxu0 0.0
  %611 = vmatprep.subr.mxu0 0.0
  %612 = vmatpush1.msra.mxu0 0.0
  %613 = vmatprep.subr.mxu0 0.0
  %614 = vmatpush1.msra.mxu0 0.0
  %615 = vmatprep.subr.mxu0 0.0
  %616 = vmatpush1.msra.mxu0 0.0
  %617 = vmatprep.subr.mxu0 0.0
  %618 = vmatpush1.msra.mxu0 0.0
  %619 = vmatprep.subr.mxu0 0.0
  %620 = vmatpush1.msra.mxu0 %v276
  %621 = vmatprep.subr.mxu0 0.0
  %622 = vmatpush1.msra.mxu0 %v275
  %623 = vmatprep.subr.mxu0 0.0
  %624 = vmatpush1.msra.mxu0 %v274
  %625 = vmatprep.subr.mxu0 0.0
  %626 = vmatpush1.msra.mxu0 %v273
  %627 = vmatprep.subr.mxu0 0.0
  %628 = vmatpush2.msra.mxu0 0.0
  %629 = vmatprep.subr.mxu0 0.0
  %630 = vmatpush2.msra.mxu0 0.0
  %631 = vmatprep.subr.mxu0 0.0
  %632 = vmatpush2.msra.mxu0 0.0
  %633 = vmatprep.subr.mxu0 0.0
  %634 = vmatpush2.msra.mxu0 0.0
  %635 = vmatprep.subr.mxu0 0.0
  %636 = vmatpush2.msra.mxu0 0.0
  %637 = vmatprep.subr.mxu0 0.0
  %638 = vmatpush2.msra.mxu0 0.0
  %639 = vmatprep.subr.mxu0 0.0
  %640 = vmatpush2.msra.mxu0 0.0
  %641 = vmatprep.subr.mxu0 0.0
  %642 = vmatpush2.msra.mxu0 0.0
  %643 = vmatprep.subr.mxu0 0.0
  %644 = vmatpush2.msra.mxu0 0.0
  %645 = vmatprep.subr.mxu0 0.0
  %646 = vmatpush2.msra.mxu0 0.0
  %647 = vmatprep.subr.mxu0 0.0
  %648 = vmatpush2.msra.mxu0 0.0
  %649 = vmatprep.subr.mxu0 0.0
  %650 = vmatpush2.msra.mxu0 0.0
  %651 = vmatprep.subr.mxu0 0.0
  %652 = vmatpush2.msra.mxu0 0.0
  %653 = vmatprep.subr.mxu0 0.0
  %654 = vmatpush2.msra.mxu0 0.0
  %655 = vmatprep.subr.mxu0 0.0
  %656 = vmatpush2.msra.mxu0 0.0
  %657 = vmatprep.subr.mxu0 0.0
  %658 = vmatpush2.msra.mxu0 0.0
  %659 = vmatprep.mubr.f32.mxu0 0.0
  %660 = vmatmul.mubr.f32.gmra.mxu0 %v593
  %v661 = vpop.f32.mrf.mxu0
  %v662 = vadd.f32 0.0, %v661
  %v663 = vpop.f32.mrf.mxu0
  %664 = vdwg.mxu0
  %v666 = vrot.slane %v662, 2
  %v668 = vadd.f32 %v265, %v666
  %v669 = vxor.u32 %v668, 2147483648
  %v670 = vmul.f32 %v669, 1.442695
  %v671 = vpow.pop %v670
  %v672 = vadd.f32 %v671, 1.0
  %v673 = vrcp.pop %v672
  %v674 = vmul.f32 1.0, %v673
  %v675 = vtanh.pop %v668
  %v677 = vrot.slane %v582, 6
  %v679 = vmul.f32 %v674, %v677
  %681 = vrot.lane.b32.xlu0 %v675, 64
  %v682 = vpop.permute.xlu0 %681
  %v684 = vmul.f32 %v674, %v682
  %686 = vrot.lane.b32.xlu0 %v684, 32
  %v687 = vpop.permute.xlu0 %686
  %v689 = vadd.f32 %v679, %v687
  %v690 = vtanh.pop %v689
  %692 = vrot.lane.b32.xlu0 %v690, 64
  %v693 = vpop.permute.xlu0 %692
  %v695 = vmul.f32 %v674, %v693
  %v697 = vrot.slane %v695, 6
  %698 = vrot.lane.b32.xlu0 %v697, 32
  %v699 = vpop.permute.xlu0 %698
  %v700 = vsel %vm277, %v699, 0
  %702 = vmatprep.subr.mxu0 0.0
  %703 = vmatpush1.msra.mxu0 0.0
  %704 = vmatprep.subr.mxu0 0.0
  %705 = vmatpush1.msra.mxu0 0.0
  %706 = vmatprep.subr.mxu0 0.0
  %707 = vmatpush1.msra.mxu0 0.0
  %708 = vmatprep.subr.mxu0 0.0
  %709 = vmatpush1.msra.mxu0 0.0
  %710 = vmatprep.subr.mxu0 0.0
  %711 = vmatpush1.msra.mxu0 0.0
  %712 = vmatprep.subr.mxu0 0.0
  %713 = vmatpush1.msra.mxu0 0.0
  %714 = vmatprep.subr.mxu0 0.0
  %715 = vmatpush1.msra.mxu0 0.0
  %716 = vmatprep.subr.mxu0 0.0
  %717 = vmatpush1.msra.mxu0 0.0
  %718 = vmatprep.subr.mxu0 0.0
  %719 = vmatpush1.msra.mxu0 0.0
  %720 = vmatprep.subr.mxu0 0.0
  %721 = vmatpush1.msra.mxu0 0.0
  %722 = vmatprep.subr.mxu0 0.0
  %723 = vmatpush1.msra.mxu0 0.0
  %724 = vmatprep.subr.mxu0 0.0
  %725 = vmatpush1.msra.mxu0 0.0
  %726 = vmatprep.subr.mxu0 0.0
  %727 = vmatpush1.msra.mxu0 %v276
  %728 = vmatprep.subr.mxu0 0.0
  %729 = vmatpush1.msra.mxu0 %v275
  %730 = vmatprep.subr.mxu0 0.0
  %731 = vmatpush1.msra.mxu0 %v274
  %732 = vmatprep.subr.mxu0 0.0
  %733 = vmatpush1.msra.mxu0 %v273
  %734 = vmatprep.subr.mxu0 0.0
  %735 = vmatpush2.msra.mxu0 0.0
  %736 = vmatprep.subr.mxu0 0.0
  %737 = vmatpush2.msra.mxu0 0.0
  %738 = vmatprep.subr.mxu0 0.0
  %739 = vmatpush2.msra.mxu0 0.0
  %740 = vmatprep.subr.mxu0 0.0
  %741 = vmatpush2.msra.mxu0 0.0
  %742 = vmatprep.subr.mxu0 0.0
  %743 = vmatpush2.msra.mxu0 0.0
  %744 = vmatprep.subr.mxu0 0.0
  %745 = vmatpush2.msra.mxu0 0.0
  %746 = vmatprep.subr.mxu0 0.0
  %747 = vmatpush2.msra.mxu0 0.0
  %748 = vmatprep.subr.mxu0 0.0
  %749 = vmatpush2.msra.mxu0 0.0
  %750 = vmatprep.subr.mxu0 0.0
  %751 = vmatpush2.msra.mxu0 0.0
  %752 = vmatprep.subr.mxu0 0.0
  %753 = vmatpush2.msra.mxu0 0.0
  %754 = vmatprep.subr.mxu0 0.0
  %755 = vmatpush2.msra.mxu0 0.0
  %756 = vmatprep.subr.mxu0 0.0
  %757 = vmatpush2.msra.mxu0 0.0
  %758 = vmatprep.subr.mxu0 0.0
  %759 = vmatpush2.msra.mxu0 0.0
  %760 = vmatprep.subr.mxu0 0.0
  %761 = vmatpush2.msra.mxu0 0.0
  %762 = vmatprep.subr.mxu0 0.0
  %763 = vmatpush2.msra.mxu0 0.0
  %764 = vmatprep.subr.mxu0 0.0
  %765 = vmatpush2.msra.mxu0 0.0
  %766 = vmatprep.mubr.f32.mxu0 0.0
  %767 = vmatmul.mubr.f32.gmra.mxu0 %v700
  %v768 = vpop.f32.mrf.mxu0
  %v769 = vadd.f32 0.0, %v768
  %v770 = vpop.f32.mrf.mxu0
  %771 = vdwg.mxu0
  %v772 = vadd.f32 %v270, %v769
  %v773 = vxor.u32 %v772, 2147483648
  %v774 = vmul.f32 %v773, 1.442695
  %v775 = vpow.pop %v774
  %v776 = vadd.f32 %v775, 1.0
  %v777 = vrcp.pop %v776
  %v778 = vmul.f32 1.0, %v777
  %v779 = vtanh.pop %v772
  %v781 = vrot.slane %v689, 6
  %v783 = vmul.f32 %v778, %v781
  %785 = vrot.lane.b32.xlu0 %v779, 64
  %v786 = vpop.permute.xlu0 %785
  %v788 = vmul.f32 %v778, %v786
  %790 = vrot.lane.b32.xlu0 %v788, 32
  %v791 = vpop.permute.xlu0 %790
  %v793 = vadd.f32 %v783, %v791
  %v794 = vtanh.pop %v793
  %796 = vrot.lane.b32.xlu0 %v794, 64
  %v797 = vpop.permute.xlu0 %796
  %v799 = vmul.f32 %v778, %v797
  %801 = vrot.lane.b32.xlu0 %v799, 32
  %v802 = vpop.permute.xlu0 %801
  %v803 = vsel %vm277, %v802, 0
  %805 = vmatprep.subr.mxu0 0.0
  %806 = vmatpush1.msra.mxu0 0.0
  %807 = vmatprep.subr.mxu0 0.0
  %808 = vmatpush1.msra.mxu0 0.0
  %809 = vmatprep.subr.mxu0 0.0
  %810 = vmatpush1.msra.mxu0 0.0
  %811 = vmatprep.subr.mxu0 0.0
  %812 = vmatpush1.msra.mxu0 0.0
  %813 = vmatprep.subr.mxu0 0.0
  %814 = vmatpush1.msra.mxu0 0.0
  %815 = vmatprep.subr.mxu0 0.0
  %816 = vmatpush1.msra.mxu0 0.0
  %817 = vmatprep.subr.mxu0 0.0
  %818 = vmatpush1.msra.mxu0 0.0
  %819 = vmatprep.subr.mxu0 0.0
  %820 = vmatpush1.msra.mxu0 0.0
  %821 = vmatprep.subr.mxu0 0.0
  %822 = vmatpush1.msra.mxu0 0.0
  %823 = vmatprep.subr.mxu0 0.0
  %824 = vmatpush1.msra.mxu0 0.0
  %825 = vmatprep.subr.mxu0 0.0
  %826 = vmatpush1.msra.mxu0 0.0
  %827 = vmatprep.subr.mxu0 0.0
  %828 = vmatpush1.msra.mxu0 0.0
  %829 = vmatprep.subr.mxu0 0.0
  %830 = vmatpush1.msra.mxu0 %v276
  %831 = vmatprep.subr.mxu0 0.0
  %832 = vmatpush1.msra.mxu0 %v275
  %833 = vmatprep.subr.mxu0 0.0
  %834 = vmatpush1.msra.mxu0 %v274
  %835 = vmatprep.subr.mxu0 0.0
  %836 = vmatpush1.msra.mxu0 %v273
  %837 = vmatprep.subr.mxu0 0.0
  %838 = vmatpush2.msra.mxu0 0.0
  %839 = vmatprep.subr.mxu0 0.0
  %840 = vmatpush2.msra.mxu0 0.0
  %841 = vmatprep.subr.mxu0 0.0
  %842 = vmatpush2.msra.mxu0 0.0
  %843 = vmatprep.subr.mxu0 0.0
  %844 = vmatpush2.msra.mxu0 0.0
  %845 = vmatprep.subr.mxu0 0.0
  %846 = vmatpush2.msra.mxu0 0.0
  %847 = vmatprep.subr.mxu0 0.0
  %848 = vmatpush2.msra.mxu0 0.0
  %849 = vmatprep.subr.mxu0 0.0
  %850 = vmatpush2.msra.mxu0 0.0
  %851 = vmatprep.subr.mxu0 0.0
  %852 = vmatpush2.msra.mxu0 0.0
  %853 = vmatprep.subr.mxu0 0.0
  %854 = vmatpush2.msra.mxu0 0.0
  %855 = vmatprep.subr.mxu0 0.0
  %856 = vmatpush2.msra.mxu0 0.0
  %857 = vmatprep.subr.mxu0 0.0
  %858 = vmatpush2.msra.mxu0 0.0
  %859 = vmatprep.subr.mxu0 0.0
  %860 = vmatpush2.msra.mxu0 0.0
  %861 = vmatprep.subr.mxu0 0.0
  %862 = vmatpush2.msra.mxu0 0.0
  %863 = vmatprep.subr.mxu0 0.0
  %864 = vmatpush2.msra.mxu0 0.0
  %865 = vmatprep.subr.mxu0 0.0
  %866 = vmatpush2.msra.mxu0 0.0
  %867 = vmatprep.subr.mxu0 0.0
  %868 = vmatpush2.msra.mxu0 0.0
  %869 = vmatprep.mubr.f32.mxu0 0.0
  %870 = vmatmul.mubr.f32.gmra.mxu0 %v803
  %v871 = vpop.f32.mrf.mxu0
  %v872 = vadd.f32 0.0, %v871
  %v873 = vpop.f32.mrf.mxu0
  %874 = vdwg.mxu0
  %v876 = vrot.slane %v872, 6
  %v878 = vadd.f32 %v270, %v876
  %v879 = vxor.u32 %v878, 2147483648
  %v880 = vmul.f32 %v879, 1.442695
  %v881 = vpow.pop %v880
  %v882 = vadd.f32 %v881, 1.0
  %v883 = vrcp.pop %v882
  %v884 = vmul.f32 1.0, %v883
  %v885 = vtanh.pop %v878
  %v887 = vrot.slane %v793, 6
  %v889 = vmul.f32 %v884, %v887
  %891 = vrot.lane.b32.xlu0 %v885, 64
  %v892 = vpop.permute.xlu0 %891
  %v894 = vmul.f32 %v884, %v892
  %896 = vrot.lane.b32.xlu0 %v894, 32
  %v897 = vpop.permute.xlu0 %896
  %v899 = vadd.f32 %v889, %v897
  %v900 = vtanh.pop %v899
  %902 = vrot.lane.b32.xlu0 %v900, 64
  %v903 = vpop.permute.xlu0 %902
  %v905 = vmul.f32 %v884, %v903
  %v907 = vrot.slane %v905, 2
  %908 = vrot.lane.b32.xlu0 %v907, 32
  %v909 = vpop.permute.xlu0 %908
  %v910 = vsel %vm277, %v909, 0
  %912 = vmatprep.subr.mxu0 0.0
  %913 = vmatpush1.msra.mxu0 0.0
  %914 = vmatprep.subr.mxu0 0.0
  %915 = vmatpush1.msra.mxu0 0.0
  %916 = vmatprep.subr.mxu0 0.0
  %917 = vmatpush1.msra.mxu0 0.0
  %918 = vmatprep.subr.mxu0 0.0
  %919 = vmatpush1.msra.mxu0 0.0
  %920 = vmatprep.subr.mxu0 0.0
  %921 = vmatpush1.msra.mxu0 0.0
  %922 = vmatprep.subr.mxu0 0.0
  %923 = vmatpush1.msra.mxu0 0.0
  %924 = vmatprep.subr.mxu0 0.0
  %925 = vmatpush1.msra.mxu0 0.0
  %926 = vmatprep.subr.mxu0 0.0
  %927 = vmatpush1.msra.mxu0 0.0
  %928 = vmatprep.subr.mxu0 0.0
  %929 = vmatpush1.msra.mxu0 0.0
  %930 = vmatprep.subr.mxu0 0.0
  %931 = vmatpush1.msra.mxu0 0.0
  %932 = vmatprep.subr.mxu0 0.0
  %933 = vmatpush1.msra.mxu0 0.0
  %934 = vmatprep.subr.mxu0 0.0
  %935 = vmatpush1.msra.mxu0 0.0
  %936 = vmatprep.subr.mxu0 0.0
  %937 = vmatpush1.msra.mxu0 %v276
  %938 = vmatprep.subr.mxu0 0.0
  %939 = vmatpush1.msra.mxu0 %v275
  %940 = vmatprep.subr.mxu0 0.0
  %941 = vmatpush1.msra.mxu0 %v274
  %942 = vmatprep.subr.mxu0 0.0
  %943 = vmatpush1.msra.mxu0 %v273
  %944 = vmatprep.subr.mxu0 0.0
  %945 = vmatpush2.msra.mxu0 0.0
  %946 = vmatprep.subr.mxu0 0.0
  %947 = vmatpush2.msra.mxu0 0.0
  %948 = vmatprep.subr.mxu0 0.0
  %949 = vmatpush2.msra.mxu0 0.0
  %950 = vmatprep.subr.mxu0 0.0
  %951 = vmatpush2.msra.mxu0 0.0
  %952 = vmatprep.subr.mxu0 0.0
  %953 = vmatpush2.msra.mxu0 0.0
  %954 = vmatprep.subr.mxu0 0.0
  %955 = vmatpush2.msra.mxu0 0.0
  %956 = vmatprep.subr.mxu0 0.0
  %957 = vmatpush2.msra.mxu0 0.0
  %958 = vmatprep.subr.mxu0 0.0
  %959 = vmatpush2.msra.mxu0 0.0
  %960 = vmatprep.subr.mxu0 0.0
  %961 = vmatpush2.msra.mxu0 0.0
  %962 = vmatprep.subr.mxu0 0.0
  %963 = vmatpush2.msra.mxu0 0.0
  %964 = vmatprep.subr.mxu0 0.0
  %965 = vmatpush2.msra.mxu0 0.0
  %966 = vmatprep.subr.mxu0 0.0
  %967 = vmatpush2.msra.mxu0 0.0
  %968 = vmatprep.subr.mxu0 0.0
  %969 = vmatpush2.msra.mxu0 0.0
  %970 = vmatprep.subr.mxu0 0.0
  %971 = vmatpush2.msra.mxu0 0.0
  %972 = vmatprep.subr.mxu0 0.0
  %973 = vmatpush2.msra.mxu0 0.0
  %974 = vmatprep.subr.mxu0 0.0
  %975 = vmatpush2.msra.mxu0 0.0
  %976 = vmatprep.mubr.f32.mxu0 0.0
  %977 = vmatmul.mubr.f32.gmra.mxu0 %v910
  %v978 = vpop.f32.mrf.mxu0
  %v979 = vadd.f32 0.0, %v978
  %v980 = vpop.f32.mrf.mxu0
  %981 = vdwg.mxu0
  %v983 = vrot.slane %v979, 4
  %v985 = vadd.f32 %v270, %v983
  %v986 = vxor.u32 %v985, 2147483648
  %v987 = vmul.f32 %v986, 1.442695
  %v988 = vpow.pop %v987
  %v989 = vadd.f32 %v988, 1.0
  %v990 = vrcp.pop %v989
  %v991 = vmul.f32 1.0, %v990
  %v992 = vtanh.pop %v985
  %v994 = vrot.slane %v899, 6
  %v996 = vmul.f32 %v991, %v994
  %998 = vrot.lane.b32.xlu0 %v992, 64
  %v999 = vpop.permute.xlu0 %998
  %v1001 = vmul.f32 %v991, %v999
  %1003 = vrot.lane.b32.xlu0 %v1001, 32
  %v1004 = vpop.permute.xlu0 %1003
  %v1006 = vadd.f32 %v996, %v1004
  %v1007 = vtanh.pop %v1006
  %1009 = vrot.lane.b32.xlu0 %v1007, 64
  %v1010 = vpop.permute.xlu0 %1009
  %v1012 = vmul.f32 %v991, %v1010
  %v1014 = vrot.slane %v1012, 4
  %1015 = vrot.lane.b32.xlu0 %v1014, 32
  %v1016 = vpop.permute.xlu0 %1015
  %v1017 = vsel %vm277, %v1016, 0
  %1019 = vmatprep.subr.mxu0 0.0
  %1020 = vmatpush1.msra.mxu0 0.0
  %1021 = vmatprep.subr.mxu0 0.0
  %1022 = vmatpush1.msra.mxu0 0.0
  %1023 = vmatprep.subr.mxu0 0.0
  %1024 = vmatpush1.msra.mxu0 0.0
  %1025 = vmatprep.subr.mxu0 0.0
  %1026 = vmatpush1.msra.mxu0 0.0
  %1027 = vmatprep.subr.mxu0 0.0
  %1028 = vmatpush1.msra.mxu0 0.0
  %1029 = vmatprep.subr.mxu0 0.0
  %1030 = vmatpush1.msra.mxu0 0.0
  %1031 = vmatprep.subr.mxu0 0.0
  %1032 = vmatpush1.msra.mxu0 0.0
  %1033 = vmatprep.subr.mxu0 0.0
  %1034 = vmatpush1.msra.mxu0 0.0
  %1035 = vmatprep.subr.mxu0 0.0
  %1036 = vmatpush1.msra.mxu0 0.0
  %1037 = vmatprep.subr.mxu0 0.0
  %1038 = vmatpush1.msra.mxu0 0.0
  %1039 = vmatprep.subr.mxu0 0.0
  %1040 = vmatpush1.msra.mxu0 0.0
  %1041 = vmatprep.subr.mxu0 0.0
  %1042 = vmatpush1.msra.mxu0 0.0
  %1043 = vmatprep.subr.mxu0 0.0
  %1044 = vmatpush1.msra.mxu0 %v276
  %1045 = vmatprep.subr.mxu0 0.0
  %1046 = vmatpush1.msra.mxu0 %v275
  %1047 = vmatprep.subr.mxu0 0.0
  %1048 = vmatpush1.msra.mxu0 %v274
  %1049 = vmatprep.subr.mxu0 0.0
  %1050 = vmatpush1.msra.mxu0 %v273
  %1051 = vmatprep.subr.mxu0 0.0
  %1052 = vmatpush2.msra.mxu0 0.0
  %1053 = vmatprep.subr.mxu0 0.0
  %1054 = vmatpush2.msra.mxu0 0.0
  %1055 = vmatprep.subr.mxu0 0.0
  %1056 = vmatpush2.msra.mxu0 0.0
  %1057 = vmatprep.subr.mxu0 0.0
  %1058 = vmatpush2.msra.mxu0 0.0
  %1059 = vmatprep.subr.mxu0 0.0
  %1060 = vmatpush2.msra.mxu0 0.0
  %1061 = vmatprep.subr.mxu0 0.0
  %1062 = vmatpush2.msra.mxu0 0.0
  %1063 = vmatprep.subr.mxu0 0.0
  %1064 = vmatpush2.msra.mxu0 0.0
  %1065 = vmatprep.subr.mxu0 0.0
  %1066 = vmatpush2.msra.mxu0 0.0
  %1067 = vmatprep.subr.mxu0 0.0
  %1068 = vmatpush2.msra.mxu0 0.0
  %1069 = vmatprep.subr.mxu0 0.0
  %1070 = vmatpush2.msra.mxu0 0.0
  %1071 = vmatprep.subr.mxu0 0.0
  %1072 = vmatpush2.msra.mxu0 0.0
  %1073 = vmatprep.subr.mxu0 0.0
  %1074 = vmatpush2.msra.mxu0 0.0
  %1075 = vmatprep.subr.mxu0 0.0
  %1076 = vmatpush2.msra.mxu0 0.0
  %1077 = vmatprep.subr.mxu0 0.0
  %1078 = vmatpush2.msra.mxu0 0.0
  %1079 = vmatprep.subr.mxu0 0.0
  %1080 = vmatpush2.msra.mxu0 0.0
  %1081 = vmatprep.subr.mxu0 0.0
  %1082 = vmatpush2.msra.mxu0 0.0
  %1083 = vmatprep.mubr.f32.mxu0 0.0
  %1084 = vmatmul.mubr.f32.gmra.mxu0 %v1017
  %v1085 = vpop.f32.mrf.mxu0
  %v1086 = vadd.f32 0.0, %v1085
  %v1087 = vpop.f32.mrf.mxu0
  %1088 = vdwg.mxu0
  %v1090 = vrot.slane %v1086, 2
  %v1092 = vadd.f32 %v270, %v1090
  %v1093 = vxor.u32 %v1092, 2147483648
  %v1094 = vmul.f32 %v1093, 1.442695
  %v1095 = vpow.pop %v1094
  %v1096 = vadd.f32 %v1095, 1.0
  %v1097 = vrcp.pop %v1096
  %v1098 = vmul.f32 1.0, %v1097
  %v1099 = vtanh.pop %v1092
  %v1101 = vrot.slane %v1006, 6
  %v1103 = vmul.f32 %v1098, %v1101
  %1105 = vrot.lane.b32.xlu0 %v1099, 64
  %v1106 = vpop.permute.xlu0 %1105
  %v1108 = vmul.f32 %v1098, %v1106
  %1110 = vrot.lane.b32.xlu0 %v1108, 32
  %v1111 = vpop.permute.xlu0 %1110
  %v1113 = vadd.f32 %v1103, %v1111
  %v1114 = vtanh.pop %v1113
  %1116 = vrot.lane.b32.xlu0 %v1114, 64
  %v1117 = vpop.permute.xlu0 %1116
  %v1119 = vmul.f32 %v1098, %v1117
  %v1120 = vld [vmem:[%s7] sm:$0xff]
  %v1121 = vld [vmem:[%s7 + $0x8] sm:$0xff]
  %v1122 = vld [vmem:[%s7 + $0x10] sm:$0xff]
  %v1123 = vld [vmem:[%s7 + $0x18] sm:$0xff]
  %v1124 = vld [vmem:[%s7 + $0x20] sm:$0xff]
  %v1125 = vld [vmem:[%s7 + $0x28] sm:$0xff]
  %v1126 = vld [vmem:[%s7 + $0x30] sm:$0xff]
  %v1127 = vld [vmem:[%s7 + $0x38] sm:$0xff]
  %v1128 = vld [vmem:[%s7 + $0x40] sm:$0xff]
  %v1129 = vld [vmem:[%s7 + $0x48] sm:$0xff]
  %v1130 = vld [vmem:[%s7 + $0x50] sm:$0xff]
  %v1131 = vld [vmem:[%s7 + $0x58] sm:$0xff]
  %v1132 = vld [vmem:[%s7 + $0x60] sm:$0xff]
  %v1133 = vld [vmem:[%s7 + $0x68] sm:$0xff]
  %v1134 = vld [vmem:[%s7 + $0x70] sm:$0xff]
  %v1135 = vld [vmem:[%s7 + $0x78] sm:$0xff]
  %v1136 = vld [vmem:[%s7 + $0x80] sm:$0xff]
  %v1137 = vld [vmem:[%s7 + $0x88] sm:$0xff]
  %v1138 = vld [vmem:[%s7 + $0x90] sm:$0xff]
  %v1139 = vld [vmem:[%s7 + $0x98] sm:$0xff]
  %v1140 = vld [vmem:[%s7 + $0xa0] sm:$0xff]
  %v1141 = vld [vmem:[%s7 + $0xa8] sm:$0xff]
  %v1142 = vld [vmem:[%s7 + $0xb0] sm:$0xff]
  %v1143 = vld [vmem:[%s7 + $0xb8] sm:$0xff]
  %v1144 = vld [vmem:[%s7 + $0xc0] sm:$0xff]
  %v1145 = vld [vmem:[%s7 + $0xc8] sm:$0xff]
  %v1146 = vld [vmem:[%s7 + $0xd0] sm:$0xff]
  %v1147 = vld [vmem:[%s7 + $0xd8] sm:$0xff]
  %v1148 = vld [vmem:[%s7 + $0xe0] sm:$0xff]
  %v1149 = vld [vmem:[%s7 + $0xe8] sm:$0xff]
  %v1150 = vld [vmem:[%s7 + $0xf0] sm:$0xff]
  %v1151 = vld [vmem:[%s7 + $0xf8] sm:$0xff]
  %v1152 = vld [vmem:[%s7 + $0x100] sm:$0xff]
  %v1153 = vld [vmem:[%s7 + $0x108] sm:$0xff]
  %v1154 = vld [vmem:[%s7 + $0x110] sm:$0xff]
  %v1155 = vld [vmem:[%s7 + $0x118] sm:$0xff]
  %v1156 = vld [vmem:[%s7 + $0x120] sm:$0xff]
  %v1157 = vld [vmem:[%s7 + $0x128] sm:$0xff]
  %v1158 = vld [vmem:[%s7 + $0x130] sm:$0xff]
  %v1159 = vld [vmem:[%s7 + $0x138] sm:$0xff]
  %v1160 = vld [vmem:[%s7 + $0x140] sm:$0xff]
  %v1161 = vld [vmem:[%s7 + $0x148] sm:$0xff]
  %v1162 = vld [vmem:[%s7 + $0x150] sm:$0xff]
  %v1163 = vld [vmem:[%s7 + $0x158] sm:$0xff]
  %v1164 = vld [vmem:[%s7 + $0x160] sm:$0xff]
  %v1165 = vld [vmem:[%s7 + $0x168] sm:$0xff]
  %v1166 = vld [vmem:[%s7 + $0x170] sm:$0xff]
  %v1167 = vld [vmem:[%s7 + $0x178] sm:$0xff]
  %v1168 = vld [vmem:[%s7 + $0x180] sm:$0xff]
  %v1169 = vld [vmem:[%s7 + $0x188] sm:$0xff]
  %v1170 = vld [vmem:[%s7 + $0x190] sm:$0xff]
  %v1171 = vld [vmem:[%s7 + $0x198] sm:$0xff]
  %v1172 = vld [vmem:[%s7 + $0x1a0] sm:$0xff]
  %v1173 = vld [vmem:[%s7 + $0x1a8] sm:$0xff]
  %v1174 = vld [vmem:[%s7 + $0x1b0] sm:$0xff]
  %v1175 = vld [vmem:[%s7 + $0x1b8] sm:$0xff]
  %v1176 = vld [vmem:[%s7 + $0x1c0] sm:$0xff]
  %v1177 = vld [vmem:[%s7 + $0x1c8] sm:$0xff]
  %v1178 = vld [vmem:[%s7 + $0x1d0] sm:$0xff]
  %v1179 = vld [vmem:[%s7 + $0x1d8] sm:$0xff]
  %v1180 = vld [vmem:[%s7 + $0x1e0] sm:$0xff]
  %v1181 = vld [vmem:[%s7 + $0x1e8] sm:$0xff]
  %v1182 = vld [vmem:[%s7 + $0x1f0] sm:$0xff]
  %v1183 = vld [vmem:[%s7 + $0x1f8] sm:$0xff]
  %v1184 = vld [vmem:[%s25] sm:$0xff]
  %v1185 = vld [vmem:[%s25 + $0x8] sm:$0xff]
  %v1186 = vld [vmem:[%s25 + $0x10] sm:$0xff]
  %v1187 = vld [vmem:[%s25 + $0x18] sm:$0x7]
  %v1188 = vld [vmem:[%s27] sm:$0x1]
  %v1190 = vlaneseq
  %v1191 = vshrl.u32 %v1190, 7
  %v1192 = vsub.s32 0, %v1191
  %v1193 = vrot.slane %v1188, %v1192
  %vm1195 = vcmask 220160
  %v1197 = vsel %vm1195, %v1120, 0
  %v1200 = vsel %vm1195, %v1121, 0
  %v1203 = vsel %vm1195, %v1122, 0
  %v1206 = vsel %vm1195, %v1123, 0
  %v1209 = vsel %vm1195, %v1124, 0
  %v1212 = vsel %vm1195, %v1125, 0
  %v1215 = vsel %vm1195, %v1126, 0
  %v1218 = vsel %vm1195, %v1127, 0
  %v1221 = vsel %vm1195, %v1128, 0
  %v1224 = vsel %vm1195, %v1129, 0
  %v1227 = vsel %vm1195, %v1130, 0
  %v1230 = vsel %vm1195, %v1131, 0
  %v1233 = vsel %vm1195, %v1132, 0
  %v1236 = vsel %vm1195, %v1133, 0
  %v1239 = vsel %vm1195, %v1134, 0
  %v1242 = vsel %vm1195, %v1135, 0
  %v1245 = vsel %vm1195, %v1136, 0
  %v1248 = vsel %vm1195, %v1137, 0
  %v1251 = vsel %vm1195, %v1138, 0
  %v1254 = vsel %vm1195, %v1139, 0
  %v1257 = vsel %vm1195, %v1140, 0
  %v1260 = vsel %vm1195, %v1141, 0
  %v1263 = vsel %vm1195, %v1142, 0
  %v1266 = vsel %vm1195, %v1143, 0
  %v1269 = vsel %vm1195, %v1144, 0
  %v1272 = vsel %vm1195, %v1145, 0
  %v1275 = vsel %vm1195, %v1146, 0
  %v1278 = vsel %vm1195, %v1147, 0
  %v1281 = vsel %vm1195, %v1148, 0
  %v1284 = vsel %vm1195, %v1149, 0
  %v1287 = vsel %vm1195, %v1150, 0
  %v1290 = vsel %vm1195, %v1151, 0
  %v1293 = vsel %vm1195, %v1152, 0
  %v1296 = vsel %vm1195, %v1153, 0
  %v1299 = vsel %vm1195, %v1154, 0
  %v1302 = vsel %vm1195, %v1155, 0
  %v1305 = vsel %vm1195, %v1156, 0
  %v1308 = vsel %vm1195, %v1157, 0
  %v1311 = vsel %vm1195, %v1158, 0
  %v1314 = vsel %vm1195, %v1159, 0
  %v1317 = vsel %vm1195, %v1160, 0
  %v1320 = vsel %vm1195, %v1161, 0
  %v1323 = vsel %vm1195, %v1162, 0
  %v1326 = vsel %vm1195, %v1163, 0
  %v1329 = vsel %vm1195, %v1164, 0
  %v1332 = vsel %vm1195, %v1165, 0
  %v1335 = vsel %vm1195, %v1166, 0
  %v1338 = vsel %vm1195, %v1167, 0
  %v1341 = vsel %vm1195, %v1168, 0
  %v1344 = vsel %vm1195, %v1169, 0
  %v1347 = vsel %vm1195, %v1170, 0
  %v1350 = vsel %vm1195, %v1171, 0
  %v1353 = vsel %vm1195, %v1172, 0
  %v1356 = vsel %vm1195, %v1173, 0
  %v1359 = vsel %vm1195, %v1174, 0
  %v1362 = vsel %vm1195, %v1175, 0
  %v1365 = vsel %vm1195, %v1176, 0
  %v1368 = vsel %vm1195, %v1177, 0
  %v1371 = vsel %vm1195, %v1178, 0
  %v1374 = vsel %vm1195, %v1179, 0
  %v1377 = vsel %vm1195, %v1180, 0
  %v1380 = vsel %vm1195, %v1181, 0
  %v1383 = vsel %vm1195, %v1182, 0
  %v1386 = vsel %vm1195, %v1183, 0
  %vm1388 = vcmask 1042432
  %v1390 = vsel %vm1388, %v1187, 0
  %1392 = vmatprep.subr.mxu0 0.0
  %1393 = vmatpush1.msra.mxu0 0.0
  %1394 = vmatprep.subr.mxu0 0.0
  %1395 = vmatpush1.msra.mxu0 0.0
  %1396 = vmatprep.subr.mxu0 0.0
  %1397 = vmatpush1.msra.mxu0 0.0
  %1398 = vmatprep.subr.mxu0 0.0
  %1399 = vmatpush1.msra.mxu0 0.0
  %1400 = vmatprep.subr.mxu0 0.0
  %1401 = vmatpush1.msra.mxu0 0.0
  %1402 = vmatprep.subr.mxu0 0.0
  %1403 = vmatpush1.msra.mxu0 0.0
  %1404 = vmatprep.subr.mxu0 0.0
  %1405 = vmatpush1.msra.mxu0 0.0
  %1406 = vmatprep.subr.mxu0 0.0
  %1407 = vmatpush1.msra.mxu0 0.0
  %1408 = vmatprep.subr.mxu0 0.0
  %1409 = vmatpush1.msra.mxu0 0.0
  %1410 = vmatprep.subr.mxu0 0.0
  %1411 = vmatpush1.msra.mxu0 0.0
  %1412 = vmatprep.subr.mxu0 0.0
  %1413 = vmatpush1.msra.mxu0 0.0
  %1414 = vmatprep.subr.mxu0 0.0
  %1415 = vmatpush1.msra.mxu0 0.0
  %1416 = vmatprep.subr.mxu0 0.0
  %1417 = vmatpush1.msra.mxu0 %v1390
  %1418 = vmatprep.subr.mxu0 0.0
  %1419 = vmatpush1.msra.mxu0 %v1186
  %1420 = vmatprep.subr.mxu0 0.0
  %1421 = vmatpush1.msra.mxu0 %v1185
  %1422 = vmatprep.subr.mxu0 0.0
  %1423 = vmatpush1.msra.mxu0 %v1184
  %1424 = vmatprep.subr.mxu0 0.0
  %1425 = vmatpush2.msra.mxu0 0.0
  %1426 = vmatprep.subr.mxu0 0.0
  %1427 = vmatpush2.msra.mxu0 0.0
  %1428 = vmatprep.subr.mxu0 0.0
  %1429 = vmatpush2.msra.mxu0 0.0
  %1430 = vmatprep.subr.mxu0 0.0
  %1431 = vmatpush2.msra.mxu0 0.0
  %1432 = vmatprep.subr.mxu0 0.0
  %1433 = vmatpush2.msra.mxu0 0.0
  %1434 = vmatprep.subr.mxu0 0.0
  %1435 = vmatpush2.msra.mxu0 0.0
  %1436 = vmatprep.subr.mxu0 0.0
  %1437 = vmatpush2.msra.mxu0 0.0
  %1438 = vmatprep.subr.mxu0 0.0
  %1439 = vmatpush2.msra.mxu0 0.0
  %1440 = vmatprep.subr.mxu0 0.0
  %1441 = vmatpush2.msra.mxu0 0.0
  %1442 = vmatprep.subr.mxu0 0.0
  %1443 = vmatpush2.msra.mxu0 0.0
  %1444 = vmatprep.subr.mxu0 0.0
  %1445 = vmatpush2.msra.mxu0 0.0
  %1446 = vmatprep.subr.mxu0 0.0
  %1447 = vmatpush2.msra.mxu0 0.0
  %1448 = vmatprep.subr.mxu0 0.0
  %1449 = vmatpush2.msra.mxu0 0.0
  %1450 = vmatprep.subr.mxu0 0.0
  %1451 = vmatpush2.msra.mxu0 0.0
  %1452 = vmatprep.subr.mxu0 0.0
  %1453 = vmatpush2.msra.mxu0 0.0
  %1454 = vmatprep.subr.mxu0 0.0
  %1455 = vmatpush2.msra.mxu0 0.0
  %1456 = vmatprep.mubr.f32.mxu0 0.0
  %1457 = vmatmul.mubr.f32.gmra.mxu0 %v1197
  %v1458 = vpop.f32.mrf.mxu0
  %v1459 = vadd.f32 %v1193, %v1458
  %v1460 = vpop.f32.mrf.mxu0
  %1461 = vmatprep.mubr.f32.mxu0 0.0
  %1462 = vmatmul.mubr.f32.gmra.mxu0 %v1200
  %v1463 = vpop.f32.mrf.mxu0
  %v1464 = vadd.f32 %v1193, %v1463
  %v1465 = vpop.f32.mrf.mxu0
  %1466 = vmatprep.mubr.f32.mxu0 0.0
  %1467 = vmatmul.mubr.f32.gmra.mxu0 %v1203
  %v1468 = vpop.f32.mrf.mxu0
  %v1469 = vadd.f32 %v1193, %v1468
  %v1470 = vpop.f32.mrf.mxu0
  %1471 = vmatprep.mubr.f32.mxu0 0.0
  %1472 = vmatmul.mubr.f32.gmra.mxu0 %v1206
  %v1473 = vpop.f32.mrf.mxu0
  %v1474 = vadd.f32 %v1193, %v1473
  %v1475 = vpop.f32.mrf.mxu0
  %1476 = vmatprep.mubr.f32.mxu0 0.0
  %1477 = vmatmul.mubr.f32.gmra.mxu0 %v1209
  %v1478 = vpop.f32.mrf.mxu0
  %v1479 = vadd.f32 %v1193, %v1478
  %v1480 = vpop.f32.mrf.mxu0
  %1481 = vmatprep.mubr.f32.mxu0 0.0
  %1482 = vmatmul.mubr.f32.gmra.mxu0 %v1212
  %v1483 = vpop.f32.mrf.mxu0
  %v1484 = vadd.f32 %v1193, %v1483
  %v1485 = vpop.f32.mrf.mxu0
  %1486 = vmatprep.mubr.f32.mxu0 0.0
  %1487 = vmatmul.mubr.f32.gmra.mxu0 %v1215
  %v1488 = vpop.f32.mrf.mxu0
  %v1489 = vadd.f32 %v1193, %v1488
  %v1490 = vpop.f32.mrf.mxu0
  %1491 = vmatprep.mubr.f32.mxu0 0.0
  %1492 = vmatmul.mubr.f32.gmra.mxu0 %v1218
  %v1493 = vpop.f32.mrf.mxu0
  %v1494 = vadd.f32 %v1193, %v1493
  %v1495 = vpop.f32.mrf.mxu0
  %1496 = vmatprep.mubr.f32.mxu0 0.0
  %1497 = vmatmul.mubr.f32.gmra.mxu0 %v1221
  %v1498 = vpop.f32.mrf.mxu0
  %v1499 = vadd.f32 %v1193, %v1498
  %v1500 = vpop.f32.mrf.mxu0
  %1501 = vmatprep.mubr.f32.mxu0 0.0
  %1502 = vmatmul.mubr.f32.gmra.mxu0 %v1224
  %v1503 = vpop.f32.mrf.mxu0
  %v1504 = vadd.f32 %v1193, %v1503
  %v1505 = vpop.f32.mrf.mxu0
  %1506 = vmatprep.mubr.f32.mxu0 0.0
  %1507 = vmatmul.mubr.f32.gmra.mxu0 %v1227
  %v1508 = vpop.f32.mrf.mxu0
  %v1509 = vadd.f32 %v1193, %v1508
  %v1510 = vpop.f32.mrf.mxu0
  %1511 = vmatprep.mubr.f32.mxu0 0.0
  %1512 = vmatmul.mubr.f32.gmra.mxu0 %v1230
  %v1513 = vpop.f32.mrf.mxu0
  %v1514 = vadd.f32 %v1193, %v1513
  %v1515 = vpop.f32.mrf.mxu0
  %1516 = vmatprep.mubr.f32.mxu0 0.0
  %1517 = vmatmul.mubr.f32.gmra.mxu0 %v1233
  %v1518 = vpop.f32.mrf.mxu0
  %v1519 = vadd.f32 %v1193, %v1518
  %v1520 = vpop.f32.mrf.mxu0
  %1521 = vmatprep.mubr.f32.mxu0 0.0
  %1522 = vmatmul.mubr.f32.gmra.mxu0 %v1236
  %v1523 = vpop.f32.mrf.mxu0
  %v1524 = vadd.f32 %v1193, %v1523
  %v1525 = vpop.f32.mrf.mxu0
  %1526 = vmatprep.mubr.f32.mxu0 0.0
  %1527 = vmatmul.mubr.f32.gmra.mxu0 %v1239
  %v1528 = vpop.f32.mrf.mxu0
  %v1529 = vadd.f32 %v1193, %v1528
  %v1530 = vpop.f32.mrf.mxu0
  %1531 = vmatprep.mubr.f32.mxu0 0.0
  %1532 = vmatmul.mubr.f32.gmra.mxu0 %v1242
  %v1533 = vpop.f32.mrf.mxu0
  %v1534 = vadd.f32 %v1193, %v1533
  %v1535 = vpop.f32.mrf.mxu0
  %1536 = vmatprep.mubr.f32.mxu0 0.0
  %1537 = vmatmul.mubr.f32.gmra.mxu0 %v1245
  %v1538 = vpop.f32.mrf.mxu0
  %v1539 = vadd.f32 %v1193, %v1538
  %v1540 = vpop.f32.mrf.mxu0
  %1541 = vmatprep.mubr.f32.mxu0 0.0
  %1542 = vmatmul.mubr.f32.gmra.mxu0 %v1248
  %v1543 = vpop.f32.mrf.mxu0
  %v1544 = vadd.f32 %v1193, %v1543
  %v1545 = vpop.f32.mrf.mxu0
  %1546 = vmatprep.mubr.f32.mxu0 0.0
  %1547 = vmatmul.mubr.f32.gmra.mxu0 %v1251
  %v1548 = vpop.f32.mrf.mxu0
  %v1549 = vadd.f32 %v1193, %v1548
  %v1550 = vpop.f32.mrf.mxu0
  %1551 = vmatprep.mubr.f32.mxu0 0.0
  %1552 = vmatmul.mubr.f32.gmra.mxu0 %v1254
  %v1553 = vpop.f32.mrf.mxu0
  %v1554 = vadd.f32 %v1193, %v1553
  %v1555 = vpop.f32.mrf.mxu0
  %1556 = vmatprep.mubr.f32.mxu0 0.0
  %1557 = vmatmul.mubr.f32.gmra.mxu0 %v1257
  %v1558 = vpop.f32.mrf.mxu0
  %v1559 = vadd.f32 %v1193, %v1558
  %v1560 = vpop.f32.mrf.mxu0
  %1561 = vmatprep.mubr.f32.mxu0 0.0
  %1562 = vmatmul.mubr.f32.gmra.mxu0 %v1260
  %v1563 = vpop.f32.mrf.mxu0
  %v1564 = vadd.f32 %v1193, %v1563
  %v1565 = vpop.f32.mrf.mxu0
  %1566 = vmatprep.mubr.f32.mxu0 0.0
  %1567 = vmatmul.mubr.f32.gmra.mxu0 %v1263
  %v1568 = vpop.f32.mrf.mxu0
  %v1569 = vadd.f32 %v1193, %v1568
  %v1570 = vpop.f32.mrf.mxu0
  %1571 = vmatprep.mubr.f32.mxu0 0.0
  %1572 = vmatmul.mubr.f32.gmra.mxu0 %v1266
  %v1573 = vpop.f32.mrf.mxu0
  %v1574 = vadd.f32 %v1193, %v1573
  %v1575 = vpop.f32.mrf.mxu0
  %1576 = vmatprep.mubr.f32.mxu0 0.0
  %1577 = vmatmul.mubr.f32.gmra.mxu0 %v1269
  %v1578 = vpop.f32.mrf.mxu0
  %v1579 = vadd.f32 %v1193, %v1578
  %v1580 = vpop.f32.mrf.mxu0
  %1581 = vmatprep.mubr.f32.mxu0 0.0
  %1582 = vmatmul.mubr.f32.gmra.mxu0 %v1272
  %v1583 = vpop.f32.mrf.mxu0
  %v1584 = vadd.f32 %v1193, %v1583
  %v1585 = vpop.f32.mrf.mxu0
  %1586 = vmatprep.mubr.f32.mxu0 0.0
  %1587 = vmatmul.mubr.f32.gmra.mxu0 %v1275
  %v1588 = vpop.f32.mrf.mxu0
  %v1589 = vadd.f32 %v1193, %v1588
  %v1590 = vpop.f32.mrf.mxu0
  %1591 = vmatprep.mubr.f32.mxu0 0.0
  %1592 = vmatmul.mubr.f32.gmra.mxu0 %v1278
  %v1593 = vpop.f32.mrf.mxu0
  %v1594 = vadd.f32 %v1193, %v1593
  %v1595 = vpop.f32.mrf.mxu0
  %1596 = vmatprep.mubr.f32.mxu0 0.0
  %1597 = vmatmul.mubr.f32.gmra.mxu0 %v1281
  %v1598 = vpop.f32.mrf.mxu0
  %v1599 = vadd.f32 %v1193, %v1598
  %v1600 = vpop.f32.mrf.mxu0
  %1601 = vmatprep.mubr.f32.mxu0 0.0
  %1602 = vmatmul.mubr.f32.gmra.mxu0 %v1284
  %v1603 = vpop.f32.mrf.mxu0
  %v1604 = vadd.f32 %v1193, %v1603
  %v1605 = vpop.f32.mrf.mxu0
  %1606 = vmatprep.mubr.f32.mxu0 0.0
  %1607 = vmatmul.mubr.f32.gmra.mxu0 %v1287
  %v1608 = vpop.f32.mrf.mxu0
  %v1609 = vadd.f32 %v1193, %v1608
  %v1610 = vpop.f32.mrf.mxu0
  %1611 = vmatprep.mubr.f32.mxu0 0.0
  %1612 = vmatmul.mubr.f32.gmra.mxu0 %v1290
  %v1613 = vpop.f32.mrf.mxu0
  %v1614 = vadd.f32 %v1193, %v1613
  %v1615 = vpop.f32.mrf.mxu0
  %1616 = vmatprep.mubr.f32.mxu0 0.0
  %1617 = vmatmul.mubr.f32.gmra.mxu0 %v1293
  %v1618 = vpop.f32.mrf.mxu0
  %v1619 = vadd.f32 %v1193, %v1618
  %v1620 = vpop.f32.mrf.mxu0
  %1621 = vmatprep.mubr.f32.mxu0 0.0
  %1622 = vmatmul.mubr.f32.gmra.mxu0 %v1296
  %v1623 = vpop.f32.mrf.mxu0
  %v1624 = vadd.f32 %v1193, %v1623
  %v1625 = vpop.f32.mrf.mxu0
  %1626 = vmatprep.mubr.f32.mxu0 0.0
  %1627 = vmatmul.mubr.f32.gmra.mxu0 %v1299
  %v1628 = vpop.f32.mrf.mxu0
  %v1629 = vadd.f32 %v1193, %v1628
  %v1630 = vpop.f32.mrf.mxu0
  %1631 = vmatprep.mubr.f32.mxu0 0.0
  %1632 = vmatmul.mubr.f32.gmra.mxu0 %v1302
  %v1633 = vpop.f32.mrf.mxu0
  %v1634 = vadd.f32 %v1193, %v1633
  %v1635 = vpop.f32.mrf.mxu0
  %1636 = vmatprep.mubr.f32.mxu0 0.0
  %1637 = vmatmul.mubr.f32.gmra.mxu0 %v1305
  %v1638 = vpop.f32.mrf.mxu0
  %v1639 = vadd.f32 %v1193, %v1638
  %v1640 = vpop.f32.mrf.mxu0
  %1641 = vmatprep.mubr.f32.mxu0 0.0
  %1642 = vmatmul.mubr.f32.gmra.mxu0 %v1308
  %v1643 = vpop.f32.mrf.mxu0
  %v1644 = vadd.f32 %v1193, %v1643
  %v1645 = vpop.f32.mrf.mxu0
  %1646 = vmatprep.mubr.f32.mxu0 0.0
  %1647 = vmatmul.mubr.f32.gmra.mxu0 %v1311
  %v1648 = vpop.f32.mrf.mxu0
  %v1649 = vadd.f32 %v1193, %v1648
  %v1650 = vpop.f32.mrf.mxu0
  %1651 = vmatprep.mubr.f32.mxu0 0.0
  %1652 = vmatmul.mubr.f32.gmra.mxu0 %v1314
  %v1653 = vpop.f32.mrf.mxu0
  %v1654 = vadd.f32 %v1193, %v1653
  %v1655 = vpop.f32.mrf.mxu0
  %1656 = vmatprep.mubr.f32.mxu0 0.0
  %1657 = vmatmul.mubr.f32.gmra.mxu0 %v1317
  %v1658 = vpop.f32.mrf.mxu0
  %v1659 = vadd.f32 %v1193, %v1658
  %v1660 = vpop.f32.mrf.mxu0
  %1661 = vmatprep.mubr.f32.mxu0 0.0
  %1662 = vmatmul.mubr.f32.gmra.mxu0 %v1320
  %v1663 = vpop.f32.mrf.mxu0
  %v1664 = vadd.f32 %v1193, %v1663
  %v1665 = vpop.f32.mrf.mxu0
  %1666 = vmatprep.mubr.f32.mxu0 0.0
  %1667 = vmatmul.mubr.f32.gmra.mxu0 %v1323
  %v1668 = vpop.f32.mrf.mxu0
  %v1669 = vadd.f32 %v1193, %v1668
  %v1670 = vpop.f32.mrf.mxu0
  %1671 = vmatprep.mubr.f32.mxu0 0.0
  %1672 = vmatmul.mubr.f32.gmra.mxu0 %v1326
  %v1673 = vpop.f32.mrf.mxu0
  %v1674 = vadd.f32 %v1193, %v1673
  %v1675 = vpop.f32.mrf.mxu0
  %1676 = vmatprep.mubr.f32.mxu0 0.0
  %1677 = vmatmul.mubr.f32.gmra.mxu0 %v1329
  %v1678 = vpop.f32.mrf.mxu0
  %v1679 = vadd.f32 %v1193, %v1678
  %v1680 = vpop.f32.mrf.mxu0
  %1681 = vmatprep.mubr.f32.mxu0 0.0
  %1682 = vmatmul.mubr.f32.gmra.mxu0 %v1332
  %v1683 = vpop.f32.mrf.mxu0
  %v1684 = vadd.f32 %v1193, %v1683
  %v1685 = vpop.f32.mrf.mxu0
  %1686 = vmatprep.mubr.f32.mxu0 0.0
  %1687 = vmatmul.mubr.f32.gmra.mxu0 %v1335
  %v1688 = vpop.f32.mrf.mxu0
  %v1689 = vadd.f32 %v1193, %v1688
  %v1690 = vpop.f32.mrf.mxu0
  %1691 = vmatprep.mubr.f32.mxu0 0.0
  %1692 = vmatmul.mubr.f32.gmra.mxu0 %v1338
  %v1693 = vpop.f32.mrf.mxu0
  %v1694 = vadd.f32 %v1193, %v1693
  %v1695 = vpop.f32.mrf.mxu0
  %1696 = vmatprep.mubr.f32.mxu0 0.0
  %1697 = vmatmul.mubr.f32.gmra.mxu0 %v1341
  %v1698 = vpop.f32.mrf.mxu0
  %v1699 = vadd.f32 %v1193, %v1698
  %v1700 = vpop.f32.mrf.mxu0
  %1701 = vmatprep.mubr.f32.mxu0 0.0
  %1702 = vmatmul.mubr.f32.gmra.mxu0 %v1344
  %v1703 = vpop.f32.mrf.mxu0
  %v1704 = vadd.f32 %v1193, %v1703
  %v1705 = vpop.f32.mrf.mxu0
  %1706 = vmatprep.mubr.f32.mxu0 0.0
  %1707 = vmatmul.mubr.f32.gmra.mxu0 %v1347
  %v1708 = vpop.f32.mrf.mxu0
  %v1709 = vadd.f32 %v1193, %v1708
  %v1710 = vpop.f32.mrf.mxu0
  %1711 = vmatprep.mubr.f32.mxu0 0.0
  %1712 = vmatmul.mubr.f32.gmra.mxu0 %v1350
  %v1713 = vpop.f32.mrf.mxu0
  %v1714 = vadd.f32 %v1193, %v1713
  %v1715 = vpop.f32.mrf.mxu0
  %1716 = vmatprep.mubr.f32.mxu0 0.0
  %1717 = vmatmul.mubr.f32.gmra.mxu0 %v1353
  %v1718 = vpop.f32.mrf.mxu0
  %v1719 = vadd.f32 %v1193, %v1718
  %v1720 = vpop.f32.mrf.mxu0
  %1721 = vmatprep.mubr.f32.mxu0 0.0
  %1722 = vmatmul.mubr.f32.gmra.mxu0 %v1356
  %v1723 = vpop.f32.mrf.mxu0
  %v1724 = vadd.f32 %v1193, %v1723
  %v1725 = vpop.f32.mrf.mxu0
  %1726 = vmatprep.mubr.f32.mxu0 0.0
  %1727 = vmatmul.mubr.f32.gmra.mxu0 %v1359
  %v1728 = vpop.f32.mrf.mxu0
  %v1729 = vadd.f32 %v1193, %v1728
  %v1730 = vpop.f32.mrf.mxu0
  %1731 = vmatprep.mubr.f32.mxu0 0.0
  %1732 = vmatmul.mubr.f32.gmra.mxu0 %v1362
  %v1733 = vpop.f32.mrf.mxu0
  %v1734 = vadd.f32 %v1193, %v1733
  %v1735 = vpop.f32.mrf.mxu0
  %1736 = vmatprep.mubr.f32.mxu0 0.0
  %1737 = vmatmul.mubr.f32.gmra.mxu0 %v1365
  %v1738 = vpop.f32.mrf.mxu0
  %v1739 = vadd.f32 %v1193, %v1738
  %v1740 = vpop.f32.mrf.mxu0
  %1741 = vmatprep.mubr.f32.mxu0 0.0
  %1742 = vmatmul.mubr.f32.gmra.mxu0 %v1368
  %v1743 = vpop.f32.mrf.mxu0
  %v1744 = vadd.f32 %v1193, %v1743
  %v1745 = vpop.f32.mrf.mxu0
  %1746 = vmatprep.mubr.f32.mxu0 0.0
  %1747 = vmatmul.mubr.f32.gmra.mxu0 %v1371
  %v1748 = vpop.f32.mrf.mxu0
  %v1749 = vadd.f32 %v1193, %v1748
  %v1750 = vpop.f32.mrf.mxu0
  %1751 = vmatprep.mubr.f32.mxu0 0.0
  %1752 = vmatmul.mubr.f32.gmra.mxu0 %v1374
  %v1753 = vpop.f32.mrf.mxu0
  %v1754 = vadd.f32 %v1193, %v1753
  %v1755 = vpop.f32.mrf.mxu0
  %1756 = vmatprep.mubr.f32.mxu0 0.0
  %1757 = vmatmul.mubr.f32.gmra.mxu0 %v1377
  %v1758 = vpop.f32.mrf.mxu0
  %v1759 = vadd.f32 %v1193, %v1758
  %v1760 = vpop.f32.mrf.mxu0
  %1761 = vmatprep.mubr.f32.mxu0 0.0
  %1762 = vmatmul.mubr.f32.gmra.mxu0 %v1380
  %v1763 = vpop.f32.mrf.mxu0
  %v1764 = vadd.f32 %v1193, %v1763
  %v1765 = vpop.f32.mrf.mxu0
  %1766 = vmatprep.mubr.f32.mxu0 0.0
  %1767 = vmatmul.mubr.f32.gmra.mxu0 %v1383
  %v1768 = vpop.f32.mrf.mxu0
  %v1769 = vadd.f32 %v1193, %v1768
  %v1770 = vpop.f32.mrf.mxu0
  %1771 = vmatprep.mubr.f32.mxu0 0.0
  %1772 = vmatmul.mubr.f32.gmra.mxu0 %v1386
  %v1773 = vpop.f32.mrf.mxu0
  %v1774 = vadd.f32 %v1193, %v1773
  %v1775 = vpop.f32.mrf.mxu0
  %1776 = vdwg.mxu0
  %v1777 = vmax.f32 %v1459, 0.0
  %v1778 = vmax.f32 %v1464, 0.0
  %v1779 = vmax.f32 %v1469, 0.0
  %v1780 = vmax.f32 %v1474, 0.0
  %v1781 = vmax.f32 %v1479, 0.0
  %v1782 = vmax.f32 %v1484, 0.0
  %v1783 = vmax.f32 %v1489, 0.0
  %v1784 = vmax.f32 %v1494, 0.0
  %v1785 = vmax.f32 %v1499, 0.0
  %v1786 = vmax.f32 %v1504, 0.0
  %v1787 = vmax.f32 %v1509, 0.0
  %v1788 = vmax.f32 %v1514, 0.0
  %v1789 = vmax.f32 %v1519, 0.0
  %v1790 = vmax.f32 %v1524, 0.0
  %v1791 = vmax.f32 %v1529, 0.0
  %v1792 = vmax.f32 %v1534, 0.0
  %v1793 = vmax.f32 %v1539, 0.0
  %v1794 = vmax.f32 %v1544, 0.0
  %v1795 = vmax.f32 %v1549, 0.0
  %v1796 = vmax.f32 %v1554, 0.0
  %v1797 = vmax.f32 %v1559, 0.0
  %v1798 = vmax.f32 %v1564, 0.0
  %v1799 = vmax.f32 %v1569, 0.0
  %v1800 = vmax.f32 %v1574, 0.0
  %v1801 = vmax.f32 %v1579, 0.0
  %v1802 = vmax.f32 %v1584, 0.0
  %v1803 = vmax.f32 %v1589, 0.0
  %v1804 = vmax.f32 %v1594, 0.0
  %v1805 = vmax.f32 %v1599, 0.0
  %v1806 = vmax.f32 %v1604, 0.0
  %v1807 = vmax.f32 %v1609, 0.0
  %v1808 = vmax.f32 %v1614, 0.0
  %v1809 = vmax.f32 %v1619, 0.0
  %v1810 = vmax.f32 %v1624, 0.0
  %v1811 = vmax.f32 %v1629, 0.0
  %v1812 = vmax.f32 %v1634, 0.0
  %v1813 = vmax.f32 %v1639, 0.0
  %v1814 = vmax.f32 %v1644, 0.0
  %v1815 = vmax.f32 %v1649, 0.0
  %v1816 = vmax.f32 %v1654, 0.0
  %v1817 = vmax.f32 %v1659, 0.0
  %v1818 = vmax.f32 %v1664, 0.0
  %v1819 = vmax.f32 %v1669, 0.0
  %v1820 = vmax.f32 %v1674, 0.0
  %v1821 = vmax.f32 %v1679, 0.0
  %v1822 = vmax.f32 %v1684, 0.0
  %v1823 = vmax.f32 %v1689, 0.0
  %v1824 = vmax.f32 %v1694, 0.0
  %v1825 = vmax.f32 %v1699, 0.0
  %v1826 = vmax.f32 %v1704, 0.0
  %v1827 = vmax.f32 %v1709, 0.0
  %v1828 = vmax.f32 %v1714, 0.0
  %v1829 = vmax.f32 %v1719, 0.0
  %v1830 = vmax.f32 %v1724, 0.0
  %v1831 = vmax.f32 %v1729, 0.0
  %v1832 = vmax.f32 %v1734, 0.0
  %v1833 = vmax.f32 %v1739, 0.0
  %v1834 = vmax.f32 %v1744, 0.0
  %v1835 = vmax.f32 %v1749, 0.0
  %v1836 = vmax.f32 %v1754, 0.0
  %v1837 = vmax.f32 %v1759, 0.0
  %v1838 = vmax.f32 %v1764, 0.0
  %v1839 = vmax.f32 %v1769, 0.0
  %v1840 = vmax.f32 %v1774, 0.0
  %v1841 = vld [vmem:[%s9] sm:$0xff]
  %v1843 = vcombine.high %v1841, %v1841
  %v1845 = vunpack.c.l.s4 1983009808
  %v1846 = vunpack.c.0.s8 %v1845
  %v1847 = vlaneseq
  %v1848 = vshrl.u32 %v1847, 7
  %v1849 = vsub.s32 %v1846, %v1848
  %v1850 = vrot.slane %v1841, %v1849
  %v1852 = vunpack.c.l.s4 1983009808
  %v1853 = vunpack.c.0.s8 %v1852
  %v1854 = vlaneseq
  %v1855 = vshrl.u32 %v1854, 7
  %v1856 = vsub.s32 %v1853, %v1855
  %v1857 = vrot.slane %v1843, %v1856
  %v1858 = vcombine.high %v1850, %v1850
  %v1859 = vcombine.high %v1857, %v1857
  %1864 = vmatprep.subr.mxu0 0.0
  %1865 = vmatpush1.msra.mxu0 %v1792
  %1866 = vmatprep.subr.mxu0 0.0
  %1867 = vmatpush1.msra.mxu0 %v1791
  %1868 = vmatprep.subr.mxu0 0.0
  %1869 = vmatpush1.msra.mxu0 %v1790
  %1870 = vmatprep.subr.mxu0 0.0
  %1871 = vmatpush1.msra.mxu0 %v1789
  %1872 = vmatprep.subr.mxu0 0.0
  %1873 = vmatpush1.msra.mxu0 %v1788
  %1874 = vmatprep.subr.mxu0 0.0
  %1875 = vmatpush1.msra.mxu0 %v1787
  %1876 = vmatprep.subr.mxu0 0.0
  %1877 = vmatpush1.msra.mxu0 %v1786
  %1878 = vmatprep.subr.mxu0 0.0
  %1879 = vmatpush1.msra.mxu0 %v1785
  %1880 = vmatprep.subr.mxu0 0.0
  %1881 = vmatpush1.msra.mxu0 %v1784
  %1882 = vmatprep.subr.mxu0 0.0
  %1883 = vmatpush1.msra.mxu0 %v1783
  %1884 = vmatprep.subr.mxu0 0.0
  %1885 = vmatpush1.msra.mxu0 %v1782
  %1886 = vmatprep.subr.mxu0 0.0
  %1887 = vmatpush1.msra.mxu0 %v1781
  %1888 = vmatprep.subr.mxu0 0.0
  %1889 = vmatpush1.msra.mxu0 %v1780
  %1890 = vmatprep.subr.mxu0 0.0
  %1891 = vmatpush1.msra.mxu0 %v1779
  %1892 = vmatprep.subr.mxu0 0.0
  %1893 = vmatpush1.msra.mxu0 %v1778
  %1894 = vmatprep.subr.mxu0 0.0
  %1895 = vmatpush1.msra.mxu0 %v1777
  %1896 = vmatprep.subr.mxu0 0.0
  %1897 = vmatpush2.msra.mxu0 %v1808
  %1898 = vmatprep.subr.mxu0 0.0
  %1899 = vmatpush2.msra.mxu0 %v1807
  %1900 = vmatprep.subr.mxu0 0.0
  %1901 = vmatpush2.msra.mxu0 %v1806
  %1902 = vmatprep.subr.mxu0 0.0
  %1903 = vmatpush2.msra.mxu0 %v1805
  %1904 = vmatprep.subr.mxu0 0.0
  %1905 = vmatpush2.msra.mxu0 %v1804
  %1906 = vmatprep.subr.mxu0 0.0
  %1907 = vmatpush2.msra.mxu0 %v1803
  %1908 = vmatprep.subr.mxu0 0.0
  %1909 = vmatpush2.msra.mxu0 %v1802
  %1910 = vmatprep.subr.mxu0 0.0
  %1911 = vmatpush2.msra.mxu0 %v1801
  %1912 = vmatprep.subr.mxu0 0.0
  %1913 = vmatpush2.msra.mxu0 %v1800
  %1914 = vmatprep.subr.mxu0 0.0
  %1915 = vmatpush2.msra.mxu0 %v1799
  %1916 = vmatprep.subr.mxu0 0.0
  %1917 = vmatpush2.msra.mxu0 %v1798
  %1918 = vmatprep.subr.mxu0 0.0
  %1919 = vmatpush2.msra.mxu0 %v1797
  %1920 = vmatprep.subr.mxu0 0.0
  %1921 = vmatpush2.msra.mxu0 %v1796
  %1922 = vmatprep.subr.mxu0 0.0
  %1923 = vmatpush2.msra.mxu0 %v1795
  %1924 = vmatprep.subr.mxu0 0.0
  %1925 = vmatpush2.msra.mxu0 %v1794
  %1926 = vmatprep.subr.mxu0 0.0
  %1927 = vmatpush2.msra.mxu0 %v1793
  %1928 = vmatprep.mubr.f32.mxu0 %v1858
  %1929 = vmatmul.mubr.f32.gmra.mxu0 %v1850
  %v1930 = vpop.f32.mrf.mxu0
  %v1931 = vadd.f32 0.0, %v1930
  %v1932 = vpop.f32.mrf.mxu0
  %1933 = vdwg.mxu0
  %1934 = vmatprep.subr.mxu0 0.0
  %1935 = vmatpush1.msra.mxu0 %v1824
  %1936 = vmatprep.subr.mxu0 0.0
  %1937 = vmatpush1.msra.mxu0 %v1823
  %1938 = vmatprep.subr.mxu0 0.0
  %1939 = vmatpush1.msra.mxu0 %v1822
  %1940 = vmatprep.subr.mxu0 0.0
  %1941 = vmatpush1.msra.mxu0 %v1821
  %1942 = vmatprep.subr.mxu0 0.0
  %1943 = vmatpush1.msra.mxu0 %v1820
  %1944 = vmatprep.subr.mxu0 0.0
  %1945 = vmatpush1.msra.mxu0 %v1819
  %1946 = vmatprep.subr.mxu0 0.0
  %1947 = vmatpush1.msra.mxu0 %v1818
  %1948 = vmatprep.subr.mxu0 0.0
  %1949 = vmatpush1.msra.mxu0 %v1817
  %1950 = vmatprep.subr.mxu0 0.0
  %1951 = vmatpush1.msra.mxu0 %v1816
  %1952 = vmatprep.subr.mxu0 0.0
  %1953 = vmatpush1.msra.mxu0 %v1815
  %1954 = vmatprep.subr.mxu0 0.0
  %1955 = vmatpush1.msra.mxu0 %v1814
  %1956 = vmatprep.subr.mxu0 0.0
  %1957 = vmatpush1.msra.mxu0 %v1813
  %1958 = vmatprep.subr.mxu0 0.0
  %1959 = vmatpush1.msra.mxu0 %v1812
  %1960 = vmatprep.subr.mxu0 0.0
  %1961 = vmatpush1.msra.mxu0 %v1811
  %1962 = vmatprep.subr.mxu0 0.0
  %1963 = vmatpush1.msra.mxu0 %v1810
  %1964 = vmatprep.subr.mxu0 0.0
  %1965 = vmatpush1.msra.mxu0 %v1809
  %1966 = vmatprep.subr.mxu0 0.0
  %1967 = vmatpush2.msra.mxu0 %v1840
  %1968 = vmatprep.subr.mxu0 0.0
  %1969 = vmatpush2.msra.mxu0 %v1839
  %1970 = vmatprep.subr.mxu0 0.0
  %1971 = vmatpush2.msra.mxu0 %v1838
  %1972 = vmatprep.subr.mxu0 0.0
  %1973 = vmatpush2.msra.mxu0 %v1837
  %1974 = vmatprep.subr.mxu0 0.0
  %1975 = vmatpush2.msra.mxu0 %v1836
  %1976 = vmatprep.subr.mxu0 0.0
  %1977 = vmatpush2.msra.mxu0 %v1835
  %1978 = vmatprep.subr.mxu0 0.0
  %1979 = vmatpush2.msra.mxu0 %v1834
  %1980 = vmatprep.subr.mxu0 0.0
  %1981 = vmatpush2.msra.mxu0 %v1833
  %1982 = vmatprep.subr.mxu0 0.0
  %1983 = vmatpush2.msra.mxu0 %v1832
  %1984 = vmatprep.subr.mxu0 0.0
  %1985 = vmatpush2.msra.mxu0 %v1831
  %1986 = vmatprep.subr.mxu0 0.0
  %1987 = vmatpush2.msra.mxu0 %v1830
  %1988 = vmatprep.subr.mxu0 0.0
  %1989 = vmatpush2.msra.mxu0 %v1829
  %1990 = vmatprep.subr.mxu0 0.0
  %1991 = vmatpush2.msra.mxu0 %v1828
  %1992 = vmatprep.subr.mxu0 0.0
  %1993 = vmatpush2.msra.mxu0 %v1827
  %1994 = vmatprep.subr.mxu0 0.0
  %1995 = vmatpush2.msra.mxu0 %v1826
  %1996 = vmatprep.subr.mxu0 0.0
  %1997 = vmatpush2.msra.mxu0 %v1825
  %1998 = vmatprep.mubr.f32.mxu0 %v1859
  %1999 = vmatmul.mubr.f32.gmra.mxu0 %v1857
  %v2000 = vpop.f32.mrf.mxu0
  %v2001 = vadd.f32 %v1931, %v2000
  %v2002 = vpop.f32.mrf.mxu0
  %2003 = vdwg.mxu0
  %v2004 = vld [vmem:[%s29] sm:$0xff]
  %v2005 = vld [vmem:[%s31] sm:$0x1]
  %v2007 = vlaneseq
  %v2008 = vshrl.u32 %v2007, 7
  %v2009 = vsub.s32 0, %v2008
  %v2010 = vrot.slane %v2005, %v2009
  %vm2012 = vcmask 64512
  %v2014 = vsel %vm2012, %v2001, 0
  %2016 = vmatprep.subr.mxu0 0.0
  %2017 = vmatpush1.msra.mxu0 0.0
  %2018 = vmatprep.subr.mxu0 0.0
  %2019 = vmatpush1.msra.mxu0 0.0
  %2020 = vmatprep.subr.mxu0 0.0
  %2021 = vmatpush1.msra.mxu0 0.0
  %2022 = vmatprep.subr.mxu0 0.0
  %2023 = vmatpush1.msra.mxu0 0.0
  %2024 = vmatprep.subr.mxu0 0.0
  %2025 = vmatpush1.msra.mxu0 0.0
  %2026 = vmatprep.subr.mxu0 0.0
  %2027 = vmatpush1.msra.mxu0 0.0
  %2028 = vmatprep.subr.mxu0 0.0
  %2029 = vmatpush1.msra.mxu0 0.0
  %2030 = vmatprep.subr.mxu0 0.0
  %2031 = vmatpush1.msra.mxu0 0.0
  %2032 = vmatprep.subr.mxu0 0.0
  %2033 = vmatpush1.msra.mxu0 0.0
  %2034 = vmatprep.subr.mxu0 0.0
  %2035 = vmatpush1.msra.mxu0 0.0
  %2036 = vmatprep.subr.mxu0 0.0
  %2037 = vmatpush1.msra.mxu0 0.0
  %2038 = vmatprep.subr.mxu0 0.0
  %2039 = vmatpush1.msra.mxu0 0.0
  %2040 = vmatprep.subr.mxu0 0.0
  %2041 = vmatpush1.msra.mxu0 0.0
  %2042 = vmatprep.subr.mxu0 0.0
  %2043 = vmatpush1.msra.mxu0 0.0
  %2044 = vmatprep.subr.mxu0 0.0
  %2045 = vmatpush1.msra.mxu0 0.0
  %2046 = vmatprep.subr.mxu0 0.0
  %2047 = vmatpush1.msra.mxu0 %v2004
  %2048 = vmatprep.subr.mxu0 0.0
  %2049 = vmatpush2.msra.mxu0 0.0
  %2050 = vmatprep.subr.mxu0 0.0
  %2051 = vmatpush2.msra.mxu0 0.0
  %2052 = vmatprep.subr.mxu0 0.0
  %2053 = vmatpush2.msra.mxu0 0.0
  %2054 = vmatprep.subr.mxu0 0.0
  %2055 = vmatpush2.msra.mxu0 0.0
  %2056 = vmatprep.subr.mxu0 0.0
  %2057 = vmatpush2.msra.mxu0 0.0
  %2058 = vmatprep.subr.mxu0 0.0
  %2059 = vmatpush2.msra.mxu0 0.0
  %2060 = vmatprep.subr.mxu0 0.0
  %2061 = vmatpush2.msra.mxu0 0.0
  %2062 = vmatprep.subr.mxu0 0.0
  %2063 = vmatpush2.msra.mxu0 0.0
  %2064 = vmatprep.subr.mxu0 0.0
  %2065 = vmatpush2.msra.mxu0 0.0
  %2066 = vmatprep.subr.mxu0 0.0
  %2067 = vmatpush2.msra.mxu0 0.0
  %2068 = vmatprep.subr.mxu0 0.0
  %2069 = vmatpush2.msra.mxu0 0.0
  %2070 = vmatprep.subr.mxu0 0.0
  %2071 = vmatpush2.msra.mxu0 0.0
  %2072 = vmatprep.subr.mxu0 0.0
  %2073 = vmatpush2.msra.mxu0 0.0
  %2074 = vmatprep.subr.mxu0 0.0
  %2075 = vmatpush2.msra.mxu0 0.0
  %2076 = vmatprep.subr.mxu0 0.0
  %2077 = vmatpush2.msra.mxu0 0.0
  %2078 = vmatprep.subr.mxu0 0.0
  %2079 = vmatpush2.msra.mxu0 0.0
  %2080 = vmatprep.mubr.f32.mxu0 0.0
  %2081 = vmatmul.mubr.f32.gmra.mxu0 %v2014
  %v2082 = vpop.f32.mrf.mxu0
  %v2083 = vadd.f32 %v2010, %v2082
  %v2084 = vpop.f32.mrf.mxu0
  %2085 = vdwg.mxu0
  %2087 = vrot.lane.b32.xlu0 %v1119, 32
  %v2088 = vpop.permute.xlu0 %2087
  %v2091 = vrot.slane %v2083, 2
  %2092 = vrot.lane.b32.xlu0 %v2091, 32
  %v2093 = vpop.permute.xlu0 %2092
  %v2095 = vsel %vm277, %v2088, %v2093
  %v2096 = vld [vmem:[%s33] sm:$0xff]
  %v2097 = vld [vmem:[%s33 + $0x8] sm:$0xff]
  %v2098 = vld [vmem:[%s33 + $0x10] sm:$0xff]
  %v2099 = vld [vmem:[%s33 + $0x18] sm:$0xff]
  %v2100 = vld [vmem:[%s33 + $0x20] sm:$0xff]
  %v2101 = vld [vmem:[%s33 + $0x28] sm:$0xff]
  %v2102 = vld [vmem:[%s33 + $0x30] sm:$0xff]
  %v2103 = vld [vmem:[%s33 + $0x38] sm:$0xff]
  %v2104 = vld [vmem:[%s35] sm:$0x1]
  %v2106 = vlaneseq
  %v2107 = vshrl.u32 %v2106, 7
  %v2108 = vsub.s32 0, %v2107
  %v2109 = vrot.slane %v2104, %v2108
  %v2112 = vrot.slane %v2095, 6
  %vm2113 = vcmask 523264
  %v2114 = vsel %vm2113, %v2112, 0
  %2116 = vmatprep.subr.mxu0 0.0
  %2117 = vmatpush1.msra.mxu0 0.0
  %2118 = vmatprep.subr.mxu0 0.0
  %2119 = vmatpush1.msra.mxu0 0.0
  %2120 = vmatprep.subr.mxu0 0.0
  %2121 = vmatpush1.msra.mxu0 0.0
  %2122 = vmatprep.subr.mxu0 0.0
  %2123 = vmatpush1.msra.mxu0 0.0
  %2124 = vmatprep.subr.mxu0 0.0
  %2125 = vmatpush1.msra.mxu0 0.0
  %2126 = vmatprep.subr.mxu0 0.0
  %2127 = vmatpush1.msra.mxu0 0.0
  %2128 = vmatprep.subr.mxu0 0.0
  %2129 = vmatpush1.msra.mxu0 0.0
  %2130 = vmatprep.subr.mxu0 0.0
  %2131 = vmatpush1.msra.mxu0 0.0
  %2132 = vmatprep.subr.mxu0 0.0
  %2133 = vmatpush1.msra.mxu0 %v2103
  %2134 = vmatprep.subr.mxu0 0.0
  %2135 = vmatpush1.msra.mxu0 %v2102
  %2136 = vmatprep.subr.mxu0 0.0
  %2137 = vmatpush1.msra.mxu0 %v2101
  %2138 = vmatprep.subr.mxu0 0.0
  %2139 = vmatpush1.msra.mxu0 %v2100
  %2140 = vmatprep.subr.mxu0 0.0
  %2141 = vmatpush1.msra.mxu0 %v2099
  %2142 = vmatprep.subr.mxu0 0.0
  %2143 = vmatpush1.msra.mxu0 %v2098
  %2144 = vmatprep.subr.mxu0 0.0
  %2145 = vmatpush1.msra.mxu0 %v2097
  %2146 = vmatprep.subr.mxu0 0.0
  %2147 = vmatpush1.msra.mxu0 %v2096
  %2148 = vmatprep.subr.mxu0 0.0
  %2149 = vmatpush2.msra.mxu0 0.0
  %2150 = vmatprep.subr.mxu0 0.0
  %2151 = vmatpush2.msra.mxu0 0.0
  %2152 = vmatprep.subr.mxu0 0.0
  %2153 = vmatpush2.msra.mxu0 0.0
  %2154 = vmatprep.subr.mxu0 0.0
  %2155 = vmatpush2.msra.mxu0 0.0
  %2156 = vmatprep.subr.mxu0 0.0
  %2157 = vmatpush2.msra.mxu0 0.0
  %2158 = vmatprep.subr.mxu0 0.0
  %2159 = vmatpush2.msra.mxu0 0.0
  %2160 = vmatprep.subr.mxu0 0.0
  %2161 = vmatpush2.msra.mxu0 0.0
  %2162 = vmatprep.subr.mxu0 0.0
  %2163 = vmatpush2.msra.mxu0 0.0
  %2164 = vmatprep.subr.mxu0 0.0
  %2165 = vmatpush2.msra.mxu0 0.0
  %2166 = vmatprep.subr.mxu0 0.0
  %2167 = vmatpush2.msra.mxu0 0.0
  %2168 = vmatprep.subr.mxu0 0.0
  %2169 = vmatpush2.msra.mxu0 0.0
  %2170 = vmatprep.subr.mxu0 0.0
  %2171 = vmatpush2.msra.mxu0 0.0
  %2172 = vmatprep.subr.mxu0 0.0
  %2173 = vmatpush2.msra.mxu0 0.0
  %2174 = vmatprep.subr.mxu0 0.0
  %2175 = vmatpush2.msra.mxu0 0.0
  %2176 = vmatprep.subr.mxu0 0.0
  %2177 = vmatpush2.msra.mxu0 0.0
  %2178 = vmatprep.subr.mxu0 0.0
  %2179 = vmatpush2.msra.mxu0 0.0
  %2180 = vmatprep.mubr.f32.mxu0 0.0
  %2181 = vmatmul.mubr.f32.gmra.mxu0 %v2114
  %v2182 = vpop.f32.mrf.mxu0
  %v2183 = vadd.f32 %v2109, %v2182
  %v2184 = vpop.f32.mrf.mxu0
  %2185 = vdwg.mxu0
  %vm2186 = vcmask 517120
  %v2187 = vsel %vm2186, %v2183, 0.0
  %2188 = vadd.xlane.f32.xlu0 %v2187
  %v2189 = vpop.xlane.xlu0 %2188
  %v2190 = vrcp.pop 64.0
  %v2191 = vmul.f32 %v2189, %v2190
  %v2192 = vsub.f32 %v2183, %v2191
  %v2193 = vmul.f32 %v2192, %v2192
  %v2194 = vsel %vm2186, %v2193, 0.0
  %2195 = vadd.xlane.f32.xlu0 %v2194
  %v2196 = vpop.xlane.xlu0 %2195
  %v2197 = vmul.f32 %v2196, %v2190
  %v2198 = vadd.f32 %v2197, 1e-05
  %v2199 = vrsqrt.pop %v2198
  %v2200 = vmul.f32 %v2192, %v2199
  %v2201 = vmax.f32 %v2200, 0.0
  %v2202 = vld [vmem:[%s37] sm:$0xff]
  %v2203 = vld [vmem:[%s37 + $0x8] sm:$0xff]
  %v2204 = vld [vmem:[%s37 + $0x10] sm:$0xff]
  %v2205 = vld [vmem:[%s37 + $0x18] sm:$0xff]
  %v2206 = vld [vmem:[%s37 + $0x20] sm:$0xff]
  %v2207 = vld [vmem:[%s37 + $0x28] sm:$0xff]
  %v2208 = vld [vmem:[%s37 + $0x30] sm:$0xff]
  %v2209 = vld [vmem:[%s37 + $0x38] sm:$0xff]
  %v2210 = vld [vmem:[%s39] sm:$0x1]
  %v2212 = vlaneseq
  %v2213 = vshrl.u32 %v2212, 7
  %v2214 = vsub.s32 0, %v2213
  %v2215 = vrot.slane %v2210, %v2214
  %v2218 = vsel %vm2113, %v2201, 0
  %2220 = vmatprep.subr.mxu0 0.0
  %2221 = vmatpush1.msra.mxu0 0.0
  %2222 = vmatprep.subr.mxu0 0.0
  %2223 = vmatpush1.msra.mxu0 0.0
  %2224 = vmatprep.subr.mxu0 0.0
  %2225 = vmatpush1.msra.mxu0 0.0
  %2226 = vmatprep.subr.mxu0 0.0
  %2227 = vmatpush1.msra.mxu0 0.0
  %2228 = vmatprep.subr.mxu0 0.0
  %2229 = vmatpush1.msra.mxu0 0.0
  %2230 = vmatprep.subr.mxu0 0.0
  %2231 = vmatpush1.msra.mxu0 0.0
  %2232 = vmatprep.subr.mxu0 0.0
  %2233 = vmatpush1.msra.mxu0 0.0
  %2234 = vmatprep.subr.mxu0 0.0
  %2235 = vmatpush1.msra.mxu0 0.0
  %2236 = vmatprep.subr.mxu0 0.0
  %2237 = vmatpush1.msra.mxu0 %v2209
  %2238 = vmatprep.subr.mxu0 0.0
  %2239 = vmatpush1.msra.mxu0 %v2208
  %2240 = vmatprep.subr.mxu0 0.0
  %2241 = vmatpush1.msra.mxu0 %v2207
  %2242 = vmatprep.subr.mxu0 0.0
  %2243 = vmatpush1.msra.mxu0 %v2206
  %2244 = vmatprep.subr.mxu0 0.0
  %2245 = vmatpush1.msra.mxu0 %v2205
  %2246 = vmatprep.subr.mxu0 0.0
  %2247 = vmatpush1.msra.mxu0 %v2204
  %2248 = vmatprep.subr.mxu0 0.0
  %2249 = vmatpush1.msra.mxu0 %v2203
  %2250 = vmatprep.subr.mxu0 0.0
  %2251 = vmatpush1.msra.mxu0 %v2202
  %2252 = vmatprep.subr.mxu0 0.0
  %2253 = vmatpush2.msra.mxu0 0.0
  %2254 = vmatprep.subr.mxu0 0.0
  %2255 = vmatpush2.msra.mxu0 0.0
  %2256 = vmatprep.subr.mxu0 0.0
  %2257 = vmatpush2.msra.mxu0 0.0
  %2258 = vmatprep.subr.mxu0 0.0
  %2259 = vmatpush2.msra.mxu0 0.0
  %2260 = vmatprep.subr.mxu0 0.0
  %2261 = vmatpush2.msra.mxu0 0.0
  %2262 = vmatprep.subr.mxu0 0.0
  %2263 = vmatpush2.msra.mxu0 0.0
  %2264 = vmatprep.subr.mxu0 0.0
  %2265 = vmatpush2.msra.mxu0 0.0
  %2266 = vmatprep.subr.mxu0 0.0
  %2267 = vmatpush2.msra.mxu0 0.0
  %2268 = vmatprep.subr.mxu0 0.0
  %2269 = vmatpush2.msra.mxu0 0.0
  %2270 = vmatprep.subr.mxu0 0.0
  %2271 = vmatpush2.msra.mxu0 0.0
  %2272 = vmatprep.subr.mxu0 0.0
  %2273 = vmatpush2.msra.mxu0 0.0
  %2274 = vmatprep.subr.mxu0 0.0
  %2275 = vmatpush2.msra.mxu0 0.0
  %2276 = vmatprep.subr.mxu0 0.0
  %2277 = vmatpush2.msra.mxu0 0.0
  %2278 = vmatprep.subr.mxu0 0.0
  %2279 = vmatpush2.msra.mxu0 0.0
  %2280 = vmatprep.subr.mxu0 0.0
  %2281 = vmatpush2.msra.mxu0 0.0
  %2282 = vmatprep.subr.mxu0 0.0
  %2283 = vmatpush2.msra.mxu0 0.0
  %2284 = vmatprep.mubr.f32.mxu0 0.0
  %2285 = vmatmul.mubr.f32.gmra.mxu0 %v2218
  %v2286 = vpop.f32.mrf.mxu0
  %v2287 = vadd.f32 %v2215, %v2286
  %v2288 = vpop.f32.mrf.mxu0
  %2289 = vdwg.mxu0
  %v2290 = vsel %vm2186, %v2287, 0.0
  %2291 = vadd.xlane.f32.xlu0 %v2290
  %v2292 = vpop.xlane.xlu0 %2291
  %v2293 = vmul.f32 %v2292, %v2190
  %v2294 = vsub.f32 %v2287, %v2293
  %v2295 = vmul.f32 %v2294, %v2294
  %v2296 = vsel %vm2186, %v2295, 0.0
  %2297 = vadd.xlane.f32.xlu0 %v2296
  %v2298 = vpop.xlane.xlu0 %2297
  %v2299 = vmul.f32 %v2298, %v2190
  %v2300 = vadd.f32 %v2299, 1e-05
  %v2301 = vrsqrt.pop %v2300
  %v2302 = vmul.f32 %v2294, %v2301
  %v2303 = vmax.f32 %v2302, 0.0
  %v2304 = vld [vmem:[%s41] sm:$0xff]
  %v2305 = vld [vmem:[%s41 + $0x8] sm:$0xff]
  %v2306 = vld [vmem:[%s41 + $0x10] sm:$0xff]
  %v2307 = vld [vmem:[%s41 + $0x18] sm:$0xff]
  %v2308 = vld [vmem:[%s41 + $0x20] sm:$0xff]
  %v2309 = vld [vmem:[%s41 + $0x28] sm:$0xff]
  %v2310 = vld [vmem:[%s41 + $0x30] sm:$0xff]
  %v2311 = vld [vmem:[%s41 + $0x38] sm:$0xff]
  %v2312 = vld [vmem:[%s43] sm:$0x1]
  %v2314 = vlaneseq
  %v2315 = vshrl.u32 %v2314, 7
  %v2316 = vsub.s32 0, %v2315
  %v2317 = vrot.slane %v2312, %v2316
  %v2320 = vsel %vm2113, %v2303, 0
  %2322 = vmatprep.subr.mxu0 0.0
  %2323 = vmatpush1.msra.mxu0 0.0
  %2324 = vmatprep.subr.mxu0 0.0
  %2325 = vmatpush1.msra.mxu0 0.0
  %2326 = vmatprep.subr.mxu0 0.0
  %2327 = vmatpush1.msra.mxu0 0.0
  %2328 = vmatprep.subr.mxu0 0.0
  %2329 = vmatpush1.msra.mxu0 0.0
  %2330 = vmatprep.subr.mxu0 0.0
  %2331 = vmatpush1.msra.mxu0 0.0
  %2332 = vmatprep.subr.mxu0 0.0
  %2333 = vmatpush1.msra.mxu0 0.0
  %2334 = vmatprep.subr.mxu0 0.0
  %2335 = vmatpush1.msra.mxu0 0.0
  %2336 = vmatprep.subr.mxu0 0.0
  %2337 = vmatpush1.msra.mxu0 0.0
  %2338 = vmatprep.subr.mxu0 0.0
  %2339 = vmatpush1.msra.mxu0 %v2311
  %2340 = vmatprep.subr.mxu0 0.0
  %2341 = vmatpush1.msra.mxu0 %v2310
  %2342 = vmatprep.subr.mxu0 0.0
  %2343 = vmatpush1.msra.mxu0 %v2309
  %2344 = vmatprep.subr.mxu0 0.0
  %2345 = vmatpush1.msra.mxu0 %v2308
  %2346 = vmatprep.subr.mxu0 0.0
  %2347 = vmatpush1.msra.mxu0 %v2307
  %2348 = vmatprep.subr.mxu0 0.0
  %2349 = vmatpush1.msra.mxu0 %v2306
  %2350 = vmatprep.subr.mxu0 0.0
  %2351 = vmatpush1.msra.mxu0 %v2305
  %2352 = vmatprep.subr.mxu0 0.0
  %2353 = vmatpush1.msra.mxu0 %v2304
  %2354 = vmatprep.subr.mxu0 0.0
  %2355 = vmatpush2.msra.mxu0 0.0
  %2356 = vmatprep.subr.mxu0 0.0
  %2357 = vmatpush2.msra.mxu0 0.0
  %2358 = vmatprep.subr.mxu0 0.0
  %2359 = vmatpush2.msra.mxu0 0.0
  %2360 = vmatprep.subr.mxu0 0.0
  %2361 = vmatpush2.msra.mxu0 0.0
  %2362 = vmatprep.subr.mxu0 0.0
  %2363 = vmatpush2.msra.mxu0 0.0
  %2364 = vmatprep.subr.mxu0 0.0
  %2365 = vmatpush2.msra.mxu0 0.0
  %2366 = vmatprep.subr.mxu0 0.0
  %2367 = vmatpush2.msra.mxu0 0.0
  %2368 = vmatprep.subr.mxu0 0.0
  %2369 = vmatpush2.msra.mxu0 0.0
  %2370 = vmatprep.subr.mxu0 0.0
  %2371 = vmatpush2.msra.mxu0 0.0
  %2372 = vmatprep.subr.mxu0 0.0
  %2373 = vmatpush2.msra.mxu0 0.0
  %2374 = vmatprep.subr.mxu0 0.0
  %2375 = vmatpush2.msra.mxu0 0.0
  %2376 = vmatprep.subr.mxu0 0.0
  %2377 = vmatpush2.msra.mxu0 0.0
  %2378 = vmatprep.subr.mxu0 0.0
  %2379 = vmatpush2.msra.mxu0 0.0
  %2380 = vmatprep.subr.mxu0 0.0
  %2381 = vmatpush2.msra.mxu0 0.0
  %2382 = vmatprep.subr.mxu0 0.0
  %2383 = vmatpush2.msra.mxu0 0.0
  %2384 = vmatprep.subr.mxu0 0.0
  %2385 = vmatpush2.msra.mxu0 0.0
  %2386 = vmatprep.mubr.f32.mxu0 0.0
  %2387 = vmatmul.mubr.f32.gmra.mxu0 %v2320
  %v2388 = vpop.f32.mrf.mxu0
  %v2389 = vadd.f32 %v2317, %v2388
  %v2390 = vpop.f32.mrf.mxu0
  %2391 = vdwg.mxu0
  %vm2392 = vcmask 254976
  %v2393 = vsel %vm2392, %v2389, 0.0
  %2394 = vadd.xlane.f32.xlu0 %v2393
  %v2395 = vpop.xlane.xlu0 %2394
  %v2396 = vrcp.pop 32.0
  %v2397 = vmul.f32 %v2395, %v2396
  %v2398 = vsub.f32 %v2389, %v2397
  %v2399 = vmul.f32 %v2398, %v2398
  %v2400 = vsel %vm2392, %v2399, 0.0
  %2401 = vadd.xlane.f32.xlu0 %v2400
  %v2402 = vpop.xlane.xlu0 %2401
  %v2403 = vmul.f32 %v2402, %v2396
  %v2404 = vadd.f32 %v2403, 1e-05
  %v2405 = vrsqrt.pop %v2404
  %v2406 = vmul.f32 %v2398, %v2405
  %v2407 = vmax.f32 %v2406, 0.0
  %v2408 = vld [vmem:[%s45] sm:$0xff]
  %v2409 = vld [vmem:[%s45 + $0x8] sm:$0xff]
  %v2410 = vld [vmem:[%s45 + $0x10] sm:$0xff]
  %v2411 = vld [vmem:[%s45 + $0x18] sm:$0xff]
  %v2412 = vld [vmem:[%s47] sm:$0x1]
  %v2414 = vlaneseq
  %v2415 = vshrl.u32 %v2414, 7
  %v2416 = vsub.s32 0, %v2415
  %v2417 = vrot.slane %v2412, %v2416
  %v2420 = vsel %vm277, %v2407, 0
  %2422 = vmatprep.subr.mxu0 0.0
  %2423 = vmatpush1.msra.mxu0 0.0
  %2424 = vmatprep.subr.mxu0 0.0
  %2425 = vmatpush1.msra.mxu0 0.0
  %2426 = vmatprep.subr.mxu0 0.0
  %2427 = vmatpush1.msra.mxu0 0.0
  %2428 = vmatprep.subr.mxu0 0.0
  %2429 = vmatpush1.msra.mxu0 0.0
  %2430 = vmatprep.subr.mxu0 0.0
  %2431 = vmatpush1.msra.mxu0 0.0
  %2432 = vmatprep.subr.mxu0 0.0
  %2433 = vmatpush1.msra.mxu0 0.0
  %2434 = vmatprep.subr.mxu0 0.0
  %2435 = vmatpush1.msra.mxu0 0.0
  %2436 = vmatprep.subr.mxu0 0.0
  %2437 = vmatpush1.msra.mxu0 0.0
  %2438 = vmatprep.subr.mxu0 0.0
  %2439 = vmatpush1.msra.mxu0 0.0
  %2440 = vmatprep.subr.mxu0 0.0
  %2441 = vmatpush1.msra.mxu0 0.0
  %2442 = vmatprep.subr.mxu0 0.0
  %2443 = vmatpush1.msra.mxu0 0.0
  %2444 = vmatprep.subr.mxu0 0.0
  %2445 = vmatpush1.msra.mxu0 0.0
  %2446 = vmatprep.subr.mxu0 0.0
  %2447 = vmatpush1.msra.mxu0 %v2411
  %2448 = vmatprep.subr.mxu0 0.0
  %2449 = vmatpush1.msra.mxu0 %v2410
  %2450 = vmatprep.subr.mxu0 0.0
  %2451 = vmatpush1.msra.mxu0 %v2409
  %2452 = vmatprep.subr.mxu0 0.0
  %2453 = vmatpush1.msra.mxu0 %v2408
  %2454 = vmatprep.subr.mxu0 0.0
  %2455 = vmatpush2.msra.mxu0 0.0
  %2456 = vmatprep.subr.mxu0 0.0
  %2457 = vmatpush2.msra.mxu0 0.0
  %2458 = vmatprep.subr.mxu0 0.0
  %2459 = vmatpush2.msra.mxu0 0.0
  %2460 = vmatprep.subr.mxu0 0.0
  %2461 = vmatpush2.msra.mxu0 0.0
  %2462 = vmatprep.subr.mxu0 0.0
  %2463 = vmatpush2.msra.mxu0 0.0
  %2464 = vmatprep.subr.mxu0 0.0
  %2465 = vmatpush2.msra.mxu0 0.0
  %2466 = vmatprep.subr.mxu0 0.0
  %2467 = vmatpush2.msra.mxu0 0.0
  %2468 = vmatprep.subr.mxu0 0.0
  %2469 = vmatpush2.msra.mxu0 0.0
  %2470 = vmatprep.subr.mxu0 0.0
  %2471 = vmatpush2.msra.mxu0 0.0
  %2472 = vmatprep.subr.mxu0 0.0
  %2473 = vmatpush2.msra.mxu0 0.0
  %2474 = vmatprep.subr.mxu0 0.0
  %2475 = vmatpush2.msra.mxu0 0.0
  %2476 = vmatprep.subr.mxu0 0.0
  %2477 = vmatpush2.msra.mxu0 0.0
  %2478 = vmatprep.subr.mxu0 0.0
  %2479 = vmatpush2.msra.mxu0 0.0
  %2480 = vmatprep.subr.mxu0 0.0
  %2481 = vmatpush2.msra.mxu0 0.0
  %2482 = vmatprep.subr.mxu0 0.0
  %2483 = vmatpush2.msra.mxu0 0.0
  %2484 = vmatprep.subr.mxu0 0.0
  %2485 = vmatpush2.msra.mxu0 0.0
  %2486 = vmatprep.mubr.f32.mxu0 0.0
  %2487 = vmatmul.mubr.f32.gmra.mxu0 %v2420
  %v2488 = vpop.f32.mrf.mxu0
  %v2489 = vadd.f32 %v2417, %v2488
  %v2490 = vpop.f32.mrf.mxu0
  %2491 = vdwg.mxu0
  %v2492 = vsel %vm2392, %v2489, 0.0
  %2493 = vadd.xlane.f32.xlu0 %v2492
  %v2494 = vpop.xlane.xlu0 %2493
  %v2495 = vmul.f32 %v2494, %v2396
  %v2496 = vsub.f32 %v2489, %v2495
  %v2497 = vmul.f32 %v2496, %v2496
  %v2498 = vsel %vm2392, %v2497, 0.0
  %2499 = vadd.xlane.f32.xlu0 %v2498
  %v2500 = vpop.xlane.xlu0 %2499
  %v2501 = vmul.f32 %v2500, %v2396
  %v2502 = vadd.f32 %v2501, 1e-05
  %v2503 = vrsqrt.pop %v2502
  %v2504 = vmul.f32 %v2496, %v2503
  %v2505 = vmax.f32 %v2504, 0.0
  %v2506 = vld [vmem:[%s49] sm:$0xff]
  %v2507 = vld [vmem:[%s49 + $0x8] sm:$0xff]
  %v2508 = vld [vmem:[%s49 + $0x10] sm:$0xff]
  %v2509 = vld [vmem:[%s49 + $0x18] sm:$0xff]
  %v2510 = vld [vmem:[%s51] sm:$0x1]
  %v2512 = vlaneseq
  %v2513 = vshrl.u32 %v2512, 7
  %v2514 = vsub.s32 0, %v2513
  %v2515 = vrot.slane %v2510, %v2514
  %v2518 = vsel %vm277, %v2505, 0
  %2520 = vmatprep.subr.mxu0 0.0
  %2521 = vmatpush1.msra.mxu0 0.0
  %2522 = vmatprep.subr.mxu0 0.0
  %2523 = vmatpush1.msra.mxu0 0.0
  %2524 = vmatprep.subr.mxu0 0.0
  %2525 = vmatpush1.msra.mxu0 0.0
  %2526 = vmatprep.subr.mxu0 0.0
  %2527 = vmatpush1.msra.mxu0 0.0
  %2528 = vmatprep.subr.mxu0 0.0
  %2529 = vmatpush1.msra.mxu0 0.0
  %2530 = vmatprep.subr.mxu0 0.0
  %2531 = vmatpush1.msra.mxu0 0.0
  %2532 = vmatprep.subr.mxu0 0.0
  %2533 = vmatpush1.msra.mxu0 0.0
  %2534 = vmatprep.subr.mxu0 0.0
  %2535 = vmatpush1.msra.mxu0 0.0
  %2536 = vmatprep.subr.mxu0 0.0
  %2537 = vmatpush1.msra.mxu0 0.0
  %2538 = vmatprep.subr.mxu0 0.0
  %2539 = vmatpush1.msra.mxu0 0.0
  %2540 = vmatprep.subr.mxu0 0.0
  %2541 = vmatpush1.msra.mxu0 0.0
  %2542 = vmatprep.subr.mxu0 0.0
  %2543 = vmatpush1.msra.mxu0 0.0
  %2544 = vmatprep.subr.mxu0 0.0
  %2545 = vmatpush1.msra.mxu0 %v2509
  %2546 = vmatprep.subr.mxu0 0.0
  %2547 = vmatpush1.msra.mxu0 %v2508
  %2548 = vmatprep.subr.mxu0 0.0
  %2549 = vmatpush1.msra.mxu0 %v2507
  %2550 = vmatprep.subr.mxu0 0.0
  %2551 = vmatpush1.msra.mxu0 %v2506
  %2552 = vmatprep.subr.mxu0 0.0
  %2553 = vmatpush2.msra.mxu0 0.0
  %2554 = vmatprep.subr.mxu0 0.0
  %2555 = vmatpush2.msra.mxu0 0.0
  %2556 = vmatprep.subr.mxu0 0.0
  %2557 = vmatpush2.msra.mxu0 0.0
  %2558 = vmatprep.subr.mxu0 0.0
  %2559 = vmatpush2.msra.mxu0 0.0
  %2560 = vmatprep.subr.mxu0 0.0
  %2561 = vmatpush2.msra.mxu0 0.0
  %2562 = vmatprep.subr.mxu0 0.0
  %2563 = vmatpush2.msra.mxu0 0.0
  %2564 = vmatprep.subr.mxu0 0.0
  %2565 = vmatpush2.msra.mxu0 0.0
  %2566 = vmatprep.subr.mxu0 0.0
  %2567 = vmatpush2.msra.mxu0 0.0
  %2568 = vmatprep.subr.mxu0 0.0
  %2569 = vmatpush2.msra.mxu0 0.0
  %2570 = vmatprep.subr.mxu0 0.0
  %2571 = vmatpush2.msra.mxu0 0.0
  %2572 = vmatprep.subr.mxu0 0.0
  %2573 = vmatpush2.msra.mxu0 0.0
  %2574 = vmatprep.subr.mxu0 0.0
  %2575 = vmatpush2.msra.mxu0 0.0
  %2576 = vmatprep.subr.mxu0 0.0
  %2577 = vmatpush2.msra.mxu0 0.0
  %2578 = vmatprep.subr.mxu0 0.0
  %2579 = vmatpush2.msra.mxu0 0.0
  %2580 = vmatprep.subr.mxu0 0.0
  %2581 = vmatpush2.msra.mxu0 0.0
  %2582 = vmatprep.subr.mxu0 0.0
  %2583 = vmatpush2.msra.mxu0 0.0
  %2584 = vmatprep.mubr.f32.mxu0 0.0
  %2585 = vmatmul.mubr.f32.gmra.mxu0 %v2518
  %v2586 = vpop.f32.mrf.mxu0
  %v2587 = vadd.f32 %v2515, %v2586
  %v2588 = vpop.f32.mrf.mxu0
  %2589 = vdwg.mxu0
  %v2590 = vld [vmem:[%s3] sm:$0xff]
  %v2591 = vld [vmem:[%s3 + $0x8] sm:$0xff]
  %v2592 = vadd.f32 %v2590, %v167
  %v2593 = vadd.f32 %v2591, %v167
  %v2594 = vmul.f32 %v2592, %v175
  %v2595 = vmul.f32 %v2593, %v175
  %v2596 = vld [vmem:[%s53] sm:$0x3f]
  %v2597 = vld [vmem:[%s57] sm:$0x1]
  %v2599 = vlaneseq
  %v2600 = vshrl.u32 %v2599, 7
  %v2601 = vsub.s32 0, %v2600
  %v2602 = vrot.slane %v2597, %v2601
  %vm2604 = vcmask 48128
  %v2606 = vsel %vm2604, %v2594, 0
  %v2609 = vsel %vm2604, %v2595, 0
  %vm2611 = vcmask 1045504
  %v2613 = vsel %vm2611, %v2596, 0
  %2615 = vmatprep.subr.mxu0 0.0
  %2616 = vmatpush1.msra.mxu0 0.0
  %2617 = vmatprep.subr.mxu0 0.0
  %2618 = vmatpush1.msra.mxu0 0.0
  %2619 = vmatprep.subr.mxu0 0.0
  %2620 = vmatpush1.msra.mxu0 0.0
  %2621 = vmatprep.subr.mxu0 0.0
  %2622 = vmatpush1.msra.mxu0 0.0
  %2623 = vmatprep.subr.mxu0 0.0
  %2624 = vmatpush1.msra.mxu0 0.0
  %2625 = vmatprep.subr.mxu0 0.0
  %2626 = vmatpush1.msra.mxu0 0.0
  %2627 = vmatprep.subr.mxu0 0.0
  %2628 = vmatpush1.msra.mxu0 0.0
  %2629 = vmatprep.subr.mxu0 0.0
  %2630 = vmatpush1.msra.mxu0 0.0
  %2631 = vmatprep.subr.mxu0 0.0
  %2632 = vmatpush1.msra.mxu0 0.0
  %2633 = vmatprep.subr.mxu0 0.0
  %2634 = vmatpush1.msra.mxu0 0.0
  %2635 = vmatprep.subr.mxu0 0.0
  %2636 = vmatpush1.msra.mxu0 0.0
  %2637 = vmatprep.subr.mxu0 0.0
  %2638 = vmatpush1.msra.mxu0 0.0
  %2639 = vmatprep.subr.mxu0 0.0
  %2640 = vmatpush1.msra.mxu0 0.0
  %2641 = vmatprep.subr.mxu0 0.0
  %2642 = vmatpush1.msra.mxu0 0.0
  %2643 = vmatprep.subr.mxu0 0.0
  %2644 = vmatpush1.msra.mxu0 0.0
  %2645 = vmatprep.subr.mxu0 0.0
  %2646 = vmatpush1.msra.mxu0 %v2613
  %2647 = vmatprep.subr.mxu0 0.0
  %2648 = vmatpush2.msra.mxu0 0.0
  %2649 = vmatprep.subr.mxu0 0.0
  %2650 = vmatpush2.msra.mxu0 0.0
  %2651 = vmatprep.subr.mxu0 0.0
  %2652 = vmatpush2.msra.mxu0 0.0
  %2653 = vmatprep.subr.mxu0 0.0
  %2654 = vmatpush2.msra.mxu0 0.0
  %2655 = vmatprep.subr.mxu0 0.0
  %2656 = vmatpush2.msra.mxu0 0.0
  %2657 = vmatprep.subr.mxu0 0.0
  %2658 = vmatpush2.msra.mxu0 0.0
  %2659 = vmatprep.subr.mxu0 0.0
  %2660 = vmatpush2.msra.mxu0 0.0
  %2661 = vmatprep.subr.mxu0 0.0
  %2662 = vmatpush2.msra.mxu0 0.0
  %2663 = vmatprep.subr.mxu0 0.0
  %2664 = vmatpush2.msra.mxu0 0.0
  %2665 = vmatprep.subr.mxu0 0.0
  %2666 = vmatpush2.msra.mxu0 0.0
  %2667 = vmatprep.subr.mxu0 0.0
  %2668 = vmatpush2.msra.mxu0 0.0
  %2669 = vmatprep.subr.mxu0 0.0
  %2670 = vmatpush2.msra.mxu0 0.0
  %2671 = vmatprep.subr.mxu0 0.0
  %2672 = vmatpush2.msra.mxu0 0.0
  %2673 = vmatprep.subr.mxu0 0.0
  %2674 = vmatpush2.msra.mxu0 0.0
  %2675 = vmatprep.subr.mxu0 0.0
  %2676 = vmatpush2.msra.mxu0 0.0
  %2677 = vmatprep.subr.mxu0 0.0
  %2678 = vmatpush2.msra.mxu0 0.0
  %2679 = vmatprep.mubr.f32.mxu0 0.0
  %2680 = vmatmul.mubr.f32.gmra.mxu0 %v2606
  %v2681 = vpop.f32.mrf.mxu0
  %v2682 = vadd.f32 %v2602, %v2681
  %v2683 = vpop.f32.mrf.mxu0
  %2684 = vmatprep.mubr.f32.mxu0 0.0
  %2685 = vmatmul.mubr.f32.gmra.mxu0 %v2609
  %v2686 = vpop.f32.mrf.mxu0
  %v2687 = vadd.f32 %v2602, %v2686
  %v2688 = vpop.f32.mrf.mxu0
  %2689 = vdwg.mxu0
  %v2690 = vld [vmem:[%s55] sm:$0xff]
  %v2691 = vld [vmem:[%s55 + $0x8] sm:$0xff]
  %v2692 = vld [vmem:[%s55 + $0x10] sm:$0xff]
  %v2693 = vld [vmem:[%s55 + $0x18] sm:$0xff]
  %2694 = vmatprep.subr.mxu0 0.0
  %2695 = vmatpush1.msra.mxu0 0.0
  %2696 = vmatprep.subr.mxu0 0.0
  %2697 = vmatpush1.msra.mxu0 0.0
  %2698 = vmatprep.subr.mxu0 0.0
  %2699 = vmatpush1.msra.mxu0 0.0
  %2700 = vmatprep.subr.mxu0 0.0
  %2701 = vmatpush1.msra.mxu0 0.0
  %2702 = vmatprep.subr.mxu0 0.0
  %2703 = vmatpush1.msra.mxu0 0.0
  %2704 = vmatprep.subr.mxu0 0.0
  %2705 = vmatpush1.msra.mxu0 0.0
  %2706 = vmatprep.subr.mxu0 0.0
  %2707 = vmatpush1.msra.mxu0 0.0
  %2708 = vmatprep.subr.mxu0 0.0
  %2709 = vmatpush1.msra.mxu0 0.0
  %2710 = vmatprep.subr.mxu0 0.0
  %2711 = vmatpush1.msra.mxu0 0.0
  %2712 = vmatprep.subr.mxu0 0.0
  %2713 = vmatpush1.msra.mxu0 0.0
  %2714 = vmatprep.subr.mxu0 0.0
  %2715 = vmatpush1.msra.mxu0 0.0
  %2716 = vmatprep.subr.mxu0 0.0
  %2717 = vmatpush1.msra.mxu0 0.0
  %2718 = vmatprep.subr.mxu0 0.0
  %2719 = vmatpush1.msra.mxu0 %v2693
  %2720 = vmatprep.subr.mxu0 0.0
  %2721 = vmatpush1.msra.mxu0 %v2692
  %2722 = vmatprep.subr.mxu0 0.0
  %2723 = vmatpush1.msra.mxu0 %v2691
  %2724 = vmatprep.subr.mxu0 0.0
  %2725 = vmatpush1.msra.mxu0 %v2690
  %2726 = vmatprep.subr.mxu0 0.0
  %2727 = vmatpush2.msra.mxu0 0.0
  %2728 = vmatprep.subr.mxu0 0.0
  %2729 = vmatpush2.msra.mxu0 0.0
  %2730 = vmatprep.subr.mxu0 0.0
  %2731 = vmatpush2.msra.mxu0 0.0
  %2732 = vmatprep.subr.mxu0 0.0
  %2733 = vmatpush2.msra.mxu0 0.0
  %2734 = vmatprep.subr.mxu0 0.0
  %2735 = vmatpush2.msra.mxu0 0.0
  %2736 = vmatprep.subr.mxu0 0.0
  %2737 = vmatpush2.msra.mxu0 0.0
  %2738 = vmatprep.subr.mxu0 0.0
  %2739 = vmatpush2.msra.mxu0 0.0
  %2740 = vmatprep.subr.mxu0 0.0
  %2741 = vmatpush2.msra.mxu0 0.0
  %2742 = vmatprep.subr.mxu0 0.0
  %2743 = vmatpush2.msra.mxu0 0.0
  %2744 = vmatprep.subr.mxu0 0.0
  %2745 = vmatpush2.msra.mxu0 0.0
  %2746 = vmatprep.subr.mxu0 0.0
  %2747 = vmatpush2.msra.mxu0 0.0
  %2748 = vmatprep.subr.mxu0 0.0
  %2749 = vmatpush2.msra.mxu0 0.0
  %2750 = vmatprep.subr.mxu0 0.0
  %2751 = vmatpush2.msra.mxu0 0.0
  %2752 = vmatprep.subr.mxu0 0.0
  %2753 = vmatpush2.msra.mxu0 0.0
  %2754 = vmatprep.subr.mxu0 0.0
  %2755 = vmatpush2.msra.mxu0 0.0
  %2756 = vmatprep.subr.mxu0 0.0
  %2757 = vmatpush2.msra.mxu0 0.0
  %2758 = vmatprep.mubr.f32.mxu0 0.0
  %2759 = vmatmul.mubr.f32.gmra.mxu0 %v279
  %v2760 = vpop.f32.mrf.mxu0
  %v2761 = vadd.f32 0.0, %v2760
  %v2762 = vpop.f32.mrf.mxu0
  %2763 = vdwg.mxu0
  %v2764 = vadd.f32 %v2682, %v2761
  %v2765 = vxor.u32 %v2764, 2147483648
  %v2766 = vmul.f32 %v2765, 1.442695
  %v2767 = vpow.pop %v2766
  %v2768 = vadd.f32 %v2767, 1.0
  %v2769 = vrcp.pop %v2768
  %v2770 = vmul.f32 1.0, %v2769
  %v2771 = vtanh.pop %v2764
  %v2772 = vmul.f32 %v2770, 0.0
  %2774 = vrot.lane.b32.xlu0 %v2771, 64
  %v2775 = vpop.permute.xlu0 %2774
  %v2777 = vmul.f32 %v2770, %v2775
  %2779 = vrot.lane.b32.xlu0 %v2777, 32
  %v2780 = vpop.permute.xlu0 %2779
  %v2782 = vadd.f32 %v2772, %v2780
  %v2783 = vtanh.pop %v2782
  %2785 = vrot.lane.b32.xlu0 %v2783, 64
  %v2786 = vpop.permute.xlu0 %2785
  %v2788 = vmul.f32 %v2770, %v2786
  %2790 = vrot.lane.b32.xlu0 %v2788, 32
  %v2791 = vpop.permute.xlu0 %2790
  %v2792 = vsel %vm277, %v2791, 0
  %2794 = vmatprep.subr.mxu0 0.0
  %2795 = vmatpush1.msra.mxu0 0.0
  %2796 = vmatprep.subr.mxu0 0.0
  %2797 = vmatpush1.msra.mxu0 0.0
  %2798 = vmatprep.subr.mxu0 0.0
  %2799 = vmatpush1.msra.mxu0 0.0
  %2800 = vmatprep.subr.mxu0 0.0
  %2801 = vmatpush1.msra.mxu0 0.0
  %2802 = vmatprep.subr.mxu0 0.0
  %2803 = vmatpush1.msra.mxu0 0.0
  %2804 = vmatprep.subr.mxu0 0.0
  %2805 = vmatpush1.msra.mxu0 0.0
  %2806 = vmatprep.subr.mxu0 0.0
  %2807 = vmatpush1.msra.mxu0 0.0
  %2808 = vmatprep.subr.mxu0 0.0
  %2809 = vmatpush1.msra.mxu0 0.0
  %2810 = vmatprep.subr.mxu0 0.0
  %2811 = vmatpush1.msra.mxu0 0.0
  %2812 = vmatprep.subr.mxu0 0.0
  %2813 = vmatpush1.msra.mxu0 0.0
  %2814 = vmatprep.subr.mxu0 0.0
  %2815 = vmatpush1.msra.mxu0 0.0
  %2816 = vmatprep.subr.mxu0 0.0
  %2817 = vmatpush1.msra.mxu0 0.0
  %2818 = vmatprep.subr.mxu0 0.0
  %2819 = vmatpush1.msra.mxu0 %v2693
  %2820 = vmatprep.subr.mxu0 0.0
  %2821 = vmatpush1.msra.mxu0 %v2692
  %2822 = vmatprep.subr.mxu0 0.0
  %2823 = vmatpush1.msra.mxu0 %v2691
  %2824 = vmatprep.subr.mxu0 0.0
  %2825 = vmatpush1.msra.mxu0 %v2690
  %2826 = vmatprep.subr.mxu0 0.0
  %2827 = vmatpush2.msra.mxu0 0.0
  %2828 = vmatprep.subr.mxu0 0.0
  %2829 = vmatpush2.msra.mxu0 0.0
  %2830 = vmatprep.subr.mxu0 0.0
  %2831 = vmatpush2.msra.mxu0 0.0
  %2832 = vmatprep.subr.mxu0 0.0
  %2833 = vmatpush2.msra.mxu0 0.0
  %2834 = vmatprep.subr.mxu0 0.0
  %2835 = vmatpush2.msra.mxu0 0.0
  %2836 = vmatprep.subr.mxu0 0.0
  %2837 = vmatpush2.msra.mxu0 0.0
  %2838 = vmatprep.subr.mxu0 0.0
  %2839 = vmatpush2.msra.mxu0 0.0
  %2840 = vmatprep.subr.mxu0 0.0
  %2841 = vmatpush2.msra.mxu0 0.0
  %2842 = vmatprep.subr.mxu0 0.0
  %2843 = vmatpush2.msra.mxu0 0.0
  %2844 = vmatprep.subr.mxu0 0.0
  %2845 = vmatpush2.msra.mxu0 0.0
  %2846 = vmatprep.subr.mxu0 0.0
  %2847 = vmatpush2.msra.mxu0 0.0
  %2848 = vmatprep.subr.mxu0 0.0
  %2849 = vmatpush2.msra.mxu0 0.0
  %2850 = vmatprep.subr.mxu0 0.0
  %2851 = vmatpush2.msra.mxu0 0.0
  %2852 = vmatprep.subr.mxu0 0.0
  %2853 = vmatpush2.msra.mxu0 0.0
  %2854 = vmatprep.subr.mxu0 0.0
  %2855 = vmatpush2.msra.mxu0 0.0
  %2856 = vmatprep.subr.mxu0 0.0
  %2857 = vmatpush2.msra.mxu0 0.0
  %2858 = vmatprep.mubr.f32.mxu0 0.0
  %2859 = vmatmul.mubr.f32.gmra.mxu0 %v2792
  %v2860 = vpop.f32.mrf.mxu0
  %v2861 = vadd.f32 0.0, %v2860
  %v2862 = vpop.f32.mrf.mxu0
  %2863 = vdwg.mxu0
  %v2865 = vrot.slane %v2861, 6
  %v2867 = vadd.f32 %v2682, %v2865
  %v2868 = vxor.u32 %v2867, 2147483648
  %v2869 = vmul.f32 %v2868, 1.442695
  %v2870 = vpow.pop %v2869
  %v2871 = vadd.f32 %v2870, 1.0
  %v2872 = vrcp.pop %v2871
  %v2873 = vmul.f32 1.0, %v2872
  %v2874 = vtanh.pop %v2867
  %v2876 = vrot.slane %v2782, 6
  %v2878 = vmul.f32 %v2873, %v2876
  %2880 = vrot.lane.b32.xlu0 %v2874, 64
  %v2881 = vpop.permute.xlu0 %2880
  %v2883 = vmul.f32 %v2873, %v2881
  %2885 = vrot.lane.b32.xlu0 %v2883, 32
  %v2886 = vpop.permute.xlu0 %2885
  %v2888 = vadd.f32 %v2878, %v2886
  %v2889 = vtanh.pop %v2888
  %2891 = vrot.lane.b32.xlu0 %v2889, 64
  %v2892 = vpop.permute.xlu0 %2891
  %v2894 = vmul.f32 %v2873, %v2892
  %v2896 = vrot.slane %v2894, 2
  %2897 = vrot.lane.b32.xlu0 %v2896, 32
  %v2898 = vpop.permute.xlu0 %2897
  %v2899 = vsel %vm277, %v2898, 0
  %2901 = vmatprep.subr.mxu0 0.0
  %2902 = vmatpush1.msra.mxu0 0.0
  %2903 = vmatprep.subr.mxu0 0.0
  %2904 = vmatpush1.msra.mxu0 0.0
  %2905 = vmatprep.subr.mxu0 0.0
  %2906 = vmatpush1.msra.mxu0 0.0
  %2907 = vmatprep.subr.mxu0 0.0
  %2908 = vmatpush1.msra.mxu0 0.0
  %2909 = vmatprep.subr.mxu0 0.0
  %2910 = vmatpush1.msra.mxu0 0.0
  %2911 = vmatprep.subr.mxu0 0.0
  %2912 = vmatpush1.msra.mxu0 0.0
  %2913 = vmatprep.subr.mxu0 0.0
  %2914 = vmatpush1.msra.mxu0 0.0
  %2915 = vmatprep.subr.mxu0 0.0
  %2916 = vmatpush1.msra.mxu0 0.0
  %2917 = vmatprep.subr.mxu0 0.0
  %2918 = vmatpush1.msra.mxu0 0.0
  %2919 = vmatprep.subr.mxu0 0.0
  %2920 = vmatpush1.msra.mxu0 0.0
  %2921 = vmatprep.subr.mxu0 0.0
  %2922 = vmatpush1.msra.mxu0 0.0
  %2923 = vmatprep.subr.mxu0 0.0
  %2924 = vmatpush1.msra.mxu0 0.0
  %2925 = vmatprep.subr.mxu0 0.0
  %2926 = vmatpush1.msra.mxu0 %v2693
  %2927 = vmatprep.subr.mxu0 0.0
  %2928 = vmatpush1.msra.mxu0 %v2692
  %2929 = vmatprep.subr.mxu0 0.0
  %2930 = vmatpush1.msra.mxu0 %v2691
  %2931 = vmatprep.subr.mxu0 0.0
  %2932 = vmatpush1.msra.mxu0 %v2690
  %2933 = vmatprep.subr.mxu0 0.0
  %2934 = vmatpush2.msra.mxu0 0.0
  %2935 = vmatprep.subr.mxu0 0.0
  %2936 = vmatpush2.msra.mxu0 0.0
  %2937 = vmatprep.subr.mxu0 0.0
  %2938 = vmatpush2.msra.mxu0 0.0
  %2939 = vmatprep.subr.mxu0 0.0
  %2940 = vmatpush2.msra.mxu0 0.0
  %2941 = vmatprep.subr.mxu0 0.0
  %2942 = vmatpush2.msra.mxu0 0.0
  %2943 = vmatprep.subr.mxu0 0.0
  %2944 = vmatpush2.msra.mxu0 0.0
  %2945 = vmatprep.subr.mxu0 0.0
  %2946 = vmatpush2.msra.mxu0 0.0
  %2947 = vmatprep.subr.mxu0 0.0
  %2948 = vmatpush2.msra.mxu0 0.0
  %2949 = vmatprep.subr.mxu0 0.0
  %2950 = vmatpush2.msra.mxu0 0.0
  %2951 = vmatprep.subr.mxu0 0.0
  %2952 = vmatpush2.msra.mxu0 0.0
  %2953 = vmatprep.subr.mxu0 0.0
  %2954 = vmatpush2.msra.mxu0 0.0
  %2955 = vmatprep.subr.mxu0 0.0
  %2956 = vmatpush2.msra.mxu0 0.0
  %2957 = vmatprep.subr.mxu0 0.0
  %2958 = vmatpush2.msra.mxu0 0.0
  %2959 = vmatprep.subr.mxu0 0.0
  %2960 = vmatpush2.msra.mxu0 0.0
  %2961 = vmatprep.subr.mxu0 0.0
  %2962 = vmatpush2.msra.mxu0 0.0
  %2963 = vmatprep.subr.mxu0 0.0
  %2964 = vmatpush2.msra.mxu0 0.0
  %2965 = vmatprep.mubr.f32.mxu0 0.0
  %2966 = vmatmul.mubr.f32.gmra.mxu0 %v2899
  %v2967 = vpop.f32.mrf.mxu0
  %v2968 = vadd.f32 0.0, %v2967
  %v2969 = vpop.f32.mrf.mxu0
  %2970 = vdwg.mxu0
  %v2972 = vrot.slane %v2968, 4
  %v2974 = vadd.f32 %v2682, %v2972
  %v2975 = vxor.u32 %v2974, 2147483648
  %v2976 = vmul.f32 %v2975, 1.442695
  %v2977 = vpow.pop %v2976
  %v2978 = vadd.f32 %v2977, 1.0
  %v2979 = vrcp.pop %v2978
  %v2980 = vmul.f32 1.0, %v2979
  %v2981 = vtanh.pop %v2974
  %v2983 = vrot.slane %v2888, 6
  %v2985 = vmul.f32 %v2980, %v2983
  %2987 = vrot.lane.b32.xlu0 %v2981, 64
  %v2988 = vpop.permute.xlu0 %2987
  %v2990 = vmul.f32 %v2980, %v2988
  %2992 = vrot.lane.b32.xlu0 %v2990, 32
  %v2993 = vpop.permute.xlu0 %2992
  %v2995 = vadd.f32 %v2985, %v2993
  %v2996 = vtanh.pop %v2995
  %2998 = vrot.lane.b32.xlu0 %v2996, 64
  %v2999 = vpop.permute.xlu0 %2998
  %v3001 = vmul.f32 %v2980, %v2999
  %v3003 = vrot.slane %v3001, 4
  %3004 = vrot.lane.b32.xlu0 %v3003, 32
  %v3005 = vpop.permute.xlu0 %3004
  %v3006 = vsel %vm277, %v3005, 0
  %3008 = vmatprep.subr.mxu0 0.0
  %3009 = vmatpush1.msra.mxu0 0.0
  %3010 = vmatprep.subr.mxu0 0.0
  %3011 = vmatpush1.msra.mxu0 0.0
  %3012 = vmatprep.subr.mxu0 0.0
  %3013 = vmatpush1.msra.mxu0 0.0
  %3014 = vmatprep.subr.mxu0 0.0
  %3015 = vmatpush1.msra.mxu0 0.0
  %3016 = vmatprep.subr.mxu0 0.0
  %3017 = vmatpush1.msra.mxu0 0.0
  %3018 = vmatprep.subr.mxu0 0.0
  %3019 = vmatpush1.msra.mxu0 0.0
  %3020 = vmatprep.subr.mxu0 0.0
  %3021 = vmatpush1.msra.mxu0 0.0
  %3022 = vmatprep.subr.mxu0 0.0
  %3023 = vmatpush1.msra.mxu0 0.0
  %3024 = vmatprep.subr.mxu0 0.0
  %3025 = vmatpush1.msra.mxu0 0.0
  %3026 = vmatprep.subr.mxu0 0.0
  %3027 = vmatpush1.msra.mxu0 0.0
  %3028 = vmatprep.subr.mxu0 0.0
  %3029 = vmatpush1.msra.mxu0 0.0
  %3030 = vmatprep.subr.mxu0 0.0
  %3031 = vmatpush1.msra.mxu0 0.0
  %3032 = vmatprep.subr.mxu0 0.0
  %3033 = vmatpush1.msra.mxu0 %v2693
  %3034 = vmatprep.subr.mxu0 0.0
  %3035 = vmatpush1.msra.mxu0 %v2692
  %3036 = vmatprep.subr.mxu0 0.0
  %3037 = vmatpush1.msra.mxu0 %v2691
  %3038 = vmatprep.subr.mxu0 0.0
  %3039 = vmatpush1.msra.mxu0 %v2690
  %3040 = vmatprep.subr.mxu0 0.0
  %3041 = vmatpush2.msra.mxu0 0.0
  %3042 = vmatprep.subr.mxu0 0.0
  %3043 = vmatpush2.msra.mxu0 0.0
  %3044 = vmatprep.subr.mxu0 0.0
  %3045 = vmatpush2.msra.mxu0 0.0
  %3046 = vmatprep.subr.mxu0 0.0
  %3047 = vmatpush2.msra.mxu0 0.0
  %3048 = vmatprep.subr.mxu0 0.0
  %3049 = vmatpush2.msra.mxu0 0.0
  %3050 = vmatprep.subr.mxu0 0.0
  %3051 = vmatpush2.msra.mxu0 0.0
  %3052 = vmatprep.subr.mxu0 0.0
  %3053 = vmatpush2.msra.mxu0 0.0
  %3054 = vmatprep.subr.mxu0 0.0
  %3055 = vmatpush2.msra.mxu0 0.0
  %3056 = vmatprep.subr.mxu0 0.0
  %3057 = vmatpush2.msra.mxu0 0.0
  %3058 = vmatprep.subr.mxu0 0.0
  %3059 = vmatpush2.msra.mxu0 0.0
  %3060 = vmatprep.subr.mxu0 0.0
  %3061 = vmatpush2.msra.mxu0 0.0
  %3062 = vmatprep.subr.mxu0 0.0
  %3063 = vmatpush2.msra.mxu0 0.0
  %3064 = vmatprep.subr.mxu0 0.0
  %3065 = vmatpush2.msra.mxu0 0.0
  %3066 = vmatprep.subr.mxu0 0.0
  %3067 = vmatpush2.msra.mxu0 0.0
  %3068 = vmatprep.subr.mxu0 0.0
  %3069 = vmatpush2.msra.mxu0 0.0
  %3070 = vmatprep.subr.mxu0 0.0
  %3071 = vmatpush2.msra.mxu0 0.0
  %3072 = vmatprep.mubr.f32.mxu0 0.0
  %3073 = vmatmul.mubr.f32.gmra.mxu0 %v3006
  %v3074 = vpop.f32.mrf.mxu0
  %v3075 = vadd.f32 0.0, %v3074
  %v3076 = vpop.f32.mrf.mxu0
  %3077 = vdwg.mxu0
  %v3079 = vrot.slane %v3075, 2
  %v3081 = vadd.f32 %v2682, %v3079
  %v3082 = vxor.u32 %v3081, 2147483648
  %v3083 = vmul.f32 %v3082, 1.442695
  %v3084 = vpow.pop %v3083
  %v3085 = vadd.f32 %v3084, 1.0
  %v3086 = vrcp.pop %v3085
  %v3087 = vmul.f32 1.0, %v3086
  %v3088 = vtanh.pop %v3081
  %v3090 = vrot.slane %v2995, 6
  %v3092 = vmul.f32 %v3087, %v3090
  %3094 = vrot.lane.b32.xlu0 %v3088, 64
  %v3095 = vpop.permute.xlu0 %3094
  %v3097 = vmul.f32 %v3087, %v3095
  %3099 = vrot.lane.b32.xlu0 %v3097, 32
  %v3100 = vpop.permute.xlu0 %3099
  %v3102 = vadd.f32 %v3092, %v3100
  %v3103 = vtanh.pop %v3102
  %3105 = vrot.lane.b32.xlu0 %v3103, 64
  %v3106 = vpop.permute.xlu0 %3105
  %v3108 = vmul.f32 %v3087, %v3106
  %v3110 = vrot.slane %v3108, 6
  %3111 = vrot.lane.b32.xlu0 %v3110, 32
  %v3112 = vpop.permute.xlu0 %3111
  %v3113 = vsel %vm277, %v3112, 0
  %3115 = vmatprep.subr.mxu0 0.0
  %3116 = vmatpush1.msra.mxu0 0.0
  %3117 = vmatprep.subr.mxu0 0.0
  %3118 = vmatpush1.msra.mxu0 0.0
  %3119 = vmatprep.subr.mxu0 0.0
  %3120 = vmatpush1.msra.mxu0 0.0
  %3121 = vmatprep.subr.mxu0 0.0
  %3122 = vmatpush1.msra.mxu0 0.0
  %3123 = vmatprep.subr.mxu0 0.0
  %3124 = vmatpush1.msra.mxu0 0.0
  %3125 = vmatprep.subr.mxu0 0.0
  %3126 = vmatpush1.msra.mxu0 0.0
  %3127 = vmatprep.subr.mxu0 0.0
  %3128 = vmatpush1.msra.mxu0 0.0
  %3129 = vmatprep.subr.mxu0 0.0
  %3130 = vmatpush1.msra.mxu0 0.0
  %3131 = vmatprep.subr.mxu0 0.0
  %3132 = vmatpush1.msra.mxu0 0.0
  %3133 = vmatprep.subr.mxu0 0.0
  %3134 = vmatpush1.msra.mxu0 0.0
  %3135 = vmatprep.subr.mxu0 0.0
  %3136 = vmatpush1.msra.mxu0 0.0
  %3137 = vmatprep.subr.mxu0 0.0
  %3138 = vmatpush1.msra.mxu0 0.0
  %3139 = vmatprep.subr.mxu0 0.0
  %3140 = vmatpush1.msra.mxu0 %v2693
  %3141 = vmatprep.subr.mxu0 0.0
  %3142 = vmatpush1.msra.mxu0 %v2692
  %3143 = vmatprep.subr.mxu0 0.0
  %3144 = vmatpush1.msra.mxu0 %v2691
  %3145 = vmatprep.subr.mxu0 0.0
  %3146 = vmatpush1.msra.mxu0 %v2690
  %3147 = vmatprep.subr.mxu0 0.0
  %3148 = vmatpush2.msra.mxu0 0.0
  %3149 = vmatprep.subr.mxu0 0.0
  %3150 = vmatpush2.msra.mxu0 0.0
  %3151 = vmatprep.subr.mxu0 0.0
  %3152 = vmatpush2.msra.mxu0 0.0
  %3153 = vmatprep.subr.mxu0 0.0
  %3154 = vmatpush2.msra.mxu0 0.0
  %3155 = vmatprep.subr.mxu0 0.0
  %3156 = vmatpush2.msra.mxu0 0.0
  %3157 = vmatprep.subr.mxu0 0.0
  %3158 = vmatpush2.msra.mxu0 0.0
  %3159 = vmatprep.subr.mxu0 0.0
  %3160 = vmatpush2.msra.mxu0 0.0
  %3161 = vmatprep.subr.mxu0 0.0
  %3162 = vmatpush2.msra.mxu0 0.0
  %3163 = vmatprep.subr.mxu0 0.0
  %3164 = vmatpush2.msra.mxu0 0.0
  %3165 = vmatprep.subr.mxu0 0.0
  %3166 = vmatpush2.msra.mxu0 0.0
  %3167 = vmatprep.subr.mxu0 0.0
  %3168 = vmatpush2.msra.mxu0 0.0
  %3169 = vmatprep.subr.mxu0 0.0
  %3170 = vmatpush2.msra.mxu0 0.0
  %3171 = vmatprep.subr.mxu0 0.0
  %3172 = vmatpush2.msra.mxu0 0.0
  %3173 = vmatprep.subr.mxu0 0.0
  %3174 = vmatpush2.msra.mxu0 0.0
  %3175 = vmatprep.subr.mxu0 0.0
  %3176 = vmatpush2.msra.mxu0 0.0
  %3177 = vmatprep.subr.mxu0 0.0
  %3178 = vmatpush2.msra.mxu0 0.0
  %3179 = vmatprep.mubr.f32.mxu0 0.0
  %3180 = vmatmul.mubr.f32.gmra.mxu0 %v3113
  %v3181 = vpop.f32.mrf.mxu0
  %v3182 = vadd.f32 0.0, %v3181
  %v3183 = vpop.f32.mrf.mxu0
  %3184 = vdwg.mxu0
  %v3185 = vadd.f32 %v2687, %v3182
  %v3186 = vxor.u32 %v3185, 2147483648
  %v3187 = vmul.f32 %v3186, 1.442695
  %v3188 = vpow.pop %v3187
  %v3189 = vadd.f32 %v3188, 1.0
  %v3190 = vrcp.pop %v3189
  %v3191 = vmul.f32 1.0, %v3190
  %v3192 = vtanh.pop %v3185
  %v3194 = vrot.slane %v3102, 6
  %v3196 = vmul.f32 %v3191, %v3194
  %3198 = vrot.lane.b32.xlu0 %v3192, 64
  %v3199 = vpop.permute.xlu0 %3198
  %v3201 = vmul.f32 %v3191, %v3199
  %3203 = vrot.lane.b32.xlu0 %v3201, 32
  %v3204 = vpop.permute.xlu0 %3203
  %v3206 = vadd.f32 %v3196, %v3204
  %v3207 = vtanh.pop %v3206
  %3209 = vrot.lane.b32.xlu0 %v3207, 64
  %v3210 = vpop.permute.xlu0 %3209
  %v3212 = vmul.f32 %v3191, %v3210
  %3214 = vrot.lane.b32.xlu0 %v3212, 32
  %v3215 = vpop.permute.xlu0 %3214
  %v3216 = vsel %vm277, %v3215, 0
  %3218 = vmatprep.subr.mxu0 0.0
  %3219 = vmatpush1.msra.mxu0 0.0
  %3220 = vmatprep.subr.mxu0 0.0
  %3221 = vmatpush1.msra.mxu0 0.0
  %3222 = vmatprep.subr.mxu0 0.0
  %3223 = vmatpush1.msra.mxu0 0.0
  %3224 = vmatprep.subr.mxu0 0.0
  %3225 = vmatpush1.msra.mxu0 0.0
  %3226 = vmatprep.subr.mxu0 0.0
  %3227 = vmatpush1.msra.mxu0 0.0
  %3228 = vmatprep.subr.mxu0 0.0
  %3229 = vmatpush1.msra.mxu0 0.0
  %3230 = vmatprep.subr.mxu0 0.0
  %3231 = vmatpush1.msra.mxu0 0.0
  %3232 = vmatprep.subr.mxu0 0.0
  %3233 = vmatpush1.msra.mxu0 0.0
  %3234 = vmatprep.subr.mxu0 0.0
  %3235 = vmatpush1.msra.mxu0 0.0
  %3236 = vmatprep.subr.mxu0 0.0
  %3237 = vmatpush1.msra.mxu0 0.0
  %3238 = vmatprep.subr.mxu0 0.0
  %3239 = vmatpush1.msra.mxu0 0.0
  %3240 = vmatprep.subr.mxu0 0.0
  %3241 = vmatpush1.msra.mxu0 0.0
  %3242 = vmatprep.subr.mxu0 0.0
  %3243 = vmatpush1.msra.mxu0 %v2693
  %3244 = vmatprep.subr.mxu0 0.0
  %3245 = vmatpush1.msra.mxu0 %v2692
  %3246 = vmatprep.subr.mxu0 0.0
  %3247 = vmatpush1.msra.mxu0 %v2691
  %3248 = vmatprep.subr.mxu0 0.0
  %3249 = vmatpush1.msra.mxu0 %v2690
  %3250 = vmatprep.subr.mxu0 0.0
  %3251 = vmatpush2.msra.mxu0 0.0
  %3252 = vmatprep.subr.mxu0 0.0
  %3253 = vmatpush2.msra.mxu0 0.0
  %3254 = vmatprep.subr.mxu0 0.0
  %3255 = vmatpush2.msra.mxu0 0.0
  %3256 = vmatprep.subr.mxu0 0.0
  %3257 = vmatpush2.msra.mxu0 0.0
  %3258 = vmatprep.subr.mxu0 0.0
  %3259 = vmatpush2.msra.mxu0 0.0
  %3260 = vmatprep.subr.mxu0 0.0
  %3261 = vmatpush2.msra.mxu0 0.0
  %3262 = vmatprep.subr.mxu0 0.0
  %3263 = vmatpush2.msra.mxu0 0.0
  %3264 = vmatprep.subr.mxu0 0.0
  %3265 = vmatpush2.msra.mxu0 0.0
  %3266 = vmatprep.subr.mxu0 0.0
  %3267 = vmatpush2.msra.mxu0 0.0
  %3268 = vmatprep.subr.mxu0 0.0
  %3269 = vmatpush2.msra.mxu0 0.0
  %3270 = vmatprep.subr.mxu0 0.0
  %3271 = vmatpush2.msra.mxu0 0.0
  %3272 = vmatprep.subr.mxu0 0.0
  %3273 = vmatpush2.msra.mxu0 0.0
  %3274 = vmatprep.subr.mxu0 0.0
  %3275 = vmatpush2.msra.mxu0 0.0
  %3276 = vmatprep.subr.mxu0 0.0
  %3277 = vmatpush2.msra.mxu0 0.0
  %3278 = vmatprep.subr.mxu0 0.0
  %3279 = vmatpush2.msra.mxu0 0.0
  %3280 = vmatprep.subr.mxu0 0.0
  %3281 = vmatpush2.msra.mxu0 0.0
  %3282 = vmatprep.mubr.f32.mxu0 0.0
  %3283 = vmatmul.mubr.f32.gmra.mxu0 %v3216
  %v3284 = vpop.f32.mrf.mxu0
  %v3285 = vadd.f32 0.0, %v3284
  %v3286 = vpop.f32.mrf.mxu0
  %3287 = vdwg.mxu0
  %v3289 = vrot.slane %v3285, 6
  %v3291 = vadd.f32 %v2687, %v3289
  %v3292 = vxor.u32 %v3291, 2147483648
  %v3293 = vmul.f32 %v3292, 1.442695
  %v3294 = vpow.pop %v3293
  %v3295 = vadd.f32 %v3294, 1.0
  %v3296 = vrcp.pop %v3295
  %v3297 = vmul.f32 1.0, %v3296
  %v3298 = vtanh.pop %v3291
  %v3300 = vrot.slane %v3206, 6
  %v3302 = vmul.f32 %v3297, %v3300
  %3304 = vrot.lane.b32.xlu0 %v3298, 64
  %v3305 = vpop.permute.xlu0 %3304
  %v3307 = vmul.f32 %v3297, %v3305
  %3309 = vrot.lane.b32.xlu0 %v3307, 32
  %v3310 = vpop.permute.xlu0 %3309
  %v3312 = vadd.f32 %v3302, %v3310
  %v3313 = vtanh.pop %v3312
  %3315 = vrot.lane.b32.xlu0 %v3313, 64
  %v3316 = vpop.permute.xlu0 %3315
  %v3318 = vmul.f32 %v3297, %v3316
  %v3320 = vrot.slane %v3318, 2
  %3321 = vrot.lane.b32.xlu0 %v3320, 32
  %v3322 = vpop.permute.xlu0 %3321
  %v3323 = vsel %vm277, %v3322, 0
  %3325 = vmatprep.subr.mxu0 0.0
  %3326 = vmatpush1.msra.mxu0 0.0
  %3327 = vmatprep.subr.mxu0 0.0
  %3328 = vmatpush1.msra.mxu0 0.0
  %3329 = vmatprep.subr.mxu0 0.0
  %3330 = vmatpush1.msra.mxu0 0.0
  %3331 = vmatprep.subr.mxu0 0.0
  %3332 = vmatpush1.msra.mxu0 0.0
  %3333 = vmatprep.subr.mxu0 0.0
  %3334 = vmatpush1.msra.mxu0 0.0
  %3335 = vmatprep.subr.mxu0 0.0
  %3336 = vmatpush1.msra.mxu0 0.0
  %3337 = vmatprep.subr.mxu0 0.0
  %3338 = vmatpush1.msra.mxu0 0.0
  %3339 = vmatprep.subr.mxu0 0.0
  %3340 = vmatpush1.msra.mxu0 0.0
  %3341 = vmatprep.subr.mxu0 0.0
  %3342 = vmatpush1.msra.mxu0 0.0
  %3343 = vmatprep.subr.mxu0 0.0
  %3344 = vmatpush1.msra.mxu0 0.0
  %3345 = vmatprep.subr.mxu0 0.0
  %3346 = vmatpush1.msra.mxu0 0.0
  %3347 = vmatprep.subr.mxu0 0.0
  %3348 = vmatpush1.msra.mxu0 0.0
  %3349 = vmatprep.subr.mxu0 0.0
  %3350 = vmatpush1.msra.mxu0 %v2693
  %3351 = vmatprep.subr.mxu0 0.0
  %3352 = vmatpush1.msra.mxu0 %v2692
  %3353 = vmatprep.subr.mxu0 0.0
  %3354 = vmatpush1.msra.mxu0 %v2691
  %3355 = vmatprep.subr.mxu0 0.0
  %3356 = vmatpush1.msra.mxu0 %v2690
  %3357 = vmatprep.subr.mxu0 0.0
  %3358 = vmatpush2.msra.mxu0 0.0
  %3359 = vmatprep.subr.mxu0 0.0
  %3360 = vmatpush2.msra.mxu0 0.0
  %3361 = vmatprep.subr.mxu0 0.0
  %3362 = vmatpush2.msra.mxu0 0.0
  %3363 = vmatprep.subr.mxu0 0.0
  %3364 = vmatpush2.msra.mxu0 0.0
  %3365 = vmatprep.subr.mxu0 0.0
  %3366 = vmatpush2.msra.mxu0 0.0
  %3367 = vmatprep.subr.mxu0 0.0
  %3368 = vmatpush2.msra.mxu0 0.0
  %3369 = vmatprep.subr.mxu0 0.0
  %3370 = vmatpush2.msra.mxu0 0.0
  %3371 = vmatprep.subr.mxu0 0.0
  %3372 = vmatpush2.msra.mxu0 0.0
  %3373 = vmatprep.subr.mxu0 0.0
  %3374 = vmatpush2.msra.mxu0 0.0
  %3375 = vmatprep.subr.mxu0 0.0
  %3376 = vmatpush2.msra.mxu0 0.0
  %3377 = vmatprep.subr.mxu0 0.0
  %3378 = vmatpush2.msra.mxu0 0.0
  %3379 = vmatprep.subr.mxu0 0.0
  %3380 = vmatpush2.msra.mxu0 0.0
  %3381 = vmatprep.subr.mxu0 0.0
  %3382 = vmatpush2.msra.mxu0 0.0
  %3383 = vmatprep.subr.mxu0 0.0
  %3384 = vmatpush2.msra.mxu0 0.0
  %3385 = vmatprep.subr.mxu0 0.0
  %3386 = vmatpush2.msra.mxu0 0.0
  %3387 = vmatprep.subr.mxu0 0.0
  %3388 = vmatpush2.msra.mxu0 0.0
  %3389 = vmatprep.mubr.f32.mxu0 0.0
  %3390 = vmatmul.mubr.f32.gmra.mxu0 %v3323
  %v3391 = vpop.f32.mrf.mxu0
  %v3392 = vadd.f32 0.0, %v3391
  %v3393 = vpop.f32.mrf.mxu0
  %3394 = vdwg.mxu0
  %v3396 = vrot.slane %v3392, 4
  %v3398 = vadd.f32 %v2687, %v3396
  %v3399 = vxor.u32 %v3398, 2147483648
  %v3400 = vmul.f32 %v3399, 1.442695
  %v3401 = vpow.pop %v3400
  %v3402 = vadd.f32 %v3401, 1.0
  %v3403 = vrcp.pop %v3402
  %v3404 = vmul.f32 1.0, %v3403
  %v3405 = vtanh.pop %v3398
  %v3407 = vrot.slane %v3312, 6
  %v3409 = vmul.f32 %v3404, %v3407
  %3411 = vrot.lane.b32.xlu0 %v3405, 64
  %v3412 = vpop.permute.xlu0 %3411
  %v3414 = vmul.f32 %v3404, %v3412
  %3416 = vrot.lane.b32.xlu0 %v3414, 32
  %v3417 = vpop.permute.xlu0 %3416
  %v3419 = vadd.f32 %v3409, %v3417
  %v3420 = vtanh.pop %v3419
  %3422 = vrot.lane.b32.xlu0 %v3420, 64
  %v3423 = vpop.permute.xlu0 %3422
  %v3425 = vmul.f32 %v3404, %v3423
  %v3427 = vrot.slane %v3425, 4
  %3428 = vrot.lane.b32.xlu0 %v3427, 32
  %v3429 = vpop.permute.xlu0 %3428
  %v3430 = vsel %vm277, %v3429, 0
  %3432 = vmatprep.subr.mxu0 0.0
  %3433 = vmatpush1.msra.mxu0 0.0
  %3434 = vmatprep.subr.mxu0 0.0
  %3435 = vmatpush1.msra.mxu0 0.0
  %3436 = vmatprep.subr.mxu0 0.0
  %3437 = vmatpush1.msra.mxu0 0.0
  %3438 = vmatprep.subr.mxu0 0.0
  %3439 = vmatpush1.msra.mxu0 0.0
  %3440 = vmatprep.subr.mxu0 0.0
  %3441 = vmatpush1.msra.mxu0 0.0
  %3442 = vmatprep.subr.mxu0 0.0
  %3443 = vmatpush1.msra.mxu0 0.0
  %3444 = vmatprep.subr.mxu0 0.0
  %3445 = vmatpush1.msra.mxu0 0.0
  %3446 = vmatprep.subr.mxu0 0.0
  %3447 = vmatpush1.msra.mxu0 0.0
  %3448 = vmatprep.subr.mxu0 0.0
  %3449 = vmatpush1.msra.mxu0 0.0
  %3450 = vmatprep.subr.mxu0 0.0
  %3451 = vmatpush1.msra.mxu0 0.0
  %3452 = vmatprep.subr.mxu0 0.0
  %3453 = vmatpush1.msra.mxu0 0.0
  %3454 = vmatprep.subr.mxu0 0.0
  %3455 = vmatpush1.msra.mxu0 0.0
  %3456 = vmatprep.subr.mxu0 0.0
  %3457 = vmatpush1.msra.mxu0 %v2693
  %3458 = vmatprep.subr.mxu0 0.0
  %3459 = vmatpush1.msra.mxu0 %v2692
  %3460 = vmatprep.subr.mxu0 0.0
  %3461 = vmatpush1.msra.mxu0 %v2691
  %3462 = vmatprep.subr.mxu0 0.0
  %3463 = vmatpush1.msra.mxu0 %v2690
  %3464 = vmatprep.subr.mxu0 0.0
  %3465 = vmatpush2.msra.mxu0 0.0
  %3466 = vmatprep.subr.mxu0 0.0
  %3467 = vmatpush2.msra.mxu0 0.0
  %3468 = vmatprep.subr.mxu0 0.0
  %3469 = vmatpush2.msra.mxu0 0.0
  %3470 = vmatprep.subr.mxu0 0.0
  %3471 = vmatpush2.msra.mxu0 0.0
  %3472 = vmatprep.subr.mxu0 0.0
  %3473 = vmatpush2.msra.mxu0 0.0
  %3474 = vmatprep.subr.mxu0 0.0
  %3475 = vmatpush2.msra.mxu0 0.0
  %3476 = vmatprep.subr.mxu0 0.0
  %3477 = vmatpush2.msra.mxu0 0.0
  %3478 = vmatprep.subr.mxu0 0.0
  %3479 = vmatpush2.msra.mxu0 0.0
  %3480 = vmatprep.subr.mxu0 0.0
  %3481 = vmatpush2.msra.mxu0 0.0
  %3482 = vmatprep.subr.mxu0 0.0
  %3483 = vmatpush2.msra.mxu0 0.0
  %3484 = vmatprep.subr.mxu0 0.0
  %3485 = vmatpush2.msra.mxu0 0.0
  %3486 = vmatprep.subr.mxu0 0.0
  %3487 = vmatpush2.msra.mxu0 0.0
  %3488 = vmatprep.subr.mxu0 0.0
  %3489 = vmatpush2.msra.mxu0 0.0
  %3490 = vmatprep.subr.mxu0 0.0
  %3491 = vmatpush2.msra.mxu0 0.0
  %3492 = vmatprep.subr.mxu0 0.0
  %3493 = vmatpush2.msra.mxu0 0.0
  %3494 = vmatprep.subr.mxu0 0.0
  %3495 = vmatpush2.msra.mxu0 0.0
  %3496 = vmatprep.mubr.f32.mxu0 0.0
  %3497 = vmatmul.mubr.f32.gmra.mxu0 %v3430
  %v3498 = vpop.f32.mrf.mxu0
  %v3499 = vadd.f32 0.0, %v3498
  %v3500 = vpop.f32.mrf.mxu0
  %3501 = vdwg.mxu0
  %v3503 = vrot.slane %v3499, 2
  %v3505 = vadd.f32 %v2687, %v3503
  %v3506 = vxor.u32 %v3505, 2147483648
  %v3507 = vmul.f32 %v3506, 1.442695
  %v3508 = vpow.pop %v3507
  %v3509 = vadd.f32 %v3508, 1.0
  %v3510 = vrcp.pop %v3509
  %v3511 = vmul.f32 1.0, %v3510
  %v3512 = vtanh.pop %v3505
  %v3514 = vrot.slane %v3419, 6
  %v3516 = vmul.f32 %v3511, %v3514
  %3518 = vrot.lane.b32.xlu0 %v3512, 64
  %v3519 = vpop.permute.xlu0 %3518
  %v3521 = vmul.f32 %v3511, %v3519
  %3523 = vrot.lane.b32.xlu0 %v3521, 32
  %v3524 = vpop.permute.xlu0 %3523
  %v3526 = vadd.f32 %v3516, %v3524
  %v3527 = vtanh.pop %v3526
  %3529 = vrot.lane.b32.xlu0 %v3527, 64
  %v3530 = vpop.permute.xlu0 %3529
  %v3532 = vmul.f32 %v3511, %v3530
  %v3533 = vld [vmem:[%s59] sm:$0xff]
  %v3534 = vld [vmem:[%s59 + $0x8] sm:$0xff]
  %v3535 = vld [vmem:[%s59 + $0x10] sm:$0xff]
  %v3536 = vld [vmem:[%s59 + $0x18] sm:$0xff]
  %v3537 = vld [vmem:[%s61] sm:$0x1]
  %v3539 = vlaneseq
  %v3540 = vshrl.u32 %v3539, 7
  %v3541 = vsub.s32 0, %v3540
  %v3542 = vrot.slane %v3537, %v3541
  %v3545 = vrot.slane %v3532, 6
  %3546 = vrot.lane.b32.xlu0 %v3545, 32
  %v3547 = vpop.permute.xlu0 %3546
  %v3548 = vsel %vm277, %v3547, 0
  %3550 = vmatprep.subr.mxu0 0.0
  %3551 = vmatpush1.msra.mxu0 0.0
  %3552 = vmatprep.subr.mxu0 0.0
  %3553 = vmatpush1.msra.mxu0 0.0
  %3554 = vmatprep.subr.mxu0 0.0
  %3555 = vmatpush1.msra.mxu0 0.0
  %3556 = vmatprep.subr.mxu0 0.0
  %3557 = vmatpush1.msra.mxu0 0.0
  %3558 = vmatprep.subr.mxu0 0.0
  %3559 = vmatpush1.msra.mxu0 0.0
  %3560 = vmatprep.subr.mxu0 0.0
  %3561 = vmatpush1.msra.mxu0 0.0
  %3562 = vmatprep.subr.mxu0 0.0
  %3563 = vmatpush1.msra.mxu0 0.0
  %3564 = vmatprep.subr.mxu0 0.0
  %3565 = vmatpush1.msra.mxu0 0.0
  %3566 = vmatprep.subr.mxu0 0.0
  %3567 = vmatpush1.msra.mxu0 0.0
  %3568 = vmatprep.subr.mxu0 0.0
  %3569 = vmatpush1.msra.mxu0 0.0
  %3570 = vmatprep.subr.mxu0 0.0
  %3571 = vmatpush1.msra.mxu0 0.0
  %3572 = vmatprep.subr.mxu0 0.0
  %3573 = vmatpush1.msra.mxu0 0.0
  %3574 = vmatprep.subr.mxu0 0.0
  %3575 = vmatpush1.msra.mxu0 %v3536
  %3576 = vmatprep.subr.mxu0 0.0
  %3577 = vmatpush1.msra.mxu0 %v3535
  %3578 = vmatprep.subr.mxu0 0.0
  %3579 = vmatpush1.msra.mxu0 %v3534
  %3580 = vmatprep.subr.mxu0 0.0
  %3581 = vmatpush1.msra.mxu0 %v3533
  %3582 = vmatprep.subr.mxu0 0.0
  %3583 = vmatpush2.msra.mxu0 0.0
  %3584 = vmatprep.subr.mxu0 0.0
  %3585 = vmatpush2.msra.mxu0 0.0
  %3586 = vmatprep.subr.mxu0 0.0
  %3587 = vmatpush2.msra.mxu0 0.0
  %3588 = vmatprep.subr.mxu0 0.0
  %3589 = vmatpush2.msra.mxu0 0.0
  %3590 = vmatprep.subr.mxu0 0.0
  %3591 = vmatpush2.msra.mxu0 0.0
  %3592 = vmatprep.subr.mxu0 0.0
  %3593 = vmatpush2.msra.mxu0 0.0
  %3594 = vmatprep.subr.mxu0 0.0
  %3595 = vmatpush2.msra.mxu0 0.0
  %3596 = vmatprep.subr.mxu0 0.0
  %3597 = vmatpush2.msra.mxu0 0.0
  %3598 = vmatprep.subr.mxu0 0.0
  %3599 = vmatpush2.msra.mxu0 0.0
  %3600 = vmatprep.subr.mxu0 0.0
  %3601 = vmatpush2.msra.mxu0 0.0
  %3602 = vmatprep.subr.mxu0 0.0
  %3603 = vmatpush2.msra.mxu0 0.0
  %3604 = vmatprep.subr.mxu0 0.0
  %3605 = vmatpush2.msra.mxu0 0.0
  %3606 = vmatprep.subr.mxu0 0.0
  %3607 = vmatpush2.msra.mxu0 0.0
  %3608 = vmatprep.subr.mxu0 0.0
  %3609 = vmatpush2.msra.mxu0 0.0
  %3610 = vmatprep.subr.mxu0 0.0
  %3611 = vmatpush2.msra.mxu0 0.0
  %3612 = vmatprep.subr.mxu0 0.0
  %3613 = vmatpush2.msra.mxu0 0.0
  %3614 = vmatprep.mubr.f32.mxu0 0.0
  %3615 = vmatmul.mubr.f32.gmra.mxu0 %v3548
  %v3616 = vpop.f32.mrf.mxu0
  %v3617 = vadd.f32 %v3542, %v3616
  %v3618 = vpop.f32.mrf.mxu0
  %3619 = vdwg.mxu0
  %v3620 = vmul.f32 %v3617, 0.5
  %v3621 = vmul.f32 %v3620, 1.442695
  %v3622 = vpow.pop %v3621
  %v3623 = vld [vmem:[%s11] sm:$0x3]
  %3625 = vrot.lane.b32.xlu0 %v3623, 8
  %v3626 = vpop.permute.xlu0 %3625
  %v3628 = vmul.f32 %v3622, %v3626
  %3630 = vrot.lane.b32.xlu0 %v3628, 120
  %v3631 = vpop.permute.xlu0 %3630
  %v3633 = vadd.f32 %v3617, %v3631
  %3635 = vrot.lane.b32.xlu0 %v2587, 8
  %v3636 = vpop.permute.xlu0 %3635
  %v3638 = vsel %vm2012, %v3633, %v3636
  %v3639 = vld [vmem:[%s63] sm:$0xff]
  %v3640 = vld [vmem:[%s63 + $0x8] sm:$0xff]
  %v3641 = vld [vmem:[%s63 + $0x10] sm:$0xff]
  %v3642 = vld [vmem:[%s63 + $0x18] sm:$0xff]
  %v3643 = vld [vmem:[%s63 + $0x20] sm:$0xff]
  %v3644 = vld [vmem:[%s67] sm:$0x1]
  %v3646 = vlaneseq
  %v3647 = vshrl.u32 %v3646, 7
  %v3648 = vsub.s32 0, %v3647
  %v3649 = vrot.slane %v3644, %v3648
  %vm3651 = vcmask 326656
  %v3653 = vsel %vm3651, %v3638, 0
  %3655 = vmatprep.subr.mxu0 0.0
  %3656 = vmatpush1.msra.mxu0 0.0
  %3657 = vmatprep.subr.mxu0 0.0
  %3658 = vmatpush1.msra.mxu0 0.0
  %3659 = vmatprep.subr.mxu0 0.0
  %3660 = vmatpush1.msra.mxu0 0.0
  %3661 = vmatprep.subr.mxu0 0.0
  %3662 = vmatpush1.msra.mxu0 0.0
  %3663 = vmatprep.subr.mxu0 0.0
  %3664 = vmatpush1.msra.mxu0 0.0
  %3665 = vmatprep.subr.mxu0 0.0
  %3666 = vmatpush1.msra.mxu0 0.0
  %3667 = vmatprep.subr.mxu0 0.0
  %3668 = vmatpush1.msra.mxu0 0.0
  %3669 = vmatprep.subr.mxu0 0.0
  %3670 = vmatpush1.msra.mxu0 0.0
  %3671 = vmatprep.subr.mxu0 0.0
  %3672 = vmatpush1.msra.mxu0 0.0
  %3673 = vmatprep.subr.mxu0 0.0
  %3674 = vmatpush1.msra.mxu0 0.0
  %3675 = vmatprep.subr.mxu0 0.0
  %3676 = vmatpush1.msra.mxu0 0.0
  %3677 = vmatprep.subr.mxu0 0.0
  %3678 = vmatpush1.msra.mxu0 %v3643
  %3679 = vmatprep.subr.mxu0 0.0
  %3680 = vmatpush1.msra.mxu0 %v3642
  %3681 = vmatprep.subr.mxu0 0.0
  %3682 = vmatpush1.msra.mxu0 %v3641
  %3683 = vmatprep.subr.mxu0 0.0
  %3684 = vmatpush1.msra.mxu0 %v3640
  %3685 = vmatprep.subr.mxu0 0.0
  %3686 = vmatpush1.msra.mxu0 %v3639
  %3687 = vmatprep.subr.mxu0 0.0
  %3688 = vmatpush2.msra.mxu0 0.0
  %3689 = vmatprep.subr.mxu0 0.0
  %3690 = vmatpush2.msra.mxu0 0.0
  %3691 = vmatprep.subr.mxu0 0.0
  %3692 = vmatpush2.msra.mxu0 0.0
  %3693 = vmatprep.subr.mxu0 0.0
  %3694 = vmatpush2.msra.mxu0 0.0
  %3695 = vmatprep.subr.mxu0 0.0
  %3696 = vmatpush2.msra.mxu0 0.0
  %3697 = vmatprep.subr.mxu0 0.0
  %3698 = vmatpush2.msra.mxu0 0.0
  %3699 = vmatprep.subr.mxu0 0.0
  %3700 = vmatpush2.msra.mxu0 0.0
  %3701 = vmatprep.subr.mxu0 0.0
  %3702 = vmatpush2.msra.mxu0 0.0
  %3703 = vmatprep.subr.mxu0 0.0
  %3704 = vmatpush2.msra.mxu0 0.0
  %3705 = vmatprep.subr.mxu0 0.0
  %3706 = vmatpush2.msra.mxu0 0.0
  %3707 = vmatprep.subr.mxu0 0.0
  %3708 = vmatpush2.msra.mxu0 0.0
  %3709 = vmatprep.subr.mxu0 0.0
  %3710 = vmatpush2.msra.mxu0 0.0
  %3711 = vmatprep.subr.mxu0 0.0
  %3712 = vmatpush2.msra.mxu0 0.0
  %3713 = vmatprep.subr.mxu0 0.0
  %3714 = vmatpush2.msra.mxu0 0.0
  %3715 = vmatprep.subr.mxu0 0.0
  %3716 = vmatpush2.msra.mxu0 0.0
  %3717 = vmatprep.subr.mxu0 0.0
  %3718 = vmatpush2.msra.mxu0 0.0
  %3719 = vmatprep.mubr.f32.mxu0 0.0
  %3720 = vmatmul.mubr.f32.gmra.mxu0 %v3653
  %v3721 = vpop.f32.mrf.mxu0
  %v3722 = vadd.f32 %v3649, %v3721
  %v3723 = vpop.f32.mrf.mxu0
  %3724 = vdwg.mxu0
  %v3725 = vld [vmem:[%s65] sm:$0xff]
  %v3726 = vld [vmem:[%s65 + $0x8] sm:$0xff]
  %v3727 = vld [vmem:[%s65 + $0x10] sm:$0xff]
  %v3728 = vld [vmem:[%s65 + $0x18] sm:$0xff]
  %v3729 = vld [vmem:[%s69] sm:$0xff]
  %v3730 = vld [vmem:[%s69 + $0x8] sm:$0xff]
  %v3731 = vld [vmem:[%s69 + $0x10] sm:$0xff]
  %v3732 = vld [vmem:[%s69 + $0x18] sm:$0xff]
  %v3733 = vld [vmem:[%s71] sm:$0x1]
  %v3734 = vld [vmem:[%s5] sm:$0x3]
  %v3735 = vlaneseq
  %v3736 = vand.u32 %v3735, 127
  %3737 = vmatprep.subr.mxu0 0.0
  %3738 = vmatpush1.msra.mxu0 0.0
  %3739 = vmatprep.subr.mxu0 0.0
  %3740 = vmatpush1.msra.mxu0 0.0
  %3741 = vmatprep.subr.mxu0 0.0
  %3742 = vmatpush1.msra.mxu0 0.0
  %3743 = vmatprep.subr.mxu0 0.0
  %3744 = vmatpush1.msra.mxu0 0.0
  %3745 = vmatprep.subr.mxu0 0.0
  %3746 = vmatpush1.msra.mxu0 0.0
  %3747 = vmatprep.subr.mxu0 0.0
  %3748 = vmatpush1.msra.mxu0 0.0
  %3749 = vmatprep.subr.mxu0 0.0
  %3750 = vmatpush1.msra.mxu0 0.0
  %3751 = vmatprep.subr.mxu0 0.0
  %3752 = vmatpush1.msra.mxu0 0.0
  %3753 = vmatprep.subr.mxu0 0.0
  %3754 = vmatpush1.msra.mxu0 0.0
  %3755 = vmatprep.subr.mxu0 0.0
  %3756 = vmatpush1.msra.mxu0 0.0
  %3757 = vmatprep.subr.mxu0 0.0
  %3758 = vmatpush1.msra.mxu0 0.0
  %3759 = vmatprep.subr.mxu0 0.0
  %3760 = vmatpush1.msra.mxu0 0.0
  %3761 = vmatprep.subr.mxu0 0.0
  %3762 = vmatpush1.msra.mxu0 %v3728
  %3763 = vmatprep.subr.mxu0 0.0
  %3764 = vmatpush1.msra.mxu0 %v3727
  %3765 = vmatprep.subr.mxu0 0.0
  %3766 = vmatpush1.msra.mxu0 %v3726
  %3767 = vmatprep.subr.mxu0 0.0
  %3768 = vmatpush1.msra.mxu0 %v3725
  %3769 = vmatprep.subr.mxu0 0.0
  %3770 = vmatpush2.msra.mxu0 0.0
  %3771 = vmatprep.subr.mxu0 0.0
  %3772 = vmatpush2.msra.mxu0 0.0
  %3773 = vmatprep.subr.mxu0 0.0
  %3774 = vmatpush2.msra.mxu0 0.0
  %3775 = vmatprep.subr.mxu0 0.0
  %3776 = vmatpush2.msra.mxu0 0.0
  %3777 = vmatprep.subr.mxu0 0.0
  %3778 = vmatpush2.msra.mxu0 0.0
  %3779 = vmatprep.subr.mxu0 0.0
  %3780 = vmatpush2.msra.mxu0 0.0
  %3781 = vmatprep.subr.mxu0 0.0
  %3782 = vmatpush2.msra.mxu0 0.0
  %3783 = vmatprep.subr.mxu0 0.0
  %3784 = vmatpush2.msra.mxu0 0.0
  %3785 = vmatprep.subr.mxu0 0.0
  %3786 = vmatpush2.msra.mxu0 0.0
  %3787 = vmatprep.subr.mxu0 0.0
  %3788 = vmatpush2.msra.mxu0 0.0
  %3789 = vmatprep.subr.mxu0 0.0
  %3790 = vmatpush2.msra.mxu0 0.0
  %3791 = vmatprep.subr.mxu0 0.0
  %3792 = vmatpush2.msra.mxu0 0.0
  %3793 = vmatprep.subr.mxu0 0.0
  %3794 = vmatpush2.msra.mxu0 0.0
  %3795 = vmatprep.subr.mxu0 0.0
  %3796 = vmatpush2.msra.mxu0 0.0
  %3797 = vmatprep.subr.mxu0 0.0
  %3798 = vmatpush2.msra.mxu0 0.0
  %3799 = vmatprep.subr.mxu0 0.0
  %3800 = vmatpush2.msra.mxu0 0.0
  %3801 = vmatprep.mubr.f32.mxu0 0.0
  %3802 = vmatmul.mubr.f32.gmra.mxu0 %v279
  %v3803 = vpop.f32.mrf.mxu0
  %v3804 = vadd.f32 0.0, %v3803
  %v3805 = vpop.f32.mrf.mxu0
  %3806 = vdwg.mxu0
  %v3807 = vadd.f32 %v3722, %v3804
  %v3808 = vxor.u32 %v3807, 2147483648
  %v3809 = vmul.f32 %v3808, 1.442695
  %v3810 = vpow.pop %v3809
  %v3811 = vadd.f32 %v3810, 1.0
  %v3812 = vrcp.pop %v3811
  %v3813 = vmul.f32 1.0, %v3812
  %v3814 = vtanh.pop %v3807
  %v3815 = vmul.f32 %v3813, 0.0
  %3817 = vrot.lane.b32.xlu0 %v3814, 64
  %v3818 = vpop.permute.xlu0 %3817
  %v3820 = vmul.f32 %v3813, %v3818
  %3822 = vrot.lane.b32.xlu0 %v3820, 32
  %v3823 = vpop.permute.xlu0 %3822
  %v3825 = vadd.f32 %v3815, %v3823
  %v3826 = vtanh.pop %v3825
  %3828 = vrot.lane.b32.xlu0 %v3826, 64
  %v3829 = vpop.permute.xlu0 %3828
  %v3831 = vmul.f32 %v3813, %v3829
  %v3833 = vlaneseq
  %v3834 = vshrl.u32 %v3833, 7
  %v3835 = vsub.s32 0, %v3834
  %v3836 = vrot.slane %v3733, %v3835
  %3839 = vrot.lane.b32.xlu0 %v3831, 32
  %v3840 = vpop.permute.xlu0 %3839
  %v3841 = vsel %vm277, %v3840, 0
  %3843 = vmatprep.subr.mxu0 0.0
  %3844 = vmatpush1.msra.mxu0 0.0
  %3845 = vmatprep.subr.mxu0 0.0
  %3846 = vmatpush1.msra.mxu0 0.0
  %3847 = vmatprep.subr.mxu0 0.0
  %3848 = vmatpush1.msra.mxu0 0.0
  %3849 = vmatprep.subr.mxu0 0.0
  %3850 = vmatpush1.msra.mxu0 0.0
  %3851 = vmatprep.subr.mxu0 0.0
  %3852 = vmatpush1.msra.mxu0 0.0
  %3853 = vmatprep.subr.mxu0 0.0
  %3854 = vmatpush1.msra.mxu0 0.0
  %3855 = vmatprep.subr.mxu0 0.0
  %3856 = vmatpush1.msra.mxu0 0.0
  %3857 = vmatprep.subr.mxu0 0.0
  %3858 = vmatpush1.msra.mxu0 0.0
  %3859 = vmatprep.subr.mxu0 0.0
  %3860 = vmatpush1.msra.mxu0 0.0
  %3861 = vmatprep.subr.mxu0 0.0
  %3862 = vmatpush1.msra.mxu0 0.0
  %3863 = vmatprep.subr.mxu0 0.0
  %3864 = vmatpush1.msra.mxu0 0.0
  %3865 = vmatprep.subr.mxu0 0.0
  %3866 = vmatpush1.msra.mxu0 0.0
  %3867 = vmatprep.subr.mxu0 0.0
  %3868 = vmatpush1.msra.mxu0 %v3732
  %3869 = vmatprep.subr.mxu0 0.0
  %3870 = vmatpush1.msra.mxu0 %v3731
  %3871 = vmatprep.subr.mxu0 0.0
  %3872 = vmatpush1.msra.mxu0 %v3730
  %3873 = vmatprep.subr.mxu0 0.0
  %3874 = vmatpush1.msra.mxu0 %v3729
  %3875 = vmatprep.subr.mxu0 0.0
  %3876 = vmatpush2.msra.mxu0 0.0
  %3877 = vmatprep.subr.mxu0 0.0
  %3878 = vmatpush2.msra.mxu0 0.0
  %3879 = vmatprep.subr.mxu0 0.0
  %3880 = vmatpush2.msra.mxu0 0.0
  %3881 = vmatprep.subr.mxu0 0.0
  %3882 = vmatpush2.msra.mxu0 0.0
  %3883 = vmatprep.subr.mxu0 0.0
  %3884 = vmatpush2.msra.mxu0 0.0
  %3885 = vmatprep.subr.mxu0 0.0
  %3886 = vmatpush2.msra.mxu0 0.0
  %3887 = vmatprep.subr.mxu0 0.0
  %3888 = vmatpush2.msra.mxu0 0.0
  %3889 = vmatprep.subr.mxu0 0.0
  %3890 = vmatpush2.msra.mxu0 0.0
  %3891 = vmatprep.subr.mxu0 0.0
  %3892 = vmatpush2.msra.mxu0 0.0
  %3893 = vmatprep.subr.mxu0 0.0
  %3894 = vmatpush2.msra.mxu0 0.0
  %3895 = vmatprep.subr.mxu0 0.0
  %3896 = vmatpush2.msra.mxu0 0.0
  %3897 = vmatprep.subr.mxu0 0.0
  %3898 = vmatpush2.msra.mxu0 0.0
  %3899 = vmatprep.subr.mxu0 0.0
  %3900 = vmatpush2.msra.mxu0 0.0
  %3901 = vmatprep.subr.mxu0 0.0
  %3902 = vmatpush2.msra.mxu0 0.0
  %3903 = vmatprep.subr.mxu0 0.0
  %3904 = vmatpush2.msra.mxu0 0.0
  %3905 = vmatprep.subr.mxu0 0.0
  %3906 = vmatpush2.msra.mxu0 0.0
  %3907 = vmatprep.mubr.f32.mxu0 0.0
  %3908 = vmatmul.mubr.f32.gmra.mxu0 %v3841
  %v3909 = vpop.f32.mrf.mxu0
  %v3910 = vadd.f32 %v3836, %v3909
  %v3911 = vpop.f32.mrf.mxu0
  %3912 = vdwg.mxu0
  %v3914 = vlaneseq
  %v3915 = vshrl.u32 %v3914, 7
  %v3916 = vsub.s32 0, %v3915
  %v3917 = vrot.slane %v159, %v3916
  %3918 = vrot.lane.b32.xlu0 %v3917, 124
  %v3919 = vpop.permute.xlu0 %3918
  %v3921 = vmul.f32 %v3910, %v3919
  %3922 = vrot.lane.b32.xlu0 %v167, 124
  %v3923 = vpop.permute.xlu0 %3922
  %v3925 = vsub.f32 %v3921, %v3923
  %v3926 = vmax.f32 %v3925, -6.0
  %v3927 = vmin.f32 %v3926, 6.0
  %v3928 = vmax.f32 %v3925, -4.0
  %v3929 = vmin.f32 %v3928, 4.0
  %vm3930 = vcmp.eq.s32.totalorder %v3736, 0
  %v3931 = vand.u32 2147483647, %v3734
  %vm3932 = vcmp.le.f32.partialorder %v3931, 0.7853982
  %vm3933 = vcmp.lt.s32.totalorder %v3734, 0
  %v3934 = vand.u32 %v3734, 2139095040
  %v3935 = vshrl.u32 %v3934, 23
  %v3936 = vsub.s32 %v3935, 127
  %v3937 = vand.u32 2147483647, %v3734
  %v3938 = vand.u32 %v3937, 8388607
  %v3939 = vor.u32 %v3938, 8388608
  %v3940 = vsub.s32 0, %v3939
  %v3941 = vadd.s32 %v3936, 1
  %vm3942 = vcmp.gt.s32.totalorder %v3941, 0
  %v3943 = vsel %vm3942, %v3941, 0
  %v3944 = vshrl.u32 %v3943, 5
  %v3945 = vand.u32 %v3943, 31
  %v3946 = vsub.s32 32, %v3945
  %v3947 = vshrl.u32 683565275, %v3946
  %v3948 = vshll.u32 683565275, %v3945
  %v3949 = vshrl.u32 2475754826, %v3946
  %v3950 = vor.u32 %v3948, %v3949
  %v3951 = vshll.u32 2475754826, %v3945
  %v3952 = vshrl.u32 2131351028, %v3946
  %v3953 = vor.u32 %v3951, %v3952
  %v3954 = vshll.u32 2131351028, %v3945
  %v3955 = vshrl.u32 2102212464, %v3946
  %v3956 = vor.u32 %v3954, %v3955
  %v3957 = vshll.u32 2102212464, %v3945
  %v3958 = vshrl.u32 920167782, %v3946
  %v3959 = vor.u32 %v3957, %v3958
  %v3960 = vshll.u32 920167782, %v3945
  %v3961 = vshrl.u32 1326507024, %v3946
  %v3962 = vor.u32 %v3960, %v3961
  %vm3963 = vcmp.lt.s32.totalorder %v3944, 1
  %vm3964 = vcmp.lt.s32.totalorder %v3944, 2
  %vm3965 = vcmp.lt.s32.totalorder %v3944, 3
  %vm3966 = vcmp.lt.s32.totalorder %v3944, 4
  %v3967 = vsel %vm3963, %v3947, %v3950
  %v3968 = vsel %vm3966, %v3956, 2102212464
  %v3969 = vsel %vm3965, %v3953, %v3968
  %v3970 = vsel %vm3964, %v3967, %v3969
  %v3971 = vsel %vm3963, %v3950, %v3953
  %v3972 = vsel %vm3966, %v3959, 920167782
  %v3973 = vsel %vm3965, %v3956, %v3972
  %v3974 = vsel %vm3964, %v3971, %v3973
  %v3975 = vsel %vm3963, %v3953, %v3956
  %v3976 = vsel %vm3966, %v3962, 1326507024
  %v3977 = vsel %vm3965, %v3959, %v3976
  %v3978 = vsel %vm3964, %v3975, %v3977
  %v3979 = vshll.u32 %v3939, 8
  %v3980 = vmul.u32.u64.compose %v3979, %v3978
  %v3981 = vextract.low.u32 %v3980
  %v3982 = vextract.high.u32 %v3980
  %v3983 = vmul.u32.u64.compose %v3979, %v3974
  %v3984 = vextract.low.u32 %v3983
  %v3985 = vextract.high.u32 %v3983
  %v3986 = vmul.u32 %v3979, %v3970
  %v3987 = vadd.s32 %v3982, %v3984
  %vm3988 = vc.u32 %v3982, %v3984
  %v3989 = vadd.s32 %v3985, 1
  %v3990 = vsel %vm3988, %v3989, %v3985
  %v3991 = vadd.s32 %v3986, %v3990
  %v3992 = vadd.s32 %v3991, 536870912
  %v3993 = vshrl.u32 %v3992, 30
  %v3994 = vshll.u32 %v3993, 30
  %v3995 = vsub.s32 %v3991, %v3994
  %vm3996 = vcmp.lt.s32.totalorder %v3995, 0
  %v3997 = vsub.s32 0, %v3995
  %v3998 = vsel %vm3996, %v3997, %v3995
  %v3999 = vclz %v3998
  %v4000 = vsub.s32 %v3999, 2
  %vm4001 = vcmp.gt.s32.totalorder 0, %v4000
  %v4002 = vsel %vm4001, 0, %v4000
  %v4003 = vsub.s32 32, %v4002
  %v4004 = vshll.u32 %v3995, %v4002
  %v4005 = vshrl.u32 %v3987, %v4003
  %v4006 = vor.u32 %v4004, %v4005
  %v4007 = vsub.s32 4294967266, %v4002
  %v4008 = vadd.s32 %v4007, 127
  %v4009 = vshll.u32 %v4008, 23
  %v4010 = vor.u32 4788187, %v4009
  %v4011 = vand.u32 2147483647, %v4010
  %v4013 = vcvt.s32.f32 %v4006
  %v4014 = vmul.f32 %v4013, %v4011
  %v4015 = vxor.u32 %v4014, 2147483648
  %v4016 = vsel %vm3933, %v4015, %v4014
  %v4017 = vsub.s32 4, %v3993
  %v4018 = vsel %vm3933, %v4017, %v3993
  %v4019 = vsel %vm3932, %v3734, %v4016
  %v4020 = vsel %vm3932, 0, %v4018
  %v4021 = vcosq.f32.pop %v4019
  %v4022 = vsinq.f32.pop %v4019
  %vm4023 = vweird.f32 %v3734
  %v4024 = vand.u32 %v4020, 3
  %vm4025 = vcmp.lt.s32.totalorder %v4024, 2
  %vm4026 = vcmp.eq.s32.totalorder %v4024, 0
  %v4027 = vxor.u32 %v4022, 2147483648
  %v4028 = vsel %vm4026, %v4021, %v4027
  %vm4029 = vcmp.eq.s32.totalorder %v4024, 2
  %v4030 = vxor.u32 %v4021, 2147483648
  %v4031 = vsel %vm4029, %v4030, %v4022
  %v4032 = vsel %vm4025, %v4028, %v4031
  %v4033 = vsel %vm4023, nan, %v4032
  %4035 = vrot.lane.b32.xlu0 %v4033, 127
  %v4036 = vpop.permute.xlu0 %4035
  %v4038 = vmul.f32 %v3734, %v4036
  %vm4039 = vcmp.eq.s32.totalorder %v3736, 1
  %v4040 = vand.u32 2147483647, %v3734
  %vm4041 = vcmp.le.f32.partialorder %v4040, 0.7853982
  %vm4042 = vcmp.lt.s32.totalorder %v3734, 0
  %v4043 = vand.u32 %v3734, 2139095040
  %v4044 = vshrl.u32 %v4043, 23
  %v4045 = vsub.s32 %v4044, 127
  %v4046 = vand.u32 2147483647, %v3734
  %v4047 = vand.u32 %v4046, 8388607
  %v4048 = vor.u32 %v4047, 8388608
  %v4049 = vsub.s32 0, %v4048
  %v4050 = vadd.s32 %v4045, 1
  %vm4051 = vcmp.gt.s32.totalorder %v4050, 0
  %v4052 = vsel %vm4051, %v4050, 0
  %v4053 = vshrl.u32 %v4052, 5
  %v4054 = vand.u32 %v4052, 31
  %v4055 = vsub.s32 32, %v4054
  %v4056 = vshrl.u32 683565275, %v4055
  %v4057 = vshll.u32 683565275, %v4054
  %v4058 = vshrl.u32 2475754826, %v4055
  %v4059 = vor.u32 %v4057, %v4058
  %v4060 = vshll.u32 2475754826, %v4054
  %v4061 = vshrl.u32 2131351028, %v4055
  %v4062 = vor.u32 %v4060, %v4061
  %v4063 = vshll.u32 2131351028, %v4054
  %v4064 = vshrl.u32 2102212464, %v4055
  %v4065 = vor.u32 %v4063, %v4064
  %v4066 = vshll.u32 2102212464, %v4054
  %v4067 = vshrl.u32 920167782, %v4055
  %v4068 = vor.u32 %v4066, %v4067
  %v4069 = vshll.u32 920167782, %v4054
  %v4070 = vshrl.u32 1326507024, %v4055
  %v4071 = vor.u32 %v4069, %v4070
  %vm4072 = vcmp.lt.s32.totalorder %v4053, 1
  %vm4073 = vcmp.lt.s32.totalorder %v4053, 2
  %vm4074 = vcmp.lt.s32.totalorder %v4053, 3
  %vm4075 = vcmp.lt.s32.totalorder %v4053, 4
  %v4076 = vsel %vm4072, %v4056, %v4059
  %v4077 = vsel %vm4075, %v4065, 2102212464
  %v4078 = vsel %vm4074, %v4062, %v4077
  %v4079 = vsel %vm4073, %v4076, %v4078
  %v4080 = vsel %vm4072, %v4059, %v4062
  %v4081 = vsel %vm4075, %v4068, 920167782
  %v4082 = vsel %vm4074, %v4065, %v4081
  %v4083 = vsel %vm4073, %v4080, %v4082
  %v4084 = vsel %vm4072, %v4062, %v4065
  %v4085 = vsel %vm4075, %v4071, 1326507024
  %v4086 = vsel %vm4074, %v4068, %v4085
  %v4087 = vsel %vm4073, %v4084, %v4086
  %v4088 = vshll.u32 %v4048, 8
  %v4089 = vmul.u32.u64.compose %v4088, %v4087
  %v4090 = vextract.low.u32 %v4089
  %v4091 = vextract.high.u32 %v4089
  %v4092 = vmul.u32.u64.compose %v4088, %v4083
  %v4093 = vextract.low.u32 %v4092
  %v4094 = vextract.high.u32 %v4092
  %v4095 = vmul.u32 %v4088, %v4079
  %v4096 = vadd.s32 %v4091, %v4093
  %vm4097 = vc.u32 %v4091, %v4093
  %v4098 = vadd.s32 %v4094, 1
  %v4099 = vsel %vm4097, %v4098, %v4094
  %v4100 = vadd.s32 %v4095, %v4099
  %v4101 = vadd.s32 %v4100, 536870912
  %v4102 = vshrl.u32 %v4101, 30
  %v4103 = vshll.u32 %v4102, 30
  %v4104 = vsub.s32 %v4100, %v4103
  %vm4105 = vcmp.lt.s32.totalorder %v4104, 0
  %v4106 = vsub.s32 0, %v4104
  %v4107 = vsel %vm4105, %v4106, %v4104
  %v4108 = vclz %v4107
  %v4109 = vsub.s32 %v4108, 2
  %vm4110 = vcmp.gt.s32.totalorder 0, %v4109
  %v4111 = vsel %vm4110, 0, %v4109
  %v4112 = vsub.s32 32, %v4111
  %v4113 = vshll.u32 %v4104, %v4111
  %v4114 = vshrl.u32 %v4096, %v4112
  %v4115 = vor.u32 %v4113, %v4114
  %v4116 = vsub.s32 4294967266, %v4111
  %v4117 = vadd.s32 %v4116, 127
  %v4118 = vshll.u32 %v4117, 23
  %v4119 = vor.u32 4788187, %v4118
  %v4120 = vand.u32 2147483647, %v4119
  %v4122 = vcvt.s32.f32 %v4115
  %v4123 = vmul.f32 %v4122, %v4120
  %v4124 = vxor.u32 %v4123, 2147483648
  %v4125 = vsel %vm4042, %v4124, %v4123
  %v4126 = vsub.s32 4, %v4102
  %v4127 = vsel %vm4042, %v4126, %v4102
  %v4128 = vsel %vm4041, %v3734, %v4125
  %v4129 = vsel %vm4041, 0, %v4127
  %v4130 = vcosq.f32.pop %v4128
  %v4131 = vsinq.f32.pop %v4128
  %vm4132 = vweird.f32 %v3734
  %v4133 = vadd.s32 %v4129, 3
  %v4134 = vand.u32 %v4133, 3
  %vm4135 = vcmp.lt.s32.totalorder %v4134, 2
  %vm4136 = vcmp.eq.s32.totalorder %v4134, 0
  %v4137 = vxor.u32 %v4131, 2147483648
  %v4138 = vsel %vm4136, %v4130, %v4137
  %vm4139 = vcmp.eq.s32.totalorder %v4134, 2
  %v4140 = vxor.u32 %v4130, 2147483648
  %v4141 = vsel %vm4139, %v4140, %v4131
  %v4142 = vsel %vm4135, %v4138, %v4141
  %v4143 = vsel %vm4132, nan, %v4142
  %4145 = vrot.lane.b32.xlu0 %v4143, 127
  %v4146 = vpop.permute.xlu0 %4145
  %v4148 = vmul.f32 %v3734, %v4146
  %vm4149 = vcmp.eq.s32.totalorder %v3736, 2
  %4151 = vset.pattern.permute.xlu0 0
  %4152 = vperm.xlu0 %4151, %v3927
  %v4153 = vpop.permute.xlu0 %4152
  %4156 = vset.pattern.permute.xlu0 1
  %4157 = vperm.xlu0 %4156, %v3929
  %v4158 = vpop.permute.xlu0 %4157
  %v4160 = vsel %vm4149, %v4153, %v4158
  %4162 = vset.pattern.permute.xlu0 2
  %4163 = vperm.xlu0 %4162, %v4148
  %v4164 = vpop.permute.xlu0 %4163
  %v4166 = vsel %vm4039, %v4164, %v4160
  %4168 = vset.pattern.permute.xlu0 2
  %4169 = vperm.xlu0 %4168, %v4038
  %v4170 = vpop.permute.xlu0 %4169
  %v4172 = vsel %vm3930, %v4170, %v4166
  %v4173 = vmul.f32 %v4172, 0.1
  %v4174 = vadd.f32 %v3734, %v4173
  %vm4175 = vcmask 25600
  %4176 = vst.msk [vmem:[%s75] sm:$0x3] %vm4175, %v4174
  %v4177 = vadd.f32 %v4174, %v167
  %v4178 = vmul.f32 %v4177, %v175
  %v4179 = vsub.f32 %v4178, %v2594
  %4180 = vrot.lane.b32.xlu0 %v2594, 124
  %v4181 = vpop.permute.xlu0 %4180
  %v4183 = vsub.f32 %v3910, %v4181
  %v4184 = vmul.f32 %v4179, %v4179
  %v4185 = vsel %vm4175, %v4184, 0.0
  %4186 = vadd.xlane.f32.xlu0 %v4185
  %v4187 = vpop.xlane.xlu0 %4186
  %v4188 = vrot.slane %v4187, 4
  %v4189 = vadd.f32 %v4187, %v4188
  %v4190 = vrot.slane %v4189, 2
  %v4191 = vadd.f32 %v4189, %v4190
  %v4192 = vrot.slane %v4191, 1
  %v4193 = vadd.f32 %v4191, %v4192
  %s4194 = vtos %v4193
  %v4195 = vstv %s4194
  %v4196 = vadd.f32 %v4195, 0.0
  %v4197 = vmul.f32 %v4183, %v4183
  %vm4198 = vcmask 9216
  %v4199 = vsel %vm4198, %v4197, 0.0
  %4200 = vadd.xlane.f32.xlu0 %v4199
  %v4201 = vpop.xlane.xlu0 %4200
  %v4202 = vrot.slane %v4201, 4
  %v4203 = vadd.f32 %v4201, %v4202
  %v4204 = vrot.slane %v4203, 2
  %v4205 = vadd.f32 %v4203, %v4204
  %v4206 = vrot.slane %v4205, 1
  %v4207 = vadd.f32 %v4205, %v4206
  %s4208 = vtos %v4207
  %v4209 = vstv %s4208
  %v4210 = vadd.f32 %v4196, %v4209
  %4211 = vmatprep.subr.mxu0 0.0
  %4212 = vmatpush1.msra.mxu0 0.0
  %4213 = vmatprep.subr.mxu0 0.0
  %4214 = vmatpush1.msra.mxu0 0.0
  %4215 = vmatprep.subr.mxu0 0.0
  %4216 = vmatpush1.msra.mxu0 0.0
  %4217 = vmatprep.subr.mxu0 0.0
  %4218 = vmatpush1.msra.mxu0 0.0
  %4219 = vmatprep.subr.mxu0 0.0
  %4220 = vmatpush1.msra.mxu0 0.0
  %4221 = vmatprep.subr.mxu0 0.0
  %4222 = vmatpush1.msra.mxu0 0.0
  %4223 = vmatprep.subr.mxu0 0.0
  %4224 = vmatpush1.msra.mxu0 0.0
  %4225 = vmatprep.subr.mxu0 0.0
  %4226 = vmatpush1.msra.mxu0 0.0
  %4227 = vmatprep.subr.mxu0 0.0
  %4228 = vmatpush1.msra.mxu0 0.0
  %4229 = vmatprep.subr.mxu0 0.0
  %4230 = vmatpush1.msra.mxu0 0.0
  %4231 = vmatprep.subr.mxu0 0.0
  %4232 = vmatpush1.msra.mxu0 0.0
  %4233 = vmatprep.subr.mxu0 0.0
  %4234 = vmatpush1.msra.mxu0 0.0
  %4235 = vmatprep.subr.mxu0 0.0
  %4236 = vmatpush1.msra.mxu0 %v3728
  %4237 = vmatprep.subr.mxu0 0.0
  %4238 = vmatpush1.msra.mxu0 %v3727
  %4239 = vmatprep.subr.mxu0 0.0
  %4240 = vmatpush1.msra.mxu0 %v3726
  %4241 = vmatprep.subr.mxu0 0.0
  %4242 = vmatpush1.msra.mxu0 %v3725
  %4243 = vmatprep.subr.mxu0 0.0
  %4244 = vmatpush2.msra.mxu0 0.0
  %4245 = vmatprep.subr.mxu0 0.0
  %4246 = vmatpush2.msra.mxu0 0.0
  %4247 = vmatprep.subr.mxu0 0.0
  %4248 = vmatpush2.msra.mxu0 0.0
  %4249 = vmatprep.subr.mxu0 0.0
  %4250 = vmatpush2.msra.mxu0 0.0
  %4251 = vmatprep.subr.mxu0 0.0
  %4252 = vmatpush2.msra.mxu0 0.0
  %4253 = vmatprep.subr.mxu0 0.0
  %4254 = vmatpush2.msra.mxu0 0.0
  %4255 = vmatprep.subr.mxu0 0.0
  %4256 = vmatpush2.msra.mxu0 0.0
  %4257 = vmatprep.subr.mxu0 0.0
  %4258 = vmatpush2.msra.mxu0 0.0
  %4259 = vmatprep.subr.mxu0 0.0
  %4260 = vmatpush2.msra.mxu0 0.0
  %4261 = vmatprep.subr.mxu0 0.0
  %4262 = vmatpush2.msra.mxu0 0.0
  %4263 = vmatprep.subr.mxu0 0.0
  %4264 = vmatpush2.msra.mxu0 0.0
  %4265 = vmatprep.subr.mxu0 0.0
  %4266 = vmatpush2.msra.mxu0 0.0
  %4267 = vmatprep.subr.mxu0 0.0
  %4268 = vmatpush2.msra.mxu0 0.0
  %4269 = vmatprep.subr.mxu0 0.0
  %4270 = vmatpush2.msra.mxu0 0.0
  %4271 = vmatprep.subr.mxu0 0.0
  %4272 = vmatpush2.msra.mxu0 0.0
  %4273 = vmatprep.subr.mxu0 0.0
  %4274 = vmatpush2.msra.mxu0 0.0
  %4275 = vmatprep.mubr.f32.mxu0 0.0
  %4276 = vmatmul.mubr.f32.gmra.mxu0 %v3841
  %v4277 = vpop.f32.mrf.mxu0
  %v4278 = vadd.f32 0.0, %v4277
  %v4279 = vpop.f32.mrf.mxu0
  %4280 = vdwg.mxu0
  %v4281 = vadd.f32 %v3722, %v4278
  %v4282 = vxor.u32 %v4281, 2147483648
  %v4283 = vmul.f32 %v4282, 1.442695
  %v4284 = vpow.pop %v4283
  %v4285 = vadd.f32 %v4284, 1.0
  %v4286 = vrcp.pop %v4285
  %v4287 = vmul.f32 1.0, %v4286
  %v4288 = vtanh.pop %v4281
  %v4289 = vmul.f32 %v4287, %v3825
  %4291 = vrot.lane.b32.xlu0 %v4288, 64
  %v4292 = vpop.permute.xlu0 %4291
  %v4294 = vmul.f32 %v4287, %v4292
  %4296 = vrot.lane.b32.xlu0 %v4294, 32
  %v4297 = vpop.permute.xlu0 %4296
  %v4299 = vadd.f32 %v4289, %v4297
  %v4300 = vtanh.pop %v4299
  %4302 = vrot.lane.b32.xlu0 %v4300, 64
  %v4303 = vpop.permute.xlu0 %4302
  %v4305 = vmul.f32 %v4287, %v4303
  %4307 = vrot.lane.b32.xlu0 %v4305, 32
  %v4308 = vpop.permute.xlu0 %4307
  %v4309 = vsel %vm277, %v4308, 0
  %4311 = vmatprep.subr.mxu0 0.0
  %4312 = vmatpush1.msra.mxu0 0.0
  %4313 = vmatprep.subr.mxu0 0.0
  %4314 = vmatpush1.msra.mxu0 0.0
  %4315 = vmatprep.subr.mxu0 0.0
  %4316 = vmatpush1.msra.mxu0 0.0
  %4317 = vmatprep.subr.mxu0 0.0
  %4318 = vmatpush1.msra.mxu0 0.0
  %4319 = vmatprep.subr.mxu0 0.0
  %4320 = vmatpush1.msra.mxu0 0.0
  %4321 = vmatprep.subr.mxu0 0.0
  %4322 = vmatpush1.msra.mxu0 0.0
  %4323 = vmatprep.subr.mxu0 0.0
  %4324 = vmatpush1.msra.mxu0 0.0
  %4325 = vmatprep.subr.mxu0 0.0
  %4326 = vmatpush1.msra.mxu0 0.0
  %4327 = vmatprep.subr.mxu0 0.0
  %4328 = vmatpush1.msra.mxu0 0.0
  %4329 = vmatprep.subr.mxu0 0.0
  %4330 = vmatpush1.msra.mxu0 0.0
  %4331 = vmatprep.subr.mxu0 0.0
  %4332 = vmatpush1.msra.mxu0 0.0
  %4333 = vmatprep.subr.mxu0 0.0
  %4334 = vmatpush1.msra.mxu0 0.0
  %4335 = vmatprep.subr.mxu0 0.0
  %4336 = vmatpush1.msra.mxu0 %v3732
  %4337 = vmatprep.subr.mxu0 0.0
  %4338 = vmatpush1.msra.mxu0 %v3731
  %4339 = vmatprep.subr.mxu0 0.0
  %4340 = vmatpush1.msra.mxu0 %v3730
  %4341 = vmatprep.subr.mxu0 0.0
  %4342 = vmatpush1.msra.mxu0 %v3729
  %4343 = vmatprep.subr.mxu0 0.0
  %4344 = vmatpush2.msra.mxu0 0.0
  %4345 = vmatprep.subr.mxu0 0.0
  %4346 = vmatpush2.msra.mxu0 0.0
  %4347 = vmatprep.subr.mxu0 0.0
  %4348 = vmatpush2.msra.mxu0 0.0
  %4349 = vmatprep.subr.mxu0 0.0
  %4350 = vmatpush2.msra.mxu0 0.0
  %4351 = vmatprep.subr.mxu0 0.0
  %4352 = vmatpush2.msra.mxu0 0.0
  %4353 = vmatprep.subr.mxu0 0.0
  %4354 = vmatpush2.msra.mxu0 0.0
  %4355 = vmatprep.subr.mxu0 0.0
  %4356 = vmatpush2.msra.mxu0 0.0
  %4357 = vmatprep.subr.mxu0 0.0
  %4358 = vmatpush2.msra.mxu0 0.0
  %4359 = vmatprep.subr.mxu0 0.0
  %4360 = vmatpush2.msra.mxu0 0.0
  %4361 = vmatprep.subr.mxu0 0.0
  %4362 = vmatpush2.msra.mxu0 0.0
  %4363 = vmatprep.subr.mxu0 0.0
  %4364 = vmatpush2.msra.mxu0 0.0
  %4365 = vmatprep.subr.mxu0 0.0
  %4366 = vmatpush2.msra.mxu0 0.0
  %4367 = vmatprep.subr.mxu0 0.0
  %4368 = vmatpush2.msra.mxu0 0.0
  %4369 = vmatprep.subr.mxu0 0.0
  %4370 = vmatpush2.msra.mxu0 0.0
  %4371 = vmatprep.subr.mxu0 0.0
  %4372 = vmatpush2.msra.mxu0 0.0
  %4373 = vmatprep.subr.mxu0 0.0
  %4374 = vmatpush2.msra.mxu0 0.0
  %4375 = vmatprep.mubr.f32.mxu0 0.0
  %4376 = vmatmul.mubr.f32.gmra.mxu0 %v4309
  %v4377 = vpop.f32.mrf.mxu0
  %v4378 = vadd.f32 %v3836, %v4377
  %v4379 = vpop.f32.mrf.mxu0
  %4380 = vdwg.mxu0
  %v4381 = vmul.f32 %v4378, %v3919
  %v4382 = vsub.f32 %v4381, %v3923
  %v4383 = vmax.f32 %v4382, -6.0
  %v4384 = vmin.f32 %v4383, 6.0
  %v4385 = vmax.f32 %v4382, -4.0
  %v4386 = vmin.f32 %v4385, 4.0
  %v4387 = vand.u32 2147483647, %v4174
  %vm4388 = vcmp.le.f32.partialorder %v4387, 0.7853982
  %vm4389 = vcmp.lt.s32.totalorder %v4174, 0
  %v4390 = vand.u32 %v4174, 2139095040
  %v4391 = vshrl.u32 %v4390, 23
  %v4392 = vsub.s32 %v4391, 127
  %v4393 = vand.u32 2147483647, %v4174
  %v4394 = vand.u32 %v4393, 8388607
  %v4395 = vor.u32 %v4394, 8388608
  %v4396 = vsub.s32 0, %v4395
  %v4397 = vadd.s32 %v4392, 1
  %vm4398 = vcmp.gt.s32.totalorder %v4397, 0
  %v4399 = vsel %vm4398, %v4397, 0
  %v4400 = vshrl.u32 %v4399, 5
  %v4401 = vand.u32 %v4399, 31
  %v4402 = vsub.s32 32, %v4401
  %v4403 = vshrl.u32 683565275, %v4402
  %v4404 = vshll.u32 683565275, %v4401
  %v4405 = vshrl.u32 2475754826, %v4402
  %v4406 = vor.u32 %v4404, %v4405
  %v4407 = vshll.u32 2475754826, %v4401
  %v4408 = vshrl.u32 2131351028, %v4402
  %v4409 = vor.u32 %v4407, %v4408
  %v4410 = vshll.u32 2131351028, %v4401
  %v4411 = vshrl.u32 2102212464, %v4402
  %v4412 = vor.u32 %v4410, %v4411
  %v4413 = vshll.u32 2102212464, %v4401
  %v4414 = vshrl.u32 920167782, %v4402
  %v4415 = vor.u32 %v4413, %v4414
  %v4416 = vshll.u32 920167782, %v4401
  %v4417 = vshrl.u32 1326507024, %v4402
  %v4418 = vor.u32 %v4416, %v4417
  %vm4419 = vcmp.lt.s32.totalorder %v4400, 1
  %vm4420 = vcmp.lt.s32.totalorder %v4400, 2
  %vm4421 = vcmp.lt.s32.totalorder %v4400, 3
  %vm4422 = vcmp.lt.s32.totalorder %v4400, 4
  %v4423 = vsel %vm4419, %v4403, %v4406
  %v4424 = vsel %vm4422, %v4412, 2102212464
  %v4425 = vsel %vm4421, %v4409, %v4424
  %v4426 = vsel %vm4420, %v4423, %v4425
  %v4427 = vsel %vm4419, %v4406, %v4409
  %v4428 = vsel %vm4422, %v4415, 920167782
  %v4429 = vsel %vm4421, %v4412, %v4428
  %v4430 = vsel %vm4420, %v4427, %v4429
  %v4431 = vsel %vm4419, %v4409, %v4412
  %v4432 = vsel %vm4422, %v4418, 1326507024
  %v4433 = vsel %vm4421, %v4415, %v4432
  %v4434 = vsel %vm4420, %v4431, %v4433
  %v4435 = vshll.u32 %v4395, 8
  %v4436 = vmul.u32.u64.compose %v4435, %v4434
  %v4437 = vextract.low.u32 %v4436
  %v4438 = vextract.high.u32 %v4436
  %v4439 = vmul.u32.u64.compose %v4435, %v4430
  %v4440 = vextract.low.u32 %v4439
  %v4441 = vextract.high.u32 %v4439
  %v4442 = vmul.u32 %v4435, %v4426
  %v4443 = vadd.s32 %v4438, %v4440
  %vm4444 = vc.u32 %v4438, %v4440
  %v4445 = vadd.s32 %v4441, 1
  %v4446 = vsel %vm4444, %v4445, %v4441
  %v4447 = vadd.s32 %v4442, %v4446
  %v4448 = vadd.s32 %v4447, 536870912
  %v4449 = vshrl.u32 %v4448, 30
  %v4450 = vshll.u32 %v4449, 30
  %v4451 = vsub.s32 %v4447, %v4450
  %vm4452 = vcmp.lt.s32.totalorder %v4451, 0
  %v4453 = vsub.s32 0, %v4451
  %v4454 = vsel %vm4452, %v4453, %v4451
  %v4455 = vclz %v4454
  %v4456 = vsub.s32 %v4455, 2
  %vm4457 = vcmp.gt.s32.totalorder 0, %v4456
  %v4458 = vsel %vm4457, 0, %v4456
  %v4459 = vsub.s32 32, %v4458
  %v4460 = vshll.u32 %v4451, %v4458
  %v4461 = vshrl.u32 %v4443, %v4459
  %v4462 = vor.u32 %v4460, %v4461
  %v4463 = vsub.s32 4294967266, %v4458
  %v4464 = vadd.s32 %v4463, 127
  %v4465 = vshll.u32 %v4464, 23
  %v4466 = vor.u32 4788187, %v4465
  %v4467 = vand.u32 2147483647, %v4466
  %v4469 = vcvt.s32.f32 %v4462
  %v4470 = vmul.f32 %v4469, %v4467
  %v4471 = vxor.u32 %v4470, 2147483648
  %v4472 = vsel %vm4389, %v4471, %v4470
  %v4473 = vsub.s32 4, %v4449
  %v4474 = vsel %vm4389, %v4473, %v4449
  %v4475 = vsel %vm4388, %v4174, %v4472
  %v4476 = vsel %vm4388, 0, %v4474
  %v4477 = vcosq.f32.pop %v4475
  %v4478 = vsinq.f32.pop %v4475
  %vm4479 = vweird.f32 %v4174
  %v4480 = vand.u32 %v4476, 3
  %vm4481 = vcmp.lt.s32.totalorder %v4480, 2
  %vm4482 = vcmp.eq.s32.totalorder %v4480, 0
  %v4483 = vxor.u32 %v4478, 2147483648
  %v4484 = vsel %vm4482, %v4477, %v4483
  %vm4485 = vcmp.eq.s32.totalorder %v4480, 2
  %v4486 = vxor.u32 %v4477, 2147483648
  %v4487 = vsel %vm4485, %v4486, %v4478
  %v4488 = vsel %vm4481, %v4484, %v4487
  %v4489 = vsel %vm4479, nan, %v4488
  %4491 = vrot.lane.b32.xlu0 %v4489, 127
  %v4492 = vpop.permute.xlu0 %4491
  %v4494 = vmul.f32 %v4174, %v4492
  %v4495 = vand.u32 2147483647, %v4174
  %vm4496 = vcmp.le.f32.partialorder %v4495, 0.7853982
  %vm4497 = vcmp.lt.s32.totalorder %v4174, 0
  %v4498 = vand.u32 %v4174, 2139095040
  %v4499 = vshrl.u32 %v4498, 23
  %v4500 = vsub.s32 %v4499, 127
  %v4501 = vand.u32 2147483647, %v4174
  %v4502 = vand.u32 %v4501, 8388607
  %v4503 = vor.u32 %v4502, 8388608
  %v4504 = vsub.s32 0, %v4503
  %v4505 = vadd.s32 %v4500, 1
  %vm4506 = vcmp.gt.s32.totalorder %v4505, 0
  %v4507 = vsel %vm4506, %v4505, 0
  %v4508 = vshrl.u32 %v4507, 5
  %v4509 = vand.u32 %v4507, 31
  %v4510 = vsub.s32 32, %v4509
  %v4511 = vshrl.u32 683565275, %v4510
  %v4512 = vshll.u32 683565275, %v4509
  %v4513 = vshrl.u32 2475754826, %v4510
  %v4514 = vor.u32 %v4512, %v4513
  %v4515 = vshll.u32 2475754826, %v4509
  %v4516 = vshrl.u32 2131351028, %v4510
  %v4517 = vor.u32 %v4515, %v4516
  %v4518 = vshll.u32 2131351028, %v4509
  %v4519 = vshrl.u32 2102212464, %v4510
  %v4520 = vor.u32 %v4518, %v4519
  %v4521 = vshll.u32 2102212464, %v4509
  %v4522 = vshrl.u32 920167782, %v4510
  %v4523 = vor.u32 %v4521, %v4522
  %v4524 = vshll.u32 920167782, %v4509
  %v4525 = vshrl.u32 1326507024, %v4510
  %v4526 = vor.u32 %v4524, %v4525
  %vm4527 = vcmp.lt.s32.totalorder %v4508, 1
  %vm4528 = vcmp.lt.s32.totalorder %v4508, 2
  %vm4529 = vcmp.lt.s32.totalorder %v4508, 3
  %vm4530 = vcmp.lt.s32.totalorder %v4508, 4
  %v4531 = vsel %vm4527, %v4511, %v4514
  %v4532 = vsel %vm4530, %v4520, 2102212464
  %v4533 = vsel %vm4529, %v4517, %v4532
  %v4534 = vsel %vm4528, %v4531, %v4533
  %v4535 = vsel %vm4527, %v4514, %v4517
  %v4536 = vsel %vm4530, %v4523, 920167782
  %v4537 = vsel %vm4529, %v4520, %v4536
  %v4538 = vsel %vm4528, %v4535, %v4537
  %v4539 = vsel %vm4527, %v4517, %v4520
  %v4540 = vsel %vm4530, %v4526, 1326507024
  %v4541 = vsel %vm4529, %v4523, %v4540
  %v4542 = vsel %vm4528, %v4539, %v4541
  %v4543 = vshll.u32 %v4503, 8
  %v4544 = vmul.u32.u64.compose %v4543, %v4542
  %v4545 = vextract.low.u32 %v4544
  %v4546 = vextract.high.u32 %v4544
  %v4547 = vmul.u32.u64.compose %v4543, %v4538
  %v4548 = vextract.low.u32 %v4547
  %v4549 = vextract.high.u32 %v4547
  %v4550 = vmul.u32 %v4543, %v4534
  %v4551 = vadd.s32 %v4546, %v4548
  %vm4552 = vc.u32 %v4546, %v4548
  %v4553 = vadd.s32 %v4549, 1
  %v4554 = vsel %vm4552, %v4553, %v4549
  %v4555 = vadd.s32 %v4550, %v4554
  %v4556 = vadd.s32 %v4555, 536870912
  %v4557 = vshrl.u32 %v4556, 30
  %v4558 = vshll.u32 %v4557, 30
  %v4559 = vsub.s32 %v4555, %v4558
  %vm4560 = vcmp.lt.s32.totalorder %v4559, 0
  %v4561 = vsub.s32 0, %v4559
  %v4562 = vsel %vm4560, %v4561, %v4559
  %v4563 = vclz %v4562
  %v4564 = vsub.s32 %v4563, 2
  %vm4565 = vcmp.gt.s32.totalorder 0, %v4564
  %v4566 = vsel %vm4565, 0, %v4564
  %v4567 = vsub.s32 32, %v4566
  %v4568 = vshll.u32 %v4559, %v4566
  %v4569 = vshrl.u32 %v4551, %v4567
  %v4570 = vor.u32 %v4568, %v4569
  %v4571 = vsub.s32 4294967266, %v4566
  %v4572 = vadd.s32 %v4571, 127
  %v4573 = vshll.u32 %v4572, 23
  %v4574 = vor.u32 4788187, %v4573
  %v4575 = vand.u32 2147483647, %v4574
  %v4577 = vcvt.s32.f32 %v4570
  %v4578 = vmul.f32 %v4577, %v4575
  %v4579 = vxor.u32 %v4578, 2147483648
  %v4580 = vsel %vm4497, %v4579, %v4578
  %v4581 = vsub.s32 4, %v4557
  %v4582 = vsel %vm4497, %v4581, %v4557
  %v4583 = vsel %vm4496, %v4174, %v4580
  %v4584 = vsel %vm4496, 0, %v4582
  %v4585 = vcosq.f32.pop %v4583
  %v4586 = vsinq.f32.pop %v4583
  %vm4587 = vweird.f32 %v4174
  %v4588 = vadd.s32 %v4584, 3
  %v4589 = vand.u32 %v4588, 3
  %vm4590 = vcmp.lt.s32.totalorder %v4589, 2
  %vm4591 = vcmp.eq.s32.totalorder %v4589, 0
  %v4592 = vxor.u32 %v4586, 2147483648
  %v4593 = vsel %vm4591, %v4585, %v4592
  %vm4594 = vcmp.eq.s32.totalorder %v4589, 2
  %v4595 = vxor.u32 %v4585, 2147483648
  %v4596 = vsel %vm4594, %v4595, %v4586
  %v4597 = vsel %vm4590, %v4593, %v4596
  %v4598 = vsel %vm4587, nan, %v4597
  %4600 = vrot.lane.b32.xlu0 %v4598, 127
  %v4601 = vpop.permute.xlu0 %4600
  %v4603 = vmul.f32 %v4174, %v4601
  %4605 = vset.pattern.permute.xlu0 0
  %4606 = vperm.xlu0 %4605, %v4384
  %v4607 = vpop.permute.xlu0 %4606
  %4610 = vset.pattern.permute.xlu0 1
  %4611 = vperm.xlu0 %4610, %v4386
  %v4612 = vpop.permute.xlu0 %4611
  %v4614 = vsel %vm4149, %v4607, %v4612
  %4616 = vset.pattern.permute.xlu0 2
  %4617 = vperm.xlu0 %4616, %v4603
  %v4618 = vpop.permute.xlu0 %4617
  %v4620 = vsel %vm4039, %v4618, %v4614
  %4622 = vset.pattern.permute.xlu0 2
  %4623 = vperm.xlu0 %4622, %v4494
  %v4624 = vpop.permute.xlu0 %4623
  %v4626 = vsel %vm3930, %v4624, %v4620
  %v4627 = vmul.f32 %v4626, 0.1
  %v4628 = vadd.f32 %v4174, %v4627
  %s4629 = scalar_lea.vmem %s75, 2
  %4630 = vst.msk [vmem:[%s4629] sm:$0x3] %vm4175, %v4628
  %v4631 = vadd.f32 %v4628, %v167
  %v4632 = vmul.f32 %v4631, %v175
  %v4633 = vrot.slane %v2594, 2
  %v4635 = vsub.f32 %v4632, %v4633
  %4636 = vrot.lane.b32.xlu0 %v4633, 124
  %v4637 = vpop.permute.xlu0 %4636
  %v4639 = vsub.f32 %v4378, %v4637
  %v4640 = vmul.f32 %v4635, %v4635
  %v4641 = vsel %vm4175, %v4640, 0.0
  %4642 = vadd.xlane.f32.xlu0 %v4641
  %v4643 = vpop.xlane.xlu0 %4642
  %v4644 = vrot.slane %v4643, 4
  %v4645 = vadd.f32 %v4643, %v4644
  %v4646 = vrot.slane %v4645, 2
  %v4647 = vadd.f32 %v4645, %v4646
  %v4648 = vrot.slane %v4647, 1
  %v4649 = vadd.f32 %v4647, %v4648
  %s4650 = vtos %v4649
  %v4651 = vstv %s4650
  %v4652 = vadd.f32 %v4210, %v4651
  %v4653 = vmul.f32 %v4639, %v4639
  %v4654 = vsel %vm4198, %v4653, 0.0
  %4655 = vadd.xlane.f32.xlu0 %v4654
  %v4656 = vpop.xlane.xlu0 %4655
  %v4657 = vrot.slane %v4656, 4
  %v4658 = vadd.f32 %v4656, %v4657
  %v4659 = vrot.slane %v4658, 2
  %v4660 = vadd.f32 %v4658, %v4659
  %v4661 = vrot.slane %v4660, 1
  %v4662 = vadd.f32 %v4660, %v4661
  %s4663 = vtos %v4662
  %v4664 = vstv %s4663
  %v4665 = vadd.f32 %v4652, %v4664
  %4666 = vmatprep.subr.mxu0 0.0
  %4667 = vmatpush1.msra.mxu0 0.0
  %4668 = vmatprep.subr.mxu0 0.0
  %4669 = vmatpush1.msra.mxu0 0.0
  %4670 = vmatprep.subr.mxu0 0.0
  %4671 = vmatpush1.msra.mxu0 0.0
  %4672 = vmatprep.subr.mxu0 0.0
  %4673 = vmatpush1.msra.mxu0 0.0
  %4674 = vmatprep.subr.mxu0 0.0
  %4675 = vmatpush1.msra.mxu0 0.0
  %4676 = vmatprep.subr.mxu0 0.0
  %4677 = vmatpush1.msra.mxu0 0.0
  %4678 = vmatprep.subr.mxu0 0.0
  %4679 = vmatpush1.msra.mxu0 0.0
  %4680 = vmatprep.subr.mxu0 0.0
  %4681 = vmatpush1.msra.mxu0 0.0
  %4682 = vmatprep.subr.mxu0 0.0
  %4683 = vmatpush1.msra.mxu0 0.0
  %4684 = vmatprep.subr.mxu0 0.0
  %4685 = vmatpush1.msra.mxu0 0.0
  %4686 = vmatprep.subr.mxu0 0.0
  %4687 = vmatpush1.msra.mxu0 0.0
  %4688 = vmatprep.subr.mxu0 0.0
  %4689 = vmatpush1.msra.mxu0 0.0
  %4690 = vmatprep.subr.mxu0 0.0
  %4691 = vmatpush1.msra.mxu0 %v3728
  %4692 = vmatprep.subr.mxu0 0.0
  %4693 = vmatpush1.msra.mxu0 %v3727
  %4694 = vmatprep.subr.mxu0 0.0
  %4695 = vmatpush1.msra.mxu0 %v3726
  %4696 = vmatprep.subr.mxu0 0.0
  %4697 = vmatpush1.msra.mxu0 %v3725
  %4698 = vmatprep.subr.mxu0 0.0
  %4699 = vmatpush2.msra.mxu0 0.0
  %4700 = vmatprep.subr.mxu0 0.0
  %4701 = vmatpush2.msra.mxu0 0.0
  %4702 = vmatprep.subr.mxu0 0.0
  %4703 = vmatpush2.msra.mxu0 0.0
  %4704 = vmatprep.subr.mxu0 0.0
  %4705 = vmatpush2.msra.mxu0 0.0
  %4706 = vmatprep.subr.mxu0 0.0
  %4707 = vmatpush2.msra.mxu0 0.0
  %4708 = vmatprep.subr.mxu0 0.0
  %4709 = vmatpush2.msra.mxu0 0.0
  %4710 = vmatprep.subr.mxu0 0.0
  %4711 = vmatpush2.msra.mxu0 0.0
  %4712 = vmatprep.subr.mxu0 0.0
  %4713 = vmatpush2.msra.mxu0 0.0
  %4714 = vmatprep.subr.mxu0 0.0
  %4715 = vmatpush2.msra.mxu0 0.0
  %4716 = vmatprep.subr.mxu0 0.0
  %4717 = vmatpush2.msra.mxu0 0.0
  %4718 = vmatprep.subr.mxu0 0.0
  %4719 = vmatpush2.msra.mxu0 0.0
  %4720 = vmatprep.subr.mxu0 0.0
  %4721 = vmatpush2.msra.mxu0 0.0
  %4722 = vmatprep.subr.mxu0 0.0
  %4723 = vmatpush2.msra.mxu0 0.0
  %4724 = vmatprep.subr.mxu0 0.0
  %4725 = vmatpush2.msra.mxu0 0.0
  %4726 = vmatprep.subr.mxu0 0.0
  %4727 = vmatpush2.msra.mxu0 0.0
  %4728 = vmatprep.subr.mxu0 0.0
  %4729 = vmatpush2.msra.mxu0 0.0
  %4730 = vmatprep.mubr.f32.mxu0 0.0
  %4731 = vmatmul.mubr.f32.gmra.mxu0 %v4309
  %v4732 = vpop.f32.mrf.mxu0
  %v4733 = vadd.f32 0.0, %v4732
  %v4734 = vpop.f32.mrf.mxu0
  %4735 = vdwg.mxu0
  %v4736 = vadd.f32 %v3722, %v4733
  %v4737 = vxor.u32 %v4736, 2147483648
  %v4738 = vmul.f32 %v4737, 1.442695
  %v4739 = vpow.pop %v4738
  %v4740 = vadd.f32 %v4739, 1.0
  %v4741 = vrcp.pop %v4740
  %v4742 = vmul.f32 1.0, %v4741
  %v4743 = vtanh.pop %v4736
  %v4744 = vmul.f32 %v4742, %v4299
  %4746 = vrot.lane.b32.xlu0 %v4743, 64
  %v4747 = vpop.permute.xlu0 %4746
  %v4749 = vmul.f32 %v4742, %v4747
  %4751 = vrot.lane.b32.xlu0 %v4749, 32
  %v4752 = vpop.permute.xlu0 %4751
  %v4754 = vadd.f32 %v4744, %v4752
  %v4755 = vtanh.pop %v4754
  %4757 = vrot.lane.b32.xlu0 %v4755, 64
  %v4758 = vpop.permute.xlu0 %4757
  %v4760 = vmul.f32 %v4742, %v4758
  %4762 = vrot.lane.b32.xlu0 %v4760, 32
  %v4763 = vpop.permute.xlu0 %4762
  %v4764 = vsel %vm277, %v4763, 0
  %4766 = vmatprep.subr.mxu0 0.0
  %4767 = vmatpush1.msra.mxu0 0.0
  %4768 = vmatprep.subr.mxu0 0.0
  %4769 = vmatpush1.msra.mxu0 0.0
  %4770 = vmatprep.subr.mxu0 0.0
  %4771 = vmatpush1.msra.mxu0 0.0
  %4772 = vmatprep.subr.mxu0 0.0
  %4773 = vmatpush1.msra.mxu0 0.0
  %4774 = vmatprep.subr.mxu0 0.0
  %4775 = vmatpush1.msra.mxu0 0.0
  %4776 = vmatprep.subr.mxu0 0.0
  %4777 = vmatpush1.msra.mxu0 0.0
  %4778 = vmatprep.subr.mxu0 0.0
  %4779 = vmatpush1.msra.mxu0 0.0
  %4780 = vmatprep.subr.mxu0 0.0
  %4781 = vmatpush1.msra.mxu0 0.0
  %4782 = vmatprep.subr.mxu0 0.0
  %4783 = vmatpush1.msra.mxu0 0.0
  %4784 = vmatprep.subr.mxu0 0.0
  %4785 = vmatpush1.msra.mxu0 0.0
  %4786 = vmatprep.subr.mxu0 0.0
  %4787 = vmatpush1.msra.mxu0 0.0
  %4788 = vmatprep.subr.mxu0 0.0
  %4789 = vmatpush1.msra.mxu0 0.0
  %4790 = vmatprep.subr.mxu0 0.0
  %4791 = vmatpush1.msra.mxu0 %v3732
  %4792 = vmatprep.subr.mxu0 0.0
  %4793 = vmatpush1.msra.mxu0 %v3731
  %4794 = vmatprep.subr.mxu0 0.0
  %4795 = vmatpush1.msra.mxu0 %v3730
  %4796 = vmatprep.subr.mxu0 0.0
  %4797 = vmatpush1.msra.mxu0 %v3729
  %4798 = vmatprep.subr.mxu0 0.0
  %4799 = vmatpush2.msra.mxu0 0.0
  %4800 = vmatprep.subr.mxu0 0.0
  %4801 = vmatpush2.msra.mxu0 0.0
  %4802 = vmatprep.subr.mxu0 0.0
  %4803 = vmatpush2.msra.mxu0 0.0
  %4804 = vmatprep.subr.mxu0 0.0
  %4805 = vmatpush2.msra.mxu0 0.0
  %4806 = vmatprep.subr.mxu0 0.0
  %4807 = vmatpush2.msra.mxu0 0.0
  %4808 = vmatprep.subr.mxu0 0.0
  %4809 = vmatpush2.msra.mxu0 0.0
  %4810 = vmatprep.subr.mxu0 0.0
  %4811 = vmatpush2.msra.mxu0 0.0
  %4812 = vmatprep.subr.mxu0 0.0
  %4813 = vmatpush2.msra.mxu0 0.0
  %4814 = vmatprep.subr.mxu0 0.0
  %4815 = vmatpush2.msra.mxu0 0.0
  %4816 = vmatprep.subr.mxu0 0.0
  %4817 = vmatpush2.msra.mxu0 0.0
  %4818 = vmatprep.subr.mxu0 0.0
  %4819 = vmatpush2.msra.mxu0 0.0
  %4820 = vmatprep.subr.mxu0 0.0
  %4821 = vmatpush2.msra.mxu0 0.0
  %4822 = vmatprep.subr.mxu0 0.0
  %4823 = vmatpush2.msra.mxu0 0.0
  %4824 = vmatprep.subr.mxu0 0.0
  %4825 = vmatpush2.msra.mxu0 0.0
  %4826 = vmatprep.subr.mxu0 0.0
  %4827 = vmatpush2.msra.mxu0 0.0
  %4828 = vmatprep.subr.mxu0 0.0
  %4829 = vmatpush2.msra.mxu0 0.0
  %4830 = vmatprep.mubr.f32.mxu0 0.0
  %4831 = vmatmul.mubr.f32.gmra.mxu0 %v4764
  %v4832 = vpop.f32.mrf.mxu0
  %v4833 = vadd.f32 %v3836, %v4832
  %v4834 = vpop.f32.mrf.mxu0
  %4835 = vdwg.mxu0
  %v4836 = vmul.f32 %v4833, %v3919
  %v4837 = vsub.f32 %v4836, %v3923
  %v4838 = vmax.f32 %v4837, -6.0
  %v4839 = vmin.f32 %v4838, 6.0
  %v4840 = vmax.f32 %v4837, -4.0
  %v4841 = vmin.f32 %v4840, 4.0
  %v4842 = vand.u32 2147483647, %v4628
  %vm4843 = vcmp.le.f32.partialorder %v4842, 0.7853982
  %vm4844 = vcmp.lt.s32.totalorder %v4628, 0
  %v4845 = vand.u32 %v4628, 2139095040
  %v4846 = vshrl.u32 %v4845, 23
  %v4847 = vsub.s32 %v4846, 127
  %v4848 = vand.u32 2147483647, %v4628
  %v4849 = vand.u32 %v4848, 8388607
  %v4850 = vor.u32 %v4849, 8388608
  %v4851 = vsub.s32 0, %v4850
  %v4852 = vadd.s32 %v4847, 1
  %vm4853 = vcmp.gt.s32.totalorder %v4852, 0
  %v4854 = vsel %vm4853, %v4852, 0
  %v4855 = vshrl.u32 %v4854, 5
  %v4856 = vand.u32 %v4854, 31
  %v4857 = vsub.s32 32, %v4856
  %v4858 = vshrl.u32 683565275, %v4857
  %v4859 = vshll.u32 683565275, %v4856
  %v4860 = vshrl.u32 2475754826, %v4857
  %v4861 = vor.u32 %v4859, %v4860
  %v4862 = vshll.u32 2475754826, %v4856
  %v4863 = vshrl.u32 2131351028, %v4857
  %v4864 = vor.u32 %v4862, %v4863
  %v4865 = vshll.u32 2131351028, %v4856
  %v4866 = vshrl.u32 2102212464, %v4857
  %v4867 = vor.u32 %v4865, %v4866
  %v4868 = vshll.u32 2102212464, %v4856
  %v4869 = vshrl.u32 920167782, %v4857
  %v4870 = vor.u32 %v4868, %v4869
  %v4871 = vshll.u32 920167782, %v4856
  %v4872 = vshrl.u32 1326507024, %v4857
  %v4873 = vor.u32 %v4871, %v4872
  %vm4874 = vcmp.lt.s32.totalorder %v4855, 1
  %vm4875 = vcmp.lt.s32.totalorder %v4855, 2
  %vm4876 = vcmp.lt.s32.totalorder %v4855, 3
  %vm4877 = vcmp.lt.s32.totalorder %v4855, 4
  %v4878 = vsel %vm4874, %v4858, %v4861
  %v4879 = vsel %vm4877, %v4867, 2102212464
  %v4880 = vsel %vm4876, %v4864, %v4879
  %v4881 = vsel %vm4875, %v4878, %v4880
  %v4882 = vsel %vm4874, %v4861, %v4864
  %v4883 = vsel %vm4877, %v4870, 920167782
  %v4884 = vsel %vm4876, %v4867, %v4883
  %v4885 = vsel %vm4875, %v4882, %v4884
  %v4886 = vsel %vm4874, %v4864, %v4867
  %v4887 = vsel %vm4877, %v4873, 1326507024
  %v4888 = vsel %vm4876, %v4870, %v4887
  %v4889 = vsel %vm4875, %v4886, %v4888
  %v4890 = vshll.u32 %v4850, 8
  %v4891 = vmul.u32.u64.compose %v4890, %v4889
  %v4892 = vextract.low.u32 %v4891
  %v4893 = vextract.high.u32 %v4891
  %v4894 = vmul.u32.u64.compose %v4890, %v4885
  %v4895 = vextract.low.u32 %v4894
  %v4896 = vextract.high.u32 %v4894
  %v4897 = vmul.u32 %v4890, %v4881
  %v4898 = vadd.s32 %v4893, %v4895
  %vm4899 = vc.u32 %v4893, %v4895
  %v4900 = vadd.s32 %v4896, 1
  %v4901 = vsel %vm4899, %v4900, %v4896
  %v4902 = vadd.s32 %v4897, %v4901
  %v4903 = vadd.s32 %v4902, 536870912
  %v4904 = vshrl.u32 %v4903, 30
  %v4905 = vshll.u32 %v4904, 30
  %v4906 = vsub.s32 %v4902, %v4905
  %vm4907 = vcmp.lt.s32.totalorder %v4906, 0
  %v4908 = vsub.s32 0, %v4906
  %v4909 = vsel %vm4907, %v4908, %v4906
  %v4910 = vclz %v4909
  %v4911 = vsub.s32 %v4910, 2
  %vm4912 = vcmp.gt.s32.totalorder 0, %v4911
  %v4913 = vsel %vm4912, 0, %v4911
  %v4914 = vsub.s32 32, %v4913
  %v4915 = vshll.u32 %v4906, %v4913
  %v4916 = vshrl.u32 %v4898, %v4914
  %v4917 = vor.u32 %v4915, %v4916
  %v4918 = vsub.s32 4294967266, %v4913
  %v4919 = vadd.s32 %v4918, 127
  %v4920 = vshll.u32 %v4919, 23
  %v4921 = vor.u32 4788187, %v4920
  %v4922 = vand.u32 2147483647, %v4921
  %v4924 = vcvt.s32.f32 %v4917
  %v4925 = vmul.f32 %v4924, %v4922
  %v4926 = vxor.u32 %v4925, 2147483648
  %v4927 = vsel %vm4844, %v4926, %v4925
  %v4928 = vsub.s32 4, %v4904
  %v4929 = vsel %vm4844, %v4928, %v4904
  %v4930 = vsel %vm4843, %v4628, %v4927
  %v4931 = vsel %vm4843, 0, %v4929
  %v4932 = vcosq.f32.pop %v4930
  %v4933 = vsinq.f32.pop %v4930
  %vm4934 = vweird.f32 %v4628
  %v4935 = vand.u32 %v4931, 3
  %vm4936 = vcmp.lt.s32.totalorder %v4935, 2
  %vm4937 = vcmp.eq.s32.totalorder %v4935, 0
  %v4938 = vxor.u32 %v4933, 2147483648
  %v4939 = vsel %vm4937, %v4932, %v4938
  %vm4940 = vcmp.eq.s32.totalorder %v4935, 2
  %v4941 = vxor.u32 %v4932, 2147483648
  %v4942 = vsel %vm4940, %v4941, %v4933
  %v4943 = vsel %vm4936, %v4939, %v4942
  %v4944 = vsel %vm4934, nan, %v4943
  %4946 = vrot.lane.b32.xlu0 %v4944, 127
  %v4947 = vpop.permute.xlu0 %4946
  %v4949 = vmul.f32 %v4628, %v4947
  %v4950 = vand.u32 2147483647, %v4628
  %vm4951 = vcmp.le.f32.partialorder %v4950, 0.7853982
  %vm4952 = vcmp.lt.s32.totalorder %v4628, 0
  %v4953 = vand.u32 %v4628, 2139095040
  %v4954 = vshrl.u32 %v4953, 23
  %v4955 = vsub.s32 %v4954, 127
  %v4956 = vand.u32 2147483647, %v4628
  %v4957 = vand.u32 %v4956, 8388607
  %v4958 = vor.u32 %v4957, 8388608
  %v4959 = vsub.s32 0, %v4958
  %v4960 = vadd.s32 %v4955, 1
  %vm4961 = vcmp.gt.s32.totalorder %v4960, 0
  %v4962 = vsel %vm4961, %v4960, 0
  %v4963 = vshrl.u32 %v4962, 5
  %v4964 = vand.u32 %v4962, 31
  %v4965 = vsub.s32 32, %v4964
  %v4966 = vshrl.u32 683565275, %v4965
  %v4967 = vshll.u32 683565275, %v4964
  %v4968 = vshrl.u32 2475754826, %v4965
  %v4969 = vor.u32 %v4967, %v4968
  %v4970 = vshll.u32 2475754826, %v4964
  %v4971 = vshrl.u32 2131351028, %v4965
  %v4972 = vor.u32 %v4970, %v4971
  %v4973 = vshll.u32 2131351028, %v4964
  %v4974 = vshrl.u32 2102212464, %v4965
  %v4975 = vor.u32 %v4973, %v4974
  %v4976 = vshll.u32 2102212464, %v4964
  %v4977 = vshrl.u32 920167782, %v4965
  %v4978 = vor.u32 %v4976, %v4977
  %v4979 = vshll.u32 920167782, %v4964
  %v4980 = vshrl.u32 1326507024, %v4965
  %v4981 = vor.u32 %v4979, %v4980
  %vm4982 = vcmp.lt.s32.totalorder %v4963, 1
  %vm4983 = vcmp.lt.s32.totalorder %v4963, 2
  %vm4984 = vcmp.lt.s32.totalorder %v4963, 3
  %vm4985 = vcmp.lt.s32.totalorder %v4963, 4
  %v4986 = vsel %vm4982, %v4966, %v4969
  %v4987 = vsel %vm4985, %v4975, 2102212464
  %v4988 = vsel %vm4984, %v4972, %v4987
  %v4989 = vsel %vm4983, %v4986, %v4988
  %v4990 = vsel %vm4982, %v4969, %v4972
  %v4991 = vsel %vm4985, %v4978, 920167782
  %v4992 = vsel %vm4984, %v4975, %v4991
  %v4993 = vsel %vm4983, %v4990, %v4992
  %v4994 = vsel %vm4982, %v4972, %v4975
  %v4995 = vsel %vm4985, %v4981, 1326507024
  %v4996 = vsel %vm4984, %v4978, %v4995
  %v4997 = vsel %vm4983, %v4994, %v4996
  %v4998 = vshll.u32 %v4958, 8
  %v4999 = vmul.u32.u64.compose %v4998, %v4997
  %v5000 = vextract.low.u32 %v4999
  %v5001 = vextract.high.u32 %v4999
  %v5002 = vmul.u32.u64.compose %v4998, %v4993
  %v5003 = vextract.low.u32 %v5002
  %v5004 = vextract.high.u32 %v5002
  %v5005 = vmul.u32 %v4998, %v4989
  %v5006 = vadd.s32 %v5001, %v5003
  %vm5007 = vc.u32 %v5001, %v5003
  %v5008 = vadd.s32 %v5004, 1
  %v5009 = vsel %vm5007, %v5008, %v5004
  %v5010 = vadd.s32 %v5005, %v5009
  %v5011 = vadd.s32 %v5010, 536870912
  %v5012 = vshrl.u32 %v5011, 30
  %v5013 = vshll.u32 %v5012, 30
  %v5014 = vsub.s32 %v5010, %v5013
  %vm5015 = vcmp.lt.s32.totalorder %v5014, 0
  %v5016 = vsub.s32 0, %v5014
  %v5017 = vsel %vm5015, %v5016, %v5014
  %v5018 = vclz %v5017
  %v5019 = vsub.s32 %v5018, 2
  %vm5020 = vcmp.gt.s32.totalorder 0, %v5019
  %v5021 = vsel %vm5020, 0, %v5019
  %v5022 = vsub.s32 32, %v5021
  %v5023 = vshll.u32 %v5014, %v5021
  %v5024 = vshrl.u32 %v5006, %v5022
  %v5025 = vor.u32 %v5023, %v5024
  %v5026 = vsub.s32 4294967266, %v5021
  %v5027 = vadd.s32 %v5026, 127
  %v5028 = vshll.u32 %v5027, 23
  %v5029 = vor.u32 4788187, %v5028
  %v5030 = vand.u32 2147483647, %v5029
  %v5032 = vcvt.s32.f32 %v5025
  %v5033 = vmul.f32 %v5032, %v5030
  %v5034 = vxor.u32 %v5033, 2147483648
  %v5035 = vsel %vm4952, %v5034, %v5033
  %v5036 = vsub.s32 4, %v5012
  %v5037 = vsel %vm4952, %v5036, %v5012
  %v5038 = vsel %vm4951, %v4628, %v5035
  %v5039 = vsel %vm4951, 0, %v5037
  %v5040 = vcosq.f32.pop %v5038
  %v5041 = vsinq.f32.pop %v5038
  %vm5042 = vweird.f32 %v4628
  %v5043 = vadd.s32 %v5039, 3
  %v5044 = vand.u32 %v5043, 3
  %vm5045 = vcmp.lt.s32.totalorder %v5044, 2
  %vm5046 = vcmp.eq.s32.totalorder %v5044, 0
  %v5047 = vxor.u32 %v5041, 2147483648
  %v5048 = vsel %vm5046, %v5040, %v5047
  %vm5049 = vcmp.eq.s32.totalorder %v5044, 2
  %v5050 = vxor.u32 %v5040, 2147483648
  %v5051 = vsel %vm5049, %v5050, %v5041
  %v5052 = vsel %vm5045, %v5048, %v5051
  %v5053 = vsel %vm5042, nan, %v5052
  %5055 = vrot.lane.b32.xlu0 %v5053, 127
  %v5056 = vpop.permute.xlu0 %5055
  %v5058 = vmul.f32 %v4628, %v5056
  %5060 = vset.pattern.permute.xlu0 0
  %5061 = vperm.xlu0 %5060, %v4839
  %v5062 = vpop.permute.xlu0 %5061
  %5065 = vset.pattern.permute.xlu0 1
  %5066 = vperm.xlu0 %5065, %v4841
  %v5067 = vpop.permute.xlu0 %5066
  %v5069 = vsel %vm4149, %v5062, %v5067
  %5071 = vset.pattern.permute.xlu0 2
  %5072 = vperm.xlu0 %5071, %v5058
  %v5073 = vpop.permute.xlu0 %5072
  %v5075 = vsel %vm4039, %v5073, %v5069
  %5077 = vset.pattern.permute.xlu0 2
  %5078 = vperm.xlu0 %5077, %v4949
  %v5079 = vpop.permute.xlu0 %5078
  %v5081 = vsel %vm3930, %v5079, %v5075
  %v5082 = vmul.f32 %v5081, 0.1
  %v5083 = vadd.f32 %v4628, %v5082
  %s5084 = scalar_lea.vmem %s75, 4
  %5085 = vst.msk [vmem:[%s5084] sm:$0x3] %vm4175, %v5083
  %v5086 = vadd.f32 %v5083, %v167
  %v5087 = vmul.f32 %v5086, %v175
  %v5088 = vrot.slane %v2594, 4
  %v5090 = vsub.f32 %v5087, %v5088
  %5091 = vrot.lane.b32.xlu0 %v5088, 124
  %v5092 = vpop.permute.xlu0 %5091
  %v5094 = vsub.f32 %v4833, %v5092
  %v5095 = vmul.f32 %v5090, %v5090
  %v5096 = vsel %vm4175, %v5095, 0.0
  %5097 = vadd.xlane.f32.xlu0 %v5096
  %v5098 = vpop.xlane.xlu0 %5097
  %v5099 = vrot.slane %v5098, 4
  %v5100 = vadd.f32 %v5098, %v5099
  %v5101 = vrot.slane %v5100, 2
  %v5102 = vadd.f32 %v5100, %v5101
  %v5103 = vrot.slane %v5102, 1
  %v5104 = vadd.f32 %v5102, %v5103
  %s5105 = vtos %v5104
  %v5106 = vstv %s5105
  %v5107 = vadd.f32 %v4665, %v5106
  %v5108 = vmul.f32 %v5094, %v5094
  %v5109 = vsel %vm4198, %v5108, 0.0
  %5110 = vadd.xlane.f32.xlu0 %v5109
  %v5111 = vpop.xlane.xlu0 %5110
  %v5112 = vrot.slane %v5111, 4
  %v5113 = vadd.f32 %v5111, %v5112
  %v5114 = vrot.slane %v5113, 2
  %v5115 = vadd.f32 %v5113, %v5114
  %v5116 = vrot.slane %v5115, 1
  %v5117 = vadd.f32 %v5115, %v5116
  %s5118 = vtos %v5117
  %v5119 = vstv %s5118
  %v5120 = vadd.f32 %v5107, %v5119
  %5121 = vmatprep.subr.mxu0 0.0
  %5122 = vmatpush1.msra.mxu0 0.0
  %5123 = vmatprep.subr.mxu0 0.0
  %5124 = vmatpush1.msra.mxu0 0.0
  %5125 = vmatprep.subr.mxu0 0.0
  %5126 = vmatpush1.msra.mxu0 0.0
  %5127 = vmatprep.subr.mxu0 0.0
  %5128 = vmatpush1.msra.mxu0 0.0
  %5129 = vmatprep.subr.mxu0 0.0
  %5130 = vmatpush1.msra.mxu0 0.0
  %5131 = vmatprep.subr.mxu0 0.0
  %5132 = vmatpush1.msra.mxu0 0.0
  %5133 = vmatprep.subr.mxu0 0.0
  %5134 = vmatpush1.msra.mxu0 0.0
  %5135 = vmatprep.subr.mxu0 0.0
  %5136 = vmatpush1.msra.mxu0 0.0
  %5137 = vmatprep.subr.mxu0 0.0
  %5138 = vmatpush1.msra.mxu0 0.0
  %5139 = vmatprep.subr.mxu0 0.0
  %5140 = vmatpush1.msra.mxu0 0.0
  %5141 = vmatprep.subr.mxu0 0.0
  %5142 = vmatpush1.msra.mxu0 0.0
  %5143 = vmatprep.subr.mxu0 0.0
  %5144 = vmatpush1.msra.mxu0 0.0
  %5145 = vmatprep.subr.mxu0 0.0
  %5146 = vmatpush1.msra.mxu0 %v3728
  %5147 = vmatprep.subr.mxu0 0.0
  %5148 = vmatpush1.msra.mxu0 %v3727
  %5149 = vmatprep.subr.mxu0 0.0
  %5150 = vmatpush1.msra.mxu0 %v3726
  %5151 = vmatprep.subr.mxu0 0.0
  %5152 = vmatpush1.msra.mxu0 %v3725
  %5153 = vmatprep.subr.mxu0 0.0
  %5154 = vmatpush2.msra.mxu0 0.0
  %5155 = vmatprep.subr.mxu0 0.0
  %5156 = vmatpush2.msra.mxu0 0.0
  %5157 = vmatprep.subr.mxu0 0.0
  %5158 = vmatpush2.msra.mxu0 0.0
  %5159 = vmatprep.subr.mxu0 0.0
  %5160 = vmatpush2.msra.mxu0 0.0
  %5161 = vmatprep.subr.mxu0 0.0
  %5162 = vmatpush2.msra.mxu0 0.0
  %5163 = vmatprep.subr.mxu0 0.0
  %5164 = vmatpush2.msra.mxu0 0.0
  %5165 = vmatprep.subr.mxu0 0.0
  %5166 = vmatpush2.msra.mxu0 0.0
  %5167 = vmatprep.subr.mxu0 0.0
  %5168 = vmatpush2.msra.mxu0 0.0
  %5169 = vmatprep.subr.mxu0 0.0
  %5170 = vmatpush2.msra.mxu0 0.0
  %5171 = vmatprep.subr.mxu0 0.0
  %5172 = vmatpush2.msra.mxu0 0.0
  %5173 = vmatprep.subr.mxu0 0.0
  %5174 = vmatpush2.msra.mxu0 0.0
  %5175 = vmatprep.subr.mxu0 0.0
  %5176 = vmatpush2.msra.mxu0 0.0
  %5177 = vmatprep.subr.mxu0 0.0
  %5178 = vmatpush2.msra.mxu0 0.0
  %5179 = vmatprep.subr.mxu0 0.0
  %5180 = vmatpush2.msra.mxu0 0.0
  %5181 = vmatprep.subr.mxu0 0.0
  %5182 = vmatpush2.msra.mxu0 0.0
  %5183 = vmatprep.subr.mxu0 0.0
  %5184 = vmatpush2.msra.mxu0 0.0
  %5185 = vmatprep.mubr.f32.mxu0 0.0
  %5186 = vmatmul.mubr.f32.gmra.mxu0 %v4764
  %v5187 = vpop.f32.mrf.mxu0
  %v5188 = vadd.f32 0.0, %v5187
  %v5189 = vpop.f32.mrf.mxu0
  %5190 = vdwg.mxu0
  %v5191 = vadd.f32 %v3722, %v5188
  %v5192 = vxor.u32 %v5191, 2147483648
  %v5193 = vmul.f32 %v5192, 1.442695
  %v5194 = vpow.pop %v5193
  %v5195 = vadd.f32 %v5194, 1.0
  %v5196 = vrcp.pop %v5195
  %v5197 = vmul.f32 1.0, %v5196
  %v5198 = vtanh.pop %v5191
  %v5199 = vmul.f32 %v5197, %v4754
  %5201 = vrot.lane.b32.xlu0 %v5198, 64
  %v5202 = vpop.permute.xlu0 %5201
  %v5204 = vmul.f32 %v5197, %v5202
  %5206 = vrot.lane.b32.xlu0 %v5204, 32
  %v5207 = vpop.permute.xlu0 %5206
  %v5209 = vadd.f32 %v5199, %v5207
  %v5210 = vtanh.pop %v5209
  %5212 = vrot.lane.b32.xlu0 %v5210, 64
  %v5213 = vpop.permute.xlu0 %5212
  %v5215 = vmul.f32 %v5197, %v5213
  %5217 = vrot.lane.b32.xlu0 %v5215, 32
  %v5218 = vpop.permute.xlu0 %5217
  %v5219 = vsel %vm277, %v5218, 0
  %5221 = vmatprep.subr.mxu0 0.0
  %5222 = vmatpush1.msra.mxu0 0.0
  %5223 = vmatprep.subr.mxu0 0.0
  %5224 = vmatpush1.msra.mxu0 0.0
  %5225 = vmatprep.subr.mxu0 0.0
  %5226 = vmatpush1.msra.mxu0 0.0
  %5227 = vmatprep.subr.mxu0 0.0
  %5228 = vmatpush1.msra.mxu0 0.0
  %5229 = vmatprep.subr.mxu0 0.0
  %5230 = vmatpush1.msra.mxu0 0.0
  %5231 = vmatprep.subr.mxu0 0.0
  %5232 = vmatpush1.msra.mxu0 0.0
  %5233 = vmatprep.subr.mxu0 0.0
  %5234 = vmatpush1.msra.mxu0 0.0
  %5235 = vmatprep.subr.mxu0 0.0
  %5236 = vmatpush1.msra.mxu0 0.0
  %5237 = vmatprep.subr.mxu0 0.0
  %5238 = vmatpush1.msra.mxu0 0.0
  %5239 = vmatprep.subr.mxu0 0.0
  %5240 = vmatpush1.msra.mxu0 0.0
  %5241 = vmatprep.subr.mxu0 0.0
  %5242 = vmatpush1.msra.mxu0 0.0
  %5243 = vmatprep.subr.mxu0 0.0
  %5244 = vmatpush1.msra.mxu0 0.0
  %5245 = vmatprep.subr.mxu0 0.0
  %5246 = vmatpush1.msra.mxu0 %v3732
  %5247 = vmatprep.subr.mxu0 0.0
  %5248 = vmatpush1.msra.mxu0 %v3731
  %5249 = vmatprep.subr.mxu0 0.0
  %5250 = vmatpush1.msra.mxu0 %v3730
  %5251 = vmatprep.subr.mxu0 0.0
  %5252 = vmatpush1.msra.mxu0 %v3729
  %5253 = vmatprep.subr.mxu0 0.0
  %5254 = vmatpush2.msra.mxu0 0.0
  %5255 = vmatprep.subr.mxu0 0.0
  %5256 = vmatpush2.msra.mxu0 0.0
  %5257 = vmatprep.subr.mxu0 0.0
  %5258 = vmatpush2.msra.mxu0 0.0
  %5259 = vmatprep.subr.mxu0 0.0
  %5260 = vmatpush2.msra.mxu0 0.0
  %5261 = vmatprep.subr.mxu0 0.0
  %5262 = vmatpush2.msra.mxu0 0.0
  %5263 = vmatprep.subr.mxu0 0.0
  %5264 = vmatpush2.msra.mxu0 0.0
  %5265 = vmatprep.subr.mxu0 0.0
  %5266 = vmatpush2.msra.mxu0 0.0
  %5267 = vmatprep.subr.mxu0 0.0
  %5268 = vmatpush2.msra.mxu0 0.0
  %5269 = vmatprep.subr.mxu0 0.0
  %5270 = vmatpush2.msra.mxu0 0.0
  %5271 = vmatprep.subr.mxu0 0.0
  %5272 = vmatpush2.msra.mxu0 0.0
  %5273 = vmatprep.subr.mxu0 0.0
  %5274 = vmatpush2.msra.mxu0 0.0
  %5275 = vmatprep.subr.mxu0 0.0
  %5276 = vmatpush2.msra.mxu0 0.0
  %5277 = vmatprep.subr.mxu0 0.0
  %5278 = vmatpush2.msra.mxu0 0.0
  %5279 = vmatprep.subr.mxu0 0.0
  %5280 = vmatpush2.msra.mxu0 0.0
  %5281 = vmatprep.subr.mxu0 0.0
  %5282 = vmatpush2.msra.mxu0 0.0
  %5283 = vmatprep.subr.mxu0 0.0
  %5284 = vmatpush2.msra.mxu0 0.0
  %5285 = vmatprep.mubr.f32.mxu0 0.0
  %5286 = vmatmul.mubr.f32.gmra.mxu0 %v5219
  %v5287 = vpop.f32.mrf.mxu0
  %v5288 = vadd.f32 %v3836, %v5287
  %v5289 = vpop.f32.mrf.mxu0
  %5290 = vdwg.mxu0
  %v5291 = vmul.f32 %v5288, %v3919
  %v5292 = vsub.f32 %v5291, %v3923
  %v5293 = vmax.f32 %v5292, -6.0
  %v5294 = vmin.f32 %v5293, 6.0
  %v5295 = vmax.f32 %v5292, -4.0
  %v5296 = vmin.f32 %v5295, 4.0
  %v5297 = vand.u32 2147483647, %v5083
  %vm5298 = vcmp.le.f32.partialorder %v5297, 0.7853982
  %vm5299 = vcmp.lt.s32.totalorder %v5083, 0
  %v5300 = vand.u32 %v5083, 2139095040
  %v5301 = vshrl.u32 %v5300, 23
  %v5302 = vsub.s32 %v5301, 127
  %v5303 = vand.u32 2147483647, %v5083
  %v5304 = vand.u32 %v5303, 8388607
  %v5305 = vor.u32 %v5304, 8388608
  %v5306 = vsub.s32 0, %v5305
  %v5307 = vadd.s32 %v5302, 1
  %vm5308 = vcmp.gt.s32.totalorder %v5307, 0
  %v5309 = vsel %vm5308, %v5307, 0
  %v5310 = vshrl.u32 %v5309, 5
  %v5311 = vand.u32 %v5309, 31
  %v5312 = vsub.s32 32, %v5311
  %v5313 = vshrl.u32 683565275, %v5312
  %v5314 = vshll.u32 683565275, %v5311
  %v5315 = vshrl.u32 2475754826, %v5312
  %v5316 = vor.u32 %v5314, %v5315
  %v5317 = vshll.u32 2475754826, %v5311
  %v5318 = vshrl.u32 2131351028, %v5312
  %v5319 = vor.u32 %v5317, %v5318
  %v5320 = vshll.u32 2131351028, %v5311
  %v5321 = vshrl.u32 2102212464, %v5312
  %v5322 = vor.u32 %v5320, %v5321
  %v5323 = vshll.u32 2102212464, %v5311
  %v5324 = vshrl.u32 920167782, %v5312
  %v5325 = vor.u32 %v5323, %v5324
  %v5326 = vshll.u32 920167782, %v5311
  %v5327 = vshrl.u32 1326507024, %v5312
  %v5328 = vor.u32 %v5326, %v5327
  %vm5329 = vcmp.lt.s32.totalorder %v5310, 1
  %vm5330 = vcmp.lt.s32.totalorder %v5310, 2
  %vm5331 = vcmp.lt.s32.totalorder %v5310, 3
  %vm5332 = vcmp.lt.s32.totalorder %v5310, 4
  %v5333 = vsel %vm5329, %v5313, %v5316
  %v5334 = vsel %vm5332, %v5322, 2102212464
  %v5335 = vsel %vm5331, %v5319, %v5334
  %v5336 = vsel %vm5330, %v5333, %v5335
  %v5337 = vsel %vm5329, %v5316, %v5319
  %v5338 = vsel %vm5332, %v5325, 920167782
  %v5339 = vsel %vm5331, %v5322, %v5338
  %v5340 = vsel %vm5330, %v5337, %v5339
  %v5341 = vsel %vm5329, %v5319, %v5322
  %v5342 = vsel %vm5332, %v5328, 1326507024
  %v5343 = vsel %vm5331, %v5325, %v5342
  %v5344 = vsel %vm5330, %v5341, %v5343
  %v5345 = vshll.u32 %v5305, 8
  %v5346 = vmul.u32.u64.compose %v5345, %v5344
  %v5347 = vextract.low.u32 %v5346
  %v5348 = vextract.high.u32 %v5346
  %v5349 = vmul.u32.u64.compose %v5345, %v5340
  %v5350 = vextract.low.u32 %v5349
  %v5351 = vextract.high.u32 %v5349
  %v5352 = vmul.u32 %v5345, %v5336
  %v5353 = vadd.s32 %v5348, %v5350
  %vm5354 = vc.u32 %v5348, %v5350
  %v5355 = vadd.s32 %v5351, 1
  %v5356 = vsel %vm5354, %v5355, %v5351
  %v5357 = vadd.s32 %v5352, %v5356
  %v5358 = vadd.s32 %v5357, 536870912
  %v5359 = vshrl.u32 %v5358, 30
  %v5360 = vshll.u32 %v5359, 30
  %v5361 = vsub.s32 %v5357, %v5360
  %vm5362 = vcmp.lt.s32.totalorder %v5361, 0
  %v5363 = vsub.s32 0, %v5361
  %v5364 = vsel %vm5362, %v5363, %v5361
  %v5365 = vclz %v5364
  %v5366 = vsub.s32 %v5365, 2
  %vm5367 = vcmp.gt.s32.totalorder 0, %v5366
  %v5368 = vsel %vm5367, 0, %v5366
  %v5369 = vsub.s32 32, %v5368
  %v5370 = vshll.u32 %v5361, %v5368
  %v5371 = vshrl.u32 %v5353, %v5369
  %v5372 = vor.u32 %v5370, %v5371
  %v5373 = vsub.s32 4294967266, %v5368
  %v5374 = vadd.s32 %v5373, 127
  %v5375 = vshll.u32 %v5374, 23
  %v5376 = vor.u32 4788187, %v5375
  %v5377 = vand.u32 2147483647, %v5376
  %v5379 = vcvt.s32.f32 %v5372
  %v5380 = vmul.f32 %v5379, %v5377
  %v5381 = vxor.u32 %v5380, 2147483648
  %v5382 = vsel %vm5299, %v5381, %v5380
  %v5383 = vsub.s32 4, %v5359
  %v5384 = vsel %vm5299, %v5383, %v5359
  %v5385 = vsel %vm5298, %v5083, %v5382
  %v5386 = vsel %vm5298, 0, %v5384
  %v5387 = vcosq.f32.pop %v5385
  %v5388 = vsinq.f32.pop %v5385
  %vm5389 = vweird.f32 %v5083
  %v5390 = vand.u32 %v5386, 3
  %vm5391 = vcmp.lt.s32.totalorder %v5390, 2
  %vm5392 = vcmp.eq.s32.totalorder %v5390, 0
  %v5393 = vxor.u32 %v5388, 2147483648
  %v5394 = vsel %vm5392, %v5387, %v5393
  %vm5395 = vcmp.eq.s32.totalorder %v5390, 2
  %v5396 = vxor.u32 %v5387, 2147483648
  %v5397 = vsel %vm5395, %v5396, %v5388
  %v5398 = vsel %vm5391, %v5394, %v5397
  %v5399 = vsel %vm5389, nan, %v5398
  %5401 = vrot.lane.b32.xlu0 %v5399, 127
  %v5402 = vpop.permute.xlu0 %5401
  %v5404 = vmul.f32 %v5083, %v5402
  %v5405 = vand.u32 2147483647, %v5083
  %vm5406 = vcmp.le.f32.partialorder %v5405, 0.7853982
  %vm5407 = vcmp.lt.s32.totalorder %v5083, 0
  %v5408 = vand.u32 %v5083, 2139095040
  %v5409 = vshrl.u32 %v5408, 23
  %v5410 = vsub.s32 %v5409, 127
  %v5411 = vand.u32 2147483647, %v5083
  %v5412 = vand.u32 %v5411, 8388607
  %v5413 = vor.u32 %v5412, 8388608
  %v5414 = vsub.s32 0, %v5413
  %v5415 = vadd.s32 %v5410, 1
  %vm5416 = vcmp.gt.s32.totalorder %v5415, 0
  %v5417 = vsel %vm5416, %v5415, 0
  %v5418 = vshrl.u32 %v5417, 5
  %v5419 = vand.u32 %v5417, 31
  %v5420 = vsub.s32 32, %v5419
  %v5421 = vshrl.u32 683565275, %v5420
  %v5422 = vshll.u32 683565275, %v5419
  %v5423 = vshrl.u32 2475754826, %v5420
  %v5424 = vor.u32 %v5422, %v5423
  %v5425 = vshll.u32 2475754826, %v5419
  %v5426 = vshrl.u32 2131351028, %v5420
  %v5427 = vor.u32 %v5425, %v5426
  %v5428 = vshll.u32 2131351028, %v5419
  %v5429 = vshrl.u32 2102212464, %v5420
  %v5430 = vor.u32 %v5428, %v5429
  %v5431 = vshll.u32 2102212464, %v5419
  %v5432 = vshrl.u32 920167782, %v5420
  %v5433 = vor.u32 %v5431, %v5432
  %v5434 = vshll.u32 920167782, %v5419
  %v5435 = vshrl.u32 1326507024, %v5420
  %v5436 = vor.u32 %v5434, %v5435
  %vm5437 = vcmp.lt.s32.totalorder %v5418, 1
  %vm5438 = vcmp.lt.s32.totalorder %v5418, 2
  %vm5439 = vcmp.lt.s32.totalorder %v5418, 3
  %vm5440 = vcmp.lt.s32.totalorder %v5418, 4
  %v5441 = vsel %vm5437, %v5421, %v5424
  %v5442 = vsel %vm5440, %v5430, 2102212464
  %v5443 = vsel %vm5439, %v5427, %v5442
  %v5444 = vsel %vm5438, %v5441, %v5443
  %v5445 = vsel %vm5437, %v5424, %v5427
  %v5446 = vsel %vm5440, %v5433, 920167782
  %v5447 = vsel %vm5439, %v5430, %v5446
  %v5448 = vsel %vm5438, %v5445, %v5447
  %v5449 = vsel %vm5437, %v5427, %v5430
  %v5450 = vsel %vm5440, %v5436, 1326507024
  %v5451 = vsel %vm5439, %v5433, %v5450
  %v5452 = vsel %vm5438, %v5449, %v5451
  %v5453 = vshll.u32 %v5413, 8
  %v5454 = vmul.u32.u64.compose %v5453, %v5452
  %v5455 = vextract.low.u32 %v5454
  %v5456 = vextract.high.u32 %v5454
  %v5457 = vmul.u32.u64.compose %v5453, %v5448
  %v5458 = vextract.low.u32 %v5457
  %v5459 = vextract.high.u32 %v5457
  %v5460 = vmul.u32 %v5453, %v5444
  %v5461 = vadd.s32 %v5456, %v5458
  %vm5462 = vc.u32 %v5456, %v5458
  %v5463 = vadd.s32 %v5459, 1
  %v5464 = vsel %vm5462, %v5463, %v5459
  %v5465 = vadd.s32 %v5460, %v5464
  %v5466 = vadd.s32 %v5465, 536870912
  %v5467 = vshrl.u32 %v5466, 30
  %v5468 = vshll.u32 %v5467, 30
  %v5469 = vsub.s32 %v5465, %v5468
  %vm5470 = vcmp.lt.s32.totalorder %v5469, 0
  %v5471 = vsub.s32 0, %v5469
  %v5472 = vsel %vm5470, %v5471, %v5469
  %v5473 = vclz %v5472
  %v5474 = vsub.s32 %v5473, 2
  %vm5475 = vcmp.gt.s32.totalorder 0, %v5474
  %v5476 = vsel %vm5475, 0, %v5474
  %v5477 = vsub.s32 32, %v5476
  %v5478 = vshll.u32 %v5469, %v5476
  %v5479 = vshrl.u32 %v5461, %v5477
  %v5480 = vor.u32 %v5478, %v5479
  %v5481 = vsub.s32 4294967266, %v5476
  %v5482 = vadd.s32 %v5481, 127
  %v5483 = vshll.u32 %v5482, 23
  %v5484 = vor.u32 4788187, %v5483
  %v5485 = vand.u32 2147483647, %v5484
  %v5487 = vcvt.s32.f32 %v5480
  %v5488 = vmul.f32 %v5487, %v5485
  %v5489 = vxor.u32 %v5488, 2147483648
  %v5490 = vsel %vm5407, %v5489, %v5488
  %v5491 = vsub.s32 4, %v5467
  %v5492 = vsel %vm5407, %v5491, %v5467
  %v5493 = vsel %vm5406, %v5083, %v5490
  %v5494 = vsel %vm5406, 0, %v5492
  %v5495 = vcosq.f32.pop %v5493
  %v5496 = vsinq.f32.pop %v5493
  %vm5497 = vweird.f32 %v5083
  %v5498 = vadd.s32 %v5494, 3
  %v5499 = vand.u32 %v5498, 3
  %vm5500 = vcmp.lt.s32.totalorder %v5499, 2
  %vm5501 = vcmp.eq.s32.totalorder %v5499, 0
  %v5502 = vxor.u32 %v5496, 2147483648
  %v5503 = vsel %vm5501, %v5495, %v5502
  %vm5504 = vcmp.eq.s32.totalorder %v5499, 2
  %v5505 = vxor.u32 %v5495, 2147483648
  %v5506 = vsel %vm5504, %v5505, %v5496
  %v5507 = vsel %vm5500, %v5503, %v5506
  %v5508 = vsel %vm5497, nan, %v5507
  %5510 = vrot.lane.b32.xlu0 %v5508, 127
  %v5511 = vpop.permute.xlu0 %5510
  %v5513 = vmul.f32 %v5083, %v5511
  %5515 = vset.pattern.permute.xlu0 0
  %5516 = vperm.xlu0 %5515, %v5294
  %v5517 = vpop.permute.xlu0 %5516
  %5520 = vset.pattern.permute.xlu0 1
  %5521 = vperm.xlu0 %5520, %v5296
  %v5522 = vpop.permute.xlu0 %5521
  %v5524 = vsel %vm4149, %v5517, %v5522
  %5526 = vset.pattern.permute.xlu0 2
  %5527 = vperm.xlu0 %5526, %v5513
  %v5528 = vpop.permute.xlu0 %5527
  %v5530 = vsel %vm4039, %v5528, %v5524
  %5532 = vset.pattern.permute.xlu0 2
  %5533 = vperm.xlu0 %5532, %v5404
  %v5534 = vpop.permute.xlu0 %5533
  %v5536 = vsel %vm3930, %v5534, %v5530
  %v5537 = vmul.f32 %v5536, 0.1
  %v5538 = vadd.f32 %v5083, %v5537
  %s5539 = scalar_lea.vmem %s75, 6
  %5540 = vst.msk [vmem:[%s5539] sm:$0x3] %vm4175, %v5538
  %v5541 = vadd.f32 %v5538, %v167
  %v5542 = vmul.f32 %v5541, %v175
  %v5543 = vrot.slane %v2594, 6
  %v5545 = vsub.f32 %v5542, %v5543
  %5546 = vrot.lane.b32.xlu0 %v5543, 124
  %v5547 = vpop.permute.xlu0 %5546
  %v5549 = vsub.f32 %v5288, %v5547
  %v5550 = vmul.f32 %v5545, %v5545
  %v5551 = vsel %vm4175, %v5550, 0.0
  %5552 = vadd.xlane.f32.xlu0 %v5551
  %v5553 = vpop.xlane.xlu0 %5552
  %v5554 = vrot.slane %v5553, 4
  %v5555 = vadd.f32 %v5553, %v5554
  %v5556 = vrot.slane %v5555, 2
  %v5557 = vadd.f32 %v5555, %v5556
  %v5558 = vrot.slane %v5557, 1
  %v5559 = vadd.f32 %v5557, %v5558
  %s5560 = vtos %v5559
  %v5561 = vstv %s5560
  %v5562 = vadd.f32 %v5120, %v5561
  %v5563 = vmul.f32 %v5549, %v5549
  %v5564 = vsel %vm4198, %v5563, 0.0
  %5565 = vadd.xlane.f32.xlu0 %v5564
  %v5566 = vpop.xlane.xlu0 %5565
  %v5567 = vrot.slane %v5566, 4
  %v5568 = vadd.f32 %v5566, %v5567
  %v5569 = vrot.slane %v5568, 2
  %v5570 = vadd.f32 %v5568, %v5569
  %v5571 = vrot.slane %v5570, 1
  %v5572 = vadd.f32 %v5570, %v5571
  %s5573 = vtos %v5572
  %v5574 = vstv %s5573
  %v5575 = vadd.f32 %v5562, %v5574
  %5576 = vmatprep.subr.mxu0 0.0
  %5577 = vmatpush1.msra.mxu0 0.0
  %5578 = vmatprep.subr.mxu0 0.0
  %5579 = vmatpush1.msra.mxu0 0.0
  %5580 = vmatprep.subr.mxu0 0.0
  %5581 = vmatpush1.msra.mxu0 0.0
  %5582 = vmatprep.subr.mxu0 0.0
  %5583 = vmatpush1.msra.mxu0 0.0
  %5584 = vmatprep.subr.mxu0 0.0
  %5585 = vmatpush1.msra.mxu0 0.0
  %5586 = vmatprep.subr.mxu0 0.0
  %5587 = vmatpush1.msra.mxu0 0.0
  %5588 = vmatprep.subr.mxu0 0.0
  %5589 = vmatpush1.msra.mxu0 0.0
  %5590 = vmatprep.subr.mxu0 0.0
  %5591 = vmatpush1.msra.mxu0 0.0
  %5592 = vmatprep.subr.mxu0 0.0
  %5593 = vmatpush1.msra.mxu0 0.0
  %5594 = vmatprep.subr.mxu0 0.0
  %5595 = vmatpush1.msra.mxu0 0.0
  %5596 = vmatprep.subr.mxu0 0.0
  %5597 = vmatpush1.msra.mxu0 0.0
  %5598 = vmatprep.subr.mxu0 0.0
  %5599 = vmatpush1.msra.mxu0 0.0
  %5600 = vmatprep.subr.mxu0 0.0
  %5601 = vmatpush1.msra.mxu0 %v3728
  %5602 = vmatprep.subr.mxu0 0.0
  %5603 = vmatpush1.msra.mxu0 %v3727
  %5604 = vmatprep.subr.mxu0 0.0
  %5605 = vmatpush1.msra.mxu0 %v3726
  %5606 = vmatprep.subr.mxu0 0.0
  %5607 = vmatpush1.msra.mxu0 %v3725
  %5608 = vmatprep.subr.mxu0 0.0
  %5609 = vmatpush2.msra.mxu0 0.0
  %5610 = vmatprep.subr.mxu0 0.0
  %5611 = vmatpush2.msra.mxu0 0.0
  %5612 = vmatprep.subr.mxu0 0.0
  %5613 = vmatpush2.msra.mxu0 0.0
  %5614 = vmatprep.subr.mxu0 0.0
  %5615 = vmatpush2.msra.mxu0 0.0
  %5616 = vmatprep.subr.mxu0 0.0
  %5617 = vmatpush2.msra.mxu0 0.0
  %5618 = vmatprep.subr.mxu0 0.0
  %5619 = vmatpush2.msra.mxu0 0.0
  %5620 = vmatprep.subr.mxu0 0.0
  %5621 = vmatpush2.msra.mxu0 0.0
  %5622 = vmatprep.subr.mxu0 0.0
  %5623 = vmatpush2.msra.mxu0 0.0
  %5624 = vmatprep.subr.mxu0 0.0
  %5625 = vmatpush2.msra.mxu0 0.0
  %5626 = vmatprep.subr.mxu0 0.0
  %5627 = vmatpush2.msra.mxu0 0.0
  %5628 = vmatprep.subr.mxu0 0.0
  %5629 = vmatpush2.msra.mxu0 0.0
  %5630 = vmatprep.subr.mxu0 0.0
  %5631 = vmatpush2.msra.mxu0 0.0
  %5632 = vmatprep.subr.mxu0 0.0
  %5633 = vmatpush2.msra.mxu0 0.0
  %5634 = vmatprep.subr.mxu0 0.0
  %5635 = vmatpush2.msra.mxu0 0.0
  %5636 = vmatprep.subr.mxu0 0.0
  %5637 = vmatpush2.msra.mxu0 0.0
  %5638 = vmatprep.subr.mxu0 0.0
  %5639 = vmatpush2.msra.mxu0 0.0
  %5640 = vmatprep.mubr.f32.mxu0 0.0
  %5641 = vmatmul.mubr.f32.gmra.mxu0 %v5219
  %v5642 = vpop.f32.mrf.mxu0
  %v5643 = vadd.f32 0.0, %v5642
  %v5644 = vpop.f32.mrf.mxu0
  %5645 = vdwg.mxu0
  %v5646 = vadd.f32 %v3722, %v5643
  %v5647 = vxor.u32 %v5646, 2147483648
  %v5648 = vmul.f32 %v5647, 1.442695
  %v5649 = vpow.pop %v5648
  %v5650 = vadd.f32 %v5649, 1.0
  %v5651 = vrcp.pop %v5650
  %v5652 = vmul.f32 1.0, %v5651
  %v5653 = vtanh.pop %v5646
  %v5654 = vmul.f32 %v5652, %v5209
  %5656 = vrot.lane.b32.xlu0 %v5653, 64
  %v5657 = vpop.permute.xlu0 %5656
  %v5659 = vmul.f32 %v5652, %v5657
  %5661 = vrot.lane.b32.xlu0 %v5659, 32
  %v5662 = vpop.permute.xlu0 %5661
  %v5664 = vadd.f32 %v5654, %v5662
  %v5665 = vtanh.pop %v5664
  %5667 = vrot.lane.b32.xlu0 %v5665, 64
  %v5668 = vpop.permute.xlu0 %5667
  %v5670 = vmul.f32 %v5652, %v5668
  %5672 = vrot.lane.b32.xlu0 %v5670, 32
  %v5673 = vpop.permute.xlu0 %5672
  %v5674 = vsel %vm277, %v5673, 0
  %5676 = vmatprep.subr.mxu0 0.0
  %5677 = vmatpush1.msra.mxu0 0.0
  %5678 = vmatprep.subr.mxu0 0.0
  %5679 = vmatpush1.msra.mxu0 0.0
  %5680 = vmatprep.subr.mxu0 0.0
  %5681 = vmatpush1.msra.mxu0 0.0
  %5682 = vmatprep.subr.mxu0 0.0
  %5683 = vmatpush1.msra.mxu0 0.0
  %5684 = vmatprep.subr.mxu0 0.0
  %5685 = vmatpush1.msra.mxu0 0.0
  %5686 = vmatprep.subr.mxu0 0.0
  %5687 = vmatpush1.msra.mxu0 0.0
  %5688 = vmatprep.subr.mxu0 0.0
  %5689 = vmatpush1.msra.mxu0 0.0
  %5690 = vmatprep.subr.mxu0 0.0
  %5691 = vmatpush1.msra.mxu0 0.0
  %5692 = vmatprep.subr.mxu0 0.0
  %5693 = vmatpush1.msra.mxu0 0.0
  %5694 = vmatprep.subr.mxu0 0.0
  %5695 = vmatpush1.msra.mxu0 0.0
  %5696 = vmatprep.subr.mxu0 0.0
  %5697 = vmatpush1.msra.mxu0 0.0
  %5698 = vmatprep.subr.mxu0 0.0
  %5699 = vmatpush1.msra.mxu0 0.0
  %5700 = vmatprep.subr.mxu0 0.0
  %5701 = vmatpush1.msra.mxu0 %v3732
  %5702 = vmatprep.subr.mxu0 0.0
  %5703 = vmatpush1.msra.mxu0 %v3731
  %5704 = vmatprep.subr.mxu0 0.0
  %5705 = vmatpush1.msra.mxu0 %v3730
  %5706 = vmatprep.subr.mxu0 0.0
  %5707 = vmatpush1.msra.mxu0 %v3729
  %5708 = vmatprep.subr.mxu0 0.0
  %5709 = vmatpush2.msra.mxu0 0.0
  %5710 = vmatprep.subr.mxu0 0.0
  %5711 = vmatpush2.msra.mxu0 0.0
  %5712 = vmatprep.subr.mxu0 0.0
  %5713 = vmatpush2.msra.mxu0 0.0
  %5714 = vmatprep.subr.mxu0 0.0
  %5715 = vmatpush2.msra.mxu0 0.0
  %5716 = vmatprep.subr.mxu0 0.0
  %5717 = vmatpush2.msra.mxu0 0.0
  %5718 = vmatprep.subr.mxu0 0.0
  %5719 = vmatpush2.msra.mxu0 0.0
  %5720 = vmatprep.subr.mxu0 0.0
  %5721 = vmatpush2.msra.mxu0 0.0
  %5722 = vmatprep.subr.mxu0 0.0
  %5723 = vmatpush2.msra.mxu0 0.0
  %5724 = vmatprep.subr.mxu0 0.0
  %5725 = vmatpush2.msra.mxu0 0.0
  %5726 = vmatprep.subr.mxu0 0.0
  %5727 = vmatpush2.msra.mxu0 0.0
  %5728 = vmatprep.subr.mxu0 0.0
  %5729 = vmatpush2.msra.mxu0 0.0
  %5730 = vmatprep.subr.mxu0 0.0
  %5731 = vmatpush2.msra.mxu0 0.0
  %5732 = vmatprep.subr.mxu0 0.0
  %5733 = vmatpush2.msra.mxu0 0.0
  %5734 = vmatprep.subr.mxu0 0.0
  %5735 = vmatpush2.msra.mxu0 0.0
  %5736 = vmatprep.subr.mxu0 0.0
  %5737 = vmatpush2.msra.mxu0 0.0
  %5738 = vmatprep.subr.mxu0 0.0
  %5739 = vmatpush2.msra.mxu0 0.0
  %5740 = vmatprep.mubr.f32.mxu0 0.0
  %5741 = vmatmul.mubr.f32.gmra.mxu0 %v5674
  %v5742 = vpop.f32.mrf.mxu0
  %v5743 = vadd.f32 %v3836, %v5742
  %v5744 = vpop.f32.mrf.mxu0
  %5745 = vdwg.mxu0
  %v5746 = vmul.f32 %v5743, %v3919
  %v5747 = vsub.f32 %v5746, %v3923
  %v5748 = vmax.f32 %v5747, -6.0
  %v5749 = vmin.f32 %v5748, 6.0
  %v5750 = vmax.f32 %v5747, -4.0
  %v5751 = vmin.f32 %v5750, 4.0
  %v5752 = vand.u32 2147483647, %v5538
  %vm5753 = vcmp.le.f32.partialorder %v5752, 0.7853982
  %vm5754 = vcmp.lt.s32.totalorder %v5538, 0
  %v5755 = vand.u32 %v5538, 2139095040
  %v5756 = vshrl.u32 %v5755, 23
  %v5757 = vsub.s32 %v5756, 127
  %v5758 = vand.u32 2147483647, %v5538
  %v5759 = vand.u32 %v5758, 8388607
  %v5760 = vor.u32 %v5759, 8388608
  %v5761 = vsub.s32 0, %v5760
  %v5762 = vadd.s32 %v5757, 1
  %vm5763 = vcmp.gt.s32.totalorder %v5762, 0
  %v5764 = vsel %vm5763, %v5762, 0
  %v5765 = vshrl.u32 %v5764, 5
  %v5766 = vand.u32 %v5764, 31
  %v5767 = vsub.s32 32, %v5766
  %v5768 = vshrl.u32 683565275, %v5767
  %v5769 = vshll.u32 683565275, %v5766
  %v5770 = vshrl.u32 2475754826, %v5767
  %v5771 = vor.u32 %v5769, %v5770
  %v5772 = vshll.u32 2475754826, %v5766
  %v5773 = vshrl.u32 2131351028, %v5767
  %v5774 = vor.u32 %v5772, %v5773
  %v5775 = vshll.u32 2131351028, %v5766
  %v5776 = vshrl.u32 2102212464, %v5767
  %v5777 = vor.u32 %v5775, %v5776
  %v5778 = vshll.u32 2102212464, %v5766
  %v5779 = vshrl.u32 920167782, %v5767
  %v5780 = vor.u32 %v5778, %v5779
  %v5781 = vshll.u32 920167782, %v5766
  %v5782 = vshrl.u32 1326507024, %v5767
  %v5783 = vor.u32 %v5781, %v5782
  %vm5784 = vcmp.lt.s32.totalorder %v5765, 1
  %vm5785 = vcmp.lt.s32.totalorder %v5765, 2
  %vm5786 = vcmp.lt.s32.totalorder %v5765, 3
  %vm5787 = vcmp.lt.s32.totalorder %v5765, 4
  %v5788 = vsel %vm5784, %v5768, %v5771
  %v5789 = vsel %vm5787, %v5777, 2102212464
  %v5790 = vsel %vm5786, %v5774, %v5789
  %v5791 = vsel %vm5785, %v5788, %v5790
  %v5792 = vsel %vm5784, %v5771, %v5774
  %v5793 = vsel %vm5787, %v5780, 920167782
  %v5794 = vsel %vm5786, %v5777, %v5793
  %v5795 = vsel %vm5785, %v5792, %v5794
  %v5796 = vsel %vm5784, %v5774, %v5777
  %v5797 = vsel %vm5787, %v5783, 1326507024
  %v5798 = vsel %vm5786, %v5780, %v5797
  %v5799 = vsel %vm5785, %v5796, %v5798
  %v5800 = vshll.u32 %v5760, 8
  %v5801 = vmul.u32.u64.compose %v5800, %v5799
  %v5802 = vextract.low.u32 %v5801
  %v5803 = vextract.high.u32 %v5801
  %v5804 = vmul.u32.u64.compose %v5800, %v5795
  %v5805 = vextract.low.u32 %v5804
  %v5806 = vextract.high.u32 %v5804
  %v5807 = vmul.u32 %v5800, %v5791
  %v5808 = vadd.s32 %v5803, %v5805
  %vm5809 = vc.u32 %v5803, %v5805
  %v5810 = vadd.s32 %v5806, 1
  %v5811 = vsel %vm5809, %v5810, %v5806
  %v5812 = vadd.s32 %v5807, %v5811
  %v5813 = vadd.s32 %v5812, 536870912
  %v5814 = vshrl.u32 %v5813, 30
  %v5815 = vshll.u32 %v5814, 30
  %v5816 = vsub.s32 %v5812, %v5815
  %vm5817 = vcmp.lt.s32.totalorder %v5816, 0
  %v5818 = vsub.s32 0, %v5816
  %v5819 = vsel %vm5817, %v5818, %v5816
  %v5820 = vclz %v5819
  %v5821 = vsub.s32 %v5820, 2
  %vm5822 = vcmp.gt.s32.totalorder 0, %v5821
  %v5823 = vsel %vm5822, 0, %v5821
  %v5824 = vsub.s32 32, %v5823
  %v5825 = vshll.u32 %v5816, %v5823
  %v5826 = vshrl.u32 %v5808, %v5824
  %v5827 = vor.u32 %v5825, %v5826
  %v5828 = vsub.s32 4294967266, %v5823
  %v5829 = vadd.s32 %v5828, 127
  %v5830 = vshll.u32 %v5829, 23
  %v5831 = vor.u32 4788187, %v5830
  %v5832 = vand.u32 2147483647, %v5831
  %v5834 = vcvt.s32.f32 %v5827
  %v5835 = vmul.f32 %v5834, %v5832
  %v5836 = vxor.u32 %v5835, 2147483648
  %v5837 = vsel %vm5754, %v5836, %v5835
  %v5838 = vsub.s32 4, %v5814
  %v5839 = vsel %vm5754, %v5838, %v5814
  %v5840 = vsel %vm5753, %v5538, %v5837
  %v5841 = vsel %vm5753, 0, %v5839
  %v5842 = vcosq.f32.pop %v5840
  %v5843 = vsinq.f32.pop %v5840
  %vm5844 = vweird.f32 %v5538
  %v5845 = vand.u32 %v5841, 3
  %vm5846 = vcmp.lt.s32.totalorder %v5845, 2
  %vm5847 = vcmp.eq.s32.totalorder %v5845, 0
  %v5848 = vxor.u32 %v5843, 2147483648
  %v5849 = vsel %vm5847, %v5842, %v5848
  %vm5850 = vcmp.eq.s32.totalorder %v5845, 2
  %v5851 = vxor.u32 %v5842, 2147483648
  %v5852 = vsel %vm5850, %v5851, %v5843
  %v5853 = vsel %vm5846, %v5849, %v5852
  %v5854 = vsel %vm5844, nan, %v5853
  %5856 = vrot.lane.b32.xlu0 %v5854, 127
  %v5857 = vpop.permute.xlu0 %5856
  %v5859 = vmul.f32 %v5538, %v5857
  %v5860 = vand.u32 2147483647, %v5538
  %vm5861 = vcmp.le.f32.partialorder %v5860, 0.7853982
  %vm5862 = vcmp.lt.s32.totalorder %v5538, 0
  %v5863 = vand.u32 %v5538, 2139095040
  %v5864 = vshrl.u32 %v5863, 23
  %v5865 = vsub.s32 %v5864, 127
  %v5866 = vand.u32 2147483647, %v5538
  %v5867 = vand.u32 %v5866, 8388607
  %v5868 = vor.u32 %v5867, 8388608
  %v5869 = vsub.s32 0, %v5868
  %v5870 = vadd.s32 %v5865, 1
  %vm5871 = vcmp.gt.s32.totalorder %v5870, 0
  %v5872 = vsel %vm5871, %v5870, 0
  %v5873 = vshrl.u32 %v5872, 5
  %v5874 = vand.u32 %v5872, 31
  %v5875 = vsub.s32 32, %v5874
  %v5876 = vshrl.u32 683565275, %v5875
  %v5877 = vshll.u32 683565275, %v5874
  %v5878 = vshrl.u32 2475754826, %v5875
  %v5879 = vor.u32 %v5877, %v5878
  %v5880 = vshll.u32 2475754826, %v5874
  %v5881 = vshrl.u32 2131351028, %v5875
  %v5882 = vor.u32 %v5880, %v5881
  %v5883 = vshll.u32 2131351028, %v5874
  %v5884 = vshrl.u32 2102212464, %v5875
  %v5885 = vor.u32 %v5883, %v5884
  %v5886 = vshll.u32 2102212464, %v5874
  %v5887 = vshrl.u32 920167782, %v5875
  %v5888 = vor.u32 %v5886, %v5887
  %v5889 = vshll.u32 920167782, %v5874
  %v5890 = vshrl.u32 1326507024, %v5875
  %v5891 = vor.u32 %v5889, %v5890
  %vm5892 = vcmp.lt.s32.totalorder %v5873, 1
  %vm5893 = vcmp.lt.s32.totalorder %v5873, 2
  %vm5894 = vcmp.lt.s32.totalorder %v5873, 3
  %vm5895 = vcmp.lt.s32.totalorder %v5873, 4
  %v5896 = vsel %vm5892, %v5876, %v5879
  %v5897 = vsel %vm5895, %v5885, 2102212464
  %v5898 = vsel %vm5894, %v5882, %v5897
  %v5899 = vsel %vm5893, %v5896, %v5898
  %v5900 = vsel %vm5892, %v5879, %v5882
  %v5901 = vsel %vm5895, %v5888, 920167782
  %v5902 = vsel %vm5894, %v5885, %v5901
  %v5903 = vsel %vm5893, %v5900, %v5902
  %v5904 = vsel %vm5892, %v5882, %v5885
  %v5905 = vsel %vm5895, %v5891, 1326507024
  %v5906 = vsel %vm5894, %v5888, %v5905
  %v5907 = vsel %vm5893, %v5904, %v5906
  %v5908 = vshll.u32 %v5868, 8
  %v5909 = vmul.u32.u64.compose %v5908, %v5907
  %v5910 = vextract.low.u32 %v5909
  %v5911 = vextract.high.u32 %v5909
  %v5912 = vmul.u32.u64.compose %v5908, %v5903
  %v5913 = vextract.low.u32 %v5912
  %v5914 = vextract.high.u32 %v5912
  %v5915 = vmul.u32 %v5908, %v5899
  %v5916 = vadd.s32 %v5911, %v5913
  %vm5917 = vc.u32 %v5911, %v5913
  %v5918 = vadd.s32 %v5914, 1
  %v5919 = vsel %vm5917, %v5918, %v5914
  %v5920 = vadd.s32 %v5915, %v5919
  %v5921 = vadd.s32 %v5920, 536870912
  %v5922 = vshrl.u32 %v5921, 30
  %v5923 = vshll.u32 %v5922, 30
  %v5924 = vsub.s32 %v5920, %v5923
  %vm5925 = vcmp.lt.s32.totalorder %v5924, 0
  %v5926 = vsub.s32 0, %v5924
  %v5927 = vsel %vm5925, %v5926, %v5924
  %v5928 = vclz %v5927
  %v5929 = vsub.s32 %v5928, 2
  %vm5930 = vcmp.gt.s32.totalorder 0, %v5929
  %v5931 = vsel %vm5930, 0, %v5929
  %v5932 = vsub.s32 32, %v5931
  %v5933 = vshll.u32 %v5924, %v5931
  %v5934 = vshrl.u32 %v5916, %v5932
  %v5935 = vor.u32 %v5933, %v5934
  %v5936 = vsub.s32 4294967266, %v5931
  %v5937 = vadd.s32 %v5936, 127
  %v5938 = vshll.u32 %v5937, 23
  %v5939 = vor.u32 4788187, %v5938
  %v5940 = vand.u32 2147483647, %v5939
  %v5942 = vcvt.s32.f32 %v5935
  %v5943 = vmul.f32 %v5942, %v5940
  %v5944 = vxor.u32 %v5943, 2147483648
  %v5945 = vsel %vm5862, %v5944, %v5943
  %v5946 = vsub.s32 4, %v5922
  %v5947 = vsel %vm5862, %v5946, %v5922
  %v5948 = vsel %vm5861, %v5538, %v5945
  %v5949 = vsel %vm5861, 0, %v5947
  %v5950 = vcosq.f32.pop %v5948
  %v5951 = vsinq.f32.pop %v5948
  %vm5952 = vweird.f32 %v5538
  %v5953 = vadd.s32 %v5949, 3
  %v5954 = vand.u32 %v5953, 3
  %vm5955 = vcmp.lt.s32.totalorder %v5954, 2
  %vm5956 = vcmp.eq.s32.totalorder %v5954, 0
  %v5957 = vxor.u32 %v5951, 2147483648
  %v5958 = vsel %vm5956, %v5950, %v5957
  %vm5959 = vcmp.eq.s32.totalorder %v5954, 2
  %v5960 = vxor.u32 %v5950, 2147483648
  %v5961 = vsel %vm5959, %v5960, %v5951
  %v5962 = vsel %vm5955, %v5958, %v5961
  %v5963 = vsel %vm5952, nan, %v5962
  %5965 = vrot.lane.b32.xlu0 %v5963, 127
  %v5966 = vpop.permute.xlu0 %5965
  %v5968 = vmul.f32 %v5538, %v5966
  %5970 = vset.pattern.permute.xlu0 0
  %5971 = vperm.xlu0 %5970, %v5749
  %v5972 = vpop.permute.xlu0 %5971
  %5975 = vset.pattern.permute.xlu0 1
  %5976 = vperm.xlu0 %5975, %v5751
  %v5977 = vpop.permute.xlu0 %5976
  %v5979 = vsel %vm4149, %v5972, %v5977
  %5981 = vset.pattern.permute.xlu0 2
  %5982 = vperm.xlu0 %5981, %v5968
  %v5983 = vpop.permute.xlu0 %5982
  %v5985 = vsel %vm4039, %v5983, %v5979
  %5987 = vset.pattern.permute.xlu0 2
  %5988 = vperm.xlu0 %5987, %v5859
  %v5989 = vpop.permute.xlu0 %5988
  %v5991 = vsel %vm3930, %v5989, %v5985
  %v5992 = vmul.f32 %v5991, 0.1
  %v5993 = vadd.f32 %v5538, %v5992
  %s5994 = scalar_lea.vmem %s75, 8
  %5995 = vst.msk [vmem:[%s5994] sm:$0x3] %vm4175, %v5993
  %v5996 = vadd.f32 %v5993, %v167
  %v5997 = vmul.f32 %v5996, %v175
  %v5998 = vsub.f32 %v5997, %v2595
  %5999 = vrot.lane.b32.xlu0 %v2595, 124
  %v6000 = vpop.permute.xlu0 %5999
  %v6002 = vsub.f32 %v5743, %v6000
  %v6003 = vmul.f32 %v5998, %v5998
  %v6004 = vsel %vm4175, %v6003, 0.0
  %6005 = vadd.xlane.f32.xlu0 %v6004
  %v6006 = vpop.xlane.xlu0 %6005
  %v6007 = vrot.slane %v6006, 4
  %v6008 = vadd.f32 %v6006, %v6007
  %v6009 = vrot.slane %v6008, 2
  %v6010 = vadd.f32 %v6008, %v6009
  %v6011 = vrot.slane %v6010, 1
  %v6012 = vadd.f32 %v6010, %v6011
  %s6013 = vtos %v6012
  %v6014 = vstv %s6013
  %v6015 = vadd.f32 %v5575, %v6014
  %v6016 = vmul.f32 %v6002, %v6002
  %v6017 = vsel %vm4198, %v6016, 0.0
  %6018 = vadd.xlane.f32.xlu0 %v6017
  %v6019 = vpop.xlane.xlu0 %6018
  %v6020 = vrot.slane %v6019, 4
  %v6021 = vadd.f32 %v6019, %v6020
  %v6022 = vrot.slane %v6021, 2
  %v6023 = vadd.f32 %v6021, %v6022
  %v6024 = vrot.slane %v6023, 1
  %v6025 = vadd.f32 %v6023, %v6024
  %s6026 = vtos %v6025
  %v6027 = vstv %s6026
  %v6028 = vadd.f32 %v6015, %v6027
  %6029 = vmatprep.subr.mxu0 0.0
  %6030 = vmatpush1.msra.mxu0 0.0
  %6031 = vmatprep.subr.mxu0 0.0
  %6032 = vmatpush1.msra.mxu0 0.0
  %6033 = vmatprep.subr.mxu0 0.0
  %6034 = vmatpush1.msra.mxu0 0.0
  %6035 = vmatprep.subr.mxu0 0.0
  %6036 = vmatpush1.msra.mxu0 0.0
  %6037 = vmatprep.subr.mxu0 0.0
  %6038 = vmatpush1.msra.mxu0 0.0
  %6039 = vmatprep.subr.mxu0 0.0
  %6040 = vmatpush1.msra.mxu0 0.0
  %6041 = vmatprep.subr.mxu0 0.0
  %6042 = vmatpush1.msra.mxu0 0.0
  %6043 = vmatprep.subr.mxu0 0.0
  %6044 = vmatpush1.msra.mxu0 0.0
  %6045 = vmatprep.subr.mxu0 0.0
  %6046 = vmatpush1.msra.mxu0 0.0
  %6047 = vmatprep.subr.mxu0 0.0
  %6048 = vmatpush1.msra.mxu0 0.0
  %6049 = vmatprep.subr.mxu0 0.0
  %6050 = vmatpush1.msra.mxu0 0.0
  %6051 = vmatprep.subr.mxu0 0.0
  %6052 = vmatpush1.msra.mxu0 0.0
  %6053 = vmatprep.subr.mxu0 0.0
  %6054 = vmatpush1.msra.mxu0 %v3728
  %6055 = vmatprep.subr.mxu0 0.0
  %6056 = vmatpush1.msra.mxu0 %v3727
  %6057 = vmatprep.subr.mxu0 0.0
  %6058 = vmatpush1.msra.mxu0 %v3726
  %6059 = vmatprep.subr.mxu0 0.0
  %6060 = vmatpush1.msra.mxu0 %v3725
  %6061 = vmatprep.subr.mxu0 0.0
  %6062 = vmatpush2.msra.mxu0 0.0
  %6063 = vmatprep.subr.mxu0 0.0
  %6064 = vmatpush2.msra.mxu0 0.0
  %6065 = vmatprep.subr.mxu0 0.0
  %6066 = vmatpush2.msra.mxu0 0.0
  %6067 = vmatprep.subr.mxu0 0.0
  %6068 = vmatpush2.msra.mxu0 0.0
  %6069 = vmatprep.subr.mxu0 0.0
  %6070 = vmatpush2.msra.mxu0 0.0
  %6071 = vmatprep.subr.mxu0 0.0
  %6072 = vmatpush2.msra.mxu0 0.0
  %6073 = vmatprep.subr.mxu0 0.0
  %6074 = vmatpush2.msra.mxu0 0.0
  %6075 = vmatprep.subr.mxu0 0.0
  %6076 = vmatpush2.msra.mxu0 0.0
  %6077 = vmatprep.subr.mxu0 0.0
  %6078 = vmatpush2.msra.mxu0 0.0
  %6079 = vmatprep.subr.mxu0 0.0
  %6080 = vmatpush2.msra.mxu0 0.0
  %6081 = vmatprep.subr.mxu0 0.0
  %6082 = vmatpush2.msra.mxu0 0.0
  %6083 = vmatprep.subr.mxu0 0.0
  %6084 = vmatpush2.msra.mxu0 0.0
  %6085 = vmatprep.subr.mxu0 0.0
  %6086 = vmatpush2.msra.mxu0 0.0
  %6087 = vmatprep.subr.mxu0 0.0
  %6088 = vmatpush2.msra.mxu0 0.0
  %6089 = vmatprep.subr.mxu0 0.0
  %6090 = vmatpush2.msra.mxu0 0.0
  %6091 = vmatprep.subr.mxu0 0.0
  %6092 = vmatpush2.msra.mxu0 0.0
  %6093 = vmatprep.mubr.f32.mxu0 0.0
  %6094 = vmatmul.mubr.f32.gmra.mxu0 %v5674
  %v6095 = vpop.f32.mrf.mxu0
  %v6096 = vadd.f32 0.0, %v6095
  %v6097 = vpop.f32.mrf.mxu0
  %6098 = vdwg.mxu0
  %v6099 = vadd.f32 %v3722, %v6096
  %v6100 = vxor.u32 %v6099, 2147483648
  %v6101 = vmul.f32 %v6100, 1.442695
  %v6102 = vpow.pop %v6101
  %v6103 = vadd.f32 %v6102, 1.0
  %v6104 = vrcp.pop %v6103
  %v6105 = vmul.f32 1.0, %v6104
  %v6106 = vtanh.pop %v6099
  %v6107 = vmul.f32 %v6105, %v5664
  %6109 = vrot.lane.b32.xlu0 %v6106, 64
  %v6110 = vpop.permute.xlu0 %6109
  %v6112 = vmul.f32 %v6105, %v6110
  %6114 = vrot.lane.b32.xlu0 %v6112, 32
  %v6115 = vpop.permute.xlu0 %6114
  %v6117 = vadd.f32 %v6107, %v6115
  %v6118 = vtanh.pop %v6117
  %6120 = vrot.lane.b32.xlu0 %v6118, 64
  %v6121 = vpop.permute.xlu0 %6120
  %v6123 = vmul.f32 %v6105, %v6121
  %6125 = vrot.lane.b32.xlu0 %v6123, 32
  %v6126 = vpop.permute.xlu0 %6125
  %v6127 = vsel %vm277, %v6126, 0
  %6129 = vmatprep.subr.mxu0 0.0
  %6130 = vmatpush1.msra.mxu0 0.0
  %6131 = vmatprep.subr.mxu0 0.0
  %6132 = vmatpush1.msra.mxu0 0.0
  %6133 = vmatprep.subr.mxu0 0.0
  %6134 = vmatpush1.msra.mxu0 0.0
  %6135 = vmatprep.subr.mxu0 0.0
  %6136 = vmatpush1.msra.mxu0 0.0
  %6137 = vmatprep.subr.mxu0 0.0
  %6138 = vmatpush1.msra.mxu0 0.0
  %6139 = vmatprep.subr.mxu0 0.0
  %6140 = vmatpush1.msra.mxu0 0.0
  %6141 = vmatprep.subr.mxu0 0.0
  %6142 = vmatpush1.msra.mxu0 0.0
  %6143 = vmatprep.subr.mxu0 0.0
  %6144 = vmatpush1.msra.mxu0 0.0
  %6145 = vmatprep.subr.mxu0 0.0
  %6146 = vmatpush1.msra.mxu0 0.0
  %6147 = vmatprep.subr.mxu0 0.0
  %6148 = vmatpush1.msra.mxu0 0.0
  %6149 = vmatprep.subr.mxu0 0.0
  %6150 = vmatpush1.msra.mxu0 0.0
  %6151 = vmatprep.subr.mxu0 0.0
  %6152 = vmatpush1.msra.mxu0 0.0
  %6153 = vmatprep.subr.mxu0 0.0
  %6154 = vmatpush1.msra.mxu0 %v3732
  %6155 = vmatprep.subr.mxu0 0.0
  %6156 = vmatpush1.msra.mxu0 %v3731
  %6157 = vmatprep.subr.mxu0 0.0
  %6158 = vmatpush1.msra.mxu0 %v3730
  %6159 = vmatprep.subr.mxu0 0.0
  %6160 = vmatpush1.msra.mxu0 %v3729
  %6161 = vmatprep.subr.mxu0 0.0
  %6162 = vmatpush2.msra.mxu0 0.0
  %6163 = vmatprep.subr.mxu0 0.0
  %6164 = vmatpush2.msra.mxu0 0.0
  %6165 = vmatprep.subr.mxu0 0.0
  %6166 = vmatpush2.msra.mxu0 0.0
  %6167 = vmatprep.subr.mxu0 0.0
  %6168 = vmatpush2.msra.mxu0 0.0
  %6169 = vmatprep.subr.mxu0 0.0
  %6170 = vmatpush2.msra.mxu0 0.0
  %6171 = vmatprep.subr.mxu0 0.0
  %6172 = vmatpush2.msra.mxu0 0.0
  %6173 = vmatprep.subr.mxu0 0.0
  %6174 = vmatpush2.msra.mxu0 0.0
  %6175 = vmatprep.subr.mxu0 0.0
  %6176 = vmatpush2.msra.mxu0 0.0
  %6177 = vmatprep.subr.mxu0 0.0
  %6178 = vmatpush2.msra.mxu0 0.0
  %6179 = vmatprep.subr.mxu0 0.0
  %6180 = vmatpush2.msra.mxu0 0.0
  %6181 = vmatprep.subr.mxu0 0.0
  %6182 = vmatpush2.msra.mxu0 0.0
  %6183 = vmatprep.subr.mxu0 0.0
  %6184 = vmatpush2.msra.mxu0 0.0
  %6185 = vmatprep.subr.mxu0 0.0
  %6186 = vmatpush2.msra.mxu0 0.0
  %6187 = vmatprep.subr.mxu0 0.0
  %6188 = vmatpush2.msra.mxu0 0.0
  %6189 = vmatprep.subr.mxu0 0.0
  %6190 = vmatpush2.msra.mxu0 0.0
  %6191 = vmatprep.subr.mxu0 0.0
  %6192 = vmatpush2.msra.mxu0 0.0
  %6193 = vmatprep.mubr.f32.mxu0 0.0
  %6194 = vmatmul.mubr.f32.gmra.mxu0 %v6127
  %v6195 = vpop.f32.mrf.mxu0
  %v6196 = vadd.f32 %v3836, %v6195
  %v6197 = vpop.f32.mrf.mxu0
  %6198 = vdwg.mxu0
  %v6199 = vmul.f32 %v6196, %v3919
  %v6200 = vsub.f32 %v6199, %v3923
  %v6201 = vmax.f32 %v6200, -6.0
  %v6202 = vmin.f32 %v6201, 6.0
  %v6203 = vmax.f32 %v6200, -4.0
  %v6204 = vmin.f32 %v6203, 4.0
  %v6205 = vand.u32 2147483647, %v5993
  %vm6206 = vcmp.le.f32.partialorder %v6205, 0.7853982
  %vm6207 = vcmp.lt.s32.totalorder %v5993, 0
  %v6208 = vand.u32 %v5993, 2139095040
  %v6209 = vshrl.u32 %v6208, 23
  %v6210 = vsub.s32 %v6209, 127
  %v6211 = vand.u32 2147483647, %v5993
  %v6212 = vand.u32 %v6211, 8388607
  %v6213 = vor.u32 %v6212, 8388608
  %v6214 = vsub.s32 0, %v6213
  %v6215 = vadd.s32 %v6210, 1
  %vm6216 = vcmp.gt.s32.totalorder %v6215, 0
  %v6217 = vsel %vm6216, %v6215, 0
  %v6218 = vshrl.u32 %v6217, 5
  %v6219 = vand.u32 %v6217, 31
  %v6220 = vsub.s32 32, %v6219
  %v6221 = vshrl.u32 683565275, %v6220
  %v6222 = vshll.u32 683565275, %v6219
  %v6223 = vshrl.u32 2475754826, %v6220
  %v6224 = vor.u32 %v6222, %v6223
  %v6225 = vshll.u32 2475754826, %v6219
  %v6226 = vshrl.u32 2131351028, %v6220
  %v6227 = vor.u32 %v6225, %v6226
  %v6228 = vshll.u32 2131351028, %v6219
  %v6229 = vshrl.u32 2102212464, %v6220
  %v6230 = vor.u32 %v6228, %v6229
  %v6231 = vshll.u32 2102212464, %v6219
  %v6232 = vshrl.u32 920167782, %v6220
  %v6233 = vor.u32 %v6231, %v6232
  %v6234 = vshll.u32 920167782, %v6219
  %v6235 = vshrl.u32 1326507024, %v6220
  %v6236 = vor.u32 %v6234, %v6235
  %vm6237 = vcmp.lt.s32.totalorder %v6218, 1
  %vm6238 = vcmp.lt.s32.totalorder %v6218, 2
  %vm6239 = vcmp.lt.s32.totalorder %v6218, 3
  %vm6240 = vcmp.lt.s32.totalorder %v6218, 4
  %v6241 = vsel %vm6237, %v6221, %v6224
  %v6242 = vsel %vm6240, %v6230, 2102212464
  %v6243 = vsel %vm6239, %v6227, %v6242
  %v6244 = vsel %vm6238, %v6241, %v6243
  %v6245 = vsel %vm6237, %v6224, %v6227
  %v6246 = vsel %vm6240, %v6233, 920167782
  %v6247 = vsel %vm6239, %v6230, %v6246
  %v6248 = vsel %vm6238, %v6245, %v6247
  %v6249 = vsel %vm6237, %v6227, %v6230
  %v6250 = vsel %vm6240, %v6236, 1326507024
  %v6251 = vsel %vm6239, %v6233, %v6250
  %v6252 = vsel %vm6238, %v6249, %v6251
  %v6253 = vshll.u32 %v6213, 8
  %v6254 = vmul.u32.u64.compose %v6253, %v6252
  %v6255 = vextract.low.u32 %v6254
  %v6256 = vextract.high.u32 %v6254
  %v6257 = vmul.u32.u64.compose %v6253, %v6248
  %v6258 = vextract.low.u32 %v6257
  %v6259 = vextract.high.u32 %v6257
  %v6260 = vmul.u32 %v6253, %v6244
  %v6261 = vadd.s32 %v6256, %v6258
  %vm6262 = vc.u32 %v6256, %v6258
  %v6263 = vadd.s32 %v6259, 1
  %v6264 = vsel %vm6262, %v6263, %v6259
  %v6265 = vadd.s32 %v6260, %v6264
  %v6266 = vadd.s32 %v6265, 536870912
  %v6267 = vshrl.u32 %v6266, 30
  %v6268 = vshll.u32 %v6267, 30
  %v6269 = vsub.s32 %v6265, %v6268
  %vm6270 = vcmp.lt.s32.totalorder %v6269, 0
  %v6271 = vsub.s32 0, %v6269
  %v6272 = vsel %vm6270, %v6271, %v6269
  %v6273 = vclz %v6272
  %v6274 = vsub.s32 %v6273, 2
  %vm6275 = vcmp.gt.s32.totalorder 0, %v6274
  %v6276 = vsel %vm6275, 0, %v6274
  %v6277 = vsub.s32 32, %v6276
  %v6278 = vshll.u32 %v6269, %v6276
  %v6279 = vshrl.u32 %v6261, %v6277
  %v6280 = vor.u32 %v6278, %v6279
  %v6281 = vsub.s32 4294967266, %v6276
  %v6282 = vadd.s32 %v6281, 127
  %v6283 = vshll.u32 %v6282, 23
  %v6284 = vor.u32 4788187, %v6283
  %v6285 = vand.u32 2147483647, %v6284
  %v6287 = vcvt.s32.f32 %v6280
  %v6288 = vmul.f32 %v6287, %v6285
  %v6289 = vxor.u32 %v6288, 2147483648
  %v6290 = vsel %vm6207, %v6289, %v6288
  %v6291 = vsub.s32 4, %v6267
  %v6292 = vsel %vm6207, %v6291, %v6267
  %v6293 = vsel %vm6206, %v5993, %v6290
  %v6294 = vsel %vm6206, 0, %v6292
  %v6295 = vcosq.f32.pop %v6293
  %v6296 = vsinq.f32.pop %v6293
  %vm6297 = vweird.f32 %v5993
  %v6298 = vand.u32 %v6294, 3
  %vm6299 = vcmp.lt.s32.totalorder %v6298, 2
  %vm6300 = vcmp.eq.s32.totalorder %v6298, 0
  %v6301 = vxor.u32 %v6296, 2147483648
  %v6302 = vsel %vm6300, %v6295, %v6301
  %vm6303 = vcmp.eq.s32.totalorder %v6298, 2
  %v6304 = vxor.u32 %v6295, 2147483648
  %v6305 = vsel %vm6303, %v6304, %v6296
  %v6306 = vsel %vm6299, %v6302, %v6305
  %v6307 = vsel %vm6297, nan, %v6306
  %6309 = vrot.lane.b32.xlu0 %v6307, 127
  %v6310 = vpop.permute.xlu0 %6309
  %v6312 = vmul.f32 %v5993, %v6310
  %v6313 = vand.u32 2147483647, %v5993
  %vm6314 = vcmp.le.f32.partialorder %v6313, 0.7853982
  %vm6315 = vcmp.lt.s32.totalorder %v5993, 0
  %v6316 = vand.u32 %v5993, 2139095040
  %v6317 = vshrl.u32 %v6316, 23
  %v6318 = vsub.s32 %v6317, 127
  %v6319 = vand.u32 2147483647, %v5993
  %v6320 = vand.u32 %v6319, 8388607
  %v6321 = vor.u32 %v6320, 8388608
  %v6322 = vsub.s32 0, %v6321
  %v6323 = vadd.s32 %v6318, 1
  %vm6324 = vcmp.gt.s32.totalorder %v6323, 0
  %v6325 = vsel %vm6324, %v6323, 0
  %v6326 = vshrl.u32 %v6325, 5
  %v6327 = vand.u32 %v6325, 31
  %v6328 = vsub.s32 32, %v6327
  %v6329 = vshrl.u32 683565275, %v6328
  %v6330 = vshll.u32 683565275, %v6327
  %v6331 = vshrl.u32 2475754826, %v6328
  %v6332 = vor.u32 %v6330, %v6331
  %v6333 = vshll.u32 2475754826, %v6327
  %v6334 = vshrl.u32 2131351028, %v6328
  %v6335 = vor.u32 %v6333, %v6334
  %v6336 = vshll.u32 2131351028, %v6327
  %v6337 = vshrl.u32 2102212464, %v6328
  %v6338 = vor.u32 %v6336, %v6337
  %v6339 = vshll.u32 2102212464, %v6327
  %v6340 = vshrl.u32 920167782, %v6328
  %v6341 = vor.u32 %v6339, %v6340
  %v6342 = vshll.u32 920167782, %v6327
  %v6343 = vshrl.u32 1326507024, %v6328
  %v6344 = vor.u32 %v6342, %v6343
  %vm6345 = vcmp.lt.s32.totalorder %v6326, 1
  %vm6346 = vcmp.lt.s32.totalorder %v6326, 2
  %vm6347 = vcmp.lt.s32.totalorder %v6326, 3
  %vm6348 = vcmp.lt.s32.totalorder %v6326, 4
  %v6349 = vsel %vm6345, %v6329, %v6332
  %v6350 = vsel %vm6348, %v6338, 2102212464
  %v6351 = vsel %vm6347, %v6335, %v6350
  %v6352 = vsel %vm6346, %v6349, %v6351
  %v6353 = vsel %vm6345, %v6332, %v6335
  %v6354 = vsel %vm6348, %v6341, 920167782
  %v6355 = vsel %vm6347, %v6338, %v6354
  %v6356 = vsel %vm6346, %v6353, %v6355
  %v6357 = vsel %vm6345, %v6335, %v6338
  %v6358 = vsel %vm6348, %v6344, 1326507024
  %v6359 = vsel %vm6347, %v6341, %v6358
  %v6360 = vsel %vm6346, %v6357, %v6359
  %v6361 = vshll.u32 %v6321, 8
  %v6362 = vmul.u32.u64.compose %v6361, %v6360
  %v6363 = vextract.low.u32 %v6362
  %v6364 = vextract.high.u32 %v6362
  %v6365 = vmul.u32.u64.compose %v6361, %v6356
  %v6366 = vextract.low.u32 %v6365
  %v6367 = vextract.high.u32 %v6365
  %v6368 = vmul.u32 %v6361, %v6352
  %v6369 = vadd.s32 %v6364, %v6366
  %vm6370 = vc.u32 %v6364, %v6366
  %v6371 = vadd.s32 %v6367, 1
  %v6372 = vsel %vm6370, %v6371, %v6367
  %v6373 = vadd.s32 %v6368, %v6372
  %v6374 = vadd.s32 %v6373, 536870912
  %v6375 = vshrl.u32 %v6374, 30
  %v6376 = vshll.u32 %v6375, 30
  %v6377 = vsub.s32 %v6373, %v6376
  %vm6378 = vcmp.lt.s32.totalorder %v6377, 0
  %v6379 = vsub.s32 0, %v6377
  %v6380 = vsel %vm6378, %v6379, %v6377
  %v6381 = vclz %v6380
  %v6382 = vsub.s32 %v6381, 2
  %vm6383 = vcmp.gt.s32.totalorder 0, %v6382
  %v6384 = vsel %vm6383, 0, %v6382
  %v6385 = vsub.s32 32, %v6384
  %v6386 = vshll.u32 %v6377, %v6384
  %v6387 = vshrl.u32 %v6369, %v6385
  %v6388 = vor.u32 %v6386, %v6387
  %v6389 = vsub.s32 4294967266, %v6384
  %v6390 = vadd.s32 %v6389, 127
  %v6391 = vshll.u32 %v6390, 23
  %v6392 = vor.u32 4788187, %v6391
  %v6393 = vand.u32 2147483647, %v6392
  %v6395 = vcvt.s32.f32 %v6388
  %v6396 = vmul.f32 %v6395, %v6393
  %v6397 = vxor.u32 %v6396, 2147483648
  %v6398 = vsel %vm6315, %v6397, %v6396
  %v6399 = vsub.s32 4, %v6375
  %v6400 = vsel %vm6315, %v6399, %v6375
  %v6401 = vsel %vm6314, %v5993, %v6398
  %v6402 = vsel %vm6314, 0, %v6400
  %v6403 = vcosq.f32.pop %v6401
  %v6404 = vsinq.f32.pop %v6401
  %vm6405 = vweird.f32 %v5993
  %v6406 = vadd.s32 %v6402, 3
  %v6407 = vand.u32 %v6406, 3
  %vm6408 = vcmp.lt.s32.totalorder %v6407, 2
  %vm6409 = vcmp.eq.s32.totalorder %v6407, 0
  %v6410 = vxor.u32 %v6404, 2147483648
  %v6411 = vsel %vm6409, %v6403, %v6410
  %vm6412 = vcmp.eq.s32.totalorder %v6407, 2
  %v6413 = vxor.u32 %v6403, 2147483648
  %v6414 = vsel %vm6412, %v6413, %v6404
  %v6415 = vsel %vm6408, %v6411, %v6414
  %v6416 = vsel %vm6405, nan, %v6415
  %6418 = vrot.lane.b32.xlu0 %v6416, 127
  %v6419 = vpop.permute.xlu0 %6418
  %v6421 = vmul.f32 %v5993, %v6419
  %6423 = vset.pattern.permute.xlu0 0
  %6424 = vperm.xlu0 %6423, %v6202
  %v6425 = vpop.permute.xlu0 %6424
  %6428 = vset.pattern.permute.xlu0 1
  %6429 = vperm.xlu0 %6428, %v6204
  %v6430 = vpop.permute.xlu0 %6429
  %v6432 = vsel %vm4149, %v6425, %v6430
  %6434 = vset.pattern.permute.xlu0 2
  %6435 = vperm.xlu0 %6434, %v6421
  %v6436 = vpop.permute.xlu0 %6435
  %v6438 = vsel %vm4039, %v6436, %v6432
  %6440 = vset.pattern.permute.xlu0 2
  %6441 = vperm.xlu0 %6440, %v6312
  %v6442 = vpop.permute.xlu0 %6441
  %v6444 = vsel %vm3930, %v6442, %v6438
  %v6445 = vmul.f32 %v6444, 0.1
  %v6446 = vadd.f32 %v5993, %v6445
  %s6447 = scalar_lea.vmem %s75, 10
  %6448 = vst.msk [vmem:[%s6447] sm:$0x3] %vm4175, %v6446
  %v6449 = vadd.f32 %v6446, %v167
  %v6450 = vmul.f32 %v6449, %v175
  %v6451 = vrot.slane %v2595, 2
  %v6453 = vsub.f32 %v6450, %v6451
  %6454 = vrot.lane.b32.xlu0 %v6451, 124
  %v6455 = vpop.permute.xlu0 %6454
  %v6457 = vsub.f32 %v6196, %v6455
  %v6458 = vmul.f32 %v6453, %v6453
  %v6459 = vsel %vm4175, %v6458, 0.0
  %6460 = vadd.xlane.f32.xlu0 %v6459
  %v6461 = vpop.xlane.xlu0 %6460
  %v6462 = vrot.slane %v6461, 4
  %v6463 = vadd.f32 %v6461, %v6462
  %v6464 = vrot.slane %v6463, 2
  %v6465 = vadd.f32 %v6463, %v6464
  %v6466 = vrot.slane %v6465, 1
  %v6467 = vadd.f32 %v6465, %v6466
  %s6468 = vtos %v6467
  %v6469 = vstv %s6468
  %v6470 = vadd.f32 %v6028, %v6469
  %v6471 = vmul.f32 %v6457, %v6457
  %v6472 = vsel %vm4198, %v6471, 0.0
  %6473 = vadd.xlane.f32.xlu0 %v6472
  %v6474 = vpop.xlane.xlu0 %6473
  %v6475 = vrot.slane %v6474, 4
  %v6476 = vadd.f32 %v6474, %v6475
  %v6477 = vrot.slane %v6476, 2
  %v6478 = vadd.f32 %v6476, %v6477
  %v6479 = vrot.slane %v6478, 1
  %v6480 = vadd.f32 %v6478, %v6479
  %s6481 = vtos %v6480
  %v6482 = vstv %s6481
  %v6483 = vadd.f32 %v6470, %v6482
  %6484 = vmatprep.subr.mxu0 0.0
  %6485 = vmatpush1.msra.mxu0 0.0
  %6486 = vmatprep.subr.mxu0 0.0
  %6487 = vmatpush1.msra.mxu0 0.0
  %6488 = vmatprep.subr.mxu0 0.0
  %6489 = vmatpush1.msra.mxu0 0.0
  %6490 = vmatprep.subr.mxu0 0.0
  %6491 = vmatpush1.msra.mxu0 0.0
  %6492 = vmatprep.subr.mxu0 0.0
  %6493 = vmatpush1.msra.mxu0 0.0
  %6494 = vmatprep.subr.mxu0 0.0
  %6495 = vmatpush1.msra.mxu0 0.0
  %6496 = vmatprep.subr.mxu0 0.0
  %6497 = vmatpush1.msra.mxu0 0.0
  %6498 = vmatprep.subr.mxu0 0.0
  %6499 = vmatpush1.msra.mxu0 0.0
  %6500 = vmatprep.subr.mxu0 0.0
  %6501 = vmatpush1.msra.mxu0 0.0
  %6502 = vmatprep.subr.mxu0 0.0
  %6503 = vmatpush1.msra.mxu0 0.0
  %6504 = vmatprep.subr.mxu0 0.0
  %6505 = vmatpush1.msra.mxu0 0.0
  %6506 = vmatprep.subr.mxu0 0.0
  %6507 = vmatpush1.msra.mxu0 0.0
  %6508 = vmatprep.subr.mxu0 0.0
  %6509 = vmatpush1.msra.mxu0 %v3728
  %6510 = vmatprep.subr.mxu0 0.0
  %6511 = vmatpush1.msra.mxu0 %v3727
  %6512 = vmatprep.subr.mxu0 0.0
  %6513 = vmatpush1.msra.mxu0 %v3726
  %6514 = vmatprep.subr.mxu0 0.0
  %6515 = vmatpush1.msra.mxu0 %v3725
  %6516 = vmatprep.subr.mxu0 0.0
  %6517 = vmatpush2.msra.mxu0 0.0
  %6518 = vmatprep.subr.mxu0 0.0
  %6519 = vmatpush2.msra.mxu0 0.0
  %6520 = vmatprep.subr.mxu0 0.0
  %6521 = vmatpush2.msra.mxu0 0.0
  %6522 = vmatprep.subr.mxu0 0.0
  %6523 = vmatpush2.msra.mxu0 0.0
  %6524 = vmatprep.subr.mxu0 0.0
  %6525 = vmatpush2.msra.mxu0 0.0
  %6526 = vmatprep.subr.mxu0 0.0
  %6527 = vmatpush2.msra.mxu0 0.0
  %6528 = vmatprep.subr.mxu0 0.0
  %6529 = vmatpush2.msra.mxu0 0.0
  %6530 = vmatprep.subr.mxu0 0.0
  %6531 = vmatpush2.msra.mxu0 0.0
  %6532 = vmatprep.subr.mxu0 0.0
  %6533 = vmatpush2.msra.mxu0 0.0
  %6534 = vmatprep.subr.mxu0 0.0
  %6535 = vmatpush2.msra.mxu0 0.0
  %6536 = vmatprep.subr.mxu0 0.0
  %6537 = vmatpush2.msra.mxu0 0.0
  %6538 = vmatprep.subr.mxu0 0.0
  %6539 = vmatpush2.msra.mxu0 0.0
  %6540 = vmatprep.subr.mxu0 0.0
  %6541 = vmatpush2.msra.mxu0 0.0
  %6542 = vmatprep.subr.mxu0 0.0
  %6543 = vmatpush2.msra.mxu0 0.0
  %6544 = vmatprep.subr.mxu0 0.0
  %6545 = vmatpush2.msra.mxu0 0.0
  %6546 = vmatprep.subr.mxu0 0.0
  %6547 = vmatpush2.msra.mxu0 0.0
  %6548 = vmatprep.mubr.f32.mxu0 0.0
  %6549 = vmatmul.mubr.f32.gmra.mxu0 %v6127
  %v6550 = vpop.f32.mrf.mxu0
  %v6551 = vadd.f32 0.0, %v6550
  %v6552 = vpop.f32.mrf.mxu0
  %6553 = vdwg.mxu0
  %v6554 = vadd.f32 %v3722, %v6551
  %v6555 = vxor.u32 %v6554, 2147483648
  %v6556 = vmul.f32 %v6555, 1.442695
  %v6557 = vpow.pop %v6556
  %v6558 = vadd.f32 %v6557, 1.0
  %v6559 = vrcp.pop %v6558
  %v6560 = vmul.f32 1.0, %v6559
  %v6561 = vtanh.pop %v6554
  %v6562 = vmul.f32 %v6560, %v6117
  %6564 = vrot.lane.b32.xlu0 %v6561, 64
  %v6565 = vpop.permute.xlu0 %6564
  %v6567 = vmul.f32 %v6560, %v6565
  %6569 = vrot.lane.b32.xlu0 %v6567, 32
  %v6570 = vpop.permute.xlu0 %6569
  %v6572 = vadd.f32 %v6562, %v6570
  %v6573 = vtanh.pop %v6572
  %6575 = vrot.lane.b32.xlu0 %v6573, 64
  %v6576 = vpop.permute.xlu0 %6575
  %v6578 = vmul.f32 %v6560, %v6576
  %6580 = vrot.lane.b32.xlu0 %v6578, 32
  %v6581 = vpop.permute.xlu0 %6580
  %v6582 = vsel %vm277, %v6581, 0
  %6584 = vmatprep.subr.mxu0 0.0
  %6585 = vmatpush1.msra.mxu0 0.0
  %6586 = vmatprep.subr.mxu0 0.0
  %6587 = vmatpush1.msra.mxu0 0.0
  %6588 = vmatprep.subr.mxu0 0.0
  %6589 = vmatpush1.msra.mxu0 0.0
  %6590 = vmatprep.subr.mxu0 0.0
  %6591 = vmatpush1.msra.mxu0 0.0
  %6592 = vmatprep.subr.mxu0 0.0
  %6593 = vmatpush1.msra.mxu0 0.0
  %6594 = vmatprep.subr.mxu0 0.0
  %6595 = vmatpush1.msra.mxu0 0.0
  %6596 = vmatprep.subr.mxu0 0.0
  %6597 = vmatpush1.msra.mxu0 0.0
  %6598 = vmatprep.subr.mxu0 0.0
  %6599 = vmatpush1.msra.mxu0 0.0
  %6600 = vmatprep.subr.mxu0 0.0
  %6601 = vmatpush1.msra.mxu0 0.0
  %6602 = vmatprep.subr.mxu0 0.0
  %6603 = vmatpush1.msra.mxu0 0.0
  %6604 = vmatprep.subr.mxu0 0.0
  %6605 = vmatpush1.msra.mxu0 0.0
  %6606 = vmatprep.subr.mxu0 0.0
  %6607 = vmatpush1.msra.mxu0 0.0
  %6608 = vmatprep.subr.mxu0 0.0
  %6609 = vmatpush1.msra.mxu0 %v3732
  %6610 = vmatprep.subr.mxu0 0.0
  %6611 = vmatpush1.msra.mxu0 %v3731
  %6612 = vmatprep.subr.mxu0 0.0
  %6613 = vmatpush1.msra.mxu0 %v3730
  %6614 = vmatprep.subr.mxu0 0.0
  %6615 = vmatpush1.msra.mxu0 %v3729
  %6616 = vmatprep.subr.mxu0 0.0
  %6617 = vmatpush2.msra.mxu0 0.0
  %6618 = vmatprep.subr.mxu0 0.0
  %6619 = vmatpush2.msra.mxu0 0.0
  %6620 = vmatprep.subr.mxu0 0.0
  %6621 = vmatpush2.msra.mxu0 0.0
  %6622 = vmatprep.subr.mxu0 0.0
  %6623 = vmatpush2.msra.mxu0 0.0
  %6624 = vmatprep.subr.mxu0 0.0
  %6625 = vmatpush2.msra.mxu0 0.0
  %6626 = vmatprep.subr.mxu0 0.0
  %6627 = vmatpush2.msra.mxu0 0.0
  %6628 = vmatprep.subr.mxu0 0.0
  %6629 = vmatpush2.msra.mxu0 0.0
  %6630 = vmatprep.subr.mxu0 0.0
  %6631 = vmatpush2.msra.mxu0 0.0
  %6632 = vmatprep.subr.mxu0 0.0
  %6633 = vmatpush2.msra.mxu0 0.0
  %6634 = vmatprep.subr.mxu0 0.0
  %6635 = vmatpush2.msra.mxu0 0.0
  %6636 = vmatprep.subr.mxu0 0.0
  %6637 = vmatpush2.msra.mxu0 0.0
  %6638 = vmatprep.subr.mxu0 0.0
  %6639 = vmatpush2.msra.mxu0 0.0
  %6640 = vmatprep.subr.mxu0 0.0
  %6641 = vmatpush2.msra.mxu0 0.0
  %6642 = vmatprep.subr.mxu0 0.0
  %6643 = vmatpush2.msra.mxu0 0.0
  %6644 = vmatprep.subr.mxu0 0.0
  %6645 = vmatpush2.msra.mxu0 0.0
  %6646 = vmatprep.subr.mxu0 0.0
  %6647 = vmatpush2.msra.mxu0 0.0
  %6648 = vmatprep.mubr.f32.mxu0 0.0
  %6649 = vmatmul.mubr.f32.gmra.mxu0 %v6582
  %v6650 = vpop.f32.mrf.mxu0
  %v6651 = vadd.f32 %v3836, %v6650
  %v6652 = vpop.f32.mrf.mxu0
  %6653 = vdwg.mxu0
  %v6654 = vmul.f32 %v6651, %v3919
  %v6655 = vsub.f32 %v6654, %v3923
  %v6656 = vmax.f32 %v6655, -6.0
  %v6657 = vmin.f32 %v6656, 6.0
  %v6658 = vmax.f32 %v6655, -4.0
  %v6659 = vmin.f32 %v6658, 4.0
  %v6660 = vand.u32 2147483647, %v6446
  %vm6661 = vcmp.le.f32.partialorder %v6660, 0.7853982
  %vm6662 = vcmp.lt.s32.totalorder %v6446, 0
  %v6663 = vand.u32 %v6446, 2139095040
  %v6664 = vshrl.u32 %v6663, 23
  %v6665 = vsub.s32 %v6664, 127
  %v6666 = vand.u32 2147483647, %v6446
  %v6667 = vand.u32 %v6666, 8388607
  %v6668 = vor.u32 %v6667, 8388608
  %v6669 = vsub.s32 0, %v6668
  %v6670 = vadd.s32 %v6665, 1
  %vm6671 = vcmp.gt.s32.totalorder %v6670, 0
  %v6672 = vsel %vm6671, %v6670, 0
  %v6673 = vshrl.u32 %v6672, 5
  %v6674 = vand.u32 %v6672, 31
  %v6675 = vsub.s32 32, %v6674
  %v6676 = vshrl.u32 683565275, %v6675
  %v6677 = vshll.u32 683565275, %v6674
  %v6678 = vshrl.u32 2475754826, %v6675
  %v6679 = vor.u32 %v6677, %v6678
  %v6680 = vshll.u32 2475754826, %v6674
  %v6681 = vshrl.u32 2131351028, %v6675
  %v6682 = vor.u32 %v6680, %v6681
  %v6683 = vshll.u32 2131351028, %v6674
  %v6684 = vshrl.u32 2102212464, %v6675
  %v6685 = vor.u32 %v6683, %v6684
  %v6686 = vshll.u32 2102212464, %v6674
  %v6687 = vshrl.u32 920167782, %v6675
  %v6688 = vor.u32 %v6686, %v6687
  %v6689 = vshll.u32 920167782, %v6674
  %v6690 = vshrl.u32 1326507024, %v6675
  %v6691 = vor.u32 %v6689, %v6690
  %vm6692 = vcmp.lt.s32.totalorder %v6673, 1
  %vm6693 = vcmp.lt.s32.totalorder %v6673, 2
  %vm6694 = vcmp.lt.s32.totalorder %v6673, 3
  %vm6695 = vcmp.lt.s32.totalorder %v6673, 4
  %v6696 = vsel %vm6692, %v6676, %v6679
  %v6697 = vsel %vm6695, %v6685, 2102212464
  %v6698 = vsel %vm6694, %v6682, %v6697
  %v6699 = vsel %vm6693, %v6696, %v6698
  %v6700 = vsel %vm6692, %v6679, %v6682
  %v6701 = vsel %vm6695, %v6688, 920167782
  %v6702 = vsel %vm6694, %v6685, %v6701
  %v6703 = vsel %vm6693, %v6700, %v6702
  %v6704 = vsel %vm6692, %v6682, %v6685
  %v6705 = vsel %vm6695, %v6691, 1326507024
  %v6706 = vsel %vm6694, %v6688, %v6705
  %v6707 = vsel %vm6693, %v6704, %v6706
  %v6708 = vshll.u32 %v6668, 8
  %v6709 = vmul.u32.u64.compose %v6708, %v6707
  %v6710 = vextract.low.u32 %v6709
  %v6711 = vextract.high.u32 %v6709
  %v6712 = vmul.u32.u64.compose %v6708, %v6703
  %v6713 = vextract.low.u32 %v6712
  %v6714 = vextract.high.u32 %v6712
  %v6715 = vmul.u32 %v6708, %v6699
  %v6716 = vadd.s32 %v6711, %v6713
  %vm6717 = vc.u32 %v6711, %v6713
  %v6718 = vadd.s32 %v6714, 1
  %v6719 = vsel %vm6717, %v6718, %v6714
  %v6720 = vadd.s32 %v6715, %v6719
  %v6721 = vadd.s32 %v6720, 536870912
  %v6722 = vshrl.u32 %v6721, 30
  %v6723 = vshll.u32 %v6722, 30
  %v6724 = vsub.s32 %v6720, %v6723
  %vm6725 = vcmp.lt.s32.totalorder %v6724, 0
  %v6726 = vsub.s32 0, %v6724
  %v6727 = vsel %vm6725, %v6726, %v6724
  %v6728 = vclz %v6727
  %v6729 = vsub.s32 %v6728, 2
  %vm6730 = vcmp.gt.s32.totalorder 0, %v6729
  %v6731 = vsel %vm6730, 0, %v6729
  %v6732 = vsub.s32 32, %v6731
  %v6733 = vshll.u32 %v6724, %v6731
  %v6734 = vshrl.u32 %v6716, %v6732
  %v6735 = vor.u32 %v6733, %v6734
  %v6736 = vsub.s32 4294967266, %v6731
  %v6737 = vadd.s32 %v6736, 127
  %v6738 = vshll.u32 %v6737, 23
  %v6739 = vor.u32 4788187, %v6738
  %v6740 = vand.u32 2147483647, %v6739
  %v6742 = vcvt.s32.f32 %v6735
  %v6743 = vmul.f32 %v6742, %v6740
  %v6744 = vxor.u32 %v6743, 2147483648
  %v6745 = vsel %vm6662, %v6744, %v6743
  %v6746 = vsub.s32 4, %v6722
  %v6747 = vsel %vm6662, %v6746, %v6722
  %v6748 = vsel %vm6661, %v6446, %v6745
  %v6749 = vsel %vm6661, 0, %v6747
  %v6750 = vcosq.f32.pop %v6748
  %v6751 = vsinq.f32.pop %v6748
  %vm6752 = vweird.f32 %v6446
  %v6753 = vand.u32 %v6749, 3
  %vm6754 = vcmp.lt.s32.totalorder %v6753, 2
  %vm6755 = vcmp.eq.s32.totalorder %v6753, 0
  %v6756 = vxor.u32 %v6751, 2147483648
  %v6757 = vsel %vm6755, %v6750, %v6756
  %vm6758 = vcmp.eq.s32.totalorder %v6753, 2
  %v6759 = vxor.u32 %v6750, 2147483648
  %v6760 = vsel %vm6758, %v6759, %v6751
  %v6761 = vsel %vm6754, %v6757, %v6760
  %v6762 = vsel %vm6752, nan, %v6761
  %6764 = vrot.lane.b32.xlu0 %v6762, 127
  %v6765 = vpop.permute.xlu0 %6764
  %v6767 = vmul.f32 %v6446, %v6765
  %v6768 = vand.u32 2147483647, %v6446
  %vm6769 = vcmp.le.f32.partialorder %v6768, 0.7853982
  %vm6770 = vcmp.lt.s32.totalorder %v6446, 0
  %v6771 = vand.u32 %v6446, 2139095040
  %v6772 = vshrl.u32 %v6771, 23
  %v6773 = vsub.s32 %v6772, 127
  %v6774 = vand.u32 2147483647, %v6446
  %v6775 = vand.u32 %v6774, 8388607
  %v6776 = vor.u32 %v6775, 8388608
  %v6777 = vsub.s32 0, %v6776
  %v6778 = vadd.s32 %v6773, 1
  %vm6779 = vcmp.gt.s32.totalorder %v6778, 0
  %v6780 = vsel %vm6779, %v6778, 0
  %v6781 = vshrl.u32 %v6780, 5
  %v6782 = vand.u32 %v6780, 31
  %v6783 = vsub.s32 32, %v6782
  %v6784 = vshrl.u32 683565275, %v6783
  %v6785 = vshll.u32 683565275, %v6782
  %v6786 = vshrl.u32 2475754826, %v6783
  %v6787 = vor.u32 %v6785, %v6786
  %v6788 = vshll.u32 2475754826, %v6782
  %v6789 = vshrl.u32 2131351028, %v6783
  %v6790 = vor.u32 %v6788, %v6789
  %v6791 = vshll.u32 2131351028, %v6782
  %v6792 = vshrl.u32 2102212464, %v6783
  %v6793 = vor.u32 %v6791, %v6792
  %v6794 = vshll.u32 2102212464, %v6782
  %v6795 = vshrl.u32 920167782, %v6783
  %v6796 = vor.u32 %v6794, %v6795
  %v6797 = vshll.u32 920167782, %v6782
  %v6798 = vshrl.u32 1326507024, %v6783
  %v6799 = vor.u32 %v6797, %v6798
  %vm6800 = vcmp.lt.s32.totalorder %v6781, 1
  %vm6801 = vcmp.lt.s32.totalorder %v6781, 2
  %vm6802 = vcmp.lt.s32.totalorder %v6781, 3
  %vm6803 = vcmp.lt.s32.totalorder %v6781, 4
  %v6804 = vsel %vm6800, %v6784, %v6787
  %v6805 = vsel %vm6803, %v6793, 2102212464
  %v6806 = vsel %vm6802, %v6790, %v6805
  %v6807 = vsel %vm6801, %v6804, %v6806
  %v6808 = vsel %vm6800, %v6787, %v6790
  %v6809 = vsel %vm6803, %v6796, 920167782
  %v6810 = vsel %vm6802, %v6793, %v6809
  %v6811 = vsel %vm6801, %v6808, %v6810
  %v6812 = vsel %vm6800, %v6790, %v6793
  %v6813 = vsel %vm6803, %v6799, 1326507024
  %v6814 = vsel %vm6802, %v6796, %v6813
  %v6815 = vsel %vm6801, %v6812, %v6814
  %v6816 = vshll.u32 %v6776, 8
  %v6817 = vmul.u32.u64.compose %v6816, %v6815
  %v6818 = vextract.low.u32 %v6817
  %v6819 = vextract.high.u32 %v6817
  %v6820 = vmul.u32.u64.compose %v6816, %v6811
  %v6821 = vextract.low.u32 %v6820
  %v6822 = vextract.high.u32 %v6820
  %v6823 = vmul.u32 %v6816, %v6807
  %v6824 = vadd.s32 %v6819, %v6821
  %vm6825 = vc.u32 %v6819, %v6821
  %v6826 = vadd.s32 %v6822, 1
  %v6827 = vsel %vm6825, %v6826, %v6822
  %v6828 = vadd.s32 %v6823, %v6827
  %v6829 = vadd.s32 %v6828, 536870912
  %v6830 = vshrl.u32 %v6829, 30
  %v6831 = vshll.u32 %v6830, 30
  %v6832 = vsub.s32 %v6828, %v6831
  %vm6833 = vcmp.lt.s32.totalorder %v6832, 0
  %v6834 = vsub.s32 0, %v6832
  %v6835 = vsel %vm6833, %v6834, %v6832
  %v6836 = vclz %v6835
  %v6837 = vsub.s32 %v6836, 2
  %vm6838 = vcmp.gt.s32.totalorder 0, %v6837
  %v6839 = vsel %vm6838, 0, %v6837
  %v6840 = vsub.s32 32, %v6839
  %v6841 = vshll.u32 %v6832, %v6839
  %v6842 = vshrl.u32 %v6824, %v6840
  %v6843 = vor.u32 %v6841, %v6842
  %v6844 = vsub.s32 4294967266, %v6839
  %v6845 = vadd.s32 %v6844, 127
  %v6846 = vshll.u32 %v6845, 23
  %v6847 = vor.u32 4788187, %v6846
  %v6848 = vand.u32 2147483647, %v6847
  %v6850 = vcvt.s32.f32 %v6843
  %v6851 = vmul.f32 %v6850, %v6848
  %v6852 = vxor.u32 %v6851, 2147483648
  %v6853 = vsel %vm6770, %v6852, %v6851
  %v6854 = vsub.s32 4, %v6830
  %v6855 = vsel %vm6770, %v6854, %v6830
  %v6856 = vsel %vm6769, %v6446, %v6853
  %v6857 = vsel %vm6769, 0, %v6855
  %v6858 = vcosq.f32.pop %v6856
  %v6859 = vsinq.f32.pop %v6856
  %vm6860 = vweird.f32 %v6446
  %v6861 = vadd.s32 %v6857, 3
  %v6862 = vand.u32 %v6861, 3
  %vm6863 = vcmp.lt.s32.totalorder %v6862, 2
  %vm6864 = vcmp.eq.s32.totalorder %v6862, 0
  %v6865 = vxor.u32 %v6859, 2147483648
  %v6866 = vsel %vm6864, %v6858, %v6865
  %vm6867 = vcmp.eq.s32.totalorder %v6862, 2
  %v6868 = vxor.u32 %v6858, 2147483648
  %v6869 = vsel %vm6867, %v6868, %v6859
  %v6870 = vsel %vm6863, %v6866, %v6869
  %v6871 = vsel %vm6860, nan, %v6870
  %6873 = vrot.lane.b32.xlu0 %v6871, 127
  %v6874 = vpop.permute.xlu0 %6873
  %v6876 = vmul.f32 %v6446, %v6874
  %6878 = vset.pattern.permute.xlu0 0
  %6879 = vperm.xlu0 %6878, %v6657
  %v6880 = vpop.permute.xlu0 %6879
  %6883 = vset.pattern.permute.xlu0 1
  %6884 = vperm.xlu0 %6883, %v6659
  %v6885 = vpop.permute.xlu0 %6884
  %v6887 = vsel %vm4149, %v6880, %v6885
  %6889 = vset.pattern.permute.xlu0 2
  %6890 = vperm.xlu0 %6889, %v6876
  %v6891 = vpop.permute.xlu0 %6890
  %v6893 = vsel %vm4039, %v6891, %v6887
  %6895 = vset.pattern.permute.xlu0 2
  %6896 = vperm.xlu0 %6895, %v6767
  %v6897 = vpop.permute.xlu0 %6896
  %v6899 = vsel %vm3930, %v6897, %v6893
  %v6900 = vmul.f32 %v6899, 0.1
  %v6901 = vadd.f32 %v6446, %v6900
  %s6902 = scalar_lea.vmem %s75, 12
  %6903 = vst.msk [vmem:[%s6902] sm:$0x3] %vm4175, %v6901
  %v6904 = vadd.f32 %v6901, %v167
  %v6905 = vmul.f32 %v6904, %v175
  %v6906 = vrot.slane %v2595, 4
  %v6908 = vsub.f32 %v6905, %v6906
  %6909 = vrot.lane.b32.xlu0 %v6906, 124
  %v6910 = vpop.permute.xlu0 %6909
  %v6912 = vsub.f32 %v6651, %v6910
  %v6913 = vmul.f32 %v6908, %v6908
  %v6914 = vsel %vm4175, %v6913, 0.0
  %6915 = vadd.xlane.f32.xlu0 %v6914
  %v6916 = vpop.xlane.xlu0 %6915
  %v6917 = vrot.slane %v6916, 4
  %v6918 = vadd.f32 %v6916, %v6917
  %v6919 = vrot.slane %v6918, 2
  %v6920 = vadd.f32 %v6918, %v6919
  %v6921 = vrot.slane %v6920, 1
  %v6922 = vadd.f32 %v6920, %v6921
  %s6923 = vtos %v6922
  %v6924 = vstv %s6923
  %v6925 = vadd.f32 %v6483, %v6924
  %v6926 = vmul.f32 %v6912, %v6912
  %v6927 = vsel %vm4198, %v6926, 0.0
  %6928 = vadd.xlane.f32.xlu0 %v6927
  %v6929 = vpop.xlane.xlu0 %6928
  %v6930 = vrot.slane %v6929, 4
  %v6931 = vadd.f32 %v6929, %v6930
  %v6932 = vrot.slane %v6931, 2
  %v6933 = vadd.f32 %v6931, %v6932
  %v6934 = vrot.slane %v6933, 1
  %v6935 = vadd.f32 %v6933, %v6934
  %s6936 = vtos %v6935
  %v6937 = vstv %s6936
  %v6938 = vadd.f32 %v6925, %v6937
  %6939 = vmatprep.subr.mxu0 0.0
  %6940 = vmatpush1.msra.mxu0 0.0
  %6941 = vmatprep.subr.mxu0 0.0
  %6942 = vmatpush1.msra.mxu0 0.0
  %6943 = vmatprep.subr.mxu0 0.0
  %6944 = vmatpush1.msra.mxu0 0.0
  %6945 = vmatprep.subr.mxu0 0.0
  %6946 = vmatpush1.msra.mxu0 0.0
  %6947 = vmatprep.subr.mxu0 0.0
  %6948 = vmatpush1.msra.mxu0 0.0
  %6949 = vmatprep.subr.mxu0 0.0
  %6950 = vmatpush1.msra.mxu0 0.0
  %6951 = vmatprep.subr.mxu0 0.0
  %6952 = vmatpush1.msra.mxu0 0.0
  %6953 = vmatprep.subr.mxu0 0.0
  %6954 = vmatpush1.msra.mxu0 0.0
  %6955 = vmatprep.subr.mxu0 0.0
  %6956 = vmatpush1.msra.mxu0 0.0
  %6957 = vmatprep.subr.mxu0 0.0
  %6958 = vmatpush1.msra.mxu0 0.0
  %6959 = vmatprep.subr.mxu0 0.0
  %6960 = vmatpush1.msra.mxu0 0.0
  %6961 = vmatprep.subr.mxu0 0.0
  %6962 = vmatpush1.msra.mxu0 0.0
  %6963 = vmatprep.subr.mxu0 0.0
  %6964 = vmatpush1.msra.mxu0 %v3728
  %6965 = vmatprep.subr.mxu0 0.0
  %6966 = vmatpush1.msra.mxu0 %v3727
  %6967 = vmatprep.subr.mxu0 0.0
  %6968 = vmatpush1.msra.mxu0 %v3726
  %6969 = vmatprep.subr.mxu0 0.0
  %6970 = vmatpush1.msra.mxu0 %v3725
  %6971 = vmatprep.subr.mxu0 0.0
  %6972 = vmatpush2.msra.mxu0 0.0
  %6973 = vmatprep.subr.mxu0 0.0
  %6974 = vmatpush2.msra.mxu0 0.0
  %6975 = vmatprep.subr.mxu0 0.0
  %6976 = vmatpush2.msra.mxu0 0.0
  %6977 = vmatprep.subr.mxu0 0.0
  %6978 = vmatpush2.msra.mxu0 0.0
  %6979 = vmatprep.subr.mxu0 0.0
  %6980 = vmatpush2.msra.mxu0 0.0
  %6981 = vmatprep.subr.mxu0 0.0
  %6982 = vmatpush2.msra.mxu0 0.0
  %6983 = vmatprep.subr.mxu0 0.0
  %6984 = vmatpush2.msra.mxu0 0.0
  %6985 = vmatprep.subr.mxu0 0.0
  %6986 = vmatpush2.msra.mxu0 0.0
  %6987 = vmatprep.subr.mxu0 0.0
  %6988 = vmatpush2.msra.mxu0 0.0
  %6989 = vmatprep.subr.mxu0 0.0
  %6990 = vmatpush2.msra.mxu0 0.0
  %6991 = vmatprep.subr.mxu0 0.0
  %6992 = vmatpush2.msra.mxu0 0.0
  %6993 = vmatprep.subr.mxu0 0.0
  %6994 = vmatpush2.msra.mxu0 0.0
  %6995 = vmatprep.subr.mxu0 0.0
  %6996 = vmatpush2.msra.mxu0 0.0
  %6997 = vmatprep.subr.mxu0 0.0
  %6998 = vmatpush2.msra.mxu0 0.0
  %6999 = vmatprep.subr.mxu0 0.0
  %7000 = vmatpush2.msra.mxu0 0.0
  %7001 = vmatprep.subr.mxu0 0.0
  %7002 = vmatpush2.msra.mxu0 0.0
  %7003 = vmatprep.mubr.f32.mxu0 0.0
  %7004 = vmatmul.mubr.f32.gmra.mxu0 %v6582
  %v7005 = vpop.f32.mrf.mxu0
  %v7006 = vadd.f32 0.0, %v7005
  %v7007 = vpop.f32.mrf.mxu0
  %7008 = vdwg.mxu0
  %v7009 = vadd.f32 %v3722, %v7006
  %v7010 = vxor.u32 %v7009, 2147483648
  %v7011 = vmul.f32 %v7010, 1.442695
  %v7012 = vpow.pop %v7011
  %v7013 = vadd.f32 %v7012, 1.0
  %v7014 = vrcp.pop %v7013
  %v7015 = vmul.f32 1.0, %v7014
  %v7016 = vtanh.pop %v7009
  %v7017 = vmul.f32 %v7015, %v6572
  %7019 = vrot.lane.b32.xlu0 %v7016, 64
  %v7020 = vpop.permute.xlu0 %7019
  %v7022 = vmul.f32 %v7015, %v7020
  %7024 = vrot.lane.b32.xlu0 %v7022, 32
  %v7025 = vpop.permute.xlu0 %7024
  %v7027 = vadd.f32 %v7017, %v7025
  %v7028 = vtanh.pop %v7027
  %7030 = vrot.lane.b32.xlu0 %v7028, 64
  %v7031 = vpop.permute.xlu0 %7030
  %v7033 = vmul.f32 %v7015, %v7031
  %7035 = vrot.lane.b32.xlu0 %v7033, 32
  %v7036 = vpop.permute.xlu0 %7035
  %v7037 = vsel %vm277, %v7036, 0
  %7039 = vmatprep.subr.mxu0 0.0
  %7040 = vmatpush1.msra.mxu0 0.0
  %7041 = vmatprep.subr.mxu0 0.0
  %7042 = vmatpush1.msra.mxu0 0.0
  %7043 = vmatprep.subr.mxu0 0.0
  %7044 = vmatpush1.msra.mxu0 0.0
  %7045 = vmatprep.subr.mxu0 0.0
  %7046 = vmatpush1.msra.mxu0 0.0
  %7047 = vmatprep.subr.mxu0 0.0
  %7048 = vmatpush1.msra.mxu0 0.0
  %7049 = vmatprep.subr.mxu0 0.0
  %7050 = vmatpush1.msra.mxu0 0.0
  %7051 = vmatprep.subr.mxu0 0.0
  %7052 = vmatpush1.msra.mxu0 0.0
  %7053 = vmatprep.subr.mxu0 0.0
  %7054 = vmatpush1.msra.mxu0 0.0
  %7055 = vmatprep.subr.mxu0 0.0
  %7056 = vmatpush1.msra.mxu0 0.0
  %7057 = vmatprep.subr.mxu0 0.0
  %7058 = vmatpush1.msra.mxu0 0.0
  %7059 = vmatprep.subr.mxu0 0.0
  %7060 = vmatpush1.msra.mxu0 0.0
  %7061 = vmatprep.subr.mxu0 0.0
  %7062 = vmatpush1.msra.mxu0 0.0
  %7063 = vmatprep.subr.mxu0 0.0
  %7064 = vmatpush1.msra.mxu0 %v3732
  %7065 = vmatprep.subr.mxu0 0.0
  %7066 = vmatpush1.msra.mxu0 %v3731
  %7067 = vmatprep.subr.mxu0 0.0
  %7068 = vmatpush1.msra.mxu0 %v3730
  %7069 = vmatprep.subr.mxu0 0.0
  %7070 = vmatpush1.msra.mxu0 %v3729
  %7071 = vmatprep.subr.mxu0 0.0
  %7072 = vmatpush2.msra.mxu0 0.0
  %7073 = vmatprep.subr.mxu0 0.0
  %7074 = vmatpush2.msra.mxu0 0.0
  %7075 = vmatprep.subr.mxu0 0.0
  %7076 = vmatpush2.msra.mxu0 0.0
  %7077 = vmatprep.subr.mxu0 0.0
  %7078 = vmatpush2.msra.mxu0 0.0
  %7079 = vmatprep.subr.mxu0 0.0
  %7080 = vmatpush2.msra.mxu0 0.0
  %7081 = vmatprep.subr.mxu0 0.0
  %7082 = vmatpush2.msra.mxu0 0.0
  %7083 = vmatprep.subr.mxu0 0.0
  %7084 = vmatpush2.msra.mxu0 0.0
  %7085 = vmatprep.subr.mxu0 0.0
  %7086 = vmatpush2.msra.mxu0 0.0
  %7087 = vmatprep.subr.mxu0 0.0
  %7088 = vmatpush2.msra.mxu0 0.0
  %7089 = vmatprep.subr.mxu0 0.0
  %7090 = vmatpush2.msra.mxu0 0.0
  %7091 = vmatprep.subr.mxu0 0.0
  %7092 = vmatpush2.msra.mxu0 0.0
  %7093 = vmatprep.subr.mxu0 0.0
  %7094 = vmatpush2.msra.mxu0 0.0
  %7095 = vmatprep.subr.mxu0 0.0
  %7096 = vmatpush2.msra.mxu0 0.0
  %7097 = vmatprep.subr.mxu0 0.0
  %7098 = vmatpush2.msra.mxu0 0.0
  %7099 = vmatprep.subr.mxu0 0.0
  %7100 = vmatpush2.msra.mxu0 0.0
  %7101 = vmatprep.subr.mxu0 0.0
  %7102 = vmatpush2.msra.mxu0 0.0
  %7103 = vmatprep.mubr.f32.mxu0 0.0
  %7104 = vmatmul.mubr.f32.gmra.mxu0 %v7037
  %v7105 = vpop.f32.mrf.mxu0
  %v7106 = vadd.f32 %v3836, %v7105
  %v7107 = vpop.f32.mrf.mxu0
  %7108 = vdwg.mxu0
  %v7109 = vmul.f32 %v7106, %v3919
  %v7110 = vsub.f32 %v7109, %v3923
  %v7111 = vmax.f32 %v7110, -6.0
  %v7112 = vmin.f32 %v7111, 6.0
  %v7113 = vmax.f32 %v7110, -4.0
  %v7114 = vmin.f32 %v7113, 4.0
  %v7115 = vand.u32 2147483647, %v6901
  %vm7116 = vcmp.le.f32.partialorder %v7115, 0.7853982
  %vm7117 = vcmp.lt.s32.totalorder %v6901, 0
  %v7118 = vand.u32 %v6901, 2139095040
  %v7119 = vshrl.u32 %v7118, 23
  %v7120 = vsub.s32 %v7119, 127
  %v7121 = vand.u32 2147483647, %v6901
  %v7122 = vand.u32 %v7121, 8388607
  %v7123 = vor.u32 %v7122, 8388608
  %v7124 = vsub.s32 0, %v7123
  %v7125 = vadd.s32 %v7120, 1
  %vm7126 = vcmp.gt.s32.totalorder %v7125, 0
  %v7127 = vsel %vm7126, %v7125, 0
  %v7128 = vshrl.u32 %v7127, 5
  %v7129 = vand.u32 %v7127, 31
  %v7130 = vsub.s32 32, %v7129
  %v7131 = vshrl.u32 683565275, %v7130
  %v7132 = vshll.u32 683565275, %v7129
  %v7133 = vshrl.u32 2475754826, %v7130
  %v7134 = vor.u32 %v7132, %v7133
  %v7135 = vshll.u32 2475754826, %v7129
  %v7136 = vshrl.u32 2131351028, %v7130
  %v7137 = vor.u32 %v7135, %v7136
  %v7138 = vshll.u32 2131351028, %v7129
  %v7139 = vshrl.u32 2102212464, %v7130
  %v7140 = vor.u32 %v7138, %v7139
  %v7141 = vshll.u32 2102212464, %v7129
  %v7142 = vshrl.u32 920167782, %v7130
  %v7143 = vor.u32 %v7141, %v7142
  %v7144 = vshll.u32 920167782, %v7129
  %v7145 = vshrl.u32 1326507024, %v7130
  %v7146 = vor.u32 %v7144, %v7145
  %vm7147 = vcmp.lt.s32.totalorder %v7128, 1
  %vm7148 = vcmp.lt.s32.totalorder %v7128, 2
  %vm7149 = vcmp.lt.s32.totalorder %v7128, 3
  %vm7150 = vcmp.lt.s32.totalorder %v7128, 4
  %v7151 = vsel %vm7147, %v7131, %v7134
  %v7152 = vsel %vm7150, %v7140, 2102212464
  %v7153 = vsel %vm7149, %v7137, %v7152
  %v7154 = vsel %vm7148, %v7151, %v7153
  %v7155 = vsel %vm7147, %v7134, %v7137
  %v7156 = vsel %vm7150, %v7143, 920167782
  %v7157 = vsel %vm7149, %v7140, %v7156
  %v7158 = vsel %vm7148, %v7155, %v7157
  %v7159 = vsel %vm7147, %v7137, %v7140
  %v7160 = vsel %vm7150, %v7146, 1326507024
  %v7161 = vsel %vm7149, %v7143, %v7160
  %v7162 = vsel %vm7148, %v7159, %v7161
  %v7163 = vshll.u32 %v7123, 8
  %v7164 = vmul.u32.u64.compose %v7163, %v7162
  %v7165 = vextract.low.u32 %v7164
  %v7166 = vextract.high.u32 %v7164
  %v7167 = vmul.u32.u64.compose %v7163, %v7158
  %v7168 = vextract.low.u32 %v7167
  %v7169 = vextract.high.u32 %v7167
  %v7170 = vmul.u32 %v7163, %v7154
  %v7171 = vadd.s32 %v7166, %v7168
  %vm7172 = vc.u32 %v7166, %v7168
  %v7173 = vadd.s32 %v7169, 1
  %v7174 = vsel %vm7172, %v7173, %v7169
  %v7175 = vadd.s32 %v7170, %v7174
  %v7176 = vadd.s32 %v7175, 536870912
  %v7177 = vshrl.u32 %v7176, 30
  %v7178 = vshll.u32 %v7177, 30
  %v7179 = vsub.s32 %v7175, %v7178
  %vm7180 = vcmp.lt.s32.totalorder %v7179, 0
  %v7181 = vsub.s32 0, %v7179
  %v7182 = vsel %vm7180, %v7181, %v7179
  %v7183 = vclz %v7182
  %v7184 = vsub.s32 %v7183, 2
  %vm7185 = vcmp.gt.s32.totalorder 0, %v7184
  %v7186 = vsel %vm7185, 0, %v7184
  %v7187 = vsub.s32 32, %v7186
  %v7188 = vshll.u32 %v7179, %v7186
  %v7189 = vshrl.u32 %v7171, %v7187
  %v7190 = vor.u32 %v7188, %v7189
  %v7191 = vsub.s32 4294967266, %v7186
  %v7192 = vadd.s32 %v7191, 127
  %v7193 = vshll.u32 %v7192, 23
  %v7194 = vor.u32 4788187, %v7193
  %v7195 = vand.u32 2147483647, %v7194
  %v7197 = vcvt.s32.f32 %v7190
  %v7198 = vmul.f32 %v7197, %v7195
  %v7199 = vxor.u32 %v7198, 2147483648
  %v7200 = vsel %vm7117, %v7199, %v7198
  %v7201 = vsub.s32 4, %v7177
  %v7202 = vsel %vm7117, %v7201, %v7177
  %v7203 = vsel %vm7116, %v6901, %v7200
  %v7204 = vsel %vm7116, 0, %v7202
  %v7205 = vcosq.f32.pop %v7203
  %v7206 = vsinq.f32.pop %v7203
  %vm7207 = vweird.f32 %v6901
  %v7208 = vand.u32 %v7204, 3
  %vm7209 = vcmp.lt.s32.totalorder %v7208, 2
  %vm7210 = vcmp.eq.s32.totalorder %v7208, 0
  %v7211 = vxor.u32 %v7206, 2147483648
  %v7212 = vsel %vm7210, %v7205, %v7211
  %vm7213 = vcmp.eq.s32.totalorder %v7208, 2
  %v7214 = vxor.u32 %v7205, 2147483648
  %v7215 = vsel %vm7213, %v7214, %v7206
  %v7216 = vsel %vm7209, %v7212, %v7215
  %v7217 = vsel %vm7207, nan, %v7216
  %7219 = vrot.lane.b32.xlu0 %v7217, 127
  %v7220 = vpop.permute.xlu0 %7219
  %v7222 = vmul.f32 %v6901, %v7220
  %v7223 = vand.u32 2147483647, %v6901
  %vm7224 = vcmp.le.f32.partialorder %v7223, 0.7853982
  %vm7225 = vcmp.lt.s32.totalorder %v6901, 0
  %v7226 = vand.u32 %v6901, 2139095040
  %v7227 = vshrl.u32 %v7226, 23
  %v7228 = vsub.s32 %v7227, 127
  %v7229 = vand.u32 2147483647, %v6901
  %v7230 = vand.u32 %v7229, 8388607
  %v7231 = vor.u32 %v7230, 8388608
  %v7232 = vsub.s32 0, %v7231
  %v7233 = vadd.s32 %v7228, 1
  %vm7234 = vcmp.gt.s32.totalorder %v7233, 0
  %v7235 = vsel %vm7234, %v7233, 0
  %v7236 = vshrl.u32 %v7235, 5
  %v7237 = vand.u32 %v7235, 31
  %v7238 = vsub.s32 32, %v7237
  %v7239 = vshrl.u32 683565275, %v7238
  %v7240 = vshll.u32 683565275, %v7237
  %v7241 = vshrl.u32 2475754826, %v7238
  %v7242 = vor.u32 %v7240, %v7241
  %v7243 = vshll.u32 2475754826, %v7237
  %v7244 = vshrl.u32 2131351028, %v7238
  %v7245 = vor.u32 %v7243, %v7244
  %v7246 = vshll.u32 2131351028, %v7237
  %v7247 = vshrl.u32 2102212464, %v7238
  %v7248 = vor.u32 %v7246, %v7247
  %v7249 = vshll.u32 2102212464, %v7237
  %v7250 = vshrl.u32 920167782, %v7238
  %v7251 = vor.u32 %v7249, %v7250
  %v7252 = vshll.u32 920167782, %v7237
  %v7253 = vshrl.u32 1326507024, %v7238
  %v7254 = vor.u32 %v7252, %v7253
  %vm7255 = vcmp.lt.s32.totalorder %v7236, 1
  %vm7256 = vcmp.lt.s32.totalorder %v7236, 2
  %vm7257 = vcmp.lt.s32.totalorder %v7236, 3
  %vm7258 = vcmp.lt.s32.totalorder %v7236, 4
  %v7259 = vsel %vm7255, %v7239, %v7242
  %v7260 = vsel %vm7258, %v7248, 2102212464
  %v7261 = vsel %vm7257, %v7245, %v7260
  %v7262 = vsel %vm7256, %v7259, %v7261
  %v7263 = vsel %vm7255, %v7242, %v7245
  %v7264 = vsel %vm7258, %v7251, 920167782
  %v7265 = vsel %vm7257, %v7248, %v7264
  %v7266 = vsel %vm7256, %v7263, %v7265
  %v7267 = vsel %vm7255, %v7245, %v7248
  %v7268 = vsel %vm7258, %v7254, 1326507024
  %v7269 = vsel %vm7257, %v7251, %v7268
  %v7270 = vsel %vm7256, %v7267, %v7269
  %v7271 = vshll.u32 %v7231, 8
  %v7272 = vmul.u32.u64.compose %v7271, %v7270
  %v7273 = vextract.low.u32 %v7272
  %v7274 = vextract.high.u32 %v7272
  %v7275 = vmul.u32.u64.compose %v7271, %v7266
  %v7276 = vextract.low.u32 %v7275
  %v7277 = vextract.high.u32 %v7275
  %v7278 = vmul.u32 %v7271, %v7262
  %v7279 = vadd.s32 %v7274, %v7276
  %vm7280 = vc.u32 %v7274, %v7276
  %v7281 = vadd.s32 %v7277, 1
  %v7282 = vsel %vm7280, %v7281, %v7277
  %v7283 = vadd.s32 %v7278, %v7282
  %v7284 = vadd.s32 %v7283, 536870912
  %v7285 = vshrl.u32 %v7284, 30
  %v7286 = vshll.u32 %v7285, 30
  %v7287 = vsub.s32 %v7283, %v7286
  %vm7288 = vcmp.lt.s32.totalorder %v7287, 0
  %v7289 = vsub.s32 0, %v7287
  %v7290 = vsel %vm7288, %v7289, %v7287
  %v7291 = vclz %v7290
  %v7292 = vsub.s32 %v7291, 2
  %vm7293 = vcmp.gt.s32.totalorder 0, %v7292
  %v7294 = vsel %vm7293, 0, %v7292
  %v7295 = vsub.s32 32, %v7294
  %v7296 = vshll.u32 %v7287, %v7294
  %v7297 = vshrl.u32 %v7279, %v7295
  %v7298 = vor.u32 %v7296, %v7297
  %v7299 = vsub.s32 4294967266, %v7294
  %v7300 = vadd.s32 %v7299, 127
  %v7301 = vshll.u32 %v7300, 23
  %v7302 = vor.u32 4788187, %v7301
  %v7303 = vand.u32 2147483647, %v7302
  %v7305 = vcvt.s32.f32 %v7298
  %v7306 = vmul.f32 %v7305, %v7303
  %v7307 = vxor.u32 %v7306, 2147483648
  %v7308 = vsel %vm7225, %v7307, %v7306
  %v7309 = vsub.s32 4, %v7285
  %v7310 = vsel %vm7225, %v7309, %v7285
  %v7311 = vsel %vm7224, %v6901, %v7308
  %v7312 = vsel %vm7224, 0, %v7310
  %v7313 = vcosq.f32.pop %v7311
  %v7314 = vsinq.f32.pop %v7311
  %vm7315 = vweird.f32 %v6901
  %v7316 = vadd.s32 %v7312, 3
  %v7317 = vand.u32 %v7316, 3
  %vm7318 = vcmp.lt.s32.totalorder %v7317, 2
  %vm7319 = vcmp.eq.s32.totalorder %v7317, 0
  %v7320 = vxor.u32 %v7314, 2147483648
  %v7321 = vsel %vm7319, %v7313, %v7320
  %vm7322 = vcmp.eq.s32.totalorder %v7317, 2
  %v7323 = vxor.u32 %v7313, 2147483648
  %v7324 = vsel %vm7322, %v7323, %v7314
  %v7325 = vsel %vm7318, %v7321, %v7324
  %v7326 = vsel %vm7315, nan, %v7325
  %7328 = vrot.lane.b32.xlu0 %v7326, 127
  %v7329 = vpop.permute.xlu0 %7328
  %v7331 = vmul.f32 %v6901, %v7329
  %7333 = vset.pattern.permute.xlu0 0
  %7334 = vperm.xlu0 %7333, %v7112
  %v7335 = vpop.permute.xlu0 %7334
  %7338 = vset.pattern.permute.xlu0 1
  %7339 = vperm.xlu0 %7338, %v7114
  %v7340 = vpop.permute.xlu0 %7339
  %v7342 = vsel %vm4149, %v7335, %v7340
  %7344 = vset.pattern.permute.xlu0 2
  %7345 = vperm.xlu0 %7344, %v7331
  %v7346 = vpop.permute.xlu0 %7345
  %v7348 = vsel %vm4039, %v7346, %v7342
  %7350 = vset.pattern.permute.xlu0 2
  %7351 = vperm.xlu0 %7350, %v7222
  %v7352 = vpop.permute.xlu0 %7351
  %v7354 = vsel %vm3930, %v7352, %v7348
  %v7355 = vmul.f32 %v7354, 0.1
  %v7356 = vadd.f32 %v6901, %v7355
  %s7357 = scalar_lea.vmem %s75, 14
  %7358 = vst.msk [vmem:[%s7357] sm:$0x3] %vm4175, %v7356
  %v7359 = vadd.f32 %v7356, %v167
  %v7360 = vmul.f32 %v7359, %v175
  %v7361 = vrot.slane %v2595, 6
  %v7363 = vsub.f32 %v7360, %v7361
  %7364 = vrot.lane.b32.xlu0 %v7361, 124
  %v7365 = vpop.permute.xlu0 %7364
  %v7367 = vsub.f32 %v7106, %v7365
  %v7368 = vmul.f32 %v7363, %v7363
  %v7369 = vsel %vm4175, %v7368, 0.0
  %7370 = vadd.xlane.f32.xlu0 %v7369
  %v7371 = vpop.xlane.xlu0 %7370
  %v7372 = vrot.slane %v7371, 4
  %v7373 = vadd.f32 %v7371, %v7372
  %v7374 = vrot.slane %v7373, 2
  %v7375 = vadd.f32 %v7373, %v7374
  %v7376 = vrot.slane %v7375, 1
  %v7377 = vadd.f32 %v7375, %v7376
  %s7378 = vtos %v7377
  %v7379 = vstv %s7378
  %v7380 = vadd.f32 %v6938, %v7379
  %v7381 = vmul.f32 %v7367, %v7367
  %v7382 = vsel %vm4198, %v7381, 0.0
  %7383 = vadd.xlane.f32.xlu0 %v7382
  %v7384 = vpop.xlane.xlu0 %7383
  %v7385 = vrot.slane %v7384, 4
  %v7386 = vadd.f32 %v7384, %v7385
  %v7387 = vrot.slane %v7386, 2
  %v7388 = vadd.f32 %v7386, %v7387
  %v7389 = vrot.slane %v7388, 1
  %v7390 = vadd.f32 %v7388, %v7389
  %s7391 = vtos %v7390
  %v7392 = vstv %s7391
  %v7393 = vadd.f32 %v7380, %v7392
  %v7394 = vrcp.pop 96.0
  %v7395 = vmul.f32 %v7393, %v7394
  %v7396 = vadd.f32 %v3617, 1.0
  %v7397 = vmul.f32 %v3617, %v3617
  %7399 = vrot.lane.b32.xlu0 %v7397, 8
  %v7400 = vpop.permute.xlu0 %7399
  %v7402 = vsub.f32 %v7396, %v7400
  %v7403 = vmul.f32 %v3617, 1.442695
  %v7404 = vpow.pop %v7403
  %v7405 = vsub.f32 %v7402, %v7404
  %7407 = vrot.lane.b32.xlu0 %v7405, 120
  %v7408 = vpop.permute.xlu0 %7407
  %vm7410 = vcmask 58368
  %v7411 = vsel %vm7410, %v7408, 0.0
  %7412 = vadd.xlane.f32.xlu0 %v7411
  %v7413 = vpop.xlane.xlu0 %7412
  %v7414 = vrot.slane %v7413, 4
  %v7415 = vadd.f32 %v7413, %v7414
  %v7416 = vrot.slane %v7415, 2
  %v7417 = vadd.f32 %v7415, %v7416
  %v7418 = vrot.slane %v7417, 1
  %v7419 = vadd.f32 %v7417, %v7418
  %s7420 = vtos %v7419
  %v7421 = vstv %s7420
  %v7422 = vmul.f32 %v7421, -0.5
  %v7423 = vrcp.pop 16.0
  %v7424 = vmul.f32 %v7422, %v7423
  %s7425 = sld [smem:[#allocation2]]
  %v7426 = vstv %s7425
  %v7427 = vmul.f32 %v7426, %v7424
  %v7428 = vadd.f32 %v7395, %v7427
  %vm7429 = vcmask 7168
  %v7430 = vsel %vm7429, %v7428, %v7395
  %vm7431 = vcmask 15360
  %v7432 = vsel %vm7431, %v7430, %v7424
  %vm7433 = vcmask 16384
  %7434 = vst.msk [vmem:[%s77] sm:$0x1] %vm7433, %v7432
  // Predicated region
  $region150: #{vae_model_forward.1} parent=0 // pred_check
    _
  $region151: #{vae_model_forward.1} parent=0 // pred_check_branch
    %7436 = sbr.rel (0) target = $region153
  $region152: #{vae_model_forward.1} parent=0 // pred_region
    _
  $region153: #{vae_model_forward.1} parent=0 // pred_fallthru
    _
  // Predicated region
  $region154: #{vae_model_forward.1} parent=0 // pred_check
    _
  $region155: #{vae_model_forward.1} parent=0 // pred_check_branch
    %7438 = sbr.rel (0) target = $region157
  $region156: #{vae_model_forward.1} parent=0 // pred_region
    _
  $region157: #{vae_model_forward.1} parent=0 // pred_fallthru
    _
  // Predicated region
  $region158: #{vae_model_forward.1} parent=0 // pred_check
    _
  $region159: #{vae_model_forward.1} parent=0 // pred_check_branch
    %7440 = sbr.rel (0) target = $region161
  $region160: #{vae_model_forward.1} parent=0 // pred_region
    _
  $region161: #{vae_model_forward.1} parent=0 // pred_fallthru
    _
  // Predicated region
  $region162: #{vae_model_forward.1} parent=0 // pred_check
    _
  $region163: #{vae_model_forward.1} parent=0 // pred_check_branch
    %7442 = sbr.rel (0) target = $region165
  $region164: #{vae_model_forward.1} parent=0 // pred_region
    _
  $region165: #{vae_model_forward.1} parent=0 // pred_fallthru
    _

</llo_original>
